<compile_context>
chip_gen: v5e
topology: v5e:2x2
jax: 0.10.0
libtpu: 0.0.40
codegen_flags: <defaults>
</compile_context>

<pallas_src>
import functools

import jax
import jax.numpy as jnp
from jax.experimental import pallas as pl
from jax.experimental.pallas import tpu as pltpu

LIGHT_PATTERN_HEIGHT = 128
LIGHT_PATTERN_NUMS = 1
LIGHT_PATTERN_WIDTH = 64

# fc1..fc7, fc9, fc10, fc11 (in, out) dims, in forward order.
FC_DIMS = [
    (LIGHT_PATTERN_WIDTH * LIGHT_PATTERN_NUMS, 128),
    (128, 256),
    (256, 256),
    (256, 512),
    (512, 1024),
    (1024, 2048),
    (2048, 2048),
    (2048, 4096),
    (4096, 4096),
    (4096, 8192),
]

N_HEAD_FC = 6                      # conv + fc1..fc6 fused (weights ~5.6 MB bf16)
# N-tile per streamed layer: ~4-8 MB bf16 tiles, even tile count for v7x megacore.
STREAM_TN = {6: 1024, 7: 2048, 8: 1024, 9: 1024}


# ---------------------------------------------------------------------------
# Fused head kernel: conv stage + fc1..fc6, everything resident in VMEM.
# conv_i(x_seg[:, i, :]) == dot(segment_i, w_i) + b_i  -> (B, 64) after ReLU.
# ---------------------------------------------------------------------------
def dae_head_kernel(x_ref, cw_ref, cb_ref, *refs):
    o_ref = refs[-1]
    wb_refs = refs[:-1]                                   # w1,b1,...,w6,b6
    x = x_ref[...]                                        # (B, 64, 128) f32
    h = jnp.sum(x * cw_ref[...][None, :, :], axis=-1) + cb_ref[...]
    h = jnp.maximum(h, 0.0)                               # (B, 64)
    for i in range(0, len(wb_refs), 2):
        w_ref, b_ref = wb_refs[i], wb_refs[i + 1]
        y = jnp.dot(h.astype(jnp.bfloat16), w_ref[...],
                    preferred_element_type=jnp.float32)
        h = jnp.maximum(y + b_ref[...], 0.0)
    o_ref[...] = h


def dae_head(x_seg, conv_w, conv_b, head_ws, head_bs):
    B = x_seg.shape[0]
    dout = head_ws[-1].shape[1]
    operands = [x_seg, conv_w, conv_b]
    in_specs = [
        pl.BlockSpec(x_seg.shape, lambda: (0, 0, 0)),
        pl.BlockSpec(conv_w.shape, lambda: (0, 0)),
        pl.BlockSpec(conv_b.shape, lambda: (0, 0)),
    ]
    for w, b in zip(head_ws, head_bs):
        operands += [w, b]
        in_specs += [pl.BlockSpec(w.shape, lambda: (0, 0)),
                     pl.BlockSpec(b.shape, lambda: (0, 0))]

    flops = 2 * B * conv_w.size + sum(2 * B * w.size for w in head_ws)
    bytes_accessed = (x_seg.size * 4 + conv_w.size * 4 + conv_b.size * 4
                      + sum(w.size * 2 + b.size * 4
                            for w, b in zip(head_ws, head_bs))
                      + B * dout * 4)
    return pl.pallas_call(
        dae_head_kernel,
        out_shape=jax.ShapeDtypeStruct((B, dout), jnp.float32),
        in_specs=in_specs,
        out_specs=pl.BlockSpec((B, dout), lambda: (0, 0)),
        compiler_params=pltpu.CompilerParams(
            vmem_limit_bytes=32 * 1024 * 1024),
        cost_estimate=pl.CostEstimate(
            flops=flops, transcendentals=0, bytes_accessed=bytes_accessed),
    )(*operands)


# ---------------------------------------------------------------------------
# Streaming Linear: y = (relu)(x @ W + b) with full-K tiles.
#   * W is pre-packed tile-major as (nt, K, tn) bf16 -> one contiguous DMA/tile.
#   * Grid = (nt,), no reduction axis -> no accumulator scratch.
#   * x's block index is constant -> fetched once, revisited.
# ---------------------------------------------------------------------------
def linear_stream_kernel(x_ref, w_ref, b_ref, o_ref, *, relu):
    y = jnp.dot(x_ref[...].astype(jnp.bfloat16), w_ref[0],
                preferred_element_type=jnp.float32)
    y = y + b_ref[...]
    if relu:
        y = jnp.maximum(y, 0.0)
    o_ref[...] = y


def linear_stream(x, w_packed, b, *, relu):
    M, K = x.shape
    nt, Kw, tn = w_packed.shape
    assert Kw == K
    N = nt * tn
    kern = functools.partial(linear_stream_kernel, relu=relu)
    flops = 2 * M * K * N
    bytes_accessed = w_packed.size * 2 + x.size * 4 + M * N * 4 + N * 4
    return pl.pallas_call(
        kern,
        out_shape=jax.ShapeDtypeStruct((M, N), jnp.float32),
        grid_spec=pltpu.PrefetchScalarGridSpec(
            num_scalar_prefetch=0,
            grid=(nt,),
            in_specs=[
                pl.BlockSpec((M, K), lambda j: (0, 0)),
                pl.BlockSpec((1, K, tn), lambda j: (j, 0, 0)),
                pl.BlockSpec((1, tn), lambda j: (0, j)),
            ],
            out_specs=pl.BlockSpec((M, tn), lambda j: (0, j)),
        ),
        compiler_params=pltpu.CompilerParams(
            dimension_semantics=("parallel",),
            vmem_limit_bytes=40 * 1024 * 1024),
        cost_estimate=pl.CostEstimate(
            flops=flops, transcendentals=0, bytes_accessed=bytes_accessed),
    )(x, w_packed, b)


# ---------------------------------------------------------------------------
# Parameter init (same shapes / init scale as the PyTorch module) + packing.
# ---------------------------------------------------------------------------
def init_params(key):
    params = {}
    n_fc = len(FC_DIMS)
    keys = jax.random.split(key, 2 + 2 * n_fc)

    conv_scale = 1.0 / jnp.sqrt(LIGHT_PATTERN_HEIGHT)
    params["conv_w"] = jax.random.uniform(
        keys[0], (LIGHT_PATTERN_WIDTH, LIGHT_PATTERN_HEIGHT),
        jnp.float32, -conv_scale, conv_scale)
    params["conv_b"] = jax.random.uniform(
        keys[1], (LIGHT_PATTERN_WIDTH,), jnp.float32, -conv_scale, conv_scale)

    fc_w, fc_b = [], []
    for i, (din, dout) in enumerate(FC_DIMS):
        scale = 1.0 / jnp.sqrt(din)
        fc_w.append(jax.random.uniform(
            keys[2 + 2 * i], (din, dout), jnp.float32, -scale, scale))
        fc_b.append(jax.random.uniform(
            keys[3 + 2 * i], (dout,), jnp.float32, -scale, scale))
    params["fc_w"] = fc_w
    params["fc_b"] = fc_b
    return params


def prepare_params(raw):
    """Cast fc weights to bf16; pre-pack the streamed layers tile-major."""
    p = {"conv_w": raw["conv_w"],
         "conv_b": raw["conv_b"].reshape(1, -1)}
    head_ws, head_bs = [], []
    for i in range(N_HEAD_FC):
        head_ws.append(raw["fc_w"][i].astype(jnp.bfloat16))
        head_bs.append(raw["fc_b"][i].reshape(1, -1))
    p["head_ws"], p["head_bs"] = head_ws, head_bs

    stream = []
    for i in range(N_HEAD_FC, len(FC_DIMS)):
        K, N = FC_DIMS[i]
        tn = STREAM_TN[i]
        nt = N // tn
        w = raw["fc_w"][i].astype(jnp.bfloat16)
        # (K, N) -> (nt, K, tn): each output tile's weights are contiguous.
        w_packed = w.reshape(K, nt, tn).transpose(1, 0, 2)
        relu = i < len(FC_DIMS) - 1
        stream.append((w_packed, raw["fc_b"][i].reshape(1, -1), relu))
    p["stream"] = stream
    return p


# ---------------------------------------------------------------------------
# Full forward pass (Pallas) and a plain-JAX reference doing identical math.
# ---------------------------------------------------------------------------
def dae_forward(x, params):
    B = x.shape[0]
    # NCHW (B,1,1,8192) -> (B, 64, 128): segment i = x[:, :, :, i*128:(i+1)*128]
    x_seg = x.reshape(B, LIGHT_PATTERN_WIDTH, LIGHT_PATTERN_HEIGHT)
    h = dae_head(x_seg, params["conv_w"], params["conv_b"],
                 params["head_ws"], params["head_bs"])
    for w_packed, b, relu in params["stream"]:
        h = linear_stream(h, w_packed, b, relu=relu)
    return h


def dae_reference(x, params):
    B = x.shape[0]
    xs = x.reshape(B, LIGHT_PATTERN_WIDTH, LIGHT_PATTERN_HEIGHT)
    h = jnp.maximum(
        jnp.sum(xs * params["conv_w"][None], axis=-1) + params["conv_b"], 0.0)
    for w, b in zip(params["head_ws"], params["head_bs"]):
        y = jnp.dot(h.astype(jnp.bfloat16), w,
                    preferred_element_type=jnp.float32) + b
        h = jnp.maximum(y, 0.0)
    for w_packed, b, relu in params["stream"]:
        nt, K, tn = w_packed.shape
        w = w_packed.transpose(1, 0, 2).reshape(K, nt * tn)
        h = jnp.dot(h.astype(jnp.bfloat16), w,
                    preferred_element_type=jnp.float32) + b
        if relu:
            h = jnp.maximum(h, 0.0)
    return h


if __name__ == "__main__":
    key = jax.random.PRNGKey(0)
    k_param, k_input = jax.random.split(key)

    params = prepare_params(init_params(k_param))

    B = 2
    x = jax.random.normal(
        k_input, (B, 1, 1, LIGHT_PATTERN_WIDTH * LIGHT_PATTERN_HEIGHT),
        dtype=jnp.float32)

    out = jax.block_until_ready(dae_forward(x, params))
    assert out.shape == (B, FC_DIMS[-1][1]), out.shape

    ref = jax.block_until_ready(dae_reference(x, params))
    assert bool(jnp.allclose(out, ref, rtol=2e-3, atol=2e-4)), \
        "mismatch vs reference"

    print("KERNEL_OK")
</pallas_src>

<mosaic_0001>
module attributes {stable_mosaic.version = 11 : i64} {
  func.func @dae_head_kernel(%arg0: memref<2x64x128xf32, #tpu.memory_space<vmem>>, %arg1: memref<64x128xf32, #tpu.memory_space<vmem>>, %arg2: memref<1x64xf32, #tpu.memory_space<vmem>>, %arg3: memref<64x128xbf16, #tpu.memory_space<vmem>>, %arg4: memref<1x128xf32, #tpu.memory_space<vmem>>, %arg5: memref<128x256xbf16, #tpu.memory_space<vmem>>, %arg6: memref<1x256xf32, #tpu.memory_space<vmem>>, %arg7: memref<256x256xbf16, #tpu.memory_space<vmem>>, %arg8: memref<1x256xf32, #tpu.memory_space<vmem>>, %arg9: memref<256x512xbf16, #tpu.memory_space<vmem>>, %arg10: memref<1x512xf32, #tpu.memory_space<vmem>>, %arg11: memref<512x1024xbf16, #tpu.memory_space<vmem>>, %arg12: memref<1x1024xf32, #tpu.memory_space<vmem>>, %arg13: memref<1024x2048xbf16, #tpu.memory_space<vmem>>, %arg14: memref<1x2048xf32, #tpu.memory_space<vmem>>, %arg15: memref<2x2048xf32, #tpu.memory_space<vmem>>) attributes {dimension_semantics = [], scalar_prefetch = 0 : i64, scratch_operands = 0 : i64, tpu.core_type = #tpu.core_type<tc>} {
    %c0 = arith.constant 0 : index
    %c0_0 = arith.constant 0 : index
    %c0_1 = arith.constant 0 : index
    %0 = vector.load %arg0[%c0, %c0_0, %c0_1] : memref<2x64x128xf32, #tpu.memory_space<vmem>>, vector<2x64x128xf32>
    %c0_2 = arith.constant 0 : index
    %c0_3 = arith.constant 0 : index
    %1 = vector.load %arg1[%c0_2, %c0_3] : memref<64x128xf32, #tpu.memory_space<vmem>>, vector<64x128xf32>
    %2 = vector.shape_cast %1 : vector<64x128xf32> to vector<1x64x128xf32>
    %3 = vector.broadcast %2 : vector<1x64x128xf32> to vector<2x64x128xf32>
    %4 = arith.mulf %0, %3 : vector<2x64x128xf32>
    %cst = arith.constant dense<0.000000e+00> : vector<2x64xf32>
    %5 = vector.multi_reduction <add>, %4, %cst [2] : vector<2x64x128xf32> to vector<2x64xf32>
    %c0_4 = arith.constant 0 : index
    %c0_5 = arith.constant 0 : index
    %6 = vector.load %arg2[%c0_4, %c0_5] : memref<1x64xf32, #tpu.memory_space<vmem>>, vector<1x64xf32>
    %7 = vector.broadcast %6 : vector<1x64xf32> to vector<2x64xf32>
    %8 = arith.addf %5, %7 : vector<2x64xf32>
    %cst_6 = arith.constant 0.000000e+00 : f32
    %9 = vector.broadcast %cst_6 : f32 to vector<2x64xf32>
    %10 = arith.maximumf %8, %9 : vector<2x64xf32>
    %11 = arith.truncf %10 : vector<2x64xf32> to vector<2x64xbf16>
    %c0_7 = arith.constant 0 : index
    %c0_8 = arith.constant 0 : index
    %12 = vector.load %arg3[%c0_7, %c0_8] : memref<64x128xbf16, #tpu.memory_space<vmem>>, vector<64x128xbf16>
    %cst_9 = arith.constant dense<0.000000e+00> : vector<2x128xf32>
    %13 = tpu.matmul %11, %12, %cst_9 {dimension_numbers = #tpu.dot_dimension_numbers<[1], [0], [0], [1], [0, 0, 1, 1], [], []>} : vector<2x64xbf16>, vector<64x128xbf16>, vector<2x128xf32> -> vector<2x128xf32>
    %c0_10 = arith.constant 0 : index
    %c0_11 = arith.constant 0 : index
    %14 = vector.load %arg4[%c0_10, %c0_11] : memref<1x128xf32, #tpu.memory_space<vmem>>, vector<1x128xf32>
    %15 = vector.broadcast %14 : vector<1x128xf32> to vector<2x128xf32>
    %16 = arith.addf %13, %15 : vector<2x128xf32>
    %cst_12 = arith.constant 0.000000e+00 : f32
    %17 = vector.broadcast %cst_12 : f32 to vector<2x128xf32>
    %18 = arith.maximumf %16, %17 : vector<2x128xf32>
    %19 = arith.truncf %18 : vector<2x128xf32> to vector<2x128xbf16>
    %c0_13 = arith.constant 0 : index
    %c0_14 = arith.constant 0 : index
    %20 = vector.load %arg5[%c0_13, %c0_14] : memref<128x256xbf16, #tpu.memory_space<vmem>>, vector<128x256xbf16>
    %cst_15 = arith.constant dense<0.000000e+00> : vector<2x256xf32>
    %21 = tpu.matmul %19, %20, %cst_15 {dimension_numbers = #tpu.dot_dimension_numbers<[1], [0], [0], [1], [0, 0, 1, 1], [], []>} : vector<2x128xbf16>, vector<128x256xbf16>, vector<2x256xf32> -> vector<2x256xf32>
    %c0_16 = arith.constant 0 : index
    %c0_17 = arith.constant 0 : index
    %22 = vector.load %arg6[%c0_16, %c0_17] : memref<1x256xf32, #tpu.memory_space<vmem>>, vector<1x256xf32>
    %23 = vector.broadcast %22 : vector<1x256xf32> to vector<2x256xf32>
    %24 = arith.addf %21, %23 : vector<2x256xf32>
    %cst_18 = arith.constant 0.000000e+00 : f32
    %25 = vector.broadcast %cst_18 : f32 to vector<2x256xf32>
    %26 = arith.maximumf %24, %25 : vector<2x256xf32>
    %27 = arith.truncf %26 : vector<2x256xf32> to vector<2x256xbf16>
    %c0_19 = arith.constant 0 : index
    %c0_20 = arith.constant 0 : index
    %28 = vector.load %arg7[%c0_19, %c0_20] : memref<256x256xbf16, #tpu.memory_space<vmem>>, vector<256x256xbf16>
    %cst_21 = arith.constant dense<0.000000e+00> : vector<2x256xf32>
    %29 = tpu.matmul %27, %28, %cst_21 {dimension_numbers = #tpu.dot_dimension_numbers<[1], [0], [0], [1], [0, 0, 1, 1], [], []>} : vector<2x256xbf16>, vector<256x256xbf16>, vector<2x256xf32> -> vector<2x256xf32>
    %c0_22 = arith.constant 0 : index
    %c0_23 = arith.constant 0 : index
    %30 = vector.load %arg8[%c0_22, %c0_23] : memref<1x256xf32, #tpu.memory_space<vmem>>, vector<1x256xf32>
    %31 = vector.broadcast %30 : vector<1x256xf32> to vector<2x256xf32>
    %32 = arith.addf %29, %31 : vector<2x256xf32>
    %cst_24 = arith.constant 0.000000e+00 : f32
    %33 = vector.broadcast %cst_24 : f32 to vector<2x256xf32>
    %34 = arith.maximumf %32, %33 : vector<2x256xf32>
    %35 = arith.truncf %34 : vector<2x256xf32> to vector<2x256xbf16>
    %c0_25 = arith.constant 0 : index
    %c0_26 = arith.constant 0 : index
    %36 = vector.load %arg9[%c0_25, %c0_26] : memref<256x512xbf16, #tpu.memory_space<vmem>>, vector<256x512xbf16>
    %cst_27 = arith.constant dense<0.000000e+00> : vector<2x512xf32>
    %37 = tpu.matmul %35, %36, %cst_27 {dimension_numbers = #tpu.dot_dimension_numbers<[1], [0], [0], [1], [0, 0, 1, 1], [], []>} : vector<2x256xbf16>, vector<256x512xbf16>, vector<2x512xf32> -> vector<2x512xf32>
    %c0_28 = arith.constant 0 : index
    %c0_29 = arith.constant 0 : index
    %38 = vector.load %arg10[%c0_28, %c0_29] : memref<1x512xf32, #tpu.memory_space<vmem>>, vector<1x512xf32>
    %39 = vector.broadcast %38 : vector<1x512xf32> to vector<2x512xf32>
    %40 = arith.addf %37, %39 : vector<2x512xf32>
    %cst_30 = arith.constant 0.000000e+00 : f32
    %41 = vector.broadcast %cst_30 : f32 to vector<2x512xf32>
    %42 = arith.maximumf %40, %41 : vector<2x512xf32>
    %43 = arith.truncf %42 : vector<2x512xf32> to vector<2x512xbf16>
    %c0_31 = arith.constant 0 : index
    %c0_32 = arith.constant 0 : index
    %44 = vector.load %arg11[%c0_31, %c0_32] : memref<512x1024xbf16, #tpu.memory_space<vmem>>, vector<512x1024xbf16>
    %cst_33 = arith.constant dense<0.000000e+00> : vector<2x1024xf32>
    %45 = tpu.matmul %43, %44, %cst_33 {dimension_numbers = #tpu.dot_dimension_numbers<[1], [0], [0], [1], [0, 0, 1, 1], [], []>} : vector<2x512xbf16>, vector<512x1024xbf16>, vector<2x1024xf32> -> vector<2x1024xf32>
    %c0_34 = arith.constant 0 : index
    %c0_35 = arith.constant 0 : index
    %46 = vector.load %arg12[%c0_34, %c0_35] : memref<1x1024xf32, #tpu.memory_space<vmem>>, vector<1x1024xf32>
    %47 = vector.broadcast %46 : vector<1x1024xf32> to vector<2x1024xf32>
    %48 = arith.addf %45, %47 : vector<2x1024xf32>
    %cst_36 = arith.constant 0.000000e+00 : f32
    %49 = vector.broadcast %cst_36 : f32 to vector<2x1024xf32>
    %50 = arith.maximumf %48, %49 : vector<2x1024xf32>
    %51 = arith.truncf %50 : vector<2x1024xf32> to vector<2x1024xbf16>
    %c0_37 = arith.constant 0 : index
    %c0_38 = arith.constant 0 : index
    %52 = vector.load %arg13[%c0_37, %c0_38] : memref<1024x2048xbf16, #tpu.memory_space<vmem>>, vector<1024x2048xbf16>
    %cst_39 = arith.constant dense<0.000000e+00> : vector<2x2048xf32>
    %53 = tpu.matmul %51, %52, %cst_39 {dimension_numbers = #tpu.dot_dimension_numbers<[1], [0], [0], [1], [0, 0, 1, 1], [], []>} : vector<2x1024xbf16>, vector<1024x2048xbf16>, vector<2x2048xf32> -> vector<2x2048xf32>
    %c0_40 = arith.constant 0 : index
    %c0_41 = arith.constant 0 : index
    %54 = vector.load %arg14[%c0_40, %c0_41] : memref<1x2048xf32, #tpu.memory_space<vmem>>, vector<1x2048xf32>
    %55 = vector.broadcast %54 : vector<1x2048xf32> to vector<2x2048xf32>
    %56 = arith.addf %53, %55 : vector<2x2048xf32>
    %cst_42 = arith.constant 0.000000e+00 : f32
    %57 = vector.broadcast %cst_42 : f32 to vector<2x2048xf32>
    %58 = arith.maximumf %56, %57 : vector<2x2048xf32>
    %c0_43 = arith.constant 0 : index
    %c0_44 = arith.constant 0 : index
    %59 = vector.load %arg15[%c0_43, %c0_44] : memref<2x2048xf32, #tpu.memory_space<vmem>>, vector<2x2048xf32>
    tpu.vector_store %arg15[%c0_43, %c0_44], %58 {strides = array<i32>} : memref<2x2048xf32, #tpu.memory_space<vmem>>, vector<2x2048xf32>,
    return
  }
}

</mosaic_0001>

<llo_original>
// kernel: tpu_custom_call.1
$region0: #{tpu_custom_call.1}
  #allocation0 [shape = 'u32[]', space=smem, size = 0x4, offset = 0x4, fixed_abs, tag = 'smem constant byte address 0x4 - core index']
  #allocation1 [shape = 'u32[72,128]{1,0:T(1,128)}', space=vmem, size = 0x9000, scoped, tag = 'internal scratch']
  %s0 = inlined_call_operand.hbm [shape: f32[2,64,128], index: 0, kind: input, shape index: {}]
  %s1 = inlined_call_operand.hbm [shape: f32[64,128], index: 1, kind: input, shape index: {}]
  %s2 = inlined_call_operand.hbm [shape: f32[1,64], index: 2, kind: input, shape index: {}]
  %s3 = inlined_call_operand.hbm [shape: bf16[64,128], index: 3, kind: input, shape index: {}]
  %s4 = inlined_call_operand.hbm [shape: f32[1,128], index: 4, kind: input, shape index: {}]
  %s5 = inlined_call_operand.hbm [shape: bf16[128,256], index: 5, kind: input, shape index: {}]
  %s6 = inlined_call_operand.hbm [shape: f32[1,256], index: 6, kind: input, shape index: {}]
  %s7 = inlined_call_operand.hbm [shape: bf16[256,256], index: 7, kind: input, shape index: {}]
  %s8 = inlined_call_operand.hbm [shape: f32[1,256], index: 8, kind: input, shape index: {}]
  %s9 = inlined_call_operand.hbm [shape: bf16[256,512], index: 9, kind: input, shape index: {}]
  %s10 = inlined_call_operand.hbm [shape: f32[1,512], index: 10, kind: input, shape index: {}]
  %s11 = inlined_call_operand.hbm [shape: bf16[512,1024], index: 11, kind: input, shape index: {}]
  %s12 = inlined_call_operand.hbm [shape: f32[1,1024], index: 12, kind: input, shape index: {}]
  %s13 = inlined_call_operand.hbm [shape: bf16[1024,2048], index: 13, kind: input, shape index: {}]
  %s14 = inlined_call_operand.hbm [shape: f32[1,2048], index: 14, kind: input, shape index: {}]
  %s15 = inlined_call_operand.hbm [shape: f32[2,2048], index: 15, kind: output, shape index: {}]
  %s16 = sld [smem:[#allocation0]]
  $region130: #{tpu_custom_call.1} parent=0
    _
  %s18 = ssub.s32 1, %s16
  %s19 = scalar_select 0, %s18, %s16
  $region1: #{tpu_custom_call.1} parent=0
    #allocation2 [shape = 'u8[65536]{0}', space=vmem, size = 0x10000, scoped, tag = 'input window, operand 0, single buffered']
    #allocation3 [shape = 's32[1]{0}', space=sflag, size = 0x4, scoped, tag = 'scoped memory for tpu_custom_call.1']
    #allocation4 [shape = 's32[1]{0}', space=sflag, size = 0x4, scoped, tag = 'scoped memory for tpu_custom_call.1']
    #allocation5 [shape = 'u8[32768]{0}', space=vmem, size = 0x8000, scoped, tag = 'input window, operand 1, single buffered']
    #allocation6 [shape = 's32[1]{0}', space=sflag, size = 0x4, scoped, tag = 'scoped memory for tpu_custom_call.1']
    #allocation7 [shape = 'u8[512]{0}', space=vmem, size = 0x400, scoped, tag = 'input window, operand 2, single buffered']
    #allocation8 [shape = 'u8[16384]{0}', space=vmem, size = 0x4000, scoped, tag = 'input window, operand 3, single buffered']
    #allocation9 [shape = 's32[1]{0}', space=sflag, size = 0x4, scoped, tag = 'scoped memory for tpu_custom_call.1']
    #allocation10 [shape = 'u8[512]{0}', space=vmem, size = 0x400, scoped, tag = 'input window, operand 4, single buffered']
    #allocation11 [shape = 'u8[65536]{0}', space=vmem, size = 0x10000, scoped, tag = 'input window, operand 5, single buffered']
    #allocation12 [shape = 's32[1]{0}', space=sflag, size = 0x4, scoped, tag = 'scoped memory for tpu_custom_call.1']
    #allocation13 [shape = 'u8[1024]{0}', space=vmem, size = 0x400, scoped, tag = 'input window, operand 6, single buffered']
    #allocation14 [shape = 'u8[131072]{0}', space=vmem, size = 0x20000, scoped, tag = 'input window, operand 7, single buffered']
    #allocation15 [shape = 's32[1]{0}', space=sflag, size = 0x4, scoped, tag = 'scoped memory for tpu_custom_call.1']
    #allocation16 [shape = 'u8[1024]{0}', space=vmem, size = 0x400, scoped, tag = 'input window, operand 8, single buffered']
    #allocation17 [shape = 'u8[262144]{0}', space=vmem, size = 0x40000, scoped, tag = 'input window, operand 9, single buffered']
    #allocation18 [shape = 's32[1]{0}', space=sflag, size = 0x4, scoped, tag = 'scoped memory for tpu_custom_call.1']
    #allocation19 [shape = 'u8[2048]{0}', space=vmem, size = 0x800, scoped, tag = 'input window, operand 10, single buffered']
    #allocation20 [shape = 'u8[1048576]{0}', space=vmem, size = 0x100000, scoped, tag = 'input window, operand 11, single buffered']
    #allocation21 [shape = 's32[1]{0}', space=sflag, size = 0x4, scoped, tag = 'scoped memory for tpu_custom_call.1']
    #allocation22 [shape = 'u8[4096]{0}', space=vmem, size = 0x1000, scoped, tag = 'input window, operand 12, single buffered']
    #allocation23 [shape = 'u8[4194304]{0}', space=vmem, size = 0x400000, scoped, tag = 'input window, operand 13, single buffered']
    #allocation24 [shape = 's32[1]{0}', space=sflag, size = 0x4, scoped, tag = 'scoped memory for tpu_custom_call.1']
    #allocation25 [shape = 'u8[8192]{0}', space=vmem, size = 0x2000, scoped, tag = 'input window, operand 14, single buffered']
    #allocation26 [shape = 'u8[16384]{0}', space=vmem, size = 0x4000, scoped, tag = 'output window, operand 0, single buffered']
    %20 = vsyncpa [#allocation3], 0
    %21 = vsyncpa [#allocation6], 0
    %22 = vsyncpa [#allocation9], 0
    %23 = vsyncpa [#allocation12], 0
    %24 = vsyncpa [#allocation15], 0
    %25 = vsyncpa [#allocation18], 0
    %26 = vsyncpa [#allocation21], 0
    %27 = vsyncpa [#allocation24], 0
    %28 = vsyncpa [#allocation4], 0
    // Predicated region
    $region2: #{tpu_custom_call.1} parent=1 // pred_check
      _
    $region3: #{tpu_custom_call.1} parent=1 // pred_check_branch
      %30 = sbr.rel (0) target = $region5
    $region4: #{tpu_custom_call.1} parent=1 // pred_region
      %32 = vsyncadd [#allocation3], 0
      %s33 = sshll.u32 %s0, 4
      %s34 = int_to_ptr.hbm [resolvable:$true] %s33
      %s35 = sshll.u32 [#allocation2], 4
      %s36 = int_to_ptr.vmem [resolvable:$true] %s35
      %41 = dma.hbm_to_vmem [thread:$0]  %s34, 2048, %s36, [#allocation3], 128, 128, 8
    $region5: #{tpu_custom_call.1} parent=1 // pred_fallthru
      _
    // Predicated region
    $region6: #{tpu_custom_call.1} parent=1 // pred_check
      _
    $region7: #{tpu_custom_call.1} parent=1 // pred_check_branch
      %43 = sbr.rel (0) target = $region9
    $region8: #{tpu_custom_call.1} parent=1 // pred_region
      %45 = vsyncadd [#allocation6], 0
      %s46 = sshll.u32 %s1, 4
      %s47 = int_to_ptr.hbm [resolvable:$true] %s46
      %s48 = sshll.u32 [#allocation5], 4
      %s49 = int_to_ptr.vmem [resolvable:$true] %s48
      %54 = dma.hbm_to_vmem [thread:$0]  %s47, 1024, %s49, [#allocation6], 128, 128, 8
    $region9: #{tpu_custom_call.1} parent=1 // pred_fallthru
      _
    // Predicated region
    $region10: #{tpu_custom_call.1} parent=1 // pred_check
      _
    $region11: #{tpu_custom_call.1} parent=1 // pred_check_branch
      %56 = sbr.rel (0) target = $region13
    $region12: #{tpu_custom_call.1} parent=1 // pred_region
      %58 = vsyncadd [#allocation6], 0
      %s60 = sshll.u32 %s2, 4
      %s61 = int_to_ptr.hbm [resolvable:$true] %s60
      %s62 = sshll.u32 [#allocation7], 4
      %s63 = int_to_ptr.vmem [resolvable:$true] %s62
      %65 = dma.hbm_to_vmem [thread:$0]  %s61, 16, %s63, [#allocation6]
    $region13: #{tpu_custom_call.1} parent=1 // pred_fallthru
      _
    // Predicated region
    $region14: #{tpu_custom_call.1} parent=1 // pred_check
      _
    $region15: #{tpu_custom_call.1} parent=1 // pred_check_branch
      %67 = sbr.rel (0) target = $region17
    $region16: #{tpu_custom_call.1} parent=1 // pred_region
      %69 = vsyncadd [#allocation9], 0
      %s70 = sshll.u32 %s3, 4
      %s71 = int_to_ptr.hbm [resolvable:$true] %s70
      %s72 = sshll.u32 [#allocation8], 4
      %s73 = int_to_ptr.vmem [resolvable:$true] %s72
      %78 = dma.hbm_to_vmem [thread:$0]  %s71, 512, %s73, [#allocation9], 64, 64, 4
    $region17: #{tpu_custom_call.1} parent=1 // pred_fallthru
      _
    // Predicated region
    $region18: #{tpu_custom_call.1} parent=1 // pred_check
      _
    $region19: #{tpu_custom_call.1} parent=1 // pred_check_branch
      %80 = sbr.rel (0) target = $region21
    $region20: #{tpu_custom_call.1} parent=1 // pred_region
      %82 = vsyncadd [#allocation9], 0
      %s84 = sshll.u32 %s4, 4
      %s85 = int_to_ptr.hbm [resolvable:$true] %s84
      %s86 = sshll.u32 [#allocation10], 4
      %s87 = int_to_ptr.vmem [resolvable:$true] %s86
      %89 = dma.hbm_to_vmem [thread:$0]  %s85, 16, %s87, [#allocation9]
    $region21: #{tpu_custom_call.1} parent=1 // pred_fallthru
      _
    // Predicated region
    $region22: #{tpu_custom_call.1} parent=1 // pred_check
      _
    $region23: #{tpu_custom_call.1} parent=1 // pred_check_branch
      %91 = sbr.rel (0) target = $region25
    $region24: #{tpu_custom_call.1} parent=1 // pred_region
      %93 = vsyncadd [#allocation12], 0
      %s94 = sshll.u32 %s5, 4
      %s95 = int_to_ptr.hbm [resolvable:$true] %s94
      %s96 = sshll.u32 [#allocation11], 4
      %s97 = int_to_ptr.vmem [resolvable:$true] %s96
      %102 = dma.hbm_to_vmem [thread:$0]  %s95, 2048, %s97, [#allocation12], 128, 128, 8
    $region25: #{tpu_custom_call.1} parent=1 // pred_fallthru
      _
    // Predicated region
    $region26: #{tpu_custom_call.1} parent=1 // pred_check
      _
    $region27: #{tpu_custom_call.1} parent=1 // pred_check_branch
      %104 = sbr.rel (0) target = $region29
    $region28: #{tpu_custom_call.1} parent=1 // pred_region
      %106 = vsyncadd [#allocation12], 0
      %s108 = sshll.u32 %s6, 4
      %s109 = int_to_ptr.hbm [resolvable:$true] %s108
      %s110 = sshll.u32 [#allocation13], 4
      %s111 = int_to_ptr.vmem [resolvable:$true] %s110
      %113 = dma.hbm_to_vmem [thread:$0]  %s109, 32, %s111, [#allocation12]
    $region29: #{tpu_custom_call.1} parent=1 // pred_fallthru
      _
    // Predicated region
    $region30: #{tpu_custom_call.1} parent=1 // pred_check
      _
    $region31: #{tpu_custom_call.1} parent=1 // pred_check_branch
      %115 = sbr.rel (0) target = $region33
    $region32: #{tpu_custom_call.1} parent=1 // pred_region
      %117 = vsyncadd [#allocation15], 0
      %s118 = sshll.u32 %s7, 4
      %s119 = int_to_ptr.hbm [resolvable:$true] %s118
      %s120 = sshll.u32 [#allocation14], 4
      %s121 = int_to_ptr.vmem [resolvable:$true] %s120
      %126 = dma.hbm_to_vmem [thread:$0]  %s119, 4096, %s121, [#allocation15], 128, 128, 8
    $region33: #{tpu_custom_call.1} parent=1 // pred_fallthru
      _
    // Predicated region
    $region34: #{tpu_custom_call.1} parent=1 // pred_check
      _
    $region35: #{tpu_custom_call.1} parent=1 // pred_check_branch
      %128 = sbr.rel (0) target = $region37
    $region36: #{tpu_custom_call.1} parent=1 // pred_region
      %130 = vsyncadd [#allocation15], 0
      %s132 = sshll.u32 %s8, 4
      %s133 = int_to_ptr.hbm [resolvable:$true] %s132
      %s134 = sshll.u32 [#allocation16], 4
      %s135 = int_to_ptr.vmem [resolvable:$true] %s134
      %137 = dma.hbm_to_vmem [thread:$0]  %s133, 32, %s135, [#allocation15]
    $region37: #{tpu_custom_call.1} parent=1 // pred_fallthru
      _
    // Predicated region
    $region38: #{tpu_custom_call.1} parent=1 // pred_check
      _
    $region39: #{tpu_custom_call.1} parent=1 // pred_check_branch
      %139 = sbr.rel (0) target = $region41
    $region40: #{tpu_custom_call.1} parent=1 // pred_region
      %141 = vsyncadd [#allocation18], 0
      %s142 = sshll.u32 %s9, 4
      %s143 = int_to_ptr.hbm [resolvable:$true] %s142
      %s144 = sshll.u32 [#allocation17], 4
      %s145 = int_to_ptr.vmem [resolvable:$true] %s144
      %150 = dma.hbm_to_vmem [thread:$0]  %s143, 8192, %s145, [#allocation18], 256, 256, 16
    $region41: #{tpu_custom_call.1} parent=1 // pred_fallthru
      _
    // Predicated region
    $region42: #{tpu_custom_call.1} parent=1 // pred_check
      _
    $region43: #{tpu_custom_call.1} parent=1 // pred_check_branch
      %152 = sbr.rel (0) target = $region45
    $region44: #{tpu_custom_call.1} parent=1 // pred_region
      %154 = vsyncadd [#allocation18], 0
      %s156 = sshll.u32 %s10, 4
      %s157 = int_to_ptr.hbm [resolvable:$true] %s156
      %s158 = sshll.u32 [#allocation19], 4
      %s159 = int_to_ptr.vmem [resolvable:$true] %s158
      %161 = dma.hbm_to_vmem [thread:$0]  %s157, 64, %s159, [#allocation18]
    $region45: #{tpu_custom_call.1} parent=1 // pred_fallthru
      _
    // Predicated region
    $region46: #{tpu_custom_call.1} parent=1 // pred_check
      _
    $region47: #{tpu_custom_call.1} parent=1 // pred_check_branch
      %163 = sbr.rel (0) target = $region49
    $region48: #{tpu_custom_call.1} parent=1 // pred_region
      %165 = vsyncadd [#allocation21], 0
      %s166 = sshll.u32 %s11, 4
      %s167 = int_to_ptr.hbm [resolvable:$true] %s166
      %s168 = sshll.u32 [#allocation20], 4
      %s169 = int_to_ptr.vmem [resolvable:$true] %s168
      %174 = dma.hbm_to_vmem [thread:$0]  %s167, 32768, %s169, [#allocation21], 512, 512, 32
    $region49: #{tpu_custom_call.1} parent=1 // pred_fallthru
      _
    // Predicated region
    $region50: #{tpu_custom_call.1} parent=1 // pred_check
      _
    $region51: #{tpu_custom_call.1} parent=1 // pred_check_branch
      %176 = sbr.rel (0) target = $region53
    $region52: #{tpu_custom_call.1} parent=1 // pred_region
      %178 = vsyncadd [#allocation21], 0
      %s180 = sshll.u32 %s12, 4
      %s181 = int_to_ptr.hbm [resolvable:$true] %s180
      %s182 = sshll.u32 [#allocation22], 4
      %s183 = int_to_ptr.vmem [resolvable:$true] %s182
      %185 = dma.hbm_to_vmem [thread:$0]  %s181, 128, %s183, [#allocation21]
    $region53: #{tpu_custom_call.1} parent=1 // pred_fallthru
      _
    // Predicated region
    $region54: #{tpu_custom_call.1} parent=1 // pred_check
      _
    $region55: #{tpu_custom_call.1} parent=1 // pred_check_branch
      %187 = sbr.rel (0) target = $region57
    $region56: #{tpu_custom_call.1} parent=1 // pred_region
      %189 = vsyncadd [#allocation24], 0
      %s190 = sshll.u32 %s13, 4
      %s191 = int_to_ptr.hbm [resolvable:$true] %s190
      %s192 = sshll.u32 [#allocation23], 4
      %s193 = int_to_ptr.vmem [resolvable:$true] %s192
      %198 = dma.hbm_to_vmem [thread:$0]  %s191, 131072, %s193, [#allocation24], 1024, 1024, 64
    $region57: #{tpu_custom_call.1} parent=1 // pred_fallthru
      _
    // Predicated region
    $region58: #{tpu_custom_call.1} parent=1 // pred_check
      _
    $region59: #{tpu_custom_call.1} parent=1 // pred_check_branch
      %200 = sbr.rel (0) target = $region61
    $region60: #{tpu_custom_call.1} parent=1 // pred_region
      %202 = vsyncadd [#allocation24], 0
      %s204 = sshll.u32 %s14, 4
      %s205 = int_to_ptr.hbm [resolvable:$true] %s204
      %s206 = sshll.u32 [#allocation25], 4
      %s207 = int_to_ptr.vmem [resolvable:$true] %s206
      %209 = dma.hbm_to_vmem [thread:$0]  %s205, 256, %s207, [#allocation24]
    $region61: #{tpu_custom_call.1} parent=1 // pred_fallthru
      _
    // Predicated region
    $region62: #{tpu_custom_call.1} parent=1 // pred_check
      _
    $region63: #{tpu_custom_call.1} parent=1 // pred_check_branch
      %211 = sbr.rel (0) target = $region65
    $region64: #{tpu_custom_call.1} parent=1 // pred_region
      %213 = dma.done [#allocation3], 2048
    $region65: #{tpu_custom_call.1} parent=1 // pred_fallthru
      _
    // Predicated region
    $region66: #{tpu_custom_call.1} parent=1 // pred_check
      _
    $region67: #{tpu_custom_call.1} parent=1 // pred_check_branch
      %215 = sbr.rel (0) target = $region69
    $region68: #{tpu_custom_call.1} parent=1 // pred_region
      %217 = dma.done [#allocation6], 1024
    $region69: #{tpu_custom_call.1} parent=1 // pred_fallthru
      _
    // Predicated region
    $region70: #{tpu_custom_call.1} parent=1 // pred_check
      _
    $region71: #{tpu_custom_call.1} parent=1 // pred_check_branch
      %219 = sbr.rel (0) target = $region73
    $region72: #{tpu_custom_call.1} parent=1 // pred_region
      %221 = dma.done [#allocation6], 16
    $region73: #{tpu_custom_call.1} parent=1 // pred_fallthru
      _
    // Predicated region
    $region74: #{tpu_custom_call.1} parent=1 // pred_check
      _
    $region75: #{tpu_custom_call.1} parent=1 // pred_check_branch
      %223 = sbr.rel (0) target = $region77
    $region76: #{tpu_custom_call.1} parent=1 // pred_region
      %225 = dma.done [#allocation9], 512
    $region77: #{tpu_custom_call.1} parent=1 // pred_fallthru
      _
    // Predicated region
    $region78: #{tpu_custom_call.1} parent=1 // pred_check
      _
    $region79: #{tpu_custom_call.1} parent=1 // pred_check_branch
      %227 = sbr.rel (0) target = $region81
    $region80: #{tpu_custom_call.1} parent=1 // pred_region
      %229 = dma.done [#allocation9], 16
    $region81: #{tpu_custom_call.1} parent=1 // pred_fallthru
      _
    // Predicated region
    $region82: #{tpu_custom_call.1} parent=1 // pred_check
      _
    $region83: #{tpu_custom_call.1} parent=1 // pred_check_branch
      %231 = sbr.rel (0) target = $region85
    $region84: #{tpu_custom_call.1} parent=1 // pred_region
      %233 = dma.done [#allocation12], 2048
    $region85: #{tpu_custom_call.1} parent=1 // pred_fallthru
      _
    // Predicated region
    $region86: #{tpu_custom_call.1} parent=1 // pred_check
      _
    $region87: #{tpu_custom_call.1} parent=1 // pred_check_branch
      %235 = sbr.rel (0) target = $region89
    $region88: #{tpu_custom_call.1} parent=1 // pred_region
      %237 = dma.done [#allocation12], 32
    $region89: #{tpu_custom_call.1} parent=1 // pred_fallthru
      _
    // Predicated region
    $region90: #{tpu_custom_call.1} parent=1 // pred_check
      _
    $region91: #{tpu_custom_call.1} parent=1 // pred_check_branch
      %239 = sbr.rel (0) target = $region93
    $region92: #{tpu_custom_call.1} parent=1 // pred_region
      %241 = dma.done [#allocation15], 4096
    $region93: #{tpu_custom_call.1} parent=1 // pred_fallthru
      _
    // Predicated region
    $region94: #{tpu_custom_call.1} parent=1 // pred_check
      _
    $region95: #{tpu_custom_call.1} parent=1 // pred_check_branch
      %243 = sbr.rel (0) target = $region97
    $region96: #{tpu_custom_call.1} parent=1 // pred_region
      %245 = dma.done [#allocation15], 32
    $region97: #{tpu_custom_call.1} parent=1 // pred_fallthru
      _
    // Predicated region
    $region98: #{tpu_custom_call.1} parent=1 // pred_check
      _
    $region99: #{tpu_custom_call.1} parent=1 // pred_check_branch
      %247 = sbr.rel (0) target = $region101
    $region100: #{tpu_custom_call.1} parent=1 // pred_region
      %249 = dma.done [#allocation18], 8192
    $region101: #{tpu_custom_call.1} parent=1 // pred_fallthru
      _
    // Predicated region
    $region102: #{tpu_custom_call.1} parent=1 // pred_check
      _
    $region103: #{tpu_custom_call.1} parent=1 // pred_check_branch
      %251 = sbr.rel (0) target = $region105
    $region104: #{tpu_custom_call.1} parent=1 // pred_region
      %253 = dma.done [#allocation18], 64
    $region105: #{tpu_custom_call.1} parent=1 // pred_fallthru
      _
    // Predicated region
    $region106: #{tpu_custom_call.1} parent=1 // pred_check
      _
    $region107: #{tpu_custom_call.1} parent=1 // pred_check_branch
      %255 = sbr.rel (0) target = $region109
    $region108: #{tpu_custom_call.1} parent=1 // pred_region
      %257 = dma.done [#allocation21], 32768
    $region109: #{tpu_custom_call.1} parent=1 // pred_fallthru
      _
    // Predicated region
    $region110: #{tpu_custom_call.1} parent=1 // pred_check
      _
    $region111: #{tpu_custom_call.1} parent=1 // pred_check_branch
      %259 = sbr.rel (0) target = $region113
    $region112: #{tpu_custom_call.1} parent=1 // pred_region
      %261 = dma.done [#allocation21], 128
    $region113: #{tpu_custom_call.1} parent=1 // pred_fallthru
      _
    // Predicated region
    $region114: #{tpu_custom_call.1} parent=1 // pred_check
      _
    $region115: #{tpu_custom_call.1} parent=1 // pred_check_branch
      %263 = sbr.rel (0) target = $region117
    $region116: #{tpu_custom_call.1} parent=1 // pred_region
      %265 = dma.done [#allocation24], 131072
    $region117: #{tpu_custom_call.1} parent=1 // pred_fallthru
      _
    // Predicated region
    $region118: #{tpu_custom_call.1} parent=1 // pred_check
      _
    $region119: #{tpu_custom_call.1} parent=1 // pred_check_branch
      %267 = sbr.rel (0) target = $region121
    $region120: #{tpu_custom_call.1} parent=1 // pred_region
      %269 = dma.done [#allocation24], 256
    $region121: #{tpu_custom_call.1} parent=1 // pred_fallthru
      _
    %v271 = vld [vmem:[#allocation2] sm:$0xff]
    %v272 = vld [vmem:[#allocation2 + $0x8] sm:$0xff]
    %v273 = vld [vmem:[#allocation2 + $0x10] sm:$0xff]
    %v274 = vld [vmem:[#allocation2 + $0x18] sm:$0xff]
    %v275 = vld [vmem:[#allocation2 + $0x20] sm:$0xff]
    %v276 = vld [vmem:[#allocation2 + $0x28] sm:$0xff]
    %v277 = vld [vmem:[#allocation2 + $0x30] sm:$0xff]
    %v278 = vld [vmem:[#allocation2 + $0x38] sm:$0xff]
    %v279 = vld [vmem:[#allocation2 + $0x40] sm:$0xff]
    %v280 = vld [vmem:[#allocation2 + $0x48] sm:$0xff]
    %v281 = vld [vmem:[#allocation2 + $0x50] sm:$0xff]
    %v282 = vld [vmem:[#allocation2 + $0x58] sm:$0xff]
    %v283 = vld [vmem:[#allocation2 + $0x60] sm:$0xff]
    %v284 = vld [vmem:[#allocation2 + $0x68] sm:$0xff]
    %v285 = vld [vmem:[#allocation2 + $0x70] sm:$0xff]
    %v286 = vld [vmem:[#allocation2 + $0x78] sm:$0xff]
    %v287 = vld [vmem:[#allocation5] sm:$0xff]
    %v288 = vld [vmem:[#allocation5 + $0x8] sm:$0xff]
    %v289 = vld [vmem:[#allocation5 + $0x10] sm:$0xff]
    %v290 = vld [vmem:[#allocation5 + $0x18] sm:$0xff]
    %v291 = vld [vmem:[#allocation5 + $0x20] sm:$0xff]
    %v292 = vld [vmem:[#allocation5 + $0x28] sm:$0xff]
    %v293 = vld [vmem:[#allocation5 + $0x30] sm:$0xff]
    %v294 = vld [vmem:[#allocation5 + $0x38] sm:$0xff]
    %v295 = vmul.f32 %v271, %v287
    %v296 = vmul.f32 %v272, %v288
    %v297 = vmul.f32 %v273, %v289
    %v298 = vmul.f32 %v274, %v290
    %v299 = vmul.f32 %v275, %v291
    %v300 = vmul.f32 %v276, %v292
    %v301 = vmul.f32 %v277, %v293
    %v302 = vmul.f32 %v278, %v294
    %v303 = vmul.f32 %v279, %v287
    %v304 = vmul.f32 %v280, %v288
    %v305 = vmul.f32 %v281, %v289
    %v306 = vmul.f32 %v282, %v290
    %v307 = vmul.f32 %v283, %v291
    %v308 = vmul.f32 %v284, %v292
    %v309 = vmul.f32 %v285, %v293
    %v310 = vmul.f32 %v286, %v294
    %311 = vadd.xlane.f32.xlu0 %v295
    %v312 = vpop.xlane.xlu0 %311
    %313 = vadd.xlane.f32.xlu0 %v296
    %v314 = vpop.xlane.xlu0 %313
    %315 = vadd.xlane.f32.xlu0 %v297
    %v316 = vpop.xlane.xlu0 %315
    %317 = vadd.xlane.f32.xlu0 %v298
    %v318 = vpop.xlane.xlu0 %317
    %319 = vadd.xlane.f32.xlu0 %v299
    %v320 = vpop.xlane.xlu0 %319
    %321 = vadd.xlane.f32.xlu0 %v300
    %v322 = vpop.xlane.xlu0 %321
    %323 = vadd.xlane.f32.xlu0 %v301
    %v324 = vpop.xlane.xlu0 %323
    %325 = vadd.xlane.f32.xlu0 %v302
    %v326 = vpop.xlane.xlu0 %325
    %327 = vadd.xlane.f32.xlu0 %v303
    %v328 = vpop.xlane.xlu0 %327
    %329 = vadd.xlane.f32.xlu0 %v304
    %v330 = vpop.xlane.xlu0 %329
    %331 = vadd.xlane.f32.xlu0 %v305
    %v332 = vpop.xlane.xlu0 %331
    %333 = vadd.xlane.f32.xlu0 %v306
    %v334 = vpop.xlane.xlu0 %333
    %335 = vadd.xlane.f32.xlu0 %v307
    %v336 = vpop.xlane.xlu0 %335
    %337 = vadd.xlane.f32.xlu0 %v308
    %v338 = vpop.xlane.xlu0 %337
    %339 = vadd.xlane.f32.xlu0 %v309
    %v340 = vpop.xlane.xlu0 %339
    %341 = vadd.xlane.f32.xlu0 %v310
    %v342 = vpop.xlane.xlu0 %341
    %v343 = vld [vmem:[#allocation7] sm:$0x1]
    %v345 = vperm.slane %v343, 0
    %v346 = vlaneseq
    %v347 = vshrl.u32 %v346, 7
    %349 = vset.pattern.permute.xlu0 %v347
    %350 = vperm.xlu0 %349, %v345
    %v351 = vpop.permute.xlu0 %350
    %v352 = vlaneseq
    %v353 = vshrl.u32 %v352, 7
    %v354 = vadd.s32 %v353, 8
    %355 = vset.pattern.permute.xlu0 %v354
    %356 = vperm.xlu0 %355, %v345
    %v357 = vpop.permute.xlu0 %356
    %v358 = vlaneseq
    %v359 = vshrl.u32 %v358, 7
    %v360 = vadd.s32 %v359, 16
    %361 = vset.pattern.permute.xlu0 %v360
    %362 = vperm.xlu0 %361, %v345
    %v363 = vpop.permute.xlu0 %362
    %v364 = vlaneseq
    %v365 = vshrl.u32 %v364, 7
    %v366 = vadd.s32 %v365, 24
    %367 = vset.pattern.permute.xlu0 %v366
    %368 = vperm.xlu0 %367, %v345
    %v369 = vpop.permute.xlu0 %368
    %v370 = vlaneseq
    %v371 = vshrl.u32 %v370, 7
    %v372 = vadd.s32 %v371, 32
    %373 = vset.pattern.permute.xlu0 %v372
    %374 = vperm.xlu0 %373, %v345
    %v375 = vpop.permute.xlu0 %374
    %v376 = vlaneseq
    %v377 = vshrl.u32 %v376, 7
    %v378 = vadd.s32 %v377, 40
    %379 = vset.pattern.permute.xlu0 %v378
    %380 = vperm.xlu0 %379, %v345
    %v381 = vpop.permute.xlu0 %380
    %v382 = vlaneseq
    %v383 = vshrl.u32 %v382, 7
    %v384 = vadd.s32 %v383, 48
    %385 = vset.pattern.permute.xlu0 %v384
    %386 = vperm.xlu0 %385, %v345
    %v387 = vpop.permute.xlu0 %386
    %v388 = vlaneseq
    %v389 = vshrl.u32 %v388, 7
    %v390 = vadd.s32 %v389, 56
    %391 = vset.pattern.permute.xlu0 %v390
    %392 = vperm.xlu0 %391, %v345
    %v393 = vpop.permute.xlu0 %392
    %v402 = vadd.f32 %v312, %v351
    %v403 = vadd.f32 %v314, %v357
    %v404 = vadd.f32 %v316, %v363
    %v405 = vadd.f32 %v318, %v369
    %v406 = vadd.f32 %v320, %v375
    %v407 = vadd.f32 %v322, %v381
    %v408 = vadd.f32 %v324, %v387
    %v409 = vadd.f32 %v326, %v393
    %v410 = vadd.f32 %v328, %v351
    %v411 = vadd.f32 %v330, %v357
    %v412 = vadd.f32 %v332, %v363
    %v413 = vadd.f32 %v334, %v369
    %v414 = vadd.f32 %v336, %v375
    %v415 = vadd.f32 %v338, %v381
    %v416 = vadd.f32 %v340, %v387
    %v417 = vadd.f32 %v342, %v393
    %v418 = vmax.f32 %v402, 0.0
    %v419 = vmax.f32 %v403, 0.0
    %v420 = vmax.f32 %v404, 0.0
    %v421 = vmax.f32 %v405, 0.0
    %v422 = vmax.f32 %v406, 0.0
    %v423 = vmax.f32 %v407, 0.0
    %v424 = vmax.f32 %v408, 0.0
    %v425 = vmax.f32 %v409, 0.0
    %v426 = vmax.f32 %v410, 0.0
    %v427 = vmax.f32 %v411, 0.0
    %v428 = vmax.f32 %v412, 0.0
    %v429 = vmax.f32 %v413, 0.0
    %v430 = vmax.f32 %v414, 0.0
    %v431 = vmax.f32 %v415, 0.0
    %v432 = vmax.f32 %v416, 0.0
    %v433 = vmax.f32 %v417, 0.0
    %v434 = vpack.c.bf16 %v419, %v418
    %v435 = vpack.c.bf16 %v421, %v420
    %v436 = vpack.c.bf16 %v423, %v422
    %v437 = vpack.c.bf16 %v425, %v424
    %v438 = vpack.c.bf16 %v427, %v426
    %v439 = vpack.c.bf16 %v429, %v428
    %v440 = vpack.c.bf16 %v431, %v430
    %v441 = vpack.c.bf16 %v433, %v432
    %v442 = vld [vmem:[#allocation8] sm:$0xf]
    %v443 = vld [vmem:[#allocation8 + $0x4] sm:$0xf]
    %v444 = vld [vmem:[#allocation8 + $0x8] sm:$0xf]
    %v445 = vld [vmem:[#allocation8 + $0xc] sm:$0xf]
    %v446 = vld [vmem:[#allocation8 + $0x10] sm:$0xf]
    %v447 = vld [vmem:[#allocation8 + $0x14] sm:$0xf]
    %v448 = vld [vmem:[#allocation8 + $0x18] sm:$0xf]
    %v449 = vld [vmem:[#allocation8 + $0x1c] sm:$0xf]
    %v450 = vld [vmem:[#allocation10] sm:$0x1]
    %v452 = vperm.slane %v450, 0
    %v462 = vunpack.c.l.b16 %v434
    %v463 = vunpack.c.h.b16 %v434
    %v464 = vunpack.c.l.b16 %v435
    %v465 = vunpack.c.h.b16 %v435
    %v466 = vunpack.c.l.b16 %v436
    %v467 = vunpack.c.h.b16 %v436
    %v468 = vunpack.c.l.b16 %v437
    %v469 = vunpack.c.h.b16 %v437
    %v470 = vunpack.c.l.b16 %v438
    %v471 = vunpack.c.h.b16 %v438
    %v472 = vunpack.c.l.b16 %v439
    %v473 = vunpack.c.h.b16 %v439
    %v474 = vunpack.c.l.b16 %v440
    %v475 = vunpack.c.h.b16 %v440
    %v476 = vunpack.c.l.b16 %v441
    %v477 = vunpack.c.h.b16 %v441
    %478 = vset.pattern.permute.xlu0 0
    %479 = vperm.xlu0 %478, %v462
    %v480 = vpop.permute.xlu0 %479
    %481 = vset.pattern.permute.xlu0 0
    %482 = vperm.xlu0 %481, %v463
    %v483 = vpop.permute.xlu0 %482
    %484 = vset.pattern.permute.xlu0 0
    %485 = vperm.xlu0 %484, %v464
    %v486 = vpop.permute.xlu0 %485
    %487 = vset.pattern.permute.xlu0 0
    %488 = vperm.xlu0 %487, %v465
    %v489 = vpop.permute.xlu0 %488
    %490 = vset.pattern.permute.xlu0 0
    %491 = vperm.xlu0 %490, %v466
    %v492 = vpop.permute.xlu0 %491
    %493 = vset.pattern.permute.xlu0 0
    %494 = vperm.xlu0 %493, %v467
    %v495 = vpop.permute.xlu0 %494
    %496 = vset.pattern.permute.xlu0 0
    %497 = vperm.xlu0 %496, %v468
    %v498 = vpop.permute.xlu0 %497
    %499 = vset.pattern.permute.xlu0 0
    %500 = vperm.xlu0 %499, %v469
    %v501 = vpop.permute.xlu0 %500
    %502 = vset.pattern.permute.xlu0 0
    %503 = vperm.xlu0 %502, %v470
    %v504 = vpop.permute.xlu0 %503
    %505 = vset.pattern.permute.xlu0 0
    %506 = vperm.xlu0 %505, %v471
    %v507 = vpop.permute.xlu0 %506
    %508 = vset.pattern.permute.xlu0 0
    %509 = vperm.xlu0 %508, %v472
    %v510 = vpop.permute.xlu0 %509
    %511 = vset.pattern.permute.xlu0 0
    %512 = vperm.xlu0 %511, %v473
    %v513 = vpop.permute.xlu0 %512
    %514 = vset.pattern.permute.xlu0 0
    %515 = vperm.xlu0 %514, %v474
    %v516 = vpop.permute.xlu0 %515
    %517 = vset.pattern.permute.xlu0 0
    %518 = vperm.xlu0 %517, %v475
    %v519 = vpop.permute.xlu0 %518
    %520 = vset.pattern.permute.xlu0 0
    %521 = vperm.xlu0 %520, %v476
    %v522 = vpop.permute.xlu0 %521
    %523 = vset.pattern.permute.xlu0 0
    %524 = vperm.xlu0 %523, %v477
    %v525 = vpop.permute.xlu0 %524
    %v526 = vlaneseq
    %v527 = vand.u32 %v526, 127
    %v528 = vperm.slane %v480, %v527
    %v529 = vadd.s32 %v527, 4294967288
    %v530 = vperm.slane %v483, %v529
    %vm531 = vcmask 130112
    %v532 = vsel %vm531, %v530, %v528
    %v533 = vadd.s32 %v527, 4294967280
    %v534 = vperm.slane %v486, %v533
    %vm535 = vcmask 195712
    %v536 = vsel %vm535, %v534, %v532
    %v537 = vadd.s32 %v527, 4294967272
    %v538 = vperm.slane %v489, %v537
    %vm539 = vcmask 261312
    %v540 = vsel %vm539, %v538, %v536
    %v541 = vadd.s32 %v527, 4294967264
    %v542 = vperm.slane %v492, %v541
    %vm543 = vcmask 326912
    %v544 = vsel %vm543, %v542, %v540
    %v545 = vadd.s32 %v527, 4294967256
    %v546 = vperm.slane %v495, %v545
    %vm547 = vcmask 392512
    %v548 = vsel %vm547, %v546, %v544
    %v549 = vadd.s32 %v527, 4294967248
    %v550 = vperm.slane %v498, %v549
    %vm551 = vcmask 458112
    %v552 = vsel %vm551, %v550, %v548
    %v553 = vadd.s32 %v527, 4294967240
    %v554 = vperm.slane %v501, %v553
    %vm555 = vcmask 523712
    %v556 = vsel %vm555, %v554, %v552
    %v557 = vperm.slane %v504, %v527
    %v558 = vperm.slane %v507, %v529
    %v559 = vsel %vm531, %v558, %v557
    %v560 = vperm.slane %v510, %v533
    %v561 = vsel %vm535, %v560, %v559
    %v562 = vperm.slane %v513, %v537
    %v563 = vsel %vm539, %v562, %v561
    %v564 = vperm.slane %v516, %v541
    %v565 = vsel %vm543, %v564, %v563
    %v566 = vperm.slane %v519, %v545
    %v567 = vsel %vm547, %v566, %v565
    %v568 = vperm.slane %v522, %v549
    %v569 = vsel %vm551, %v568, %v567
    %v570 = vperm.slane %v525, %v553
    %v571 = vsel %vm555, %v570, %v569
    %vm572 = vcmask 1041409
    %v573 = vsel %vm572, %v571, %v556
    %v574 = vpack.c.b16 %v573, %v573
    %v583 = vunpack.c.l.b16 %v442
    %v584 = vunpack.c.l.b16 %v443
    %v585 = vunpack.c.l.b16 %v444
    %v586 = vunpack.c.l.b16 %v445
    %v587 = vunpack.c.l.b16 %v446
    %v588 = vunpack.c.l.b16 %v447
    %v589 = vunpack.c.l.b16 %v448
    %v590 = vunpack.c.l.b16 %v449
    %v591 = vpack.c.b16 %v584, %v583
    %v592 = vpack.c.b16 %v586, %v585
    %v593 = vpack.c.b16 %v588, %v587
    %v594 = vpack.c.b16 %v590, %v589
    %vm599 = vcmask 523264
    %v601 = vsel %vm599, %v574, 0
    %603 = vmatpush.bf16.msra.mxu0 0
    %604 = vmatpush.bf16.msra.mxu0 0
    %605 = vmatpush.bf16.msra.mxu0 0
    %606 = vmatpush.bf16.msra.mxu0 0
    %607 = vmatpush.bf16.msra.mxu0 %v594
    %608 = vmatpush.bf16.msra.mxu0 %v593
    %609 = vmatpush.bf16.msra.mxu0 %v592
    %610 = vmatpush.bf16.msra.mxu0 %v591
    %611 = vmatmul.bf16.gmra.mxu0 %v601
    %v612 = vpop.f32.mrf.mxu0
    %v613 = vadd.f32 %v452, %v612
    %v614 = vpop.f32.mrf.mxu0
    %615 = vdwg.mxu0
    %v616 = vmax.f32 %v613, 0.0
    %v617 = vpack.c.bf16 %v616, %v616
    %v618 = vld [vmem:[#allocation11] sm:$0xff]
    %v619 = vld [vmem:[#allocation11 + $0x8] sm:$0xff]
    %v620 = vld [vmem:[#allocation11 + $0x10] sm:$0xff]
    %v621 = vld [vmem:[#allocation11 + $0x18] sm:$0xff]
    %v622 = vld [vmem:[#allocation11 + $0x20] sm:$0xff]
    %v623 = vld [vmem:[#allocation11 + $0x28] sm:$0xff]
    %v624 = vld [vmem:[#allocation11 + $0x30] sm:$0xff]
    %v625 = vld [vmem:[#allocation11 + $0x38] sm:$0xff]
    %v626 = vld [vmem:[#allocation11 + $0x40] sm:$0xff]
    %v627 = vld [vmem:[#allocation11 + $0x48] sm:$0xff]
    %v628 = vld [vmem:[#allocation11 + $0x50] sm:$0xff]
    %v629 = vld [vmem:[#allocation11 + $0x58] sm:$0xff]
    %v630 = vld [vmem:[#allocation11 + $0x60] sm:$0xff]
    %v631 = vld [vmem:[#allocation11 + $0x68] sm:$0xff]
    %v632 = vld [vmem:[#allocation11 + $0x70] sm:$0xff]
    %v633 = vld [vmem:[#allocation11 + $0x78] sm:$0xff]
    %v634 = vld [vmem:[#allocation13] sm:$0x3]
    %v636 = vperm.slane %v634, 0
    %v637 = vperm.slane %v634, 1
    %v656 = vunpack.c.l.b16 %v618
    %v657 = vunpack.c.h.b16 %v618
    %v658 = vunpack.c.l.b16 %v619
    %v659 = vunpack.c.h.b16 %v619
    %v660 = vunpack.c.l.b16 %v620
    %v661 = vunpack.c.h.b16 %v620
    %v662 = vunpack.c.l.b16 %v621
    %v663 = vunpack.c.h.b16 %v621
    %v664 = vunpack.c.l.b16 %v622
    %v665 = vunpack.c.h.b16 %v622
    %v666 = vunpack.c.l.b16 %v623
    %v667 = vunpack.c.h.b16 %v623
    %v668 = vunpack.c.l.b16 %v624
    %v669 = vunpack.c.h.b16 %v624
    %v670 = vunpack.c.l.b16 %v625
    %v671 = vunpack.c.h.b16 %v625
    %v672 = vunpack.c.l.b16 %v626
    %v673 = vunpack.c.h.b16 %v626
    %v674 = vunpack.c.l.b16 %v627
    %v675 = vunpack.c.h.b16 %v627
    %v676 = vunpack.c.l.b16 %v628
    %v677 = vunpack.c.h.b16 %v628
    %v678 = vunpack.c.l.b16 %v629
    %v679 = vunpack.c.h.b16 %v629
    %v680 = vunpack.c.l.b16 %v630
    %v681 = vunpack.c.h.b16 %v630
    %v682 = vunpack.c.l.b16 %v631
    %v683 = vunpack.c.h.b16 %v631
    %v684 = vunpack.c.l.b16 %v632
    %v685 = vunpack.c.h.b16 %v632
    %v686 = vunpack.c.l.b16 %v633
    %v687 = vunpack.c.h.b16 %v633
    %v688 = vpack.c.b16 %v658, %v656
    %v689 = vpack.c.b16 %v659, %v657
    %v690 = vpack.c.b16 %v662, %v660
    %v691 = vpack.c.b16 %v663, %v661
    %v692 = vpack.c.b16 %v666, %v664
    %v693 = vpack.c.b16 %v667, %v665
    %v694 = vpack.c.b16 %v670, %v668
    %v695 = vpack.c.b16 %v671, %v669
    %v696 = vpack.c.b16 %v674, %v672
    %v697 = vpack.c.b16 %v675, %v673
    %v698 = vpack.c.b16 %v678, %v676
    %v699 = vpack.c.b16 %v679, %v677
    %v700 = vpack.c.b16 %v682, %v680
    %v701 = vpack.c.b16 %v683, %v681
    %v702 = vpack.c.b16 %v686, %v684
    %v703 = vpack.c.b16 %v687, %v685
    %720 = vmatpush.bf16.msra.mxu0 %v702
    %721 = vmatpush.bf16.msra.mxu0 %v700
    %722 = vmatpush.bf16.msra.mxu0 %v698
    %723 = vmatpush.bf16.msra.mxu0 %v696
    %724 = vmatpush.bf16.msra.mxu0 %v694
    %725 = vmatpush.bf16.msra.mxu0 %v692
    %726 = vmatpush.bf16.msra.mxu0 %v690
    %727 = vmatpush.bf16.msra.mxu0 %v688
    %728 = vmatmul.bf16.gmra.mxu0 %v617
    %v729 = vpop.f32.mrf.mxu0
    %v730 = vadd.f32 %v636, %v729
    %v731 = vpop.f32.mrf.mxu0
    %732 = vdwg.mxu0
    %733 = vmatpush.bf16.msra.mxu0 %v703
    %734 = vmatpush.bf16.msra.mxu0 %v701
    %735 = vmatpush.bf16.msra.mxu0 %v699
    %736 = vmatpush.bf16.msra.mxu0 %v697
    %737 = vmatpush.bf16.msra.mxu0 %v695
    %738 = vmatpush.bf16.msra.mxu0 %v693
    %739 = vmatpush.bf16.msra.mxu0 %v691
    %740 = vmatpush.bf16.msra.mxu0 %v689
    %741 = vmatmul.bf16.gmra.mxu0 %v617
    %v742 = vpop.f32.mrf.mxu0
    %v743 = vadd.f32 %v637, %v742
    %v744 = vpop.f32.mrf.mxu0
    %745 = vdwg.mxu0
    %v746 = vmax.f32 %v730, 0.0
    %v747 = vmax.f32 %v743, 0.0
    %v748 = vpack.c.bf16 %v746, %v746
    %v749 = vpack.c.bf16 %v747, %v747
    %v750 = vld [vmem:[#allocation14] sm:$0xff]
    %v751 = vld [vmem:[#allocation14 + $0x8] sm:$0xff]
    %v752 = vld [vmem:[#allocation14 + $0x10] sm:$0xff]
    %v753 = vld [vmem:[#allocation14 + $0x18] sm:$0xff]
    %v754 = vld [vmem:[#allocation14 + $0x20] sm:$0xff]
    %v755 = vld [vmem:[#allocation14 + $0x28] sm:$0xff]
    %v756 = vld [vmem:[#allocation14 + $0x30] sm:$0xff]
    %v757 = vld [vmem:[#allocation14 + $0x38] sm:$0xff]
    %v758 = vld [vmem:[#allocation14 + $0x40] sm:$0xff]
    %v759 = vld [vmem:[#allocation14 + $0x48] sm:$0xff]
    %v760 = vld [vmem:[#allocation14 + $0x50] sm:$0xff]
    %v761 = vld [vmem:[#allocation14 + $0x58] sm:$0xff]
    %v762 = vld [vmem:[#allocation14 + $0x60] sm:$0xff]
    %v763 = vld [vmem:[#allocation14 + $0x68] sm:$0xff]
    %v764 = vld [vmem:[#allocation14 + $0x70] sm:$0xff]
    %v765 = vld [vmem:[#allocation14 + $0x78] sm:$0xff]
    %v766 = vld [vmem:[#allocation14 + $0x80] sm:$0xff]
    %v767 = vld [vmem:[#allocation14 + $0x88] sm:$0xff]
    %v768 = vld [vmem:[#allocation14 + $0x90] sm:$0xff]
    %v769 = vld [vmem:[#allocation14 + $0x98] sm:$0xff]
    %v770 = vld [vmem:[#allocation14 + $0xa0] sm:$0xff]
    %v771 = vld [vmem:[#allocation14 + $0xa8] sm:$0xff]
    %v772 = vld [vmem:[#allocation14 + $0xb0] sm:$0xff]
    %v773 = vld [vmem:[#allocation14 + $0xb8] sm:$0xff]
    %v774 = vld [vmem:[#allocation14 + $0xc0] sm:$0xff]
    %v775 = vld [vmem:[#allocation14 + $0xc8] sm:$0xff]
    %v776 = vld [vmem:[#allocation14 + $0xd0] sm:$0xff]
    %v777 = vld [vmem:[#allocation14 + $0xd8] sm:$0xff]
    %v778 = vld [vmem:[#allocation14 + $0xe0] sm:$0xff]
    %v779 = vld [vmem:[#allocation14 + $0xe8] sm:$0xff]
    %v780 = vld [vmem:[#allocation14 + $0xf0] sm:$0xff]
    %v781 = vld [vmem:[#allocation14 + $0xf8] sm:$0xff]
    %v782 = vld [vmem:[#allocation16] sm:$0x3]
    %v784 = vperm.slane %v782, 0
    %v785 = vperm.slane %v782, 1
    %v820 = vunpack.c.l.b16 %v750
    %v821 = vunpack.c.h.b16 %v750
    %v822 = vunpack.c.l.b16 %v751
    %v823 = vunpack.c.h.b16 %v751
    %v824 = vunpack.c.l.b16 %v752
    %v825 = vunpack.c.h.b16 %v752
    %v826 = vunpack.c.l.b16 %v753
    %v827 = vunpack.c.h.b16 %v753
    %v828 = vunpack.c.l.b16 %v754
    %v829 = vunpack.c.h.b16 %v754
    %v830 = vunpack.c.l.b16 %v755
    %v831 = vunpack.c.h.b16 %v755
    %v832 = vunpack.c.l.b16 %v756
    %v833 = vunpack.c.h.b16 %v756
    %v834 = vunpack.c.l.b16 %v757
    %v835 = vunpack.c.h.b16 %v757
    %v836 = vunpack.c.l.b16 %v758
    %v837 = vunpack.c.h.b16 %v758
    %v838 = vunpack.c.l.b16 %v759
    %v839 = vunpack.c.h.b16 %v759
    %v840 = vunpack.c.l.b16 %v760
    %v841 = vunpack.c.h.b16 %v760
    %v842 = vunpack.c.l.b16 %v761
    %v843 = vunpack.c.h.b16 %v761
    %v844 = vunpack.c.l.b16 %v762
    %v845 = vunpack.c.h.b16 %v762
    %v846 = vunpack.c.l.b16 %v763
    %v847 = vunpack.c.h.b16 %v763
    %v848 = vunpack.c.l.b16 %v764
    %v849 = vunpack.c.h.b16 %v764
    %v850 = vunpack.c.l.b16 %v765
    %v851 = vunpack.c.h.b16 %v765
    %v852 = vunpack.c.l.b16 %v766
    %v853 = vunpack.c.h.b16 %v766
    %v854 = vunpack.c.l.b16 %v767
    %v855 = vunpack.c.h.b16 %v767
    %v856 = vunpack.c.l.b16 %v768
    %v857 = vunpack.c.h.b16 %v768
    %v858 = vunpack.c.l.b16 %v769
    %v859 = vunpack.c.h.b16 %v769
    %v860 = vunpack.c.l.b16 %v770
    %v861 = vunpack.c.h.b16 %v770
    %v862 = vunpack.c.l.b16 %v771
    %v863 = vunpack.c.h.b16 %v771
    %v864 = vunpack.c.l.b16 %v772
    %v865 = vunpack.c.h.b16 %v772
    %v866 = vunpack.c.l.b16 %v773
    %v867 = vunpack.c.h.b16 %v773
    %v868 = vunpack.c.l.b16 %v774
    %v869 = vunpack.c.h.b16 %v774
    %v870 = vunpack.c.l.b16 %v775
    %v871 = vunpack.c.h.b16 %v775
    %v872 = vunpack.c.l.b16 %v776
    %v873 = vunpack.c.h.b16 %v776
    %v874 = vunpack.c.l.b16 %v777
    %v875 = vunpack.c.h.b16 %v777
    %v876 = vunpack.c.l.b16 %v778
    %v877 = vunpack.c.h.b16 %v778
    %v878 = vunpack.c.l.b16 %v779
    %v879 = vunpack.c.h.b16 %v779
    %v880 = vunpack.c.l.b16 %v780
    %v881 = vunpack.c.h.b16 %v780
    %v882 = vunpack.c.l.b16 %v781
    %v883 = vunpack.c.h.b16 %v781
    %v884 = vpack.c.b16 %v822, %v820
    %v885 = vpack.c.b16 %v823, %v821
    %v886 = vpack.c.b16 %v826, %v824
    %v887 = vpack.c.b16 %v827, %v825
    %v888 = vpack.c.b16 %v830, %v828
    %v889 = vpack.c.b16 %v831, %v829
    %v890 = vpack.c.b16 %v834, %v832
    %v891 = vpack.c.b16 %v835, %v833
    %v892 = vpack.c.b16 %v838, %v836
    %v893 = vpack.c.b16 %v839, %v837
    %v894 = vpack.c.b16 %v842, %v840
    %v895 = vpack.c.b16 %v843, %v841
    %v896 = vpack.c.b16 %v846, %v844
    %v897 = vpack.c.b16 %v847, %v845
    %v898 = vpack.c.b16 %v850, %v848
    %v899 = vpack.c.b16 %v851, %v849
    %v900 = vpack.c.b16 %v854, %v852
    %v901 = vpack.c.b16 %v855, %v853
    %v902 = vpack.c.b16 %v858, %v856
    %v903 = vpack.c.b16 %v859, %v857
    %v904 = vpack.c.b16 %v862, %v860
    %v905 = vpack.c.b16 %v863, %v861
    %v906 = vpack.c.b16 %v866, %v864
    %v907 = vpack.c.b16 %v867, %v865
    %v908 = vpack.c.b16 %v870, %v868
    %v909 = vpack.c.b16 %v871, %v869
    %v910 = vpack.c.b16 %v874, %v872
    %v911 = vpack.c.b16 %v875, %v873
    %v912 = vpack.c.b16 %v878, %v876
    %v913 = vpack.c.b16 %v879, %v877
    %v914 = vpack.c.b16 %v882, %v880
    %v915 = vpack.c.b16 %v883, %v881
    %948 = vmatpush.bf16.msra.mxu0 %v898
    %949 = vmatpush.bf16.msra.mxu0 %v896
    %950 = vmatpush.bf16.msra.mxu0 %v894
    %951 = vmatpush.bf16.msra.mxu0 %v892
    %952 = vmatpush.bf16.msra.mxu0 %v890
    %953 = vmatpush.bf16.msra.mxu0 %v888
    %954 = vmatpush.bf16.msra.mxu0 %v886
    %955 = vmatpush.bf16.msra.mxu0 %v884
    %956 = vmatmul.bf16.gmra.mxu0 %v748
    %v957 = vpop.f32.mrf.mxu0
    %v958 = vadd.f32 %v784, %v957
    %v959 = vpop.f32.mrf.mxu0
    %960 = vdwg.mxu0
    %961 = vmatpush.bf16.msra.mxu0 %v914
    %962 = vmatpush.bf16.msra.mxu0 %v912
    %963 = vmatpush.bf16.msra.mxu0 %v910
    %964 = vmatpush.bf16.msra.mxu0 %v908
    %965 = vmatpush.bf16.msra.mxu0 %v906
    %966 = vmatpush.bf16.msra.mxu0 %v904
    %967 = vmatpush.bf16.msra.mxu0 %v902
    %968 = vmatpush.bf16.msra.mxu0 %v900
    %969 = vmatmul.bf16.gmra.mxu0 %v749
    %v970 = vpop.f32.mrf.mxu0
    %v971 = vadd.f32 %v958, %v970
    %v972 = vpop.f32.mrf.mxu0
    %973 = vdwg.mxu0
    %974 = vmatpush.bf16.msra.mxu0 %v899
    %975 = vmatpush.bf16.msra.mxu0 %v897
    %976 = vmatpush.bf16.msra.mxu0 %v895
    %977 = vmatpush.bf16.msra.mxu0 %v893
    %978 = vmatpush.bf16.msra.mxu0 %v891
    %979 = vmatpush.bf16.msra.mxu0 %v889
    %980 = vmatpush.bf16.msra.mxu0 %v887
    %981 = vmatpush.bf16.msra.mxu0 %v885
    %982 = vmatmul.bf16.gmra.mxu0 %v748
    %v983 = vpop.f32.mrf.mxu0
    %v984 = vadd.f32 %v785, %v983
    %v985 = vpop.f32.mrf.mxu0
    %986 = vdwg.mxu0
    %987 = vmatpush.bf16.msra.mxu0 %v915
    %988 = vmatpush.bf16.msra.mxu0 %v913
    %989 = vmatpush.bf16.msra.mxu0 %v911
    %990 = vmatpush.bf16.msra.mxu0 %v909
    %991 = vmatpush.bf16.msra.mxu0 %v907
    %992 = vmatpush.bf16.msra.mxu0 %v905
    %993 = vmatpush.bf16.msra.mxu0 %v903
    %994 = vmatpush.bf16.msra.mxu0 %v901
    %995 = vmatmul.bf16.gmra.mxu0 %v749
    %v996 = vpop.f32.mrf.mxu0
    %v997 = vadd.f32 %v984, %v996
    %v998 = vpop.f32.mrf.mxu0
    %999 = vdwg.mxu0
    %v1000 = vmax.f32 %v971, 0.0
    %v1001 = vmax.f32 %v997, 0.0
    %v1002 = vpack.c.bf16 %v1000, %v1000
    %v1003 = vpack.c.bf16 %v1001, %v1001
    %v1004 = vld [vmem:[#allocation17] sm:$0xff]
    %v1005 = vld [vmem:[#allocation17 + $0x8] sm:$0xff]
    %v1006 = vld [vmem:[#allocation17 + $0x10] sm:$0xff]
    %v1007 = vld [vmem:[#allocation17 + $0x18] sm:$0xff]
    %v1008 = vld [vmem:[#allocation17 + $0x20] sm:$0xff]
    %v1009 = vld [vmem:[#allocation17 + $0x28] sm:$0xff]
    %v1010 = vld [vmem:[#allocation17 + $0x30] sm:$0xff]
    %v1011 = vld [vmem:[#allocation17 + $0x38] sm:$0xff]
    %v1012 = vld [vmem:[#allocation17 + $0x40] sm:$0xff]
    %v1013 = vld [vmem:[#allocation17 + $0x48] sm:$0xff]
    %v1014 = vld [vmem:[#allocation17 + $0x50] sm:$0xff]
    %v1015 = vld [vmem:[#allocation17 + $0x58] sm:$0xff]
    %v1016 = vld [vmem:[#allocation17 + $0x60] sm:$0xff]
    %v1017 = vld [vmem:[#allocation17 + $0x68] sm:$0xff]
    %v1018 = vld [vmem:[#allocation17 + $0x70] sm:$0xff]
    %v1019 = vld [vmem:[#allocation17 + $0x78] sm:$0xff]
    %v1020 = vld [vmem:[#allocation17 + $0x80] sm:$0xff]
    %v1021 = vld [vmem:[#allocation17 + $0x88] sm:$0xff]
    %v1022 = vld [vmem:[#allocation17 + $0x90] sm:$0xff]
    %v1023 = vld [vmem:[#allocation17 + $0x98] sm:$0xff]
    %v1024 = vld [vmem:[#allocation17 + $0xa0] sm:$0xff]
    %v1025 = vld [vmem:[#allocation17 + $0xa8] sm:$0xff]
    %v1026 = vld [vmem:[#allocation17 + $0xb0] sm:$0xff]
    %v1027 = vld [vmem:[#allocation17 + $0xb8] sm:$0xff]
    %v1028 = vld [vmem:[#allocation17 + $0xc0] sm:$0xff]
    %v1029 = vld [vmem:[#allocation17 + $0xc8] sm:$0xff]
    %v1030 = vld [vmem:[#allocation17 + $0xd0] sm:$0xff]
    %v1031 = vld [vmem:[#allocation17 + $0xd8] sm:$0xff]
    %v1032 = vld [vmem:[#allocation17 + $0xe0] sm:$0xff]
    %v1033 = vld [vmem:[#allocation17 + $0xe8] sm:$0xff]
    %v1034 = vld [vmem:[#allocation17 + $0xf0] sm:$0xff]
    %v1035 = vld [vmem:[#allocation17 + $0xf8] sm:$0xff]
    %v1036 = vld [vmem:[#allocation17 + $0x100] sm:$0xff]
    %v1037 = vld [vmem:[#allocation17 + $0x108] sm:$0xff]
    %v1038 = vld [vmem:[#allocation17 + $0x110] sm:$0xff]
    %v1039 = vld [vmem:[#allocation17 + $0x118] sm:$0xff]
    %v1040 = vld [vmem:[#allocation17 + $0x120] sm:$0xff]
    %v1041 = vld [vmem:[#allocation17 + $0x128] sm:$0xff]
    %v1042 = vld [vmem:[#allocation17 + $0x130] sm:$0xff]
    %v1043 = vld [vmem:[#allocation17 + $0x138] sm:$0xff]
    %v1044 = vld [vmem:[#allocation17 + $0x140] sm:$0xff]
    %v1045 = vld [vmem:[#allocation17 + $0x148] sm:$0xff]
    %v1046 = vld [vmem:[#allocation17 + $0x150] sm:$0xff]
    %v1047 = vld [vmem:[#allocation17 + $0x158] sm:$0xff]
    %v1048 = vld [vmem:[#allocation17 + $0x160] sm:$0xff]
    %v1049 = vld [vmem:[#allocation17 + $0x168] sm:$0xff]
    %v1050 = vld [vmem:[#allocation17 + $0x170] sm:$0xff]
    %v1051 = vld [vmem:[#allocation17 + $0x178] sm:$0xff]
    %v1052 = vld [vmem:[#allocation17 + $0x180] sm:$0xff]
    %v1053 = vld [vmem:[#allocation17 + $0x188] sm:$0xff]
    %v1054 = vld [vmem:[#allocation17 + $0x190] sm:$0xff]
    %v1055 = vld [vmem:[#allocation17 + $0x198] sm:$0xff]
    %v1056 = vld [vmem:[#allocation17 + $0x1a0] sm:$0xff]
    %v1057 = vld [vmem:[#allocation17 + $0x1a8] sm:$0xff]
    %v1058 = vld [vmem:[#allocation17 + $0x1b0] sm:$0xff]
    %v1059 = vld [vmem:[#allocation17 + $0x1b8] sm:$0xff]
    %v1060 = vld [vmem:[#allocation17 + $0x1c0] sm:$0xff]
    %v1061 = vld [vmem:[#allocation17 + $0x1c8] sm:$0xff]
    %v1062 = vld [vmem:[#allocation17 + $0x1d0] sm:$0xff]
    %v1063 = vld [vmem:[#allocation17 + $0x1d8] sm:$0xff]
    %v1064 = vld [vmem:[#allocation17 + $0x1e0] sm:$0xff]
    %v1065 = vld [vmem:[#allocation17 + $0x1e8] sm:$0xff]
    %v1066 = vld [vmem:[#allocation17 + $0x1f0] sm:$0xff]
    %v1067 = vld [vmem:[#allocation17 + $0x1f8] sm:$0xff]
    %v1068 = vld [vmem:[#allocation19] sm:$0xf]
    %v1070 = vperm.slane %v1068, 0
    %v1071 = vperm.slane %v1068, 1
    %v1072 = vperm.slane %v1068, 2
    %v1073 = vperm.slane %v1068, 3
    %v1142 = vunpack.c.l.b16 %v1004
    %v1143 = vunpack.c.h.b16 %v1004
    %v1144 = vunpack.c.l.b16 %v1005
    %v1145 = vunpack.c.h.b16 %v1005
    %v1146 = vunpack.c.l.b16 %v1006
    %v1147 = vunpack.c.h.b16 %v1006
    %v1148 = vunpack.c.l.b16 %v1007
    %v1149 = vunpack.c.h.b16 %v1007
    %v1150 = vunpack.c.l.b16 %v1008
    %v1151 = vunpack.c.h.b16 %v1008
    %v1152 = vunpack.c.l.b16 %v1009
    %v1153 = vunpack.c.h.b16 %v1009
    %v1154 = vunpack.c.l.b16 %v1010
    %v1155 = vunpack.c.h.b16 %v1010
    %v1156 = vunpack.c.l.b16 %v1011
    %v1157 = vunpack.c.h.b16 %v1011
    %v1158 = vunpack.c.l.b16 %v1012
    %v1159 = vunpack.c.h.b16 %v1012
    %v1160 = vunpack.c.l.b16 %v1013
    %v1161 = vunpack.c.h.b16 %v1013
    %v1162 = vunpack.c.l.b16 %v1014
    %v1163 = vunpack.c.h.b16 %v1014
    %v1164 = vunpack.c.l.b16 %v1015
    %v1165 = vunpack.c.h.b16 %v1015
    %v1166 = vunpack.c.l.b16 %v1016
    %v1167 = vunpack.c.h.b16 %v1016
    %v1168 = vunpack.c.l.b16 %v1017
    %v1169 = vunpack.c.h.b16 %v1017
    %v1170 = vunpack.c.l.b16 %v1018
    %v1171 = vunpack.c.h.b16 %v1018
    %v1172 = vunpack.c.l.b16 %v1019
    %v1173 = vunpack.c.h.b16 %v1019
    %v1174 = vunpack.c.l.b16 %v1020
    %v1175 = vunpack.c.h.b16 %v1020
    %v1176 = vunpack.c.l.b16 %v1021
    %v1177 = vunpack.c.h.b16 %v1021
    %v1178 = vunpack.c.l.b16 %v1022
    %v1179 = vunpack.c.h.b16 %v1022
    %v1180 = vunpack.c.l.b16 %v1023
    %v1181 = vunpack.c.h.b16 %v1023
    %v1182 = vunpack.c.l.b16 %v1024
    %v1183 = vunpack.c.h.b16 %v1024
    %v1184 = vunpack.c.l.b16 %v1025
    %v1185 = vunpack.c.h.b16 %v1025
    %v1186 = vunpack.c.l.b16 %v1026
    %v1187 = vunpack.c.h.b16 %v1026
    %v1188 = vunpack.c.l.b16 %v1027
    %v1189 = vunpack.c.h.b16 %v1027
    %v1190 = vunpack.c.l.b16 %v1028
    %v1191 = vunpack.c.h.b16 %v1028
    %v1192 = vunpack.c.l.b16 %v1029
    %v1193 = vunpack.c.h.b16 %v1029
    %v1194 = vunpack.c.l.b16 %v1030
    %v1195 = vunpack.c.h.b16 %v1030
    %v1196 = vunpack.c.l.b16 %v1031
    %v1197 = vunpack.c.h.b16 %v1031
    %v1198 = vunpack.c.l.b16 %v1032
    %v1199 = vunpack.c.h.b16 %v1032
    %v1200 = vunpack.c.l.b16 %v1033
    %v1201 = vunpack.c.h.b16 %v1033
    %v1202 = vunpack.c.l.b16 %v1034
    %v1203 = vunpack.c.h.b16 %v1034
    %v1204 = vunpack.c.l.b16 %v1035
    %v1205 = vunpack.c.h.b16 %v1035
    %v1206 = vunpack.c.l.b16 %v1036
    %v1207 = vunpack.c.h.b16 %v1036
    %v1208 = vunpack.c.l.b16 %v1037
    %v1209 = vunpack.c.h.b16 %v1037
    %v1210 = vunpack.c.l.b16 %v1038
    %v1211 = vunpack.c.h.b16 %v1038
    %v1212 = vunpack.c.l.b16 %v1039
    %v1213 = vunpack.c.h.b16 %v1039
    %v1214 = vunpack.c.l.b16 %v1040
    %v1215 = vunpack.c.h.b16 %v1040
    %v1216 = vunpack.c.l.b16 %v1041
    %v1217 = vunpack.c.h.b16 %v1041
    %v1218 = vunpack.c.l.b16 %v1042
    %v1219 = vunpack.c.h.b16 %v1042
    %v1220 = vunpack.c.l.b16 %v1043
    %v1221 = vunpack.c.h.b16 %v1043
    %v1222 = vunpack.c.l.b16 %v1044
    %v1223 = vunpack.c.h.b16 %v1044
    %v1224 = vunpack.c.l.b16 %v1045
    %v1225 = vunpack.c.h.b16 %v1045
    %v1226 = vunpack.c.l.b16 %v1046
    %v1227 = vunpack.c.h.b16 %v1046
    %v1228 = vunpack.c.l.b16 %v1047
    %v1229 = vunpack.c.h.b16 %v1047
    %v1230 = vunpack.c.l.b16 %v1048
    %v1231 = vunpack.c.h.b16 %v1048
    %v1232 = vunpack.c.l.b16 %v1049
    %v1233 = vunpack.c.h.b16 %v1049
    %v1234 = vunpack.c.l.b16 %v1050
    %v1235 = vunpack.c.h.b16 %v1050
    %v1236 = vunpack.c.l.b16 %v1051
    %v1237 = vunpack.c.h.b16 %v1051
    %v1238 = vunpack.c.l.b16 %v1052
    %v1239 = vunpack.c.h.b16 %v1052
    %v1240 = vunpack.c.l.b16 %v1053
    %v1241 = vunpack.c.h.b16 %v1053
    %v1242 = vunpack.c.l.b16 %v1054
    %v1243 = vunpack.c.h.b16 %v1054
    %v1244 = vunpack.c.l.b16 %v1055
    %v1245 = vunpack.c.h.b16 %v1055
    %v1246 = vunpack.c.l.b16 %v1056
    %v1247 = vunpack.c.h.b16 %v1056
    %v1248 = vunpack.c.l.b16 %v1057
    %v1249 = vunpack.c.h.b16 %v1057
    %v1250 = vunpack.c.l.b16 %v1058
    %v1251 = vunpack.c.h.b16 %v1058
    %v1252 = vunpack.c.l.b16 %v1059
    %v1253 = vunpack.c.h.b16 %v1059
    %v1254 = vunpack.c.l.b16 %v1060
    %v1255 = vunpack.c.h.b16 %v1060
    %v1256 = vunpack.c.l.b16 %v1061
    %v1257 = vunpack.c.h.b16 %v1061
    %v1258 = vunpack.c.l.b16 %v1062
    %v1259 = vunpack.c.h.b16 %v1062
    %v1260 = vunpack.c.l.b16 %v1063
    %v1261 = vunpack.c.h.b16 %v1063
    %v1262 = vunpack.c.l.b16 %v1064
    %v1263 = vunpack.c.h.b16 %v1064
    %v1264 = vunpack.c.l.b16 %v1065
    %v1265 = vunpack.c.h.b16 %v1065
    %v1266 = vunpack.c.l.b16 %v1066
    %v1267 = vunpack.c.h.b16 %v1066
    %v1268 = vunpack.c.l.b16 %v1067
    %v1269 = vunpack.c.h.b16 %v1067
    %v1270 = vpack.c.b16 %v1146, %v1142
    %v1271 = vpack.c.b16 %v1147, %v1143
    %v1272 = vpack.c.b16 %v1148, %v1144
    %v1273 = vpack.c.b16 %v1149, %v1145
    %v1274 = vpack.c.b16 %v1154, %v1150
    %v1275 = vpack.c.b16 %v1155, %v1151
    %v1276 = vpack.c.b16 %v1156, %v1152
    %v1277 = vpack.c.b16 %v1157, %v1153
    %v1278 = vpack.c.b16 %v1162, %v1158
    %v1279 = vpack.c.b16 %v1163, %v1159
    %v1280 = vpack.c.b16 %v1164, %v1160
    %v1281 = vpack.c.b16 %v1165, %v1161
    %v1282 = vpack.c.b16 %v1170, %v1166
    %v1283 = vpack.c.b16 %v1171, %v1167
    %v1284 = vpack.c.b16 %v1172, %v1168
    %v1285 = vpack.c.b16 %v1173, %v1169
    %v1286 = vpack.c.b16 %v1178, %v1174
    %v1287 = vpack.c.b16 %v1179, %v1175
    %v1288 = vpack.c.b16 %v1180, %v1176
    %v1289 = vpack.c.b16 %v1181, %v1177
    %v1290 = vpack.c.b16 %v1186, %v1182
    %v1291 = vpack.c.b16 %v1187, %v1183
    %v1292 = vpack.c.b16 %v1188, %v1184
    %v1293 = vpack.c.b16 %v1189, %v1185
    %v1294 = vpack.c.b16 %v1194, %v1190
    %v1295 = vpack.c.b16 %v1195, %v1191
    %v1296 = vpack.c.b16 %v1196, %v1192
    %v1297 = vpack.c.b16 %v1197, %v1193
    %v1298 = vpack.c.b16 %v1202, %v1198
    %v1299 = vpack.c.b16 %v1203, %v1199
    %v1300 = vpack.c.b16 %v1204, %v1200
    %v1301 = vpack.c.b16 %v1205, %v1201
    %v1302 = vpack.c.b16 %v1210, %v1206
    %v1303 = vpack.c.b16 %v1211, %v1207
    %v1304 = vpack.c.b16 %v1212, %v1208
    %v1305 = vpack.c.b16 %v1213, %v1209
    %v1306 = vpack.c.b16 %v1218, %v1214
    %v1307 = vpack.c.b16 %v1219, %v1215
    %v1308 = vpack.c.b16 %v1220, %v1216
    %v1309 = vpack.c.b16 %v1221, %v1217
    %v1310 = vpack.c.b16 %v1226, %v1222
    %v1311 = vpack.c.b16 %v1227, %v1223
    %v1312 = vpack.c.b16 %v1228, %v1224
    %v1313 = vpack.c.b16 %v1229, %v1225
    %v1314 = vpack.c.b16 %v1234, %v1230
    %v1315 = vpack.c.b16 %v1235, %v1231
    %v1316 = vpack.c.b16 %v1236, %v1232
    %v1317 = vpack.c.b16 %v1237, %v1233
    %v1318 = vpack.c.b16 %v1242, %v1238
    %v1319 = vpack.c.b16 %v1243, %v1239
    %v1320 = vpack.c.b16 %v1244, %v1240
    %v1321 = vpack.c.b16 %v1245, %v1241
    %v1322 = vpack.c.b16 %v1250, %v1246
    %v1323 = vpack.c.b16 %v1251, %v1247
    %v1324 = vpack.c.b16 %v1252, %v1248
    %v1325 = vpack.c.b16 %v1253, %v1249
    %v1326 = vpack.c.b16 %v1258, %v1254
    %v1327 = vpack.c.b16 %v1259, %v1255
    %v1328 = vpack.c.b16 %v1260, %v1256
    %v1329 = vpack.c.b16 %v1261, %v1257
    %v1330 = vpack.c.b16 %v1266, %v1262
    %v1331 = vpack.c.b16 %v1267, %v1263
    %v1332 = vpack.c.b16 %v1268, %v1264
    %v1333 = vpack.c.b16 %v1269, %v1265
    %1398 = vmatpush.bf16.msra.mxu0 %v1298
    %1399 = vmatpush.bf16.msra.mxu0 %v1294
    %1400 = vmatpush.bf16.msra.mxu0 %v1290
    %1401 = vmatpush.bf16.msra.mxu0 %v1286
    %1402 = vmatpush.bf16.msra.mxu0 %v1282
    %1403 = vmatpush.bf16.msra.mxu0 %v1278
    %1404 = vmatpush.bf16.msra.mxu0 %v1274
    %1405 = vmatpush.bf16.msra.mxu0 %v1270
    %1406 = vmatmul.bf16.gmra.mxu0 %v1002
    %v1407 = vpop.f32.mrf.mxu0
    %v1408 = vadd.f32 %v1070, %v1407
    %v1409 = vpop.f32.mrf.mxu0
    %1410 = vdwg.mxu0
    %1411 = vmatpush.bf16.msra.mxu0 %v1330
    %1412 = vmatpush.bf16.msra.mxu0 %v1326
    %1413 = vmatpush.bf16.msra.mxu0 %v1322
    %1414 = vmatpush.bf16.msra.mxu0 %v1318
    %1415 = vmatpush.bf16.msra.mxu0 %v1314
    %1416 = vmatpush.bf16.msra.mxu0 %v1310
    %1417 = vmatpush.bf16.msra.mxu0 %v1306
    %1418 = vmatpush.bf16.msra.mxu0 %v1302
    %1419 = vmatmul.bf16.gmra.mxu0 %v1003
    %v1420 = vpop.f32.mrf.mxu0
    %v1421 = vadd.f32 %v1408, %v1420
    %v1422 = vpop.f32.mrf.mxu0
    %1423 = vdwg.mxu0
    %1424 = vmatpush.bf16.msra.mxu0 %v1299
    %1425 = vmatpush.bf16.msra.mxu0 %v1295
    %1426 = vmatpush.bf16.msra.mxu0 %v1291
    %1427 = vmatpush.bf16.msra.mxu0 %v1287
    %1428 = vmatpush.bf16.msra.mxu0 %v1283
    %1429 = vmatpush.bf16.msra.mxu0 %v1279
    %1430 = vmatpush.bf16.msra.mxu0 %v1275
    %1431 = vmatpush.bf16.msra.mxu0 %v1271
    %1432 = vmatmul.bf16.gmra.mxu0 %v1002
    %v1433 = vpop.f32.mrf.mxu0
    %v1434 = vadd.f32 %v1071, %v1433
    %v1435 = vpop.f32.mrf.mxu0
    %1436 = vdwg.mxu0
    %1437 = vmatpush.bf16.msra.mxu0 %v1331
    %1438 = vmatpush.bf16.msra.mxu0 %v1327
    %1439 = vmatpush.bf16.msra.mxu0 %v1323
    %1440 = vmatpush.bf16.msra.mxu0 %v1319
    %1441 = vmatpush.bf16.msra.mxu0 %v1315
    %1442 = vmatpush.bf16.msra.mxu0 %v1311
    %1443 = vmatpush.bf16.msra.mxu0 %v1307
    %1444 = vmatpush.bf16.msra.mxu0 %v1303
    %1445 = vmatmul.bf16.gmra.mxu0 %v1003
    %v1446 = vpop.f32.mrf.mxu0
    %v1447 = vadd.f32 %v1434, %v1446
    %v1448 = vpop.f32.mrf.mxu0
    %1449 = vdwg.mxu0
    %1450 = vmatpush.bf16.msra.mxu0 %v1300
    %1451 = vmatpush.bf16.msra.mxu0 %v1296
    %1452 = vmatpush.bf16.msra.mxu0 %v1292
    %1453 = vmatpush.bf16.msra.mxu0 %v1288
    %1454 = vmatpush.bf16.msra.mxu0 %v1284
    %1455 = vmatpush.bf16.msra.mxu0 %v1280
    %1456 = vmatpush.bf16.msra.mxu0 %v1276
    %1457 = vmatpush.bf16.msra.mxu0 %v1272
    %1458 = vmatmul.bf16.gmra.mxu0 %v1002
    %v1459 = vpop.f32.mrf.mxu0
    %v1460 = vadd.f32 %v1072, %v1459
    %v1461 = vpop.f32.mrf.mxu0
    %1462 = vdwg.mxu0
    %1463 = vmatpush.bf16.msra.mxu0 %v1332
    %1464 = vmatpush.bf16.msra.mxu0 %v1328
    %1465 = vmatpush.bf16.msra.mxu0 %v1324
    %1466 = vmatpush.bf16.msra.mxu0 %v1320
    %1467 = vmatpush.bf16.msra.mxu0 %v1316
    %1468 = vmatpush.bf16.msra.mxu0 %v1312
    %1469 = vmatpush.bf16.msra.mxu0 %v1308
    %1470 = vmatpush.bf16.msra.mxu0 %v1304
    %1471 = vmatmul.bf16.gmra.mxu0 %v1003
    %v1472 = vpop.f32.mrf.mxu0
    %v1473 = vadd.f32 %v1460, %v1472
    %v1474 = vpop.f32.mrf.mxu0
    %1475 = vdwg.mxu0
    %1476 = vmatpush.bf16.msra.mxu0 %v1301
    %1477 = vmatpush.bf16.msra.mxu0 %v1297
    %1478 = vmatpush.bf16.msra.mxu0 %v1293
    %1479 = vmatpush.bf16.msra.mxu0 %v1289
    %1480 = vmatpush.bf16.msra.mxu0 %v1285
    %1481 = vmatpush.bf16.msra.mxu0 %v1281
    %1482 = vmatpush.bf16.msra.mxu0 %v1277
    %1483 = vmatpush.bf16.msra.mxu0 %v1273
    %1484 = vmatmul.bf16.gmra.mxu0 %v1002
    %v1485 = vpop.f32.mrf.mxu0
    %v1486 = vadd.f32 %v1073, %v1485
    %v1487 = vpop.f32.mrf.mxu0
    %1488 = vdwg.mxu0
    %1489 = vmatpush.bf16.msra.mxu0 %v1333
    %1490 = vmatpush.bf16.msra.mxu0 %v1329
    %1491 = vmatpush.bf16.msra.mxu0 %v1325
    %1492 = vmatpush.bf16.msra.mxu0 %v1321
    %1493 = vmatpush.bf16.msra.mxu0 %v1317
    %1494 = vmatpush.bf16.msra.mxu0 %v1313
    %1495 = vmatpush.bf16.msra.mxu0 %v1309
    %1496 = vmatpush.bf16.msra.mxu0 %v1305
    %1497 = vmatmul.bf16.gmra.mxu0 %v1003
    %v1498 = vpop.f32.mrf.mxu0
    %v1499 = vadd.f32 %v1486, %v1498
    %v1500 = vpop.f32.mrf.mxu0
    %1501 = vdwg.mxu0
    %v1502 = vmax.f32 %v1421, 0.0
    %v1503 = vmax.f32 %v1447, 0.0
    %v1504 = vmax.f32 %v1473, 0.0
    %v1505 = vmax.f32 %v1499, 0.0
    %v1506 = vpack.c.bf16 %v1502, %v1502
    %v1507 = vpack.c.bf16 %v1503, %v1503
    %v1508 = vpack.c.bf16 %v1504, %v1504
    %v1509 = vpack.c.bf16 %v1505, %v1505
    %v1510 = vld [vmem:[#allocation20] sm:$0xff]
    %v1511 = vld [vmem:[#allocation20 + $0x8] sm:$0xff]
    %v1512 = vld [vmem:[#allocation20 + $0x10] sm:$0xff]
    %v1513 = vld [vmem:[#allocation20 + $0x18] sm:$0xff]
    %v1514 = vld [vmem:[#allocation20 + $0x20] sm:$0xff]
    %v1515 = vld [vmem:[#allocation20 + $0x28] sm:$0xff]
    %v1516 = vld [vmem:[#allocation20 + $0x30] sm:$0xff]
    %v1517 = vld [vmem:[#allocation20 + $0x38] sm:$0xff]
    %v1518 = vld [vmem:[#allocation20 + $0x40] sm:$0xff]
    %v1519 = vld [vmem:[#allocation20 + $0x48] sm:$0xff]
    %v1520 = vld [vmem:[#allocation20 + $0x50] sm:$0xff]
    %v1521 = vld [vmem:[#allocation20 + $0x58] sm:$0xff]
    %v1522 = vld [vmem:[#allocation20 + $0x60] sm:$0xff]
    %v1523 = vld [vmem:[#allocation20 + $0x68] sm:$0xff]
    %v1524 = vld [vmem:[#allocation20 + $0x70] sm:$0xff]
    %v1525 = vld [vmem:[#allocation20 + $0x78] sm:$0xff]
    %v1526 = vld [vmem:[#allocation20 + $0x80] sm:$0xff]
    %v1527 = vld [vmem:[#allocation20 + $0x88] sm:$0xff]
    %v1528 = vld [vmem:[#allocation20 + $0x90] sm:$0xff]
    %v1529 = vld [vmem:[#allocation20 + $0x98] sm:$0xff]
    %v1530 = vld [vmem:[#allocation20 + $0xa0] sm:$0xff]
    %v1531 = vld [vmem:[#allocation20 + $0xa8] sm:$0xff]
    %v1532 = vld [vmem:[#allocation20 + $0xb0] sm:$0xff]
    %v1533 = vld [vmem:[#allocation20 + $0xb8] sm:$0xff]
    %v1534 = vld [vmem:[#allocation20 + $0xc0] sm:$0xff]
    %v1535 = vld [vmem:[#allocation20 + $0xc8] sm:$0xff]
    %v1536 = vld [vmem:[#allocation20 + $0xd0] sm:$0xff]
    %v1537 = vld [vmem:[#allocation20 + $0xd8] sm:$0xff]
    %v1538 = vld [vmem:[#allocation20 + $0xe0] sm:$0xff]
    %v1539 = vld [vmem:[#allocation20 + $0xe8] sm:$0xff]
    %v1540 = vld [vmem:[#allocation20 + $0xf0] sm:$0xff]
    %v1541 = vld [vmem:[#allocation20 + $0xf8] sm:$0xff]
    %v1542 = vld [vmem:[#allocation20 + $0x100] sm:$0xff]
    %v1543 = vld [vmem:[#allocation20 + $0x108] sm:$0xff]
    %v1544 = vld [vmem:[#allocation20 + $0x110] sm:$0xff]
    %v1545 = vld [vmem:[#allocation20 + $0x118] sm:$0xff]
    %v1546 = vld [vmem:[#allocation20 + $0x120] sm:$0xff]
    %v1547 = vld [vmem:[#allocation20 + $0x128] sm:$0xff]
    %v1548 = vld [vmem:[#allocation20 + $0x130] sm:$0xff]
    %v1549 = vld [vmem:[#allocation20 + $0x138] sm:$0xff]
    %v1550 = vld [vmem:[#allocation20 + $0x140] sm:$0xff]
    %v1551 = vld [vmem:[#allocation20 + $0x148] sm:$0xff]
    %v1552 = vld [vmem:[#allocation20 + $0x150] sm:$0xff]
    %v1553 = vld [vmem:[#allocation20 + $0x158] sm:$0xff]
    %v1554 = vld [vmem:[#allocation20 + $0x160] sm:$0xff]
    %v1555 = vld [vmem:[#allocation20 + $0x168] sm:$0xff]
    %v1556 = vld [vmem:[#allocation20 + $0x170] sm:$0xff]
    %v1557 = vld [vmem:[#allocation20 + $0x178] sm:$0xff]
    %v1558 = vld [vmem:[#allocation20 + $0x180] sm:$0xff]
    %v1559 = vld [vmem:[#allocation20 + $0x188] sm:$0xff]
    %v1560 = vld [vmem:[#allocation20 + $0x190] sm:$0xff]
    %v1561 = vld [vmem:[#allocation20 + $0x198] sm:$0xff]
    %v1562 = vld [vmem:[#allocation20 + $0x1a0] sm:$0xff]
    %v1563 = vld [vmem:[#allocation20 + $0x1a8] sm:$0xff]
    %v1564 = vld [vmem:[#allocation20 + $0x1b0] sm:$0xff]
    %v1565 = vld [vmem:[#allocation20 + $0x1b8] sm:$0xff]
    %v1566 = vld [vmem:[#allocation20 + $0x1c0] sm:$0xff]
    %v1567 = vld [vmem:[#allocation20 + $0x1c8] sm:$0xff]
    %v1568 = vld [vmem:[#allocation20 + $0x1d0] sm:$0xff]
    %v1569 = vld [vmem:[#allocation20 + $0x1d8] sm:$0xff]
    %v1570 = vld [vmem:[#allocation20 + $0x1e0] sm:$0xff]
    %v1571 = vld [vmem:[#allocation20 + $0x1e8] sm:$0xff]
    %v1572 = vld [vmem:[#allocation20 + $0x1f0] sm:$0xff]
    %v1573 = vld [vmem:[#allocation20 + $0x1f8] sm:$0xff]
    %v1574 = vld [vmem:[#allocation20 + $0x200] sm:$0xff]
    %v1575 = vld [vmem:[#allocation20 + $0x208] sm:$0xff]
    %v1576 = vld [vmem:[#allocation20 + $0x210] sm:$0xff]
    %v1577 = vld [vmem:[#allocation20 + $0x218] sm:$0xff]
    %v1578 = vld [vmem:[#allocation20 + $0x220] sm:$0xff]
    %v1579 = vld [vmem:[#allocation20 + $0x228] sm:$0xff]
    %v1580 = vld [vmem:[#allocation20 + $0x230] sm:$0xff]
    %v1581 = vld [vmem:[#allocation20 + $0x238] sm:$0xff]
    %v1582 = vld [vmem:[#allocation20 + $0x240] sm:$0xff]
    %v1583 = vld [vmem:[#allocation20 + $0x248] sm:$0xff]
    %v1584 = vld [vmem:[#allocation20 + $0x250] sm:$0xff]
    %v1585 = vld [vmem:[#allocation20 + $0x258] sm:$0xff]
    %v1586 = vld [vmem:[#allocation20 + $0x260] sm:$0xff]
    %v1587 = vld [vmem:[#allocation20 + $0x268] sm:$0xff]
    %v1588 = vld [vmem:[#allocation20 + $0x270] sm:$0xff]
    %v1589 = vld [vmem:[#allocation20 + $0x278] sm:$0xff]
    %v1590 = vld [vmem:[#allocation20 + $0x280] sm:$0xff]
    %v1591 = vld [vmem:[#allocation20 + $0x288] sm:$0xff]
    %v1592 = vld [vmem:[#allocation20 + $0x290] sm:$0xff]
    %v1593 = vld [vmem:[#allocation20 + $0x298] sm:$0xff]
    %v1594 = vld [vmem:[#allocation20 + $0x2a0] sm:$0xff]
    %v1595 = vld [vmem:[#allocation20 + $0x2a8] sm:$0xff]
    %v1596 = vld [vmem:[#allocation20 + $0x2b0] sm:$0xff]
    %v1597 = vld [vmem:[#allocation20 + $0x2b8] sm:$0xff]
    %v1598 = vld [vmem:[#allocation20 + $0x2c0] sm:$0xff]
    %v1599 = vld [vmem:[#allocation20 + $0x2c8] sm:$0xff]
    %v1600 = vld [vmem:[#allocation20 + $0x2d0] sm:$0xff]
    %v1601 = vld [vmem:[#allocation20 + $0x2d8] sm:$0xff]
    %v1602 = vld [vmem:[#allocation20 + $0x2e0] sm:$0xff]
    %v1603 = vld [vmem:[#allocation20 + $0x2e8] sm:$0xff]
    %v1604 = vld [vmem:[#allocation20 + $0x2f0] sm:$0xff]
    %v1605 = vld [vmem:[#allocation20 + $0x2f8] sm:$0xff]
    %v1606 = vld [vmem:[#allocation20 + $0x300] sm:$0xff]
    %v1607 = vld [vmem:[#allocation20 + $0x308] sm:$0xff]
    %v1608 = vld [vmem:[#allocation20 + $0x310] sm:$0xff]
    %v1609 = vld [vmem:[#allocation20 + $0x318] sm:$0xff]
    %v1610 = vld [vmem:[#allocation20 + $0x320] sm:$0xff]
    %v1611 = vld [vmem:[#allocation20 + $0x328] sm:$0xff]
    %v1612 = vld [vmem:[#allocation20 + $0x330] sm:$0xff]
    %v1613 = vld [vmem:[#allocation20 + $0x338] sm:$0xff]
    %v1614 = vld [vmem:[#allocation20 + $0x340] sm:$0xff]
    %v1615 = vld [vmem:[#allocation20 + $0x348] sm:$0xff]
    %v1616 = vld [vmem:[#allocation20 + $0x350] sm:$0xff]
    %v1617 = vld [vmem:[#allocation20 + $0x358] sm:$0xff]
    %v1618 = vld [vmem:[#allocation20 + $0x360] sm:$0xff]
    %v1619 = vld [vmem:[#allocation20 + $0x368] sm:$0xff]
    %v1620 = vld [vmem:[#allocation20 + $0x370] sm:$0xff]
    %v1621 = vld [vmem:[#allocation20 + $0x378] sm:$0xff]
    %v1622 = vld [vmem:[#allocation20 + $0x380] sm:$0xff]
    %v1623 = vld [vmem:[#allocation20 + $0x388] sm:$0xff]
    %v1624 = vld [vmem:[#allocation20 + $0x390] sm:$0xff]
    %v1625 = vld [vmem:[#allocation20 + $0x398] sm:$0xff]
    %v1626 = vld [vmem:[#allocation20 + $0x3a0] sm:$0xff]
    %v1627 = vld [vmem:[#allocation20 + $0x3a8] sm:$0xff]
    %v1628 = vld [vmem:[#allocation20 + $0x3b0] sm:$0xff]
    %v1629 = vld [vmem:[#allocation20 + $0x3b8] sm:$0xff]
    %v1630 = vld [vmem:[#allocation20 + $0x3c0] sm:$0xff]
    %v1631 = vld [vmem:[#allocation20 + $0x3c8] sm:$0xff]
    %v1632 = vld [vmem:[#allocation20 + $0x3d0] sm:$0xff]
    %v1633 = vld [vmem:[#allocation20 + $0x3d8] sm:$0xff]
    %v1634 = vld [vmem:[#allocation20 + $0x3e0] sm:$0xff]
    %v1635 = vld [vmem:[#allocation20 + $0x3e8] sm:$0xff]
    %v1636 = vld [vmem:[#allocation20 + $0x3f0] sm:$0xff]
    %v1637 = vld [vmem:[#allocation20 + $0x3f8] sm:$0xff]
    %v1638 = vld [vmem:[#allocation20 + $0x400] sm:$0xff]
    %v1639 = vld [vmem:[#allocation20 + $0x408] sm:$0xff]
    %v1640 = vld [vmem:[#allocation20 + $0x410] sm:$0xff]
    %v1641 = vld [vmem:[#allocation20 + $0x418] sm:$0xff]
    %v1642 = vld [vmem:[#allocation20 + $0x420] sm:$0xff]
    %v1643 = vld [vmem:[#allocation20 + $0x428] sm:$0xff]
    %v1644 = vld [vmem:[#allocation20 + $0x430] sm:$0xff]
    %v1645 = vld [vmem:[#allocation20 + $0x438] sm:$0xff]
    %v1646 = vld [vmem:[#allocation20 + $0x440] sm:$0xff]
    %v1647 = vld [vmem:[#allocation20 + $0x448] sm:$0xff]
    %v1648 = vld [vmem:[#allocation20 + $0x450] sm:$0xff]
    %v1649 = vld [vmem:[#allocation20 + $0x458] sm:$0xff]
    %v1650 = vld [vmem:[#allocation20 + $0x460] sm:$0xff]
    %v1651 = vld [vmem:[#allocation20 + $0x468] sm:$0xff]
    %v1652 = vld [vmem:[#allocation20 + $0x470] sm:$0xff]
    %v1653 = vld [vmem:[#allocation20 + $0x478] sm:$0xff]
    %v1654 = vld [vmem:[#allocation20 + $0x480] sm:$0xff]
    %v1655 = vld [vmem:[#allocation20 + $0x488] sm:$0xff]
    %v1656 = vld [vmem:[#allocation20 + $0x490] sm:$0xff]
    %v1657 = vld [vmem:[#allocation20 + $0x498] sm:$0xff]
    %v1658 = vld [vmem:[#allocation20 + $0x4a0] sm:$0xff]
    %v1659 = vld [vmem:[#allocation20 + $0x4a8] sm:$0xff]
    %v1660 = vld [vmem:[#allocation20 + $0x4b0] sm:$0xff]
    %v1661 = vld [vmem:[#allocation20 + $0x4b8] sm:$0xff]
    %v1662 = vld [vmem:[#allocation20 + $0x4c0] sm:$0xff]
    %v1663 = vld [vmem:[#allocation20 + $0x4c8] sm:$0xff]
    %v1664 = vld [vmem:[#allocation20 + $0x4d0] sm:$0xff]
    %v1665 = vld [vmem:[#allocation20 + $0x4d8] sm:$0xff]
    %v1666 = vld [vmem:[#allocation20 + $0x4e0] sm:$0xff]
    %v1667 = vld [vmem:[#allocation20 + $0x4e8] sm:$0xff]
    %v1668 = vld [vmem:[#allocation20 + $0x4f0] sm:$0xff]
    %v1669 = vld [vmem:[#allocation20 + $0x4f8] sm:$0xff]
    %v1670 = vld [vmem:[#allocation20 + $0x500] sm:$0xff]
    %v1671 = vld [vmem:[#allocation20 + $0x508] sm:$0xff]
    %v1672 = vld [vmem:[#allocation20 + $0x510] sm:$0xff]
    %v1673 = vld [vmem:[#allocation20 + $0x518] sm:$0xff]
    %v1674 = vld [vmem:[#allocation20 + $0x520] sm:$0xff]
    %v1675 = vld [vmem:[#allocation20 + $0x528] sm:$0xff]
    %v1676 = vld [vmem:[#allocation20 + $0x530] sm:$0xff]
    %v1677 = vld [vmem:[#allocation20 + $0x538] sm:$0xff]
    %v1678 = vld [vmem:[#allocation20 + $0x540] sm:$0xff]
    %v1679 = vld [vmem:[#allocation20 + $0x548] sm:$0xff]
    %v1680 = vld [vmem:[#allocation20 + $0x550] sm:$0xff]
    %v1681 = vld [vmem:[#allocation20 + $0x558] sm:$0xff]
    %v1682 = vld [vmem:[#allocation20 + $0x560] sm:$0xff]
    %v1683 = vld [vmem:[#allocation20 + $0x568] sm:$0xff]
    %v1684 = vld [vmem:[#allocation20 + $0x570] sm:$0xff]
    %v1685 = vld [vmem:[#allocation20 + $0x578] sm:$0xff]
    %v1686 = vld [vmem:[#allocation20 + $0x580] sm:$0xff]
    %v1687 = vld [vmem:[#allocation20 + $0x588] sm:$0xff]
    %v1688 = vld [vmem:[#allocation20 + $0x590] sm:$0xff]
    %v1689 = vld [vmem:[#allocation20 + $0x598] sm:$0xff]
    %v1690 = vld [vmem:[#allocation20 + $0x5a0] sm:$0xff]
    %v1691 = vld [vmem:[#allocation20 + $0x5a8] sm:$0xff]
    %v1692 = vld [vmem:[#allocation20 + $0x5b0] sm:$0xff]
    %v1693 = vld [vmem:[#allocation20 + $0x5b8] sm:$0xff]
    %v1694 = vld [vmem:[#allocation20 + $0x5c0] sm:$0xff]
    %v1695 = vld [vmem:[#allocation20 + $0x5c8] sm:$0xff]
    %v1696 = vld [vmem:[#allocation20 + $0x5d0] sm:$0xff]
    %v1697 = vld [vmem:[#allocation20 + $0x5d8] sm:$0xff]
    %v1698 = vld [vmem:[#allocation20 + $0x5e0] sm:$0xff]
    %v1699 = vld [vmem:[#allocation20 + $0x5e8] sm:$0xff]
    %v1700 = vld [vmem:[#allocation20 + $0x5f0] sm:$0xff]
    %v1701 = vld [vmem:[#allocation20 + $0x5f8] sm:$0xff]
    %v1702 = vld [vmem:[#allocation20 + $0x600] sm:$0xff]
    %v1703 = vld [vmem:[#allocation20 + $0x608] sm:$0xff]
    %v1704 = vld [vmem:[#allocation20 + $0x610] sm:$0xff]
    %v1705 = vld [vmem:[#allocation20 + $0x618] sm:$0xff]
    %v1706 = vld [vmem:[#allocation20 + $0x620] sm:$0xff]
    %v1707 = vld [vmem:[#allocation20 + $0x628] sm:$0xff]
    %v1708 = vld [vmem:[#allocation20 + $0x630] sm:$0xff]
    %v1709 = vld [vmem:[#allocation20 + $0x638] sm:$0xff]
    %v1710 = vld [vmem:[#allocation20 + $0x640] sm:$0xff]
    %v1711 = vld [vmem:[#allocation20 + $0x648] sm:$0xff]
    %v1712 = vld [vmem:[#allocation20 + $0x650] sm:$0xff]
    %v1713 = vld [vmem:[#allocation20 + $0x658] sm:$0xff]
    %v1714 = vld [vmem:[#allocation20 + $0x660] sm:$0xff]
    %v1715 = vld [vmem:[#allocation20 + $0x668] sm:$0xff]
    %v1716 = vld [vmem:[#allocation20 + $0x670] sm:$0xff]
    %v1717 = vld [vmem:[#allocation20 + $0x678] sm:$0xff]
    %v1718 = vld [vmem:[#allocation20 + $0x680] sm:$0xff]
    %v1719 = vld [vmem:[#allocation20 + $0x688] sm:$0xff]
    %v1720 = vld [vmem:[#allocation20 + $0x690] sm:$0xff]
    %v1721 = vld [vmem:[#allocation20 + $0x698] sm:$0xff]
    %v1722 = vld [vmem:[#allocation20 + $0x6a0] sm:$0xff]
    %v1723 = vld [vmem:[#allocation20 + $0x6a8] sm:$0xff]
    %v1724 = vld [vmem:[#allocation20 + $0x6b0] sm:$0xff]
    %v1725 = vld [vmem:[#allocation20 + $0x6b8] sm:$0xff]
    %v1726 = vld [vmem:[#allocation20 + $0x6c0] sm:$0xff]
    %v1727 = vld [vmem:[#allocation20 + $0x6c8] sm:$0xff]
    %v1728 = vld [vmem:[#allocation20 + $0x6d0] sm:$0xff]
    %v1729 = vld [vmem:[#allocation20 + $0x6d8] sm:$0xff]
    %v1730 = vld [vmem:[#allocation20 + $0x6e0] sm:$0xff]
    %v1731 = vld [vmem:[#allocation20 + $0x6e8] sm:$0xff]
    %v1732 = vld [vmem:[#allocation20 + $0x6f0] sm:$0xff]
    %v1733 = vld [vmem:[#allocation20 + $0x6f8] sm:$0xff]
    %v1734 = vld [vmem:[#allocation20 + $0x700] sm:$0xff]
    %v1735 = vld [vmem:[#allocation20 + $0x708] sm:$0xff]
    %v1736 = vld [vmem:[#allocation20 + $0x710] sm:$0xff]
    %v1737 = vld [vmem:[#allocation20 + $0x718] sm:$0xff]
    %v1738 = vld [vmem:[#allocation20 + $0x720] sm:$0xff]
    %v1739 = vld [vmem:[#allocation20 + $0x728] sm:$0xff]
    %v1740 = vld [vmem:[#allocation20 + $0x730] sm:$0xff]
    %v1741 = vld [vmem:[#allocation20 + $0x738] sm:$0xff]
    %v1742 = vld [vmem:[#allocation20 + $0x740] sm:$0xff]
    %v1743 = vld [vmem:[#allocation20 + $0x748] sm:$0xff]
    %v1744 = vld [vmem:[#allocation20 + $0x750] sm:$0xff]
    %v1745 = vld [vmem:[#allocation20 + $0x758] sm:$0xff]
    %v1746 = vld [vmem:[#allocation20 + $0x760] sm:$0xff]
    %v1747 = vld [vmem:[#allocation20 + $0x768] sm:$0xff]
    %v1748 = vld [vmem:[#allocation20 + $0x770] sm:$0xff]
    %v1749 = vld [vmem:[#allocation20 + $0x778] sm:$0xff]
    %v1750 = vld [vmem:[#allocation20 + $0x780] sm:$0xff]
    %v1751 = vld [vmem:[#allocation20 + $0x788] sm:$0xff]
    %v1752 = vld [vmem:[#allocation20 + $0x790] sm:$0xff]
    %v1753 = vld [vmem:[#allocation20 + $0x798] sm:$0xff]
    %v1754 = vld [vmem:[#allocation20 + $0x7a0] sm:$0xff]
    %v1755 = vld [vmem:[#allocation20 + $0x7a8] sm:$0xff]
    %v1756 = vld [vmem:[#allocation20 + $0x7b0] sm:$0xff]
    %v1757 = vld [vmem:[#allocation20 + $0x7b8] sm:$0xff]
    %v1758 = vld [vmem:[#allocation20 + $0x7c0] sm:$0xff]
    %v1759 = vld [vmem:[#allocation20 + $0x7c8] sm:$0xff]
    %v1760 = vld [vmem:[#allocation20 + $0x7d0] sm:$0xff]
    %v1761 = vld [vmem:[#allocation20 + $0x7d8] sm:$0xff]
    %v1762 = vld [vmem:[#allocation20 + $0x7e0] sm:$0xff]
    %v1763 = vld [vmem:[#allocation20 + $0x7e8] sm:$0xff]
    %v1764 = vld [vmem:[#allocation20 + $0x7f0] sm:$0xff]
    %v1765 = vld [vmem:[#allocation20 + $0x7f8] sm:$0xff]
    %v1766 = vld [vmem:[#allocation22] sm:$0xff]
    %v1768 = vperm.slane %v1766, 0
    %v1769 = vperm.slane %v1766, 1
    %v1770 = vperm.slane %v1766, 2
    %v1771 = vperm.slane %v1766, 3
    %v1772 = vperm.slane %v1766, 4
    %v1773 = vperm.slane %v1766, 5
    %v1774 = vperm.slane %v1766, 6
    %v1775 = vperm.slane %v1766, 7
    %v2040 = vunpack.c.l.b16 %v1510
    %v2041 = vunpack.c.h.b16 %v1510
    %v2042 = vunpack.c.l.b16 %v1511
    %v2043 = vunpack.c.h.b16 %v1511
    %v2044 = vunpack.c.l.b16 %v1512
    %v2045 = vunpack.c.h.b16 %v1512
    %v2046 = vunpack.c.l.b16 %v1513
    %v2047 = vunpack.c.h.b16 %v1513
    %v2048 = vunpack.c.l.b16 %v1514
    %v2049 = vunpack.c.h.b16 %v1514
    %v2050 = vunpack.c.l.b16 %v1515
    %v2051 = vunpack.c.h.b16 %v1515
    %v2052 = vunpack.c.l.b16 %v1516
    %v2053 = vunpack.c.h.b16 %v1516
    %v2054 = vunpack.c.l.b16 %v1517
    %v2055 = vunpack.c.h.b16 %v1517
    %v2056 = vunpack.c.l.b16 %v1518
    %v2057 = vunpack.c.h.b16 %v1518
    %v2058 = vunpack.c.l.b16 %v1519
    %v2059 = vunpack.c.h.b16 %v1519
    %v2060 = vunpack.c.l.b16 %v1520
    %v2061 = vunpack.c.h.b16 %v1520
    %v2062 = vunpack.c.l.b16 %v1521
    %v2063 = vunpack.c.h.b16 %v1521
    %v2064 = vunpack.c.l.b16 %v1522
    %v2065 = vunpack.c.h.b16 %v1522
    %v2066 = vunpack.c.l.b16 %v1523
    %v2067 = vunpack.c.h.b16 %v1523
    %v2068 = vunpack.c.l.b16 %v1524
    %v2069 = vunpack.c.h.b16 %v1524
    %v2070 = vunpack.c.l.b16 %v1525
    %v2071 = vunpack.c.h.b16 %v1525
    %v2072 = vunpack.c.l.b16 %v1526
    %v2073 = vunpack.c.h.b16 %v1526
    %v2074 = vunpack.c.l.b16 %v1527
    %v2075 = vunpack.c.h.b16 %v1527
    %v2076 = vunpack.c.l.b16 %v1528
    %v2077 = vunpack.c.h.b16 %v1528
    %v2078 = vunpack.c.l.b16 %v1529
    %v2079 = vunpack.c.h.b16 %v1529
    %v2080 = vunpack.c.l.b16 %v1530
    %v2081 = vunpack.c.h.b16 %v1530
    %v2082 = vunpack.c.l.b16 %v1531
    %v2083 = vunpack.c.h.b16 %v1531
    %v2084 = vunpack.c.l.b16 %v1532
    %v2085 = vunpack.c.h.b16 %v1532
    %v2086 = vunpack.c.l.b16 %v1533
    %v2087 = vunpack.c.h.b16 %v1533
    %v2088 = vunpack.c.l.b16 %v1534
    %v2089 = vunpack.c.h.b16 %v1534
    %v2090 = vunpack.c.l.b16 %v1535
    %v2091 = vunpack.c.h.b16 %v1535
    %v2092 = vunpack.c.l.b16 %v1536
    %v2093 = vunpack.c.h.b16 %v1536
    %v2094 = vunpack.c.l.b16 %v1537
    %v2095 = vunpack.c.h.b16 %v1537
    %v2096 = vunpack.c.l.b16 %v1538
    %v2097 = vunpack.c.h.b16 %v1538
    %v2098 = vunpack.c.l.b16 %v1539
    %v2099 = vunpack.c.h.b16 %v1539
    %v2100 = vunpack.c.l.b16 %v1540
    %v2101 = vunpack.c.h.b16 %v1540
    %v2102 = vunpack.c.l.b16 %v1541
    %v2103 = vunpack.c.h.b16 %v1541
    %v2104 = vunpack.c.l.b16 %v1542
    %v2105 = vunpack.c.h.b16 %v1542
    %v2106 = vunpack.c.l.b16 %v1543
    %v2107 = vunpack.c.h.b16 %v1543
    %v2108 = vunpack.c.l.b16 %v1544
    %v2109 = vunpack.c.h.b16 %v1544
    %v2110 = vunpack.c.l.b16 %v1545
    %v2111 = vunpack.c.h.b16 %v1545
    %v2112 = vunpack.c.l.b16 %v1546
    %v2113 = vunpack.c.h.b16 %v1546
    %v2114 = vunpack.c.l.b16 %v1547
    %v2115 = vunpack.c.h.b16 %v1547
    %v2116 = vunpack.c.l.b16 %v1548
    %v2117 = vunpack.c.h.b16 %v1548
    %v2118 = vunpack.c.l.b16 %v1549
    %v2119 = vunpack.c.h.b16 %v1549
    %v2120 = vunpack.c.l.b16 %v1550
    %v2121 = vunpack.c.h.b16 %v1550
    %v2122 = vunpack.c.l.b16 %v1551
    %v2123 = vunpack.c.h.b16 %v1551
    %v2124 = vunpack.c.l.b16 %v1552
    %v2125 = vunpack.c.h.b16 %v1552
    %v2126 = vunpack.c.l.b16 %v1553
    %v2127 = vunpack.c.h.b16 %v1553
    %v2128 = vunpack.c.l.b16 %v1554
    %v2129 = vunpack.c.h.b16 %v1554
    %v2130 = vunpack.c.l.b16 %v1555
    %v2131 = vunpack.c.h.b16 %v1555
    %v2132 = vunpack.c.l.b16 %v1556
    %v2133 = vunpack.c.h.b16 %v1556
    %v2134 = vunpack.c.l.b16 %v1557
    %v2135 = vunpack.c.h.b16 %v1557
    %v2136 = vunpack.c.l.b16 %v1558
    %v2137 = vunpack.c.h.b16 %v1558
    %v2138 = vunpack.c.l.b16 %v1559
    %v2139 = vunpack.c.h.b16 %v1559
    %v2140 = vunpack.c.l.b16 %v1560
    %v2141 = vunpack.c.h.b16 %v1560
    %v2142 = vunpack.c.l.b16 %v1561
    %v2143 = vunpack.c.h.b16 %v1561
    %v2144 = vunpack.c.l.b16 %v1562
    %v2145 = vunpack.c.h.b16 %v1562
    %v2146 = vunpack.c.l.b16 %v1563
    %v2147 = vunpack.c.h.b16 %v1563
    %v2148 = vunpack.c.l.b16 %v1564
    %v2149 = vunpack.c.h.b16 %v1564
    %v2150 = vunpack.c.l.b16 %v1565
    %v2151 = vunpack.c.h.b16 %v1565
    %v2152 = vunpack.c.l.b16 %v1566
    %v2153 = vunpack.c.h.b16 %v1566
    %v2154 = vunpack.c.l.b16 %v1567
    %v2155 = vunpack.c.h.b16 %v1567
    %v2156 = vunpack.c.l.b16 %v1568
    %v2157 = vunpack.c.h.b16 %v1568
    %v2158 = vunpack.c.l.b16 %v1569
    %v2159 = vunpack.c.h.b16 %v1569
    %v2160 = vunpack.c.l.b16 %v1570
    %v2161 = vunpack.c.h.b16 %v1570
    %v2162 = vunpack.c.l.b16 %v1571
    %v2163 = vunpack.c.h.b16 %v1571
    %v2164 = vunpack.c.l.b16 %v1572
    %v2165 = vunpack.c.h.b16 %v1572
    %v2166 = vunpack.c.l.b16 %v1573
    %v2167 = vunpack.c.h.b16 %v1573
    %v2168 = vunpack.c.l.b16 %v1574
    %v2169 = vunpack.c.h.b16 %v1574
    %v2170 = vunpack.c.l.b16 %v1575
    %v2171 = vunpack.c.h.b16 %v1575
    %v2172 = vunpack.c.l.b16 %v1576
    %v2173 = vunpack.c.h.b16 %v1576
    %v2174 = vunpack.c.l.b16 %v1577
    %v2175 = vunpack.c.h.b16 %v1577
    %v2176 = vunpack.c.l.b16 %v1578
    %v2177 = vunpack.c.h.b16 %v1578
    %v2178 = vunpack.c.l.b16 %v1579
    %v2179 = vunpack.c.h.b16 %v1579
    %v2180 = vunpack.c.l.b16 %v1580
    %v2181 = vunpack.c.h.b16 %v1580
    %v2182 = vunpack.c.l.b16 %v1581
    %v2183 = vunpack.c.h.b16 %v1581
    %v2184 = vunpack.c.l.b16 %v1582
    %v2185 = vunpack.c.h.b16 %v1582
    %v2186 = vunpack.c.l.b16 %v1583
    %v2187 = vunpack.c.h.b16 %v1583
    %v2188 = vunpack.c.l.b16 %v1584
    %v2189 = vunpack.c.h.b16 %v1584
    %v2190 = vunpack.c.l.b16 %v1585
    %v2191 = vunpack.c.h.b16 %v1585
    %v2192 = vunpack.c.l.b16 %v1586
    %v2193 = vunpack.c.h.b16 %v1586
    %v2194 = vunpack.c.l.b16 %v1587
    %v2195 = vunpack.c.h.b16 %v1587
    %v2196 = vunpack.c.l.b16 %v1588
    %v2197 = vunpack.c.h.b16 %v1588
    %v2198 = vunpack.c.l.b16 %v1589
    %v2199 = vunpack.c.h.b16 %v1589
    %v2200 = vunpack.c.l.b16 %v1590
    %v2201 = vunpack.c.h.b16 %v1590
    %v2202 = vunpack.c.l.b16 %v1591
    %v2203 = vunpack.c.h.b16 %v1591
    %v2204 = vunpack.c.l.b16 %v1592
    %v2205 = vunpack.c.h.b16 %v1592
    %v2206 = vunpack.c.l.b16 %v1593
    %v2207 = vunpack.c.h.b16 %v1593
    %v2208 = vunpack.c.l.b16 %v1594
    %v2209 = vunpack.c.h.b16 %v1594
    %v2210 = vunpack.c.l.b16 %v1595
    %v2211 = vunpack.c.h.b16 %v1595
    %v2212 = vunpack.c.l.b16 %v1596
    %v2213 = vunpack.c.h.b16 %v1596
    %v2214 = vunpack.c.l.b16 %v1597
    %v2215 = vunpack.c.h.b16 %v1597
    %v2216 = vunpack.c.l.b16 %v1598
    %v2217 = vunpack.c.h.b16 %v1598
    %v2218 = vunpack.c.l.b16 %v1599
    %v2219 = vunpack.c.h.b16 %v1599
    %v2220 = vunpack.c.l.b16 %v1600
    %v2221 = vunpack.c.h.b16 %v1600
    %v2222 = vunpack.c.l.b16 %v1601
    %v2223 = vunpack.c.h.b16 %v1601
    %v2224 = vunpack.c.l.b16 %v1602
    %v2225 = vunpack.c.h.b16 %v1602
    %v2226 = vunpack.c.l.b16 %v1603
    %v2227 = vunpack.c.h.b16 %v1603
    %v2228 = vunpack.c.l.b16 %v1604
    %v2229 = vunpack.c.h.b16 %v1604
    %v2230 = vunpack.c.l.b16 %v1605
    %v2231 = vunpack.c.h.b16 %v1605
    %v2232 = vunpack.c.l.b16 %v1606
    %v2233 = vunpack.c.h.b16 %v1606
    %v2234 = vunpack.c.l.b16 %v1607
    %v2235 = vunpack.c.h.b16 %v1607
    %v2236 = vunpack.c.l.b16 %v1608
    %v2237 = vunpack.c.h.b16 %v1608
    %v2238 = vunpack.c.l.b16 %v1609
    %v2239 = vunpack.c.h.b16 %v1609
    %v2240 = vunpack.c.l.b16 %v1610
    %v2241 = vunpack.c.h.b16 %v1610
    %v2242 = vunpack.c.l.b16 %v1611
    %v2243 = vunpack.c.h.b16 %v1611
    %v2244 = vunpack.c.l.b16 %v1612
    %v2245 = vunpack.c.h.b16 %v1612
    %v2246 = vunpack.c.l.b16 %v1613
    %v2247 = vunpack.c.h.b16 %v1613
    %v2248 = vunpack.c.l.b16 %v1614
    %v2249 = vunpack.c.h.b16 %v1614
    %v2250 = vunpack.c.l.b16 %v1615
    %v2251 = vunpack.c.h.b16 %v1615
    %v2252 = vunpack.c.l.b16 %v1616
    %v2253 = vunpack.c.h.b16 %v1616
    %v2254 = vunpack.c.l.b16 %v1617
    %v2255 = vunpack.c.h.b16 %v1617
    %v2256 = vunpack.c.l.b16 %v1618
    %v2257 = vunpack.c.h.b16 %v1618
    %v2258 = vunpack.c.l.b16 %v1619
    %v2259 = vunpack.c.h.b16 %v1619
    %v2260 = vunpack.c.l.b16 %v1620
    %v2261 = vunpack.c.h.b16 %v1620
    %v2262 = vunpack.c.l.b16 %v1621
    %v2263 = vunpack.c.h.b16 %v1621
    %v2264 = vunpack.c.l.b16 %v1622
    %v2265 = vunpack.c.h.b16 %v1622
    %v2266 = vunpack.c.l.b16 %v1623
    %v2267 = vunpack.c.h.b16 %v1623
    %v2268 = vunpack.c.l.b16 %v1624
    %v2269 = vunpack.c.h.b16 %v1624
    %v2270 = vunpack.c.l.b16 %v1625
    %v2271 = vunpack.c.h.b16 %v1625
    %v2272 = vunpack.c.l.b16 %v1626
    %v2273 = vunpack.c.h.b16 %v1626
    %v2274 = vunpack.c.l.b16 %v1627
    %v2275 = vunpack.c.h.b16 %v1627
    %v2276 = vunpack.c.l.b16 %v1628
    %v2277 = vunpack.c.h.b16 %v1628
    %v2278 = vunpack.c.l.b16 %v1629
    %v2279 = vunpack.c.h.b16 %v1629
    %v2280 = vunpack.c.l.b16 %v1630
    %v2281 = vunpack.c.h.b16 %v1630
    %v2282 = vunpack.c.l.b16 %v1631
    %v2283 = vunpack.c.h.b16 %v1631
    %v2284 = vunpack.c.l.b16 %v1632
    %v2285 = vunpack.c.h.b16 %v1632
    %v2286 = vunpack.c.l.b16 %v1633
    %v2287 = vunpack.c.h.b16 %v1633
    %v2288 = vunpack.c.l.b16 %v1634
    %v2289 = vunpack.c.h.b16 %v1634
    %v2290 = vunpack.c.l.b16 %v1635
    %v2291 = vunpack.c.h.b16 %v1635
    %v2292 = vunpack.c.l.b16 %v1636
    %v2293 = vunpack.c.h.b16 %v1636
    %v2294 = vunpack.c.l.b16 %v1637
    %v2295 = vunpack.c.h.b16 %v1637
    %v2296 = vunpack.c.l.b16 %v1638
    %v2297 = vunpack.c.h.b16 %v1638
    %v2298 = vunpack.c.l.b16 %v1639
    %v2299 = vunpack.c.h.b16 %v1639
    %v2300 = vunpack.c.l.b16 %v1640
    %v2301 = vunpack.c.h.b16 %v1640
    %v2302 = vunpack.c.l.b16 %v1641
    %v2303 = vunpack.c.h.b16 %v1641
    %v2304 = vunpack.c.l.b16 %v1642
    %v2305 = vunpack.c.h.b16 %v1642
    %v2306 = vunpack.c.l.b16 %v1643
    %v2307 = vunpack.c.h.b16 %v1643
    %v2308 = vunpack.c.l.b16 %v1644
    %v2309 = vunpack.c.h.b16 %v1644
    %v2310 = vunpack.c.l.b16 %v1645
    %v2311 = vunpack.c.h.b16 %v1645
    %v2312 = vunpack.c.l.b16 %v1646
    %v2313 = vunpack.c.h.b16 %v1646
    %v2314 = vunpack.c.l.b16 %v1647
    %v2315 = vunpack.c.h.b16 %v1647
    %v2316 = vunpack.c.l.b16 %v1648
    %v2317 = vunpack.c.h.b16 %v1648
    %v2318 = vunpack.c.l.b16 %v1649
    %v2319 = vunpack.c.h.b16 %v1649
    %v2320 = vunpack.c.l.b16 %v1650
    %v2321 = vunpack.c.h.b16 %v1650
    %v2322 = vunpack.c.l.b16 %v1651
    %v2323 = vunpack.c.h.b16 %v1651
    %v2324 = vunpack.c.l.b16 %v1652
    %v2325 = vunpack.c.h.b16 %v1652
    %v2326 = vunpack.c.l.b16 %v1653
    %v2327 = vunpack.c.h.b16 %v1653
    %v2328 = vunpack.c.l.b16 %v1654
    %v2329 = vunpack.c.h.b16 %v1654
    %v2330 = vunpack.c.l.b16 %v1655
    %v2331 = vunpack.c.h.b16 %v1655
    %v2332 = vunpack.c.l.b16 %v1656
    %v2333 = vunpack.c.h.b16 %v1656
    %v2334 = vunpack.c.l.b16 %v1657
    %v2335 = vunpack.c.h.b16 %v1657
    %v2336 = vunpack.c.l.b16 %v1658
    %v2337 = vunpack.c.h.b16 %v1658
    %v2338 = vunpack.c.l.b16 %v1659
    %v2339 = vunpack.c.h.b16 %v1659
    %v2340 = vunpack.c.l.b16 %v1660
    %v2341 = vunpack.c.h.b16 %v1660
    %v2342 = vunpack.c.l.b16 %v1661
    %v2343 = vunpack.c.h.b16 %v1661
    %v2344 = vunpack.c.l.b16 %v1662
    %v2345 = vunpack.c.h.b16 %v1662
    %v2346 = vunpack.c.l.b16 %v1663
    %v2347 = vunpack.c.h.b16 %v1663
    %v2348 = vunpack.c.l.b16 %v1664
    %v2349 = vunpack.c.h.b16 %v1664
    %v2350 = vunpack.c.l.b16 %v1665
    %v2351 = vunpack.c.h.b16 %v1665
    %v2352 = vunpack.c.l.b16 %v1666
    %v2353 = vunpack.c.h.b16 %v1666
    %v2354 = vunpack.c.l.b16 %v1667
    %v2355 = vunpack.c.h.b16 %v1667
    %v2356 = vunpack.c.l.b16 %v1668
    %v2357 = vunpack.c.h.b16 %v1668
    %v2358 = vunpack.c.l.b16 %v1669
    %v2359 = vunpack.c.h.b16 %v1669
    %v2360 = vunpack.c.l.b16 %v1670
    %v2361 = vunpack.c.h.b16 %v1670
    %v2362 = vunpack.c.l.b16 %v1671
    %v2363 = vunpack.c.h.b16 %v1671
    %v2364 = vunpack.c.l.b16 %v1672
    %v2365 = vunpack.c.h.b16 %v1672
    %v2366 = vunpack.c.l.b16 %v1673
    %v2367 = vunpack.c.h.b16 %v1673
    %v2368 = vunpack.c.l.b16 %v1674
    %v2369 = vunpack.c.h.b16 %v1674
    %v2370 = vunpack.c.l.b16 %v1675
    %v2371 = vunpack.c.h.b16 %v1675
    %v2372 = vunpack.c.l.b16 %v1676
    %v2373 = vunpack.c.h.b16 %v1676
    %v2374 = vunpack.c.l.b16 %v1677
    %v2375 = vunpack.c.h.b16 %v1677
    %v2376 = vunpack.c.l.b16 %v1678
    %v2377 = vunpack.c.h.b16 %v1678
    %v2378 = vunpack.c.l.b16 %v1679
    %v2379 = vunpack.c.h.b16 %v1679
    %v2380 = vunpack.c.l.b16 %v1680
    %v2381 = vunpack.c.h.b16 %v1680
    %v2382 = vunpack.c.l.b16 %v1681
    %v2383 = vunpack.c.h.b16 %v1681
    %v2384 = vunpack.c.l.b16 %v1682
    %v2385 = vunpack.c.h.b16 %v1682
    %v2386 = vunpack.c.l.b16 %v1683
    %v2387 = vunpack.c.h.b16 %v1683
    %v2388 = vunpack.c.l.b16 %v1684
    %v2389 = vunpack.c.h.b16 %v1684
    %v2390 = vunpack.c.l.b16 %v1685
    %v2391 = vunpack.c.h.b16 %v1685
    %v2392 = vunpack.c.l.b16 %v1686
    %v2393 = vunpack.c.h.b16 %v1686
    %v2394 = vunpack.c.l.b16 %v1687
    %v2395 = vunpack.c.h.b16 %v1687
    %v2396 = vunpack.c.l.b16 %v1688
    %v2397 = vunpack.c.h.b16 %v1688
    %v2398 = vunpack.c.l.b16 %v1689
    %v2399 = vunpack.c.h.b16 %v1689
    %v2400 = vunpack.c.l.b16 %v1690
    %v2401 = vunpack.c.h.b16 %v1690
    %v2402 = vunpack.c.l.b16 %v1691
    %v2403 = vunpack.c.h.b16 %v1691
    %v2404 = vunpack.c.l.b16 %v1692
    %v2405 = vunpack.c.h.b16 %v1692
    %v2406 = vunpack.c.l.b16 %v1693
    %v2407 = vunpack.c.h.b16 %v1693
    %v2408 = vunpack.c.l.b16 %v1694
    %v2409 = vunpack.c.h.b16 %v1694
    %v2410 = vunpack.c.l.b16 %v1695
    %v2411 = vunpack.c.h.b16 %v1695
    %v2412 = vunpack.c.l.b16 %v1696
    %v2413 = vunpack.c.h.b16 %v1696
    %v2414 = vunpack.c.l.b16 %v1697
    %v2415 = vunpack.c.h.b16 %v1697
    %v2416 = vunpack.c.l.b16 %v1698
    %v2417 = vunpack.c.h.b16 %v1698
    %v2418 = vunpack.c.l.b16 %v1699
    %v2419 = vunpack.c.h.b16 %v1699
    %v2420 = vunpack.c.l.b16 %v1700
    %v2421 = vunpack.c.h.b16 %v1700
    %v2422 = vunpack.c.l.b16 %v1701
    %v2423 = vunpack.c.h.b16 %v1701
    %v2424 = vunpack.c.l.b16 %v1702
    %v2425 = vunpack.c.h.b16 %v1702
    %v2426 = vunpack.c.l.b16 %v1703
    %v2427 = vunpack.c.h.b16 %v1703
    %v2428 = vunpack.c.l.b16 %v1704
    %v2429 = vunpack.c.h.b16 %v1704
    %v2430 = vunpack.c.l.b16 %v1705
    %v2431 = vunpack.c.h.b16 %v1705
    %v2432 = vunpack.c.l.b16 %v1706
    %v2433 = vunpack.c.h.b16 %v1706
    %v2434 = vunpack.c.l.b16 %v1707
    %v2435 = vunpack.c.h.b16 %v1707
    %v2436 = vunpack.c.l.b16 %v1708
    %v2437 = vunpack.c.h.b16 %v1708
    %v2438 = vunpack.c.l.b16 %v1709
    %v2439 = vunpack.c.h.b16 %v1709
    %v2440 = vunpack.c.l.b16 %v1710
    %v2441 = vunpack.c.h.b16 %v1710
    %v2442 = vunpack.c.l.b16 %v1711
    %v2443 = vunpack.c.h.b16 %v1711
    %v2444 = vunpack.c.l.b16 %v1712
    %v2445 = vunpack.c.h.b16 %v1712
    %v2446 = vunpack.c.l.b16 %v1713
    %v2447 = vunpack.c.h.b16 %v1713
    %v2448 = vunpack.c.l.b16 %v1714
    %v2449 = vunpack.c.h.b16 %v1714
    %v2450 = vunpack.c.l.b16 %v1715
    %v2451 = vunpack.c.h.b16 %v1715
    %v2452 = vunpack.c.l.b16 %v1716
    %v2453 = vunpack.c.h.b16 %v1716
    %v2454 = vunpack.c.l.b16 %v1717
    %v2455 = vunpack.c.h.b16 %v1717
    %v2456 = vunpack.c.l.b16 %v1718
    %v2457 = vunpack.c.h.b16 %v1718
    %v2458 = vunpack.c.l.b16 %v1719
    %v2459 = vunpack.c.h.b16 %v1719
    %v2460 = vunpack.c.l.b16 %v1720
    %v2461 = vunpack.c.h.b16 %v1720
    %v2462 = vunpack.c.l.b16 %v1721
    %v2463 = vunpack.c.h.b16 %v1721
    %v2464 = vunpack.c.l.b16 %v1722
    %v2465 = vunpack.c.h.b16 %v1722
    %v2466 = vunpack.c.l.b16 %v1723
    %v2467 = vunpack.c.h.b16 %v1723
    %v2468 = vunpack.c.l.b16 %v1724
    %v2469 = vunpack.c.h.b16 %v1724
    %v2470 = vunpack.c.l.b16 %v1725
    %v2471 = vunpack.c.h.b16 %v1725
    %v2472 = vunpack.c.l.b16 %v1726
    %v2473 = vunpack.c.h.b16 %v1726
    %v2474 = vunpack.c.l.b16 %v1727
    %v2475 = vunpack.c.h.b16 %v1727
    %v2476 = vunpack.c.l.b16 %v1728
    %v2477 = vunpack.c.h.b16 %v1728
    %v2478 = vunpack.c.l.b16 %v1729
    %v2479 = vunpack.c.h.b16 %v1729
    %v2480 = vunpack.c.l.b16 %v1730
    %v2481 = vunpack.c.h.b16 %v1730
    %v2482 = vunpack.c.l.b16 %v1731
    %v2483 = vunpack.c.h.b16 %v1731
    %v2484 = vunpack.c.l.b16 %v1732
    %v2485 = vunpack.c.h.b16 %v1732
    %v2486 = vunpack.c.l.b16 %v1733
    %v2487 = vunpack.c.h.b16 %v1733
    %v2488 = vunpack.c.l.b16 %v1734
    %v2489 = vunpack.c.h.b16 %v1734
    %v2490 = vunpack.c.l.b16 %v1735
    %v2491 = vunpack.c.h.b16 %v1735
    %v2492 = vunpack.c.l.b16 %v1736
    %v2493 = vunpack.c.h.b16 %v1736
    %v2494 = vunpack.c.l.b16 %v1737
    %v2495 = vunpack.c.h.b16 %v1737
    %v2496 = vunpack.c.l.b16 %v1738
    %v2497 = vunpack.c.h.b16 %v1738
    %v2498 = vunpack.c.l.b16 %v1739
    %v2499 = vunpack.c.h.b16 %v1739
    %v2500 = vunpack.c.l.b16 %v1740
    %v2501 = vunpack.c.h.b16 %v1740
    %v2502 = vunpack.c.l.b16 %v1741
    %v2503 = vunpack.c.h.b16 %v1741
    %v2504 = vunpack.c.l.b16 %v1742
    %v2505 = vunpack.c.h.b16 %v1742
    %v2506 = vunpack.c.l.b16 %v1743
    %v2507 = vunpack.c.h.b16 %v1743
    %v2508 = vunpack.c.l.b16 %v1744
    %v2509 = vunpack.c.h.b16 %v1744
    %v2510 = vunpack.c.l.b16 %v1745
    %v2511 = vunpack.c.h.b16 %v1745
    %v2512 = vunpack.c.l.b16 %v1746
    %v2513 = vunpack.c.h.b16 %v1746
    %v2514 = vunpack.c.l.b16 %v1747
    %v2515 = vunpack.c.h.b16 %v1747
    %v2516 = vunpack.c.l.b16 %v1748
    %v2517 = vunpack.c.h.b16 %v1748
    %v2518 = vunpack.c.l.b16 %v1749
    %v2519 = vunpack.c.h.b16 %v1749
    %v2520 = vunpack.c.l.b16 %v1750
    %v2521 = vunpack.c.h.b16 %v1750
    %v2522 = vunpack.c.l.b16 %v1751
    %v2523 = vunpack.c.h.b16 %v1751
    %v2524 = vunpack.c.l.b16 %v1752
    %v2525 = vunpack.c.h.b16 %v1752
    %v2526 = vunpack.c.l.b16 %v1753
    %v2527 = vunpack.c.h.b16 %v1753
    %v2528 = vunpack.c.l.b16 %v1754
    %v2529 = vunpack.c.h.b16 %v1754
    %v2530 = vunpack.c.l.b16 %v1755
    %v2531 = vunpack.c.h.b16 %v1755
    %v2532 = vunpack.c.l.b16 %v1756
    %v2533 = vunpack.c.h.b16 %v1756
    %v2534 = vunpack.c.l.b16 %v1757
    %v2535 = vunpack.c.h.b16 %v1757
    %v2536 = vunpack.c.l.b16 %v1758
    %v2537 = vunpack.c.h.b16 %v1758
    %v2538 = vunpack.c.l.b16 %v1759
    %v2539 = vunpack.c.h.b16 %v1759
    %v2540 = vunpack.c.l.b16 %v1760
    %v2541 = vunpack.c.h.b16 %v1760
    %v2542 = vunpack.c.l.b16 %v1761
    %v2543 = vunpack.c.h.b16 %v1761
    %v2544 = vunpack.c.l.b16 %v1762
    %v2545 = vunpack.c.h.b16 %v1762
    %v2546 = vunpack.c.l.b16 %v1763
    %v2547 = vunpack.c.h.b16 %v1763
    %v2548 = vunpack.c.l.b16 %v1764
    %v2549 = vunpack.c.h.b16 %v1764
    %v2550 = vunpack.c.l.b16 %v1765
    %v2551 = vunpack.c.h.b16 %v1765
    %v2552 = vpack.c.b16 %v2048, %v2040
    %v2553 = vpack.c.b16 %v2049, %v2041
    %v2554 = vpack.c.b16 %v2050, %v2042
    %v2555 = vpack.c.b16 %v2051, %v2043
    %v2556 = vpack.c.b16 %v2052, %v2044
    %v2557 = vpack.c.b16 %v2053, %v2045
    %v2558 = vpack.c.b16 %v2054, %v2046
    %v2559 = vpack.c.b16 %v2055, %v2047
    %v2560 = vpack.c.b16 %v2064, %v2056
    %v2561 = vpack.c.b16 %v2065, %v2057
    %v2562 = vpack.c.b16 %v2066, %v2058
    %v2563 = vpack.c.b16 %v2067, %v2059
    %v2564 = vpack.c.b16 %v2068, %v2060
    %v2565 = vpack.c.b16 %v2069, %v2061
    %v2566 = vpack.c.b16 %v2070, %v2062
    %v2567 = vpack.c.b16 %v2071, %v2063
    %v2568 = vpack.c.b16 %v2080, %v2072
    %v2569 = vpack.c.b16 %v2081, %v2073
    %v2570 = vpack.c.b16 %v2082, %v2074
    %v2571 = vpack.c.b16 %v2083, %v2075
    %v2572 = vpack.c.b16 %v2084, %v2076
    %v2573 = vpack.c.b16 %v2085, %v2077
    %v2574 = vpack.c.b16 %v2086, %v2078
    %v2575 = vpack.c.b16 %v2087, %v2079
    %v2576 = vpack.c.b16 %v2096, %v2088
    %v2577 = vpack.c.b16 %v2097, %v2089
    %v2578 = vpack.c.b16 %v2098, %v2090
    %v2579 = vpack.c.b16 %v2099, %v2091
    %v2580 = vpack.c.b16 %v2100, %v2092
    %v2581 = vpack.c.b16 %v2101, %v2093
    %v2582 = vpack.c.b16 %v2102, %v2094
    %v2583 = vpack.c.b16 %v2103, %v2095
    %v2584 = vpack.c.b16 %v2112, %v2104
    %v2585 = vpack.c.b16 %v2113, %v2105
    %v2586 = vpack.c.b16 %v2114, %v2106
    %v2587 = vpack.c.b16 %v2115, %v2107
    %v2588 = vpack.c.b16 %v2116, %v2108
    %v2589 = vpack.c.b16 %v2117, %v2109
    %v2590 = vpack.c.b16 %v2118, %v2110
    %v2591 = vpack.c.b16 %v2119, %v2111
    %v2592 = vpack.c.b16 %v2128, %v2120
    %v2593 = vpack.c.b16 %v2129, %v2121
    %v2594 = vpack.c.b16 %v2130, %v2122
    %v2595 = vpack.c.b16 %v2131, %v2123
    %v2596 = vpack.c.b16 %v2132, %v2124
    %v2597 = vpack.c.b16 %v2133, %v2125
    %v2598 = vpack.c.b16 %v2134, %v2126
    %v2599 = vpack.c.b16 %v2135, %v2127
    %v2600 = vpack.c.b16 %v2144, %v2136
    %v2601 = vpack.c.b16 %v2145, %v2137
    %v2602 = vpack.c.b16 %v2146, %v2138
    %v2603 = vpack.c.b16 %v2147, %v2139
    %v2604 = vpack.c.b16 %v2148, %v2140
    %v2605 = vpack.c.b16 %v2149, %v2141
    %v2606 = vpack.c.b16 %v2150, %v2142
    %v2607 = vpack.c.b16 %v2151, %v2143
    %v2608 = vpack.c.b16 %v2160, %v2152
    %v2609 = vpack.c.b16 %v2161, %v2153
    %v2610 = vpack.c.b16 %v2162, %v2154
    %v2611 = vpack.c.b16 %v2163, %v2155
    %v2612 = vpack.c.b16 %v2164, %v2156
    %v2613 = vpack.c.b16 %v2165, %v2157
    %v2614 = vpack.c.b16 %v2166, %v2158
    %v2615 = vpack.c.b16 %v2167, %v2159
    %v2616 = vpack.c.b16 %v2176, %v2168
    %v2617 = vpack.c.b16 %v2177, %v2169
    %v2618 = vpack.c.b16 %v2178, %v2170
    %v2619 = vpack.c.b16 %v2179, %v2171
    %v2620 = vpack.c.b16 %v2180, %v2172
    %v2621 = vpack.c.b16 %v2181, %v2173
    %v2622 = vpack.c.b16 %v2182, %v2174
    %v2623 = vpack.c.b16 %v2183, %v2175
    %v2624 = vpack.c.b16 %v2192, %v2184
    %v2625 = vpack.c.b16 %v2193, %v2185
    %v2626 = vpack.c.b16 %v2194, %v2186
    %v2627 = vpack.c.b16 %v2195, %v2187
    %v2628 = vpack.c.b16 %v2196, %v2188
    %v2629 = vpack.c.b16 %v2197, %v2189
    %v2630 = vpack.c.b16 %v2198, %v2190
    %v2631 = vpack.c.b16 %v2199, %v2191
    %v2632 = vpack.c.b16 %v2208, %v2200
    %v2633 = vpack.c.b16 %v2209, %v2201
    %v2634 = vpack.c.b16 %v2210, %v2202
    %v2635 = vpack.c.b16 %v2211, %v2203
    %v2636 = vpack.c.b16 %v2212, %v2204
    %v2637 = vpack.c.b16 %v2213, %v2205
    %v2638 = vpack.c.b16 %v2214, %v2206
    %v2639 = vpack.c.b16 %v2215, %v2207
    %v2640 = vpack.c.b16 %v2224, %v2216
    %v2641 = vpack.c.b16 %v2225, %v2217
    %v2642 = vpack.c.b16 %v2226, %v2218
    %v2643 = vpack.c.b16 %v2227, %v2219
    %v2644 = vpack.c.b16 %v2228, %v2220
    %v2645 = vpack.c.b16 %v2229, %v2221
    %v2646 = vpack.c.b16 %v2230, %v2222
    %v2647 = vpack.c.b16 %v2231, %v2223
    %v2648 = vpack.c.b16 %v2240, %v2232
    %v2649 = vpack.c.b16 %v2241, %v2233
    %v2650 = vpack.c.b16 %v2242, %v2234
    %v2651 = vpack.c.b16 %v2243, %v2235
    %v2652 = vpack.c.b16 %v2244, %v2236
    %v2653 = vpack.c.b16 %v2245, %v2237
    %v2654 = vpack.c.b16 %v2246, %v2238
    %v2655 = vpack.c.b16 %v2247, %v2239
    %v2656 = vpack.c.b16 %v2256, %v2248
    %v2657 = vpack.c.b16 %v2257, %v2249
    %v2658 = vpack.c.b16 %v2258, %v2250
    %v2659 = vpack.c.b16 %v2259, %v2251
    %v2660 = vpack.c.b16 %v2260, %v2252
    %v2661 = vpack.c.b16 %v2261, %v2253
    %v2662 = vpack.c.b16 %v2262, %v2254
    %v2663 = vpack.c.b16 %v2263, %v2255
    %v2664 = vpack.c.b16 %v2272, %v2264
    %v2665 = vpack.c.b16 %v2273, %v2265
    %v2666 = vpack.c.b16 %v2274, %v2266
    %v2667 = vpack.c.b16 %v2275, %v2267
    %v2668 = vpack.c.b16 %v2276, %v2268
    %v2669 = vpack.c.b16 %v2277, %v2269
    %v2670 = vpack.c.b16 %v2278, %v2270
    %v2671 = vpack.c.b16 %v2279, %v2271
    %v2672 = vpack.c.b16 %v2288, %v2280
    %v2673 = vpack.c.b16 %v2289, %v2281
    %v2674 = vpack.c.b16 %v2290, %v2282
    %v2675 = vpack.c.b16 %v2291, %v2283
    %v2676 = vpack.c.b16 %v2292, %v2284
    %v2677 = vpack.c.b16 %v2293, %v2285
    %v2678 = vpack.c.b16 %v2294, %v2286
    %v2679 = vpack.c.b16 %v2295, %v2287
    %v2680 = vpack.c.b16 %v2304, %v2296
    %v2681 = vpack.c.b16 %v2305, %v2297
    %v2682 = vpack.c.b16 %v2306, %v2298
    %v2683 = vpack.c.b16 %v2307, %v2299
    %v2684 = vpack.c.b16 %v2308, %v2300
    %v2685 = vpack.c.b16 %v2309, %v2301
    %v2686 = vpack.c.b16 %v2310, %v2302
    %v2687 = vpack.c.b16 %v2311, %v2303
    %v2688 = vpack.c.b16 %v2320, %v2312
    %v2689 = vpack.c.b16 %v2321, %v2313
    %v2690 = vpack.c.b16 %v2322, %v2314
    %v2691 = vpack.c.b16 %v2323, %v2315
    %v2692 = vpack.c.b16 %v2324, %v2316
    %v2693 = vpack.c.b16 %v2325, %v2317
    %v2694 = vpack.c.b16 %v2326, %v2318
    %v2695 = vpack.c.b16 %v2327, %v2319
    %v2696 = vpack.c.b16 %v2336, %v2328
    %v2697 = vpack.c.b16 %v2337, %v2329
    %v2698 = vpack.c.b16 %v2338, %v2330
    %v2699 = vpack.c.b16 %v2339, %v2331
    %v2700 = vpack.c.b16 %v2340, %v2332
    %v2701 = vpack.c.b16 %v2341, %v2333
    %v2702 = vpack.c.b16 %v2342, %v2334
    %v2703 = vpack.c.b16 %v2343, %v2335
    %v2704 = vpack.c.b16 %v2352, %v2344
    %v2705 = vpack.c.b16 %v2353, %v2345
    %v2706 = vpack.c.b16 %v2354, %v2346
    %v2707 = vpack.c.b16 %v2355, %v2347
    %v2708 = vpack.c.b16 %v2356, %v2348
    %v2709 = vpack.c.b16 %v2357, %v2349
    %v2710 = vpack.c.b16 %v2358, %v2350
    %v2711 = vpack.c.b16 %v2359, %v2351
    %v2712 = vpack.c.b16 %v2368, %v2360
    %v2713 = vpack.c.b16 %v2369, %v2361
    %v2714 = vpack.c.b16 %v2370, %v2362
    %v2715 = vpack.c.b16 %v2371, %v2363
    %v2716 = vpack.c.b16 %v2372, %v2364
    %v2717 = vpack.c.b16 %v2373, %v2365
    %v2718 = vpack.c.b16 %v2374, %v2366
    %v2719 = vpack.c.b16 %v2375, %v2367
    %v2720 = vpack.c.b16 %v2384, %v2376
    %v2721 = vpack.c.b16 %v2385, %v2377
    %v2722 = vpack.c.b16 %v2386, %v2378
    %v2723 = vpack.c.b16 %v2387, %v2379
    %v2724 = vpack.c.b16 %v2388, %v2380
    %v2725 = vpack.c.b16 %v2389, %v2381
    %v2726 = vpack.c.b16 %v2390, %v2382
    %v2727 = vpack.c.b16 %v2391, %v2383
    %v2728 = vpack.c.b16 %v2400, %v2392
    %v2729 = vpack.c.b16 %v2401, %v2393
    %v2730 = vpack.c.b16 %v2402, %v2394
    %v2731 = vpack.c.b16 %v2403, %v2395
    %v2732 = vpack.c.b16 %v2404, %v2396
    %v2733 = vpack.c.b16 %v2405, %v2397
    %v2734 = vpack.c.b16 %v2406, %v2398
    %v2735 = vpack.c.b16 %v2407, %v2399
    %v2736 = vpack.c.b16 %v2416, %v2408
    %v2737 = vpack.c.b16 %v2417, %v2409
    %v2738 = vpack.c.b16 %v2418, %v2410
    %v2739 = vpack.c.b16 %v2419, %v2411
    %v2740 = vpack.c.b16 %v2420, %v2412
    %v2741 = vpack.c.b16 %v2421, %v2413
    %v2742 = vpack.c.b16 %v2422, %v2414
    %v2743 = vpack.c.b16 %v2423, %v2415
    %v2744 = vpack.c.b16 %v2432, %v2424
    %v2745 = vpack.c.b16 %v2433, %v2425
    %v2746 = vpack.c.b16 %v2434, %v2426
    %v2747 = vpack.c.b16 %v2435, %v2427
    %v2748 = vpack.c.b16 %v2436, %v2428
    %v2749 = vpack.c.b16 %v2437, %v2429
    %v2750 = vpack.c.b16 %v2438, %v2430
    %v2751 = vpack.c.b16 %v2439, %v2431
    %v2752 = vpack.c.b16 %v2448, %v2440
    %v2753 = vpack.c.b16 %v2449, %v2441
    %v2754 = vpack.c.b16 %v2450, %v2442
    %v2755 = vpack.c.b16 %v2451, %v2443
    %v2756 = vpack.c.b16 %v2452, %v2444
    %v2757 = vpack.c.b16 %v2453, %v2445
    %v2758 = vpack.c.b16 %v2454, %v2446
    %v2759 = vpack.c.b16 %v2455, %v2447
    %v2760 = vpack.c.b16 %v2464, %v2456
    %v2761 = vpack.c.b16 %v2465, %v2457
    %v2762 = vpack.c.b16 %v2466, %v2458
    %v2763 = vpack.c.b16 %v2467, %v2459
    %v2764 = vpack.c.b16 %v2468, %v2460
    %v2765 = vpack.c.b16 %v2469, %v2461
    %v2766 = vpack.c.b16 %v2470, %v2462
    %v2767 = vpack.c.b16 %v2471, %v2463
    %v2768 = vpack.c.b16 %v2480, %v2472
    %v2769 = vpack.c.b16 %v2481, %v2473
    %v2770 = vpack.c.b16 %v2482, %v2474
    %v2771 = vpack.c.b16 %v2483, %v2475
    %v2772 = vpack.c.b16 %v2484, %v2476
    %v2773 = vpack.c.b16 %v2485, %v2477
    %v2774 = vpack.c.b16 %v2486, %v2478
    %v2775 = vpack.c.b16 %v2487, %v2479
    %v2776 = vpack.c.b16 %v2496, %v2488
    %v2777 = vpack.c.b16 %v2497, %v2489
    %v2778 = vpack.c.b16 %v2498, %v2490
    %v2779 = vpack.c.b16 %v2499, %v2491
    %v2780 = vpack.c.b16 %v2500, %v2492
    %v2781 = vpack.c.b16 %v2501, %v2493
    %v2782 = vpack.c.b16 %v2502, %v2494
    %v2783 = vpack.c.b16 %v2503, %v2495
    %v2784 = vpack.c.b16 %v2512, %v2504
    %v2785 = vpack.c.b16 %v2513, %v2505
    %v2786 = vpack.c.b16 %v2514, %v2506
    %v2787 = vpack.c.b16 %v2515, %v2507
    %v2788 = vpack.c.b16 %v2516, %v2508
    %v2789 = vpack.c.b16 %v2517, %v2509
    %v2790 = vpack.c.b16 %v2518, %v2510
    %v2791 = vpack.c.b16 %v2519, %v2511
    %v2792 = vpack.c.b16 %v2528, %v2520
    %v2793 = vpack.c.b16 %v2529, %v2521
    %v2794 = vpack.c.b16 %v2530, %v2522
    %v2795 = vpack.c.b16 %v2531, %v2523
    %v2796 = vpack.c.b16 %v2532, %v2524
    %v2797 = vpack.c.b16 %v2533, %v2525
    %v2798 = vpack.c.b16 %v2534, %v2526
    %v2799 = vpack.c.b16 %v2535, %v2527
    %v2800 = vpack.c.b16 %v2544, %v2536
    %v2801 = vpack.c.b16 %v2545, %v2537
    %v2802 = vpack.c.b16 %v2546, %v2538
    %v2803 = vpack.c.b16 %v2547, %v2539
    %v2804 = vpack.c.b16 %v2548, %v2540
    %v2805 = vpack.c.b16 %v2549, %v2541
    %v2806 = vpack.c.b16 %v2550, %v2542
    %v2807 = vpack.c.b16 %v2551, %v2543
    %3064 = vmatpush.bf16.msra.mxu0 %v2608
    %3065 = vmatpush.bf16.msra.mxu0 %v2600
    %3066 = vmatpush.bf16.msra.mxu0 %v2592
    %3067 = vmatpush.bf16.msra.mxu0 %v2584
    %3068 = vmatpush.bf16.msra.mxu0 %v2576
    %3069 = vmatpush.bf16.msra.mxu0 %v2568
    %3070 = vmatpush.bf16.msra.mxu0 %v2560
    %3071 = vmatpush.bf16.msra.mxu0 %v2552
    %3072 = vmatmul.bf16.gmra.mxu0 %v1506
    %v3073 = vpop.f32.mrf.mxu0
    %v3074 = vadd.f32 %v1768, %v3073
    %v3075 = vpop.f32.mrf.mxu0
    %3076 = vdwg.mxu0
    %3077 = vmatpush.bf16.msra.mxu0 %v2672
    %3078 = vmatpush.bf16.msra.mxu0 %v2664
    %3079 = vmatpush.bf16.msra.mxu0 %v2656
    %3080 = vmatpush.bf16.msra.mxu0 %v2648
    %3081 = vmatpush.bf16.msra.mxu0 %v2640
    %3082 = vmatpush.bf16.msra.mxu0 %v2632
    %3083 = vmatpush.bf16.msra.mxu0 %v2624
    %3084 = vmatpush.bf16.msra.mxu0 %v2616
    %3085 = vmatmul.bf16.gmra.mxu0 %v1507
    %v3086 = vpop.f32.mrf.mxu0
    %v3087 = vadd.f32 %v3074, %v3086
    %v3088 = vpop.f32.mrf.mxu0
    %3089 = vdwg.mxu0
    %3090 = vmatpush.bf16.msra.mxu0 %v2736
    %3091 = vmatpush.bf16.msra.mxu0 %v2728
    %3092 = vmatpush.bf16.msra.mxu0 %v2720
    %3093 = vmatpush.bf16.msra.mxu0 %v2712
    %3094 = vmatpush.bf16.msra.mxu0 %v2704
    %3095 = vmatpush.bf16.msra.mxu0 %v2696
    %3096 = vmatpush.bf16.msra.mxu0 %v2688
    %3097 = vmatpush.bf16.msra.mxu0 %v2680
    %3098 = vmatmul.bf16.gmra.mxu0 %v1508
    %v3099 = vpop.f32.mrf.mxu0
    %v3100 = vadd.f32 %v3087, %v3099
    %v3101 = vpop.f32.mrf.mxu0
    %3102 = vdwg.mxu0
    %3103 = vmatpush.bf16.msra.mxu0 %v2800
    %3104 = vmatpush.bf16.msra.mxu0 %v2792
    %3105 = vmatpush.bf16.msra.mxu0 %v2784
    %3106 = vmatpush.bf16.msra.mxu0 %v2776
    %3107 = vmatpush.bf16.msra.mxu0 %v2768
    %3108 = vmatpush.bf16.msra.mxu0 %v2760
    %3109 = vmatpush.bf16.msra.mxu0 %v2752
    %3110 = vmatpush.bf16.msra.mxu0 %v2744
    %3111 = vmatmul.bf16.gmra.mxu0 %v1509
    %v3112 = vpop.f32.mrf.mxu0
    %v3113 = vadd.f32 %v3100, %v3112
    %v3114 = vpop.f32.mrf.mxu0
    %3115 = vdwg.mxu0
    %3116 = vmatpush.bf16.msra.mxu0 %v2609
    %3117 = vmatpush.bf16.msra.mxu0 %v2601
    %3118 = vmatpush.bf16.msra.mxu0 %v2593
    %3119 = vmatpush.bf16.msra.mxu0 %v2585
    %3120 = vmatpush.bf16.msra.mxu0 %v2577
    %3121 = vmatpush.bf16.msra.mxu0 %v2569
    %3122 = vmatpush.bf16.msra.mxu0 %v2561
    %3123 = vmatpush.bf16.msra.mxu0 %v2553
    %3124 = vmatmul.bf16.gmra.mxu0 %v1506
    %v3125 = vpop.f32.mrf.mxu0
    %v3126 = vadd.f32 %v1769, %v3125
    %v3127 = vpop.f32.mrf.mxu0
    %3128 = vdwg.mxu0
    %3129 = vmatpush.bf16.msra.mxu0 %v2673
    %3130 = vmatpush.bf16.msra.mxu0 %v2665
    %3131 = vmatpush.bf16.msra.mxu0 %v2657
    %3132 = vmatpush.bf16.msra.mxu0 %v2649
    %3133 = vmatpush.bf16.msra.mxu0 %v2641
    %3134 = vmatpush.bf16.msra.mxu0 %v2633
    %3135 = vmatpush.bf16.msra.mxu0 %v2625
    %3136 = vmatpush.bf16.msra.mxu0 %v2617
    %3137 = vmatmul.bf16.gmra.mxu0 %v1507
    %v3138 = vpop.f32.mrf.mxu0
    %v3139 = vadd.f32 %v3126, %v3138
    %v3140 = vpop.f32.mrf.mxu0
    %3141 = vdwg.mxu0
    %3142 = vmatpush.bf16.msra.mxu0 %v2737
    %3143 = vmatpush.bf16.msra.mxu0 %v2729
    %3144 = vmatpush.bf16.msra.mxu0 %v2721
    %3145 = vmatpush.bf16.msra.mxu0 %v2713
    %3146 = vmatpush.bf16.msra.mxu0 %v2705
    %3147 = vmatpush.bf16.msra.mxu0 %v2697
    %3148 = vmatpush.bf16.msra.mxu0 %v2689
    %3149 = vmatpush.bf16.msra.mxu0 %v2681
    %3150 = vmatmul.bf16.gmra.mxu0 %v1508
    %v3151 = vpop.f32.mrf.mxu0
    %v3152 = vadd.f32 %v3139, %v3151
    %v3153 = vpop.f32.mrf.mxu0
    %3154 = vdwg.mxu0
    %3155 = vmatpush.bf16.msra.mxu0 %v2801
    %3156 = vmatpush.bf16.msra.mxu0 %v2793
    %3157 = vmatpush.bf16.msra.mxu0 %v2785
    %3158 = vmatpush.bf16.msra.mxu0 %v2777
    %3159 = vmatpush.bf16.msra.mxu0 %v2769
    %3160 = vmatpush.bf16.msra.mxu0 %v2761
    %3161 = vmatpush.bf16.msra.mxu0 %v2753
    %3162 = vmatpush.bf16.msra.mxu0 %v2745
    %3163 = vmatmul.bf16.gmra.mxu0 %v1509
    %v3164 = vpop.f32.mrf.mxu0
    %v3165 = vadd.f32 %v3152, %v3164
    %v3166 = vpop.f32.mrf.mxu0
    %3167 = vdwg.mxu0
    %3168 = vmatpush.bf16.msra.mxu0 %v2610
    %3169 = vmatpush.bf16.msra.mxu0 %v2602
    %3170 = vmatpush.bf16.msra.mxu0 %v2594
    %3171 = vmatpush.bf16.msra.mxu0 %v2586
    %3172 = vmatpush.bf16.msra.mxu0 %v2578
    %3173 = vmatpush.bf16.msra.mxu0 %v2570
    %3174 = vmatpush.bf16.msra.mxu0 %v2562
    %3175 = vmatpush.bf16.msra.mxu0 %v2554
    %3176 = vmatmul.bf16.gmra.mxu0 %v1506
    %v3177 = vpop.f32.mrf.mxu0
    %v3178 = vadd.f32 %v1770, %v3177
    %v3179 = vpop.f32.mrf.mxu0
    %3180 = vdwg.mxu0
    %3181 = vmatpush.bf16.msra.mxu0 %v2674
    %3182 = vmatpush.bf16.msra.mxu0 %v2666
    %3183 = vmatpush.bf16.msra.mxu0 %v2658
    %3184 = vmatpush.bf16.msra.mxu0 %v2650
    %3185 = vmatpush.bf16.msra.mxu0 %v2642
    %3186 = vmatpush.bf16.msra.mxu0 %v2634
    %3187 = vmatpush.bf16.msra.mxu0 %v2626
    %3188 = vmatpush.bf16.msra.mxu0 %v2618
    %3189 = vmatmul.bf16.gmra.mxu0 %v1507
    %v3190 = vpop.f32.mrf.mxu0
    %v3191 = vadd.f32 %v3178, %v3190
    %v3192 = vpop.f32.mrf.mxu0
    %3193 = vdwg.mxu0
    %3194 = vmatpush.bf16.msra.mxu0 %v2738
    %3195 = vmatpush.bf16.msra.mxu0 %v2730
    %3196 = vmatpush.bf16.msra.mxu0 %v2722
    %3197 = vmatpush.bf16.msra.mxu0 %v2714
    %3198 = vmatpush.bf16.msra.mxu0 %v2706
    %3199 = vmatpush.bf16.msra.mxu0 %v2698
    %3200 = vmatpush.bf16.msra.mxu0 %v2690
    %3201 = vmatpush.bf16.msra.mxu0 %v2682
    %3202 = vmatmul.bf16.gmra.mxu0 %v1508
    %v3203 = vpop.f32.mrf.mxu0
    %v3204 = vadd.f32 %v3191, %v3203
    %v3205 = vpop.f32.mrf.mxu0
    %3206 = vdwg.mxu0
    %3207 = vmatpush.bf16.msra.mxu0 %v2802
    %3208 = vmatpush.bf16.msra.mxu0 %v2794
    %3209 = vmatpush.bf16.msra.mxu0 %v2786
    %3210 = vmatpush.bf16.msra.mxu0 %v2778
    %3211 = vmatpush.bf16.msra.mxu0 %v2770
    %3212 = vmatpush.bf16.msra.mxu0 %v2762
    %3213 = vmatpush.bf16.msra.mxu0 %v2754
    %3214 = vmatpush.bf16.msra.mxu0 %v2746
    %3215 = vmatmul.bf16.gmra.mxu0 %v1509
    %v3216 = vpop.f32.mrf.mxu0
    %v3217 = vadd.f32 %v3204, %v3216
    %v3218 = vpop.f32.mrf.mxu0
    %3219 = vdwg.mxu0
    %3220 = vmatpush.bf16.msra.mxu0 %v2611
    %3221 = vmatpush.bf16.msra.mxu0 %v2603
    %3222 = vmatpush.bf16.msra.mxu0 %v2595
    %3223 = vmatpush.bf16.msra.mxu0 %v2587
    %3224 = vmatpush.bf16.msra.mxu0 %v2579
    %3225 = vmatpush.bf16.msra.mxu0 %v2571
    %3226 = vmatpush.bf16.msra.mxu0 %v2563
    %3227 = vmatpush.bf16.msra.mxu0 %v2555
    %3228 = vmatmul.bf16.gmra.mxu0 %v1506
    %v3229 = vpop.f32.mrf.mxu0
    %v3230 = vadd.f32 %v1771, %v3229
    %v3231 = vpop.f32.mrf.mxu0
    %3232 = vdwg.mxu0
    %3233 = vmatpush.bf16.msra.mxu0 %v2675
    %3234 = vmatpush.bf16.msra.mxu0 %v2667
    %3235 = vmatpush.bf16.msra.mxu0 %v2659
    %3236 = vmatpush.bf16.msra.mxu0 %v2651
    %3237 = vmatpush.bf16.msra.mxu0 %v2643
    %3238 = vmatpush.bf16.msra.mxu0 %v2635
    %3239 = vmatpush.bf16.msra.mxu0 %v2627
    %3240 = vmatpush.bf16.msra.mxu0 %v2619
    %3241 = vmatmul.bf16.gmra.mxu0 %v1507
    %v3242 = vpop.f32.mrf.mxu0
    %v3243 = vadd.f32 %v3230, %v3242
    %v3244 = vpop.f32.mrf.mxu0
    %3245 = vdwg.mxu0
    %3246 = vmatpush.bf16.msra.mxu0 %v2739
    %3247 = vmatpush.bf16.msra.mxu0 %v2731
    %3248 = vmatpush.bf16.msra.mxu0 %v2723
    %3249 = vmatpush.bf16.msra.mxu0 %v2715
    %3250 = vmatpush.bf16.msra.mxu0 %v2707
    %3251 = vmatpush.bf16.msra.mxu0 %v2699
    %3252 = vmatpush.bf16.msra.mxu0 %v2691
    %3253 = vmatpush.bf16.msra.mxu0 %v2683
    %3254 = vmatmul.bf16.gmra.mxu0 %v1508
    %v3255 = vpop.f32.mrf.mxu0
    %v3256 = vadd.f32 %v3243, %v3255
    %v3257 = vpop.f32.mrf.mxu0
    %3258 = vdwg.mxu0
    %3259 = vmatpush.bf16.msra.mxu0 %v2803
    %3260 = vmatpush.bf16.msra.mxu0 %v2795
    %3261 = vmatpush.bf16.msra.mxu0 %v2787
    %3262 = vmatpush.bf16.msra.mxu0 %v2779
    %3263 = vmatpush.bf16.msra.mxu0 %v2771
    %3264 = vmatpush.bf16.msra.mxu0 %v2763
    %3265 = vmatpush.bf16.msra.mxu0 %v2755
    %3266 = vmatpush.bf16.msra.mxu0 %v2747
    %3267 = vmatmul.bf16.gmra.mxu0 %v1509
    %v3268 = vpop.f32.mrf.mxu0
    %v3269 = vadd.f32 %v3256, %v3268
    %v3270 = vpop.f32.mrf.mxu0
    %3271 = vdwg.mxu0
    %3272 = vmatpush.bf16.msra.mxu0 %v2612
    %3273 = vmatpush.bf16.msra.mxu0 %v2604
    %3274 = vmatpush.bf16.msra.mxu0 %v2596
    %3275 = vmatpush.bf16.msra.mxu0 %v2588
    %3276 = vmatpush.bf16.msra.mxu0 %v2580
    %3277 = vmatpush.bf16.msra.mxu0 %v2572
    %3278 = vmatpush.bf16.msra.mxu0 %v2564
    %3279 = vmatpush.bf16.msra.mxu0 %v2556
    %3280 = vmatmul.bf16.gmra.mxu0 %v1506
    %v3281 = vpop.f32.mrf.mxu0
    %v3282 = vadd.f32 %v1772, %v3281
    %v3283 = vpop.f32.mrf.mxu0
    %3284 = vdwg.mxu0
    %3285 = vmatpush.bf16.msra.mxu0 %v2676
    %3286 = vmatpush.bf16.msra.mxu0 %v2668
    %3287 = vmatpush.bf16.msra.mxu0 %v2660
    %3288 = vmatpush.bf16.msra.mxu0 %v2652
    %3289 = vmatpush.bf16.msra.mxu0 %v2644
    %3290 = vmatpush.bf16.msra.mxu0 %v2636
    %3291 = vmatpush.bf16.msra.mxu0 %v2628
    %3292 = vmatpush.bf16.msra.mxu0 %v2620
    %3293 = vmatmul.bf16.gmra.mxu0 %v1507
    %v3294 = vpop.f32.mrf.mxu0
    %v3295 = vadd.f32 %v3282, %v3294
    %v3296 = vpop.f32.mrf.mxu0
    %3297 = vdwg.mxu0
    %3298 = vmatpush.bf16.msra.mxu0 %v2740
    %3299 = vmatpush.bf16.msra.mxu0 %v2732
    %3300 = vmatpush.bf16.msra.mxu0 %v2724
    %3301 = vmatpush.bf16.msra.mxu0 %v2716
    %3302 = vmatpush.bf16.msra.mxu0 %v2708
    %3303 = vmatpush.bf16.msra.mxu0 %v2700
    %3304 = vmatpush.bf16.msra.mxu0 %v2692
    %3305 = vmatpush.bf16.msra.mxu0 %v2684
    %3306 = vmatmul.bf16.gmra.mxu0 %v1508
    %v3307 = vpop.f32.mrf.mxu0
    %v3308 = vadd.f32 %v3295, %v3307
    %v3309 = vpop.f32.mrf.mxu0
    %3310 = vdwg.mxu0
    %3311 = vmatpush.bf16.msra.mxu0 %v2804
    %3312 = vmatpush.bf16.msra.mxu0 %v2796
    %3313 = vmatpush.bf16.msra.mxu0 %v2788
    %3314 = vmatpush.bf16.msra.mxu0 %v2780
    %3315 = vmatpush.bf16.msra.mxu0 %v2772
    %3316 = vmatpush.bf16.msra.mxu0 %v2764
    %3317 = vmatpush.bf16.msra.mxu0 %v2756
    %3318 = vmatpush.bf16.msra.mxu0 %v2748
    %3319 = vmatmul.bf16.gmra.mxu0 %v1509
    %v3320 = vpop.f32.mrf.mxu0
    %v3321 = vadd.f32 %v3308, %v3320
    %v3322 = vpop.f32.mrf.mxu0
    %3323 = vdwg.mxu0
    %3324 = vmatpush.bf16.msra.mxu0 %v2613
    %3325 = vmatpush.bf16.msra.mxu0 %v2605
    %3326 = vmatpush.bf16.msra.mxu0 %v2597
    %3327 = vmatpush.bf16.msra.mxu0 %v2589
    %3328 = vmatpush.bf16.msra.mxu0 %v2581
    %3329 = vmatpush.bf16.msra.mxu0 %v2573
    %3330 = vmatpush.bf16.msra.mxu0 %v2565
    %3331 = vmatpush.bf16.msra.mxu0 %v2557
    %3332 = vmatmul.bf16.gmra.mxu0 %v1506
    %v3333 = vpop.f32.mrf.mxu0
    %v3334 = vadd.f32 %v1773, %v3333
    %v3335 = vpop.f32.mrf.mxu0
    %3336 = vdwg.mxu0
    %3337 = vmatpush.bf16.msra.mxu0 %v2677
    %3338 = vmatpush.bf16.msra.mxu0 %v2669
    %3339 = vmatpush.bf16.msra.mxu0 %v2661
    %3340 = vmatpush.bf16.msra.mxu0 %v2653
    %3341 = vmatpush.bf16.msra.mxu0 %v2645
    %3342 = vmatpush.bf16.msra.mxu0 %v2637
    %3343 = vmatpush.bf16.msra.mxu0 %v2629
    %3344 = vmatpush.bf16.msra.mxu0 %v2621
    %3345 = vmatmul.bf16.gmra.mxu0 %v1507
    %v3346 = vpop.f32.mrf.mxu0
    %v3347 = vadd.f32 %v3334, %v3346
    %v3348 = vpop.f32.mrf.mxu0
    %3349 = vdwg.mxu0
    %3350 = vmatpush.bf16.msra.mxu0 %v2741
    %3351 = vmatpush.bf16.msra.mxu0 %v2733
    %3352 = vmatpush.bf16.msra.mxu0 %v2725
    %3353 = vmatpush.bf16.msra.mxu0 %v2717
    %3354 = vmatpush.bf16.msra.mxu0 %v2709
    %3355 = vmatpush.bf16.msra.mxu0 %v2701
    %3356 = vmatpush.bf16.msra.mxu0 %v2693
    %3357 = vmatpush.bf16.msra.mxu0 %v2685
    %3358 = vmatmul.bf16.gmra.mxu0 %v1508
    %v3359 = vpop.f32.mrf.mxu0
    %v3360 = vadd.f32 %v3347, %v3359
    %v3361 = vpop.f32.mrf.mxu0
    %3362 = vdwg.mxu0
    %3363 = vmatpush.bf16.msra.mxu0 %v2805
    %3364 = vmatpush.bf16.msra.mxu0 %v2797
    %3365 = vmatpush.bf16.msra.mxu0 %v2789
    %3366 = vmatpush.bf16.msra.mxu0 %v2781
    %3367 = vmatpush.bf16.msra.mxu0 %v2773
    %3368 = vmatpush.bf16.msra.mxu0 %v2765
    %3369 = vmatpush.bf16.msra.mxu0 %v2757
    %3370 = vmatpush.bf16.msra.mxu0 %v2749
    %3371 = vmatmul.bf16.gmra.mxu0 %v1509
    %v3372 = vpop.f32.mrf.mxu0
    %v3373 = vadd.f32 %v3360, %v3372
    %v3374 = vpop.f32.mrf.mxu0
    %3375 = vdwg.mxu0
    %3376 = vmatpush.bf16.msra.mxu0 %v2614
    %3377 = vmatpush.bf16.msra.mxu0 %v2606
    %3378 = vmatpush.bf16.msra.mxu0 %v2598
    %3379 = vmatpush.bf16.msra.mxu0 %v2590
    %3380 = vmatpush.bf16.msra.mxu0 %v2582
    %3381 = vmatpush.bf16.msra.mxu0 %v2574
    %3382 = vmatpush.bf16.msra.mxu0 %v2566
    %3383 = vmatpush.bf16.msra.mxu0 %v2558
    %3384 = vmatmul.bf16.gmra.mxu0 %v1506
    %v3385 = vpop.f32.mrf.mxu0
    %v3386 = vadd.f32 %v1774, %v3385
    %v3387 = vpop.f32.mrf.mxu0
    %3388 = vdwg.mxu0
    %3389 = vmatpush.bf16.msra.mxu0 %v2678
    %3390 = vmatpush.bf16.msra.mxu0 %v2670
    %3391 = vmatpush.bf16.msra.mxu0 %v2662
    %3392 = vmatpush.bf16.msra.mxu0 %v2654
    %3393 = vmatpush.bf16.msra.mxu0 %v2646
    %3394 = vmatpush.bf16.msra.mxu0 %v2638
    %3395 = vmatpush.bf16.msra.mxu0 %v2630
    %3396 = vmatpush.bf16.msra.mxu0 %v2622
    %3397 = vmatmul.bf16.gmra.mxu0 %v1507
    %v3398 = vpop.f32.mrf.mxu0
    %v3399 = vadd.f32 %v3386, %v3398
    %v3400 = vpop.f32.mrf.mxu0
    %3401 = vdwg.mxu0
    %3402 = vmatpush.bf16.msra.mxu0 %v2742
    %3403 = vmatpush.bf16.msra.mxu0 %v2734
    %3404 = vmatpush.bf16.msra.mxu0 %v2726
    %3405 = vmatpush.bf16.msra.mxu0 %v2718
    %3406 = vmatpush.bf16.msra.mxu0 %v2710
    %3407 = vmatpush.bf16.msra.mxu0 %v2702
    %3408 = vmatpush.bf16.msra.mxu0 %v2694
    %3409 = vmatpush.bf16.msra.mxu0 %v2686
    %3410 = vmatmul.bf16.gmra.mxu0 %v1508
    %v3411 = vpop.f32.mrf.mxu0
    %v3412 = vadd.f32 %v3399, %v3411
    %v3413 = vpop.f32.mrf.mxu0
    %3414 = vdwg.mxu0
    %3415 = vmatpush.bf16.msra.mxu0 %v2806
    %3416 = vmatpush.bf16.msra.mxu0 %v2798
    %3417 = vmatpush.bf16.msra.mxu0 %v2790
    %3418 = vmatpush.bf16.msra.mxu0 %v2782
    %3419 = vmatpush.bf16.msra.mxu0 %v2774
    %3420 = vmatpush.bf16.msra.mxu0 %v2766
    %3421 = vmatpush.bf16.msra.mxu0 %v2758
    %3422 = vmatpush.bf16.msra.mxu0 %v2750
    %3423 = vmatmul.bf16.gmra.mxu0 %v1509
    %v3424 = vpop.f32.mrf.mxu0
    %v3425 = vadd.f32 %v3412, %v3424
    %v3426 = vpop.f32.mrf.mxu0
    %3427 = vdwg.mxu0
    %3428 = vmatpush.bf16.msra.mxu0 %v2615
    %3429 = vmatpush.bf16.msra.mxu0 %v2607
    %3430 = vmatpush.bf16.msra.mxu0 %v2599
    %3431 = vmatpush.bf16.msra.mxu0 %v2591
    %3432 = vmatpush.bf16.msra.mxu0 %v2583
    %3433 = vmatpush.bf16.msra.mxu0 %v2575
    %3434 = vmatpush.bf16.msra.mxu0 %v2567
    %3435 = vmatpush.bf16.msra.mxu0 %v2559
    %3436 = vmatmul.bf16.gmra.mxu0 %v1506
    %v3437 = vpop.f32.mrf.mxu0
    %v3438 = vadd.f32 %v1775, %v3437
    %v3439 = vpop.f32.mrf.mxu0
    %3440 = vdwg.mxu0
    %3441 = vmatpush.bf16.msra.mxu0 %v2679
    %3442 = vmatpush.bf16.msra.mxu0 %v2671
    %3443 = vmatpush.bf16.msra.mxu0 %v2663
    %3444 = vmatpush.bf16.msra.mxu0 %v2655
    %3445 = vmatpush.bf16.msra.mxu0 %v2647
    %3446 = vmatpush.bf16.msra.mxu0 %v2639
    %3447 = vmatpush.bf16.msra.mxu0 %v2631
    %3448 = vmatpush.bf16.msra.mxu0 %v2623
    %3449 = vmatmul.bf16.gmra.mxu0 %v1507
    %v3450 = vpop.f32.mrf.mxu0
    %v3451 = vadd.f32 %v3438, %v3450
    %v3452 = vpop.f32.mrf.mxu0
    %3453 = vdwg.mxu0
    %3454 = vmatpush.bf16.msra.mxu0 %v2743
    %3455 = vmatpush.bf16.msra.mxu0 %v2735
    %3456 = vmatpush.bf16.msra.mxu0 %v2727
    %3457 = vmatpush.bf16.msra.mxu0 %v2719
    %3458 = vmatpush.bf16.msra.mxu0 %v2711
    %3459 = vmatpush.bf16.msra.mxu0 %v2703
    %3460 = vmatpush.bf16.msra.mxu0 %v2695
    %3461 = vmatpush.bf16.msra.mxu0 %v2687
    %3462 = vmatmul.bf16.gmra.mxu0 %v1508
    %v3463 = vpop.f32.mrf.mxu0
    %v3464 = vadd.f32 %v3451, %v3463
    %v3465 = vpop.f32.mrf.mxu0
    %3466 = vdwg.mxu0
    %3467 = vmatpush.bf16.msra.mxu0 %v2807
    %3468 = vmatpush.bf16.msra.mxu0 %v2799
    %3469 = vmatpush.bf16.msra.mxu0 %v2791
    %3470 = vmatpush.bf16.msra.mxu0 %v2783
    %3471 = vmatpush.bf16.msra.mxu0 %v2775
    %3472 = vmatpush.bf16.msra.mxu0 %v2767
    %3473 = vmatpush.bf16.msra.mxu0 %v2759
    %3474 = vmatpush.bf16.msra.mxu0 %v2751
    %3475 = vmatmul.bf16.gmra.mxu0 %v1509
    %v3476 = vpop.f32.mrf.mxu0
    %v3477 = vadd.f32 %v3464, %v3476
    %v3478 = vpop.f32.mrf.mxu0
    %3479 = vdwg.mxu0
    %v3480 = vmax.f32 %v3113, 0.0
    %v3481 = vmax.f32 %v3165, 0.0
    %v3482 = vmax.f32 %v3217, 0.0
    %v3483 = vmax.f32 %v3269, 0.0
    %v3484 = vmax.f32 %v3321, 0.0
    %v3485 = vmax.f32 %v3373, 0.0
    %v3486 = vmax.f32 %v3425, 0.0
    %v3487 = vmax.f32 %v3477, 0.0
    %v3488 = vpack.c.bf16 %v3480, %v3480
    %v3489 = vpack.c.bf16 %v3481, %v3481
    %v3490 = vpack.c.bf16 %v3482, %v3482
    %v3491 = vpack.c.bf16 %v3483, %v3483
    %v3492 = vpack.c.bf16 %v3484, %v3484
    %v3493 = vpack.c.bf16 %v3485, %v3485
    %v3494 = vpack.c.bf16 %v3486, %v3486
    %v3495 = vpack.c.bf16 %v3487, %v3487
    %v3496 = vld [vmem:[#allocation23] sm:$0xff]
    %v3497 = vld [vmem:[#allocation23 + $0x8] sm:$0xff]
    %v3498 = vld [vmem:[#allocation23 + $0x10] sm:$0xff]
    %v3499 = vld [vmem:[#allocation23 + $0x18] sm:$0xff]
    %v3500 = vld [vmem:[#allocation23 + $0x20] sm:$0xff]
    %v3501 = vld [vmem:[#allocation23 + $0x28] sm:$0xff]
    %v3502 = vld [vmem:[#allocation23 + $0x30] sm:$0xff]
    %v3503 = vld [vmem:[#allocation23 + $0x38] sm:$0xff]
    %v3504 = vld [vmem:[#allocation23 + $0x40] sm:$0xff]
    %v3505 = vld [vmem:[#allocation23 + $0x48] sm:$0xff]
    %v3506 = vld [vmem:[#allocation23 + $0x50] sm:$0xff]
    %v3507 = vld [vmem:[#allocation23 + $0x58] sm:$0xff]
    %v3508 = vld [vmem:[#allocation23 + $0x60] sm:$0xff]
    %v3509 = vld [vmem:[#allocation23 + $0x68] sm:$0xff]
    %v3510 = vld [vmem:[#allocation23 + $0x70] sm:$0xff]
    %v3511 = vld [vmem:[#allocation23 + $0x78] sm:$0xff]
    %v3512 = vld [vmem:[#allocation23 + $0x80] sm:$0xff]
    %v3513 = vld [vmem:[#allocation23 + $0x88] sm:$0xff]
    %v3514 = vld [vmem:[#allocation23 + $0x90] sm:$0xff]
    %v3515 = vld [vmem:[#allocation23 + $0x98] sm:$0xff]
    %v3516 = vld [vmem:[#allocation23 + $0xa0] sm:$0xff]
    %v3517 = vld [vmem:[#allocation23 + $0xa8] sm:$0xff]
    %v3518 = vld [vmem:[#allocation23 + $0xb0] sm:$0xff]
    %v3519 = vld [vmem:[#allocation23 + $0xb8] sm:$0xff]
    %v3520 = vld [vmem:[#allocation23 + $0xc0] sm:$0xff]
    %v3521 = vld [vmem:[#allocation23 + $0xc8] sm:$0xff]
    %v3522 = vld [vmem:[#allocation23 + $0xd0] sm:$0xff]
    %v3523 = vld [vmem:[#allocation23 + $0xd8] sm:$0xff]
    %v3524 = vld [vmem:[#allocation23 + $0xe0] sm:$0xff]
    %v3525 = vld [vmem:[#allocation23 + $0xe8] sm:$0xff]
    %v3526 = vld [vmem:[#allocation23 + $0xf0] sm:$0xff]
    %v3527 = vld [vmem:[#allocation23 + $0xf8] sm:$0xff]
    %v3528 = vld [vmem:[#allocation23 + $0x100] sm:$0xff]
    %v3529 = vld [vmem:[#allocation23 + $0x108] sm:$0xff]
    %v3530 = vld [vmem:[#allocation23 + $0x110] sm:$0xff]
    %v3531 = vld [vmem:[#allocation23 + $0x118] sm:$0xff]
    %v3532 = vld [vmem:[#allocation23 + $0x120] sm:$0xff]
    %v3533 = vld [vmem:[#allocation23 + $0x128] sm:$0xff]
    %v3534 = vld [vmem:[#allocation23 + $0x130] sm:$0xff]
    %v3535 = vld [vmem:[#allocation23 + $0x138] sm:$0xff]
    %v3536 = vld [vmem:[#allocation23 + $0x140] sm:$0xff]
    %v3537 = vld [vmem:[#allocation23 + $0x148] sm:$0xff]
    %v3538 = vld [vmem:[#allocation23 + $0x150] sm:$0xff]
    %v3539 = vld [vmem:[#allocation23 + $0x158] sm:$0xff]
    %v3540 = vld [vmem:[#allocation23 + $0x160] sm:$0xff]
    %v3541 = vld [vmem:[#allocation23 + $0x168] sm:$0xff]
    %v3542 = vld [vmem:[#allocation23 + $0x170] sm:$0xff]
    %v3543 = vld [vmem:[#allocation23 + $0x178] sm:$0xff]
    %v3544 = vld [vmem:[#allocation23 + $0x180] sm:$0xff]
    %v3545 = vld [vmem:[#allocation23 + $0x188] sm:$0xff]
    %v3546 = vld [vmem:[#allocation23 + $0x190] sm:$0xff]
    %v3547 = vld [vmem:[#allocation23 + $0x198] sm:$0xff]
    %v3548 = vld [vmem:[#allocation23 + $0x1a0] sm:$0xff]
    %v3549 = vld [vmem:[#allocation23 + $0x1a8] sm:$0xff]
    %v3550 = vld [vmem:[#allocation23 + $0x1b0] sm:$0xff]
    %v3551 = vld [vmem:[#allocation23 + $0x1b8] sm:$0xff]
    %v3552 = vld [vmem:[#allocation23 + $0x1c0] sm:$0xff]
    %v3553 = vld [vmem:[#allocation23 + $0x1c8] sm:$0xff]
    %v3554 = vld [vmem:[#allocation23 + $0x1d0] sm:$0xff]
    %v3555 = vld [vmem:[#allocation23 + $0x1d8] sm:$0xff]
    %v3556 = vld [vmem:[#allocation23 + $0x1e0] sm:$0xff]
    %v3557 = vld [vmem:[#allocation23 + $0x1e8] sm:$0xff]
    %v3558 = vld [vmem:[#allocation23 + $0x1f0] sm:$0xff]
    %v3559 = vld [vmem:[#allocation23 + $0x1f8] sm:$0xff]
    %v3560 = vld [vmem:[#allocation23 + $0x200] sm:$0xff]
    %v3561 = vld [vmem:[#allocation23 + $0x208] sm:$0xff]
    %v3562 = vld [vmem:[#allocation23 + $0x210] sm:$0xff]
    %v3563 = vld [vmem:[#allocation23 + $0x218] sm:$0xff]
    %v3564 = vld [vmem:[#allocation23 + $0x220] sm:$0xff]
    %v3565 = vld [vmem:[#allocation23 + $0x228] sm:$0xff]
    %v3566 = vld [vmem:[#allocation23 + $0x230] sm:$0xff]
    %v3567 = vld [vmem:[#allocation23 + $0x238] sm:$0xff]
    %v3568 = vld [vmem:[#allocation23 + $0x240] sm:$0xff]
    %v3569 = vld [vmem:[#allocation23 + $0x248] sm:$0xff]
    %v3570 = vld [vmem:[#allocation23 + $0x250] sm:$0xff]
    %v3571 = vld [vmem:[#allocation23 + $0x258] sm:$0xff]
    %v3572 = vld [vmem:[#allocation23 + $0x260] sm:$0xff]
    %v3573 = vld [vmem:[#allocation23 + $0x268] sm:$0xff]
    %v3574 = vld [vmem:[#allocation23 + $0x270] sm:$0xff]
    %v3575 = vld [vmem:[#allocation23 + $0x278] sm:$0xff]
    %v3576 = vld [vmem:[#allocation23 + $0x280] sm:$0xff]
    %v3577 = vld [vmem:[#allocation23 + $0x288] sm:$0xff]
    %v3578 = vld [vmem:[#allocation23 + $0x290] sm:$0xff]
    %v3579 = vld [vmem:[#allocation23 + $0x298] sm:$0xff]
    %v3580 = vld [vmem:[#allocation23 + $0x2a0] sm:$0xff]
    %v3581 = vld [vmem:[#allocation23 + $0x2a8] sm:$0xff]
    %v3582 = vld [vmem:[#allocation23 + $0x2b0] sm:$0xff]
    %v3583 = vld [vmem:[#allocation23 + $0x2b8] sm:$0xff]
    %v3584 = vld [vmem:[#allocation23 + $0x2c0] sm:$0xff]
    %v3585 = vld [vmem:[#allocation23 + $0x2c8] sm:$0xff]
    %v3586 = vld [vmem:[#allocation23 + $0x2d0] sm:$0xff]
    %v3587 = vld [vmem:[#allocation23 + $0x2d8] sm:$0xff]
    %v3588 = vld [vmem:[#allocation23 + $0x2e0] sm:$0xff]
    %v3589 = vld [vmem:[#allocation23 + $0x2e8] sm:$0xff]
    %v3590 = vld [vmem:[#allocation23 + $0x2f0] sm:$0xff]
    %v3591 = vld [vmem:[#allocation23 + $0x2f8] sm:$0xff]
    %v3592 = vld [vmem:[#allocation23 + $0x300] sm:$0xff]
    %v3593 = vld [vmem:[#allocation23 + $0x308] sm:$0xff]
    %v3594 = vld [vmem:[#allocation23 + $0x310] sm:$0xff]
    %v3595 = vld [vmem:[#allocation23 + $0x318] sm:$0xff]
    %v3596 = vld [vmem:[#allocation23 + $0x320] sm:$0xff]
    %v3597 = vld [vmem:[#allocation23 + $0x328] sm:$0xff]
    %v3598 = vld [vmem:[#allocation23 + $0x330] sm:$0xff]
    %v3599 = vld [vmem:[#allocation23 + $0x338] sm:$0xff]
    %v3600 = vld [vmem:[#allocation23 + $0x340] sm:$0xff]
    %v3601 = vld [vmem:[#allocation23 + $0x348] sm:$0xff]
    %v3602 = vld [vmem:[#allocation23 + $0x350] sm:$0xff]
    %v3603 = vld [vmem:[#allocation23 + $0x358] sm:$0xff]
    %v3604 = vld [vmem:[#allocation23 + $0x360] sm:$0xff]
    %v3605 = vld [vmem:[#allocation23 + $0x368] sm:$0xff]
    %v3606 = vld [vmem:[#allocation23 + $0x370] sm:$0xff]
    %v3607 = vld [vmem:[#allocation23 + $0x378] sm:$0xff]
    %v3608 = vld [vmem:[#allocation23 + $0x380] sm:$0xff]
    %v3609 = vld [vmem:[#allocation23 + $0x388] sm:$0xff]
    %v3610 = vld [vmem:[#allocation23 + $0x390] sm:$0xff]
    %v3611 = vld [vmem:[#allocation23 + $0x398] sm:$0xff]
    %v3612 = vld [vmem:[#allocation23 + $0x3a0] sm:$0xff]
    %v3613 = vld [vmem:[#allocation23 + $0x3a8] sm:$0xff]
    %v3614 = vld [vmem:[#allocation23 + $0x3b0] sm:$0xff]
    %v3615 = vld [vmem:[#allocation23 + $0x3b8] sm:$0xff]
    %v3616 = vld [vmem:[#allocation23 + $0x3c0] sm:$0xff]
    %v3617 = vld [vmem:[#allocation23 + $0x3c8] sm:$0xff]
    %v3618 = vld [vmem:[#allocation23 + $0x3d0] sm:$0xff]
    %v3619 = vld [vmem:[#allocation23 + $0x3d8] sm:$0xff]
    %v3620 = vld [vmem:[#allocation23 + $0x3e0] sm:$0xff]
    %v3621 = vld [vmem:[#allocation23 + $0x3e8] sm:$0xff]
    %v3622 = vld [vmem:[#allocation23 + $0x3f0] sm:$0xff]
    %v3623 = vld [vmem:[#allocation23 + $0x3f8] sm:$0xff]
    %v3624 = vld [vmem:[#allocation23 + $0x400] sm:$0xff]
    %v3625 = vld [vmem:[#allocation23 + $0x408] sm:$0xff]
    %v3626 = vld [vmem:[#allocation23 + $0x410] sm:$0xff]
    %v3627 = vld [vmem:[#allocation23 + $0x418] sm:$0xff]
    %v3628 = vld [vmem:[#allocation23 + $0x420] sm:$0xff]
    %v3629 = vld [vmem:[#allocation23 + $0x428] sm:$0xff]
    %v3630 = vld [vmem:[#allocation23 + $0x430] sm:$0xff]
    %v3631 = vld [vmem:[#allocation23 + $0x438] sm:$0xff]
    %v3632 = vld [vmem:[#allocation23 + $0x440] sm:$0xff]
    %v3633 = vld [vmem:[#allocation23 + $0x448] sm:$0xff]
    %v3634 = vld [vmem:[#allocation23 + $0x450] sm:$0xff]
    %v3635 = vld [vmem:[#allocation23 + $0x458] sm:$0xff]
    %v3636 = vld [vmem:[#allocation23 + $0x460] sm:$0xff]
    %v3637 = vld [vmem:[#allocation23 + $0x468] sm:$0xff]
    %v3638 = vld [vmem:[#allocation23 + $0x470] sm:$0xff]
    %v3639 = vld [vmem:[#allocation23 + $0x478] sm:$0xff]
    %v3640 = vld [vmem:[#allocation23 + $0x480] sm:$0xff]
    %v3641 = vld [vmem:[#allocation23 + $0x488] sm:$0xff]
    %v3642 = vld [vmem:[#allocation23 + $0x490] sm:$0xff]
    %v3643 = vld [vmem:[#allocation23 + $0x498] sm:$0xff]
    %v3644 = vld [vmem:[#allocation23 + $0x4a0] sm:$0xff]
    %v3645 = vld [vmem:[#allocation23 + $0x4a8] sm:$0xff]
    %v3646 = vld [vmem:[#allocation23 + $0x4b0] sm:$0xff]
    %v3647 = vld [vmem:[#allocation23 + $0x4b8] sm:$0xff]
    %v3648 = vld [vmem:[#allocation23 + $0x4c0] sm:$0xff]
    %v3649 = vld [vmem:[#allocation23 + $0x4c8] sm:$0xff]
    %v3650 = vld [vmem:[#allocation23 + $0x4d0] sm:$0xff]
    %v3651 = vld [vmem:[#allocation23 + $0x4d8] sm:$0xff]
    %v3652 = vld [vmem:[#allocation23 + $0x4e0] sm:$0xff]
    %v3653 = vld [vmem:[#allocation23 + $0x4e8] sm:$0xff]
    %v3654 = vld [vmem:[#allocation23 + $0x4f0] sm:$0xff]
    %v3655 = vld [vmem:[#allocation23 + $0x4f8] sm:$0xff]
    %v3656 = vld [vmem:[#allocation23 + $0x500] sm:$0xff]
    %v3657 = vld [vmem:[#allocation23 + $0x508] sm:$0xff]
    %v3658 = vld [vmem:[#allocation23 + $0x510] sm:$0xff]
    %v3659 = vld [vmem:[#allocation23 + $0x518] sm:$0xff]
    %v3660 = vld [vmem:[#allocation23 + $0x520] sm:$0xff]
    %v3661 = vld [vmem:[#allocation23 + $0x528] sm:$0xff]
    %v3662 = vld [vmem:[#allocation23 + $0x530] sm:$0xff]
    %v3663 = vld [vmem:[#allocation23 + $0x538] sm:$0xff]
    %v3664 = vld [vmem:[#allocation23 + $0x540] sm:$0xff]
    %v3665 = vld [vmem:[#allocation23 + $0x548] sm:$0xff]
    %v3666 = vld [vmem:[#allocation23 + $0x550] sm:$0xff]
    %v3667 = vld [vmem:[#allocation23 + $0x558] sm:$0xff]
    %v3668 = vld [vmem:[#allocation23 + $0x560] sm:$0xff]
    %v3669 = vld [vmem:[#allocation23 + $0x568] sm:$0xff]
    %v3670 = vld [vmem:[#allocation23 + $0x570] sm:$0xff]
    %v3671 = vld [vmem:[#allocation23 + $0x578] sm:$0xff]
    %v3672 = vld [vmem:[#allocation23 + $0x580] sm:$0xff]
    %v3673 = vld [vmem:[#allocation23 + $0x588] sm:$0xff]
    %v3674 = vld [vmem:[#allocation23 + $0x590] sm:$0xff]
    %v3675 = vld [vmem:[#allocation23 + $0x598] sm:$0xff]
    %v3676 = vld [vmem:[#allocation23 + $0x5a0] sm:$0xff]
    %v3677 = vld [vmem:[#allocation23 + $0x5a8] sm:$0xff]
    %v3678 = vld [vmem:[#allocation23 + $0x5b0] sm:$0xff]
    %v3679 = vld [vmem:[#allocation23 + $0x5b8] sm:$0xff]
    %v3680 = vld [vmem:[#allocation23 + $0x5c0] sm:$0xff]
    %v3681 = vld [vmem:[#allocation23 + $0x5c8] sm:$0xff]
    %v3682 = vld [vmem:[#allocation23 + $0x5d0] sm:$0xff]
    %v3683 = vld [vmem:[#allocation23 + $0x5d8] sm:$0xff]
    %v3684 = vld [vmem:[#allocation23 + $0x5e0] sm:$0xff]
    %v3685 = vld [vmem:[#allocation23 + $0x5e8] sm:$0xff]
    %v3686 = vld [vmem:[#allocation23 + $0x5f0] sm:$0xff]
    %v3687 = vld [vmem:[#allocation23 + $0x5f8] sm:$0xff]
    %v3688 = vld [vmem:[#allocation23 + $0x600] sm:$0xff]
    %v3689 = vld [vmem:[#allocation23 + $0x608] sm:$0xff]
    %v3690 = vld [vmem:[#allocation23 + $0x610] sm:$0xff]
    %v3691 = vld [vmem:[#allocation23 + $0x618] sm:$0xff]
    %v3692 = vld [vmem:[#allocation23 + $0x620] sm:$0xff]
    %v3693 = vld [vmem:[#allocation23 + $0x628] sm:$0xff]
    %v3694 = vld [vmem:[#allocation23 + $0x630] sm:$0xff]
    %v3695 = vld [vmem:[#allocation23 + $0x638] sm:$0xff]
    %v3696 = vld [vmem:[#allocation23 + $0x640] sm:$0xff]
    %v3697 = vld [vmem:[#allocation23 + $0x648] sm:$0xff]
    %v3698 = vld [vmem:[#allocation23 + $0x650] sm:$0xff]
    %v3699 = vld [vmem:[#allocation23 + $0x658] sm:$0xff]
    %v3700 = vld [vmem:[#allocation23 + $0x660] sm:$0xff]
    %v3701 = vld [vmem:[#allocation23 + $0x668] sm:$0xff]
    %v3702 = vld [vmem:[#allocation23 + $0x670] sm:$0xff]
    %v3703 = vld [vmem:[#allocation23 + $0x678] sm:$0xff]
    %v3704 = vld [vmem:[#allocation23 + $0x680] sm:$0xff]
    %v3705 = vld [vmem:[#allocation23 + $0x688] sm:$0xff]
    %v3706 = vld [vmem:[#allocation23 + $0x690] sm:$0xff]
    %v3707 = vld [vmem:[#allocation23 + $0x698] sm:$0xff]
    %v3708 = vld [vmem:[#allocation23 + $0x6a0] sm:$0xff]
    %v3709 = vld [vmem:[#allocation23 + $0x6a8] sm:$0xff]
    %v3710 = vld [vmem:[#allocation23 + $0x6b0] sm:$0xff]
    %v3711 = vld [vmem:[#allocation23 + $0x6b8] sm:$0xff]
    %v3712 = vld [vmem:[#allocation23 + $0x6c0] sm:$0xff]
    %v3713 = vld [vmem:[#allocation23 + $0x6c8] sm:$0xff]
    %v3714 = vld [vmem:[#allocation23 + $0x6d0] sm:$0xff]
    %v3715 = vld [vmem:[#allocation23 + $0x6d8] sm:$0xff]
    %v3716 = vld [vmem:[#allocation23 + $0x6e0] sm:$0xff]
    %v3717 = vld [vmem:[#allocation23 + $0x6e8] sm:$0xff]
    %v3718 = vld [vmem:[#allocation23 + $0x6f0] sm:$0xff]
    %v3719 = vld [vmem:[#allocation23 + $0x6f8] sm:$0xff]
    %v3720 = vld [vmem:[#allocation23 + $0x700] sm:$0xff]
    %v3721 = vld [vmem:[#allocation23 + $0x708] sm:$0xff]
    %v3722 = vld [vmem:[#allocation23 + $0x710] sm:$0xff]
    %v3723 = vld [vmem:[#allocation23 + $0x718] sm:$0xff]
    %v3724 = vld [vmem:[#allocation23 + $0x720] sm:$0xff]
    %v3725 = vld [vmem:[#allocation23 + $0x728] sm:$0xff]
    %v3726 = vld [vmem:[#allocation23 + $0x730] sm:$0xff]
    %v3727 = vld [vmem:[#allocation23 + $0x738] sm:$0xff]
    %v3728 = vld [vmem:[#allocation23 + $0x740] sm:$0xff]
    %v3729 = vld [vmem:[#allocation23 + $0x748] sm:$0xff]
    %v3730 = vld [vmem:[#allocation23 + $0x750] sm:$0xff]
    %v3731 = vld [vmem:[#allocation23 + $0x758] sm:$0xff]
    %v3732 = vld [vmem:[#allocation23 + $0x760] sm:$0xff]
    %v3733 = vld [vmem:[#allocation23 + $0x768] sm:$0xff]
    %v3734 = vld [vmem:[#allocation23 + $0x770] sm:$0xff]
    %v3735 = vld [vmem:[#allocation23 + $0x778] sm:$0xff]
    %v3736 = vld [vmem:[#allocation23 + $0x780] sm:$0xff]
    %v3737 = vld [vmem:[#allocation23 + $0x788] sm:$0xff]
    %v3738 = vld [vmem:[#allocation23 + $0x790] sm:$0xff]
    %v3739 = vld [vmem:[#allocation23 + $0x798] sm:$0xff]
    %v3740 = vld [vmem:[#allocation23 + $0x7a0] sm:$0xff]
    %v3741 = vld [vmem:[#allocation23 + $0x7a8] sm:$0xff]
    %v3742 = vld [vmem:[#allocation23 + $0x7b0] sm:$0xff]
    %v3743 = vld [vmem:[#allocation23 + $0x7b8] sm:$0xff]
    %v3744 = vld [vmem:[#allocation23 + $0x7c0] sm:$0xff]
    %v3745 = vld [vmem:[#allocation23 + $0x7c8] sm:$0xff]
    %v3746 = vld [vmem:[#allocation23 + $0x7d0] sm:$0xff]
    %v3747 = vld [vmem:[#allocation23 + $0x7d8] sm:$0xff]
    %v3748 = vld [vmem:[#allocation23 + $0x7e0] sm:$0xff]
    %v3749 = vld [vmem:[#allocation23 + $0x7e8] sm:$0xff]
    %v3750 = vld [vmem:[#allocation23 + $0x7f0] sm:$0xff]
    %v3751 = vld [vmem:[#allocation23 + $0x7f8] sm:$0xff]
    %v3752 = vld [vmem:[#allocation23 + $0x800] sm:$0xff]
    %v3753 = vld [vmem:[#allocation23 + $0x808] sm:$0xff]
    %v3754 = vld [vmem:[#allocation23 + $0x810] sm:$0xff]
    %v3755 = vld [vmem:[#allocation23 + $0x818] sm:$0xff]
    %v3756 = vld [vmem:[#allocation23 + $0x820] sm:$0xff]
    %v3757 = vld [vmem:[#allocation23 + $0x828] sm:$0xff]
    %v3758 = vld [vmem:[#allocation23 + $0x830] sm:$0xff]
    %v3759 = vld [vmem:[#allocation23 + $0x838] sm:$0xff]
    %v3760 = vld [vmem:[#allocation23 + $0x840] sm:$0xff]
    %v3761 = vld [vmem:[#allocation23 + $0x848] sm:$0xff]
    %v3762 = vld [vmem:[#allocation23 + $0x850] sm:$0xff]
    %v3763 = vld [vmem:[#allocation23 + $0x858] sm:$0xff]
    %v3764 = vld [vmem:[#allocation23 + $0x860] sm:$0xff]
    %v3765 = vld [vmem:[#allocation23 + $0x868] sm:$0xff]
    %v3766 = vld [vmem:[#allocation23 + $0x870] sm:$0xff]
    %v3767 = vld [vmem:[#allocation23 + $0x878] sm:$0xff]
    %v3768 = vld [vmem:[#allocation23 + $0x880] sm:$0xff]
    %v3769 = vld [vmem:[#allocation23 + $0x888] sm:$0xff]
    %v3770 = vld [vmem:[#allocation23 + $0x890] sm:$0xff]
    %v3771 = vld [vmem:[#allocation23 + $0x898] sm:$0xff]
    %v3772 = vld [vmem:[#allocation23 + $0x8a0] sm:$0xff]
    %v3773 = vld [vmem:[#allocation23 + $0x8a8] sm:$0xff]
    %v3774 = vld [vmem:[#allocation23 + $0x8b0] sm:$0xff]
    %v3775 = vld [vmem:[#allocation23 + $0x8b8] sm:$0xff]
    %v3776 = vld [vmem:[#allocation23 + $0x8c0] sm:$0xff]
    %v3777 = vld [vmem:[#allocation23 + $0x8c8] sm:$0xff]
    %v3778 = vld [vmem:[#allocation23 + $0x8d0] sm:$0xff]
    %v3779 = vld [vmem:[#allocation23 + $0x8d8] sm:$0xff]
    %v3780 = vld [vmem:[#allocation23 + $0x8e0] sm:$0xff]
    %v3781 = vld [vmem:[#allocation23 + $0x8e8] sm:$0xff]
    %v3782 = vld [vmem:[#allocation23 + $0x8f0] sm:$0xff]
    %v3783 = vld [vmem:[#allocation23 + $0x8f8] sm:$0xff]
    %v3784 = vld [vmem:[#allocation23 + $0x900] sm:$0xff]
    %v3785 = vld [vmem:[#allocation23 + $0x908] sm:$0xff]
    %v3786 = vld [vmem:[#allocation23 + $0x910] sm:$0xff]
    %v3787 = vld [vmem:[#allocation23 + $0x918] sm:$0xff]
    %v3788 = vld [vmem:[#allocation23 + $0x920] sm:$0xff]
    %v3789 = vld [vmem:[#allocation23 + $0x928] sm:$0xff]
    %v3790 = vld [vmem:[#allocation23 + $0x930] sm:$0xff]
    %v3791 = vld [vmem:[#allocation23 + $0x938] sm:$0xff]
    %v3792 = vld [vmem:[#allocation23 + $0x940] sm:$0xff]
    %v3793 = vld [vmem:[#allocation23 + $0x948] sm:$0xff]
    %v3794 = vld [vmem:[#allocation23 + $0x950] sm:$0xff]
    %v3795 = vld [vmem:[#allocation23 + $0x958] sm:$0xff]
    %v3796 = vld [vmem:[#allocation23 + $0x960] sm:$0xff]
    %v3797 = vld [vmem:[#allocation23 + $0x968] sm:$0xff]
    %v3798 = vld [vmem:[#allocation23 + $0x970] sm:$0xff]
    %v3799 = vld [vmem:[#allocation23 + $0x978] sm:$0xff]
    %v3800 = vld [vmem:[#allocation23 + $0x980] sm:$0xff]
    %v3801 = vld [vmem:[#allocation23 + $0x988] sm:$0xff]
    %v3802 = vld [vmem:[#allocation23 + $0x990] sm:$0xff]
    %v3803 = vld [vmem:[#allocation23 + $0x998] sm:$0xff]
    %v3804 = vld [vmem:[#allocation23 + $0x9a0] sm:$0xff]
    %v3805 = vld [vmem:[#allocation23 + $0x9a8] sm:$0xff]
    %v3806 = vld [vmem:[#allocation23 + $0x9b0] sm:$0xff]
    %v3807 = vld [vmem:[#allocation23 + $0x9b8] sm:$0xff]
    %v3808 = vld [vmem:[#allocation23 + $0x9c0] sm:$0xff]
    %v3809 = vld [vmem:[#allocation23 + $0x9c8] sm:$0xff]
    %v3810 = vld [vmem:[#allocation23 + $0x9d0] sm:$0xff]
    %v3811 = vld [vmem:[#allocation23 + $0x9d8] sm:$0xff]
    %v3812 = vld [vmem:[#allocation23 + $0x9e0] sm:$0xff]
    %v3813 = vld [vmem:[#allocation23 + $0x9e8] sm:$0xff]
    %v3814 = vld [vmem:[#allocation23 + $0x9f0] sm:$0xff]
    %v3815 = vld [vmem:[#allocation23 + $0x9f8] sm:$0xff]
    %v3816 = vld [vmem:[#allocation23 + $0xa00] sm:$0xff]
    %v3817 = vld [vmem:[#allocation23 + $0xa08] sm:$0xff]
    %v3818 = vld [vmem:[#allocation23 + $0xa10] sm:$0xff]
    %v3819 = vld [vmem:[#allocation23 + $0xa18] sm:$0xff]
    %v3820 = vld [vmem:[#allocation23 + $0xa20] sm:$0xff]
    %v3821 = vld [vmem:[#allocation23 + $0xa28] sm:$0xff]
    %v3822 = vld [vmem:[#allocation23 + $0xa30] sm:$0xff]
    %v3823 = vld [vmem:[#allocation23 + $0xa38] sm:$0xff]
    %v3824 = vld [vmem:[#allocation23 + $0xa40] sm:$0xff]
    %v3825 = vld [vmem:[#allocation23 + $0xa48] sm:$0xff]
    %v3826 = vld [vmem:[#allocation23 + $0xa50] sm:$0xff]
    %v3827 = vld [vmem:[#allocation23 + $0xa58] sm:$0xff]
    %v3828 = vld [vmem:[#allocation23 + $0xa60] sm:$0xff]
    %v3829 = vld [vmem:[#allocation23 + $0xa68] sm:$0xff]
    %v3830 = vld [vmem:[#allocation23 + $0xa70] sm:$0xff]
    %v3831 = vld [vmem:[#allocation23 + $0xa78] sm:$0xff]
    %v3832 = vld [vmem:[#allocation23 + $0xa80] sm:$0xff]
    %v3833 = vld [vmem:[#allocation23 + $0xa88] sm:$0xff]
    %v3834 = vld [vmem:[#allocation23 + $0xa90] sm:$0xff]
    %v3835 = vld [vmem:[#allocation23 + $0xa98] sm:$0xff]
    %v3836 = vld [vmem:[#allocation23 + $0xaa0] sm:$0xff]
    %v3837 = vld [vmem:[#allocation23 + $0xaa8] sm:$0xff]
    %v3838 = vld [vmem:[#allocation23 + $0xab0] sm:$0xff]
    %v3839 = vld [vmem:[#allocation23 + $0xab8] sm:$0xff]
    %v3840 = vld [vmem:[#allocation23 + $0xac0] sm:$0xff]
    %v3841 = vld [vmem:[#allocation23 + $0xac8] sm:$0xff]
    %v3842 = vld [vmem:[#allocation23 + $0xad0] sm:$0xff]
    %v3843 = vld [vmem:[#allocation23 + $0xad8] sm:$0xff]
    %v3844 = vld [vmem:[#allocation23 + $0xae0] sm:$0xff]
    %v3845 = vld [vmem:[#allocation23 + $0xae8] sm:$0xff]
    %v3846 = vld [vmem:[#allocation23 + $0xaf0] sm:$0xff]
    %v3847 = vld [vmem:[#allocation23 + $0xaf8] sm:$0xff]
    %v3848 = vld [vmem:[#allocation23 + $0xb00] sm:$0xff]
    %v3849 = vld [vmem:[#allocation23 + $0xb08] sm:$0xff]
    %v3850 = vld [vmem:[#allocation23 + $0xb10] sm:$0xff]
    %v3851 = vld [vmem:[#allocation23 + $0xb18] sm:$0xff]
    %v3852 = vld [vmem:[#allocation23 + $0xb20] sm:$0xff]
    %v3853 = vld [vmem:[#allocation23 + $0xb28] sm:$0xff]
    %v3854 = vld [vmem:[#allocation23 + $0xb30] sm:$0xff]
    %v3855 = vld [vmem:[#allocation23 + $0xb38] sm:$0xff]
    %v3856 = vld [vmem:[#allocation23 + $0xb40] sm:$0xff]
    %v3857 = vld [vmem:[#allocation23 + $0xb48] sm:$0xff]
    %v3858 = vld [vmem:[#allocation23 + $0xb50] sm:$0xff]
    %v3859 = vld [vmem:[#allocation23 + $0xb58] sm:$0xff]
    %v3860 = vld [vmem:[#allocation23 + $0xb60] sm:$0xff]
    %v3861 = vld [vmem:[#allocation23 + $0xb68] sm:$0xff]
    %v3862 = vld [vmem:[#allocation23 + $0xb70] sm:$0xff]
    %v3863 = vld [vmem:[#allocation23 + $0xb78] sm:$0xff]
    %v3864 = vld [vmem:[#allocation23 + $0xb80] sm:$0xff]
    %v3865 = vld [vmem:[#allocation23 + $0xb88] sm:$0xff]
    %v3866 = vld [vmem:[#allocation23 + $0xb90] sm:$0xff]
    %v3867 = vld [vmem:[#allocation23 + $0xb98] sm:$0xff]
    %v3868 = vld [vmem:[#allocation23 + $0xba0] sm:$0xff]
    %v3869 = vld [vmem:[#allocation23 + $0xba8] sm:$0xff]
    %v3870 = vld [vmem:[#allocation23 + $0xbb0] sm:$0xff]
    %v3871 = vld [vmem:[#allocation23 + $0xbb8] sm:$0xff]
    %v3872 = vld [vmem:[#allocation23 + $0xbc0] sm:$0xff]
    %v3873 = vld [vmem:[#allocation23 + $0xbc8] sm:$0xff]
    %v3874 = vld [vmem:[#allocation23 + $0xbd0] sm:$0xff]
    %v3875 = vld [vmem:[#allocation23 + $0xbd8] sm:$0xff]
    %v3876 = vld [vmem:[#allocation23 + $0xbe0] sm:$0xff]
    %v3877 = vld [vmem:[#allocation23 + $0xbe8] sm:$0xff]
    %v3878 = vld [vmem:[#allocation23 + $0xbf0] sm:$0xff]
    %v3879 = vld [vmem:[#allocation23 + $0xbf8] sm:$0xff]
    %v3880 = vld [vmem:[#allocation23 + $0xc00] sm:$0xff]
    %v3881 = vld [vmem:[#allocation23 + $0xc08] sm:$0xff]
    %v3882 = vld [vmem:[#allocation23 + $0xc10] sm:$0xff]
    %v3883 = vld [vmem:[#allocation23 + $0xc18] sm:$0xff]
    %v3884 = vld [vmem:[#allocation23 + $0xc20] sm:$0xff]
    %v3885 = vld [vmem:[#allocation23 + $0xc28] sm:$0xff]
    %v3886 = vld [vmem:[#allocation23 + $0xc30] sm:$0xff]
    %v3887 = vld [vmem:[#allocation23 + $0xc38] sm:$0xff]
    %v3888 = vld [vmem:[#allocation23 + $0xc40] sm:$0xff]
    %v3889 = vld [vmem:[#allocation23 + $0xc48] sm:$0xff]
    %v3890 = vld [vmem:[#allocation23 + $0xc50] sm:$0xff]
    %v3891 = vld [vmem:[#allocation23 + $0xc58] sm:$0xff]
    %v3892 = vld [vmem:[#allocation23 + $0xc60] sm:$0xff]
    %v3893 = vld [vmem:[#allocation23 + $0xc68] sm:$0xff]
    %v3894 = vld [vmem:[#allocation23 + $0xc70] sm:$0xff]
    %v3895 = vld [vmem:[#allocation23 + $0xc78] sm:$0xff]
    %v3896 = vld [vmem:[#allocation23 + $0xc80] sm:$0xff]
    %v3897 = vld [vmem:[#allocation23 + $0xc88] sm:$0xff]
    %v3898 = vld [vmem:[#allocation23 + $0xc90] sm:$0xff]
    %v3899 = vld [vmem:[#allocation23 + $0xc98] sm:$0xff]
    %v3900 = vld [vmem:[#allocation23 + $0xca0] sm:$0xff]
    %v3901 = vld [vmem:[#allocation23 + $0xca8] sm:$0xff]
    %v3902 = vld [vmem:[#allocation23 + $0xcb0] sm:$0xff]
    %v3903 = vld [vmem:[#allocation23 + $0xcb8] sm:$0xff]
    %v3904 = vld [vmem:[#allocation23 + $0xcc0] sm:$0xff]
    %v3905 = vld [vmem:[#allocation23 + $0xcc8] sm:$0xff]
    %v3906 = vld [vmem:[#allocation23 + $0xcd0] sm:$0xff]
    %v3907 = vld [vmem:[#allocation23 + $0xcd8] sm:$0xff]
    %v3908 = vld [vmem:[#allocation23 + $0xce0] sm:$0xff]
    %v3909 = vld [vmem:[#allocation23 + $0xce8] sm:$0xff]
    %v3910 = vld [vmem:[#allocation23 + $0xcf0] sm:$0xff]
    %v3911 = vld [vmem:[#allocation23 + $0xcf8] sm:$0xff]
    %v3912 = vld [vmem:[#allocation23 + $0xd00] sm:$0xff]
    %v3913 = vld [vmem:[#allocation23 + $0xd08] sm:$0xff]
    %v3914 = vld [vmem:[#allocation23 + $0xd10] sm:$0xff]
    %v3915 = vld [vmem:[#allocation23 + $0xd18] sm:$0xff]
    %v3916 = vld [vmem:[#allocation23 + $0xd20] sm:$0xff]
    %v3917 = vld [vmem:[#allocation23 + $0xd28] sm:$0xff]
    %v3918 = vld [vmem:[#allocation23 + $0xd30] sm:$0xff]
    %v3919 = vld [vmem:[#allocation23 + $0xd38] sm:$0xff]
    %v3920 = vld [vmem:[#allocation23 + $0xd40] sm:$0xff]
    %v3921 = vld [vmem:[#allocation23 + $0xd48] sm:$0xff]
    %v3922 = vld [vmem:[#allocation23 + $0xd50] sm:$0xff]
    %v3923 = vld [vmem:[#allocation23 + $0xd58] sm:$0xff]
    %v3924 = vld [vmem:[#allocation23 + $0xd60] sm:$0xff]
    %v3925 = vld [vmem:[#allocation23 + $0xd68] sm:$0xff]
    %v3926 = vld [vmem:[#allocation23 + $0xd70] sm:$0xff]
    %v3927 = vld [vmem:[#allocation23 + $0xd78] sm:$0xff]
    %v3928 = vld [vmem:[#allocation23 + $0xd80] sm:$0xff]
    %v3929 = vld [vmem:[#allocation23 + $0xd88] sm:$0xff]
    %v3930 = vld [vmem:[#allocation23 + $0xd90] sm:$0xff]
    %v3931 = vld [vmem:[#allocation23 + $0xd98] sm:$0xff]
    %v3932 = vld [vmem:[#allocation23 + $0xda0] sm:$0xff]
    %v3933 = vld [vmem:[#allocation23 + $0xda8] sm:$0xff]
    %v3934 = vld [vmem:[#allocation23 + $0xdb0] sm:$0xff]
    %v3935 = vld [vmem:[#allocation23 + $0xdb8] sm:$0xff]
    %v3936 = vld [vmem:[#allocation23 + $0xdc0] sm:$0xff]
    %v3937 = vld [vmem:[#allocation23 + $0xdc8] sm:$0xff]
    %v3938 = vld [vmem:[#allocation23 + $0xdd0] sm:$0xff]
    %v3939 = vld [vmem:[#allocation23 + $0xdd8] sm:$0xff]
    %v3940 = vld [vmem:[#allocation23 + $0xde0] sm:$0xff]
    %v3941 = vld [vmem:[#allocation23 + $0xde8] sm:$0xff]
    %v3942 = vld [vmem:[#allocation23 + $0xdf0] sm:$0xff]
    %v3943 = vld [vmem:[#allocation23 + $0xdf8] sm:$0xff]
    %v3944 = vld [vmem:[#allocation23 + $0xe00] sm:$0xff]
    %v3945 = vld [vmem:[#allocation23 + $0xe08] sm:$0xff]
    %v3946 = vld [vmem:[#allocation23 + $0xe10] sm:$0xff]
    %v3947 = vld [vmem:[#allocation23 + $0xe18] sm:$0xff]
    %v3948 = vld [vmem:[#allocation23 + $0xe20] sm:$0xff]
    %v3949 = vld [vmem:[#allocation23 + $0xe28] sm:$0xff]
    %v3950 = vld [vmem:[#allocation23 + $0xe30] sm:$0xff]
    %v3951 = vld [vmem:[#allocation23 + $0xe38] sm:$0xff]
    %v3952 = vld [vmem:[#allocation23 + $0xe40] sm:$0xff]
    %v3953 = vld [vmem:[#allocation23 + $0xe48] sm:$0xff]
    %v3954 = vld [vmem:[#allocation23 + $0xe50] sm:$0xff]
    %v3955 = vld [vmem:[#allocation23 + $0xe58] sm:$0xff]
    %v3956 = vld [vmem:[#allocation23 + $0xe60] sm:$0xff]
    %v3957 = vld [vmem:[#allocation23 + $0xe68] sm:$0xff]
    %v3958 = vld [vmem:[#allocation23 + $0xe70] sm:$0xff]
    %v3959 = vld [vmem:[#allocation23 + $0xe78] sm:$0xff]
    %v3960 = vld [vmem:[#allocation23 + $0xe80] sm:$0xff]
    %v3961 = vld [vmem:[#allocation23 + $0xe88] sm:$0xff]
    %v3962 = vld [vmem:[#allocation23 + $0xe90] sm:$0xff]
    %v3963 = vld [vmem:[#allocation23 + $0xe98] sm:$0xff]
    %v3964 = vld [vmem:[#allocation23 + $0xea0] sm:$0xff]
    %v3965 = vld [vmem:[#allocation23 + $0xea8] sm:$0xff]
    %v3966 = vld [vmem:[#allocation23 + $0xeb0] sm:$0xff]
    %v3967 = vld [vmem:[#allocation23 + $0xeb8] sm:$0xff]
    %v3968 = vld [vmem:[#allocation23 + $0xec0] sm:$0xff]
    %v3969 = vld [vmem:[#allocation23 + $0xec8] sm:$0xff]
    %v3970 = vld [vmem:[#allocation23 + $0xed0] sm:$0xff]
    %v3971 = vld [vmem:[#allocation23 + $0xed8] sm:$0xff]
    %v3972 = vld [vmem:[#allocation23 + $0xee0] sm:$0xff]
    %v3973 = vld [vmem:[#allocation23 + $0xee8] sm:$0xff]
    %v3974 = vld [vmem:[#allocation23 + $0xef0] sm:$0xff]
    %v3975 = vld [vmem:[#allocation23 + $0xef8] sm:$0xff]
    %v3976 = vld [vmem:[#allocation23 + $0xf00] sm:$0xff]
    %v3977 = vld [vmem:[#allocation23 + $0xf08] sm:$0xff]
    %v3978 = vld [vmem:[#allocation23 + $0xf10] sm:$0xff]
    %v3979 = vld [vmem:[#allocation23 + $0xf18] sm:$0xff]
    %v3980 = vld [vmem:[#allocation23 + $0xf20] sm:$0xff]
    %v3981 = vld [vmem:[#allocation23 + $0xf28] sm:$0xff]
    %v3982 = vld [vmem:[#allocation23 + $0xf30] sm:$0xff]
    %v3983 = vld [vmem:[#allocation23 + $0xf38] sm:$0xff]
    %v3984 = vld [vmem:[#allocation23 + $0xf40] sm:$0xff]
    %v3985 = vld [vmem:[#allocation23 + $0xf48] sm:$0xff]
    %v3986 = vld [vmem:[#allocation23 + $0xf50] sm:$0xff]
    %v3987 = vld [vmem:[#allocation23 + $0xf58] sm:$0xff]
    %v3988 = vld [vmem:[#allocation23 + $0xf60] sm:$0xff]
    %v3989 = vld [vmem:[#allocation23 + $0xf68] sm:$0xff]
    %v3990 = vld [vmem:[#allocation23 + $0xf70] sm:$0xff]
    %v3991 = vld [vmem:[#allocation23 + $0xf78] sm:$0xff]
    %v3992 = vld [vmem:[#allocation23 + $0xf80] sm:$0xff]
    %v3993 = vld [vmem:[#allocation23 + $0xf88] sm:$0xff]
    %v3994 = vld [vmem:[#allocation23 + $0xf90] sm:$0xff]
    %v3995 = vld [vmem:[#allocation23 + $0xf98] sm:$0xff]
    %v3996 = vld [vmem:[#allocation23 + $0xfa0] sm:$0xff]
    %v3997 = vld [vmem:[#allocation23 + $0xfa8] sm:$0xff]
    %v3998 = vld [vmem:[#allocation23 + $0xfb0] sm:$0xff]
    %v3999 = vld [vmem:[#allocation23 + $0xfb8] sm:$0xff]
    %v4000 = vld [vmem:[#allocation23 + $0xfc0] sm:$0xff]
    %v4001 = vld [vmem:[#allocation23 + $0xfc8] sm:$0xff]
    %v4002 = vld [vmem:[#allocation23 + $0xfd0] sm:$0xff]
    %v4003 = vld [vmem:[#allocation23 + $0xfd8] sm:$0xff]
    %v4004 = vld [vmem:[#allocation23 + $0xfe0] sm:$0xff]
    %v4005 = vld [vmem:[#allocation23 + $0xfe8] sm:$0xff]
    %v4006 = vld [vmem:[#allocation23 + $0xff0] sm:$0xff]
    %v4007 = vld [vmem:[#allocation23 + $0xff8] sm:$0xff]
    %v4008 = vld [vmem:[#allocation23 + $0x1000] sm:$0xff]
    %v4009 = vld [vmem:[#allocation23 + $0x1008] sm:$0xff]
    %v4010 = vld [vmem:[#allocation23 + $0x1010] sm:$0xff]
    %v4011 = vld [vmem:[#allocation23 + $0x1018] sm:$0xff]
    %v4012 = vld [vmem:[#allocation23 + $0x1020] sm:$0xff]
    %v4013 = vld [vmem:[#allocation23 + $0x1028] sm:$0xff]
    %v4014 = vld [vmem:[#allocation23 + $0x1030] sm:$0xff]
    %v4015 = vld [vmem:[#allocation23 + $0x1038] sm:$0xff]
    %v4016 = vld [vmem:[#allocation23 + $0x1040] sm:$0xff]
    %v4017 = vld [vmem:[#allocation23 + $0x1048] sm:$0xff]
    %v4018 = vld [vmem:[#allocation23 + $0x1050] sm:$0xff]
    %v4019 = vld [vmem:[#allocation23 + $0x1058] sm:$0xff]
    %v4020 = vld [vmem:[#allocation23 + $0x1060] sm:$0xff]
    %v4021 = vld [vmem:[#allocation23 + $0x1068] sm:$0xff]
    %v4022 = vld [vmem:[#allocation23 + $0x1070] sm:$0xff]
    %v4023 = vld [vmem:[#allocation23 + $0x1078] sm:$0xff]
    %v4024 = vld [vmem:[#allocation23 + $0x1080] sm:$0xff]
    %v4025 = vld [vmem:[#allocation23 + $0x1088] sm:$0xff]
    %v4026 = vld [vmem:[#allocation23 + $0x1090] sm:$0xff]
    %v4027 = vld [vmem:[#allocation23 + $0x1098] sm:$0xff]
    %v4028 = vld [vmem:[#allocation23 + $0x10a0] sm:$0xff]
    %v4029 = vld [vmem:[#allocation23 + $0x10a8] sm:$0xff]
    %v4030 = vld [vmem:[#allocation23 + $0x10b0] sm:$0xff]
    %v4031 = vld [vmem:[#allocation23 + $0x10b8] sm:$0xff]
    %v4032 = vld [vmem:[#allocation23 + $0x10c0] sm:$0xff]
    %v4033 = vld [vmem:[#allocation23 + $0x10c8] sm:$0xff]
    %v4034 = vld [vmem:[#allocation23 + $0x10d0] sm:$0xff]
    %v4035 = vld [vmem:[#allocation23 + $0x10d8] sm:$0xff]
    %v4036 = vld [vmem:[#allocation23 + $0x10e0] sm:$0xff]
    %v4037 = vld [vmem:[#allocation23 + $0x10e8] sm:$0xff]
    %v4038 = vld [vmem:[#allocation23 + $0x10f0] sm:$0xff]
    %v4039 = vld [vmem:[#allocation23 + $0x10f8] sm:$0xff]
    %v4040 = vld [vmem:[#allocation23 + $0x1100] sm:$0xff]
    %v4041 = vld [vmem:[#allocation23 + $0x1108] sm:$0xff]
    %v4042 = vld [vmem:[#allocation23 + $0x1110] sm:$0xff]
    %v4043 = vld [vmem:[#allocation23 + $0x1118] sm:$0xff]
    %v4044 = vld [vmem:[#allocation23 + $0x1120] sm:$0xff]
    %v4045 = vld [vmem:[#allocation23 + $0x1128] sm:$0xff]
    %v4046 = vld [vmem:[#allocation23 + $0x1130] sm:$0xff]
    %v4047 = vld [vmem:[#allocation23 + $0x1138] sm:$0xff]
    %v4048 = vld [vmem:[#allocation23 + $0x1140] sm:$0xff]
    %v4049 = vld [vmem:[#allocation23 + $0x1148] sm:$0xff]
    %v4050 = vld [vmem:[#allocation23 + $0x1150] sm:$0xff]
    %v4051 = vld [vmem:[#allocation23 + $0x1158] sm:$0xff]
    %v4052 = vld [vmem:[#allocation23 + $0x1160] sm:$0xff]
    %v4053 = vld [vmem:[#allocation23 + $0x1168] sm:$0xff]
    %v4054 = vld [vmem:[#allocation23 + $0x1170] sm:$0xff]
    %v4055 = vld [vmem:[#allocation23 + $0x1178] sm:$0xff]
    %v4056 = vld [vmem:[#allocation23 + $0x1180] sm:$0xff]
    %v4057 = vld [vmem:[#allocation23 + $0x1188] sm:$0xff]
    %v4058 = vld [vmem:[#allocation23 + $0x1190] sm:$0xff]
    %v4059 = vld [vmem:[#allocation23 + $0x1198] sm:$0xff]
    %v4060 = vld [vmem:[#allocation23 + $0x11a0] sm:$0xff]
    %v4061 = vld [vmem:[#allocation23 + $0x11a8] sm:$0xff]
    %v4062 = vld [vmem:[#allocation23 + $0x11b0] sm:$0xff]
    %v4063 = vld [vmem:[#allocation23 + $0x11b8] sm:$0xff]
    %v4064 = vld [vmem:[#allocation23 + $0x11c0] sm:$0xff]
    %v4065 = vld [vmem:[#allocation23 + $0x11c8] sm:$0xff]
    %v4066 = vld [vmem:[#allocation23 + $0x11d0] sm:$0xff]
    %v4067 = vld [vmem:[#allocation23 + $0x11d8] sm:$0xff]
    %v4068 = vld [vmem:[#allocation23 + $0x11e0] sm:$0xff]
    %v4069 = vld [vmem:[#allocation23 + $0x11e8] sm:$0xff]
    %v4070 = vld [vmem:[#allocation23 + $0x11f0] sm:$0xff]
    %v4071 = vld [vmem:[#allocation23 + $0x11f8] sm:$0xff]
    %v4072 = vld [vmem:[#allocation23 + $0x1200] sm:$0xff]
    %v4073 = vld [vmem:[#allocation23 + $0x1208] sm:$0xff]
    %v4074 = vld [vmem:[#allocation23 + $0x1210] sm:$0xff]
    %v4075 = vld [vmem:[#allocation23 + $0x1218] sm:$0xff]
    %v4076 = vld [vmem:[#allocation23 + $0x1220] sm:$0xff]
    %v4077 = vld [vmem:[#allocation23 + $0x1228] sm:$0xff]
    %v4078 = vld [vmem:[#allocation23 + $0x1230] sm:$0xff]
    %v4079 = vld [vmem:[#allocation23 + $0x1238] sm:$0xff]
    %v4080 = vld [vmem:[#allocation23 + $0x1240] sm:$0xff]
    %v4081 = vld [vmem:[#allocation23 + $0x1248] sm:$0xff]
    %v4082 = vld [vmem:[#allocation23 + $0x1250] sm:$0xff]
    %v4083 = vld [vmem:[#allocation23 + $0x1258] sm:$0xff]
    %v4084 = vld [vmem:[#allocation23 + $0x1260] sm:$0xff]
    %v4085 = vld [vmem:[#allocation23 + $0x1268] sm:$0xff]
    %v4086 = vld [vmem:[#allocation23 + $0x1270] sm:$0xff]
    %v4087 = vld [vmem:[#allocation23 + $0x1278] sm:$0xff]
    %v4088 = vld [vmem:[#allocation23 + $0x1280] sm:$0xff]
    %v4089 = vld [vmem:[#allocation23 + $0x1288] sm:$0xff]
    %v4090 = vld [vmem:[#allocation23 + $0x1290] sm:$0xff]
    %v4091 = vld [vmem:[#allocation23 + $0x1298] sm:$0xff]
    %v4092 = vld [vmem:[#allocation23 + $0x12a0] sm:$0xff]
    %v4093 = vld [vmem:[#allocation23 + $0x12a8] sm:$0xff]
    %v4094 = vld [vmem:[#allocation23 + $0x12b0] sm:$0xff]
    %v4095 = vld [vmem:[#allocation23 + $0x12b8] sm:$0xff]
    %v4096 = vld [vmem:[#allocation23 + $0x12c0] sm:$0xff]
    %v4097 = vld [vmem:[#allocation23 + $0x12c8] sm:$0xff]
    %v4098 = vld [vmem:[#allocation23 + $0x12d0] sm:$0xff]
    %v4099 = vld [vmem:[#allocation23 + $0x12d8] sm:$0xff]
    %v4100 = vld [vmem:[#allocation23 + $0x12e0] sm:$0xff]
    %v4101 = vld [vmem:[#allocation23 + $0x12e8] sm:$0xff]
    %v4102 = vld [vmem:[#allocation23 + $0x12f0] sm:$0xff]
    %v4103 = vld [vmem:[#allocation23 + $0x12f8] sm:$0xff]
    %v4104 = vld [vmem:[#allocation23 + $0x1300] sm:$0xff]
    %v4105 = vld [vmem:[#allocation23 + $0x1308] sm:$0xff]
    %v4106 = vld [vmem:[#allocation23 + $0x1310] sm:$0xff]
    %v4107 = vld [vmem:[#allocation23 + $0x1318] sm:$0xff]
    %v4108 = vld [vmem:[#allocation23 + $0x1320] sm:$0xff]
    %v4109 = vld [vmem:[#allocation23 + $0x1328] sm:$0xff]
    %v4110 = vld [vmem:[#allocation23 + $0x1330] sm:$0xff]
    %v4111 = vld [vmem:[#allocation23 + $0x1338] sm:$0xff]
    %v4112 = vld [vmem:[#allocation23 + $0x1340] sm:$0xff]
    %v4113 = vld [vmem:[#allocation23 + $0x1348] sm:$0xff]
    %v4114 = vld [vmem:[#allocation23 + $0x1350] sm:$0xff]
    %v4115 = vld [vmem:[#allocation23 + $0x1358] sm:$0xff]
    %v4116 = vld [vmem:[#allocation23 + $0x1360] sm:$0xff]
    %v4117 = vld [vmem:[#allocation23 + $0x1368] sm:$0xff]
    %v4118 = vld [vmem:[#allocation23 + $0x1370] sm:$0xff]
    %v4119 = vld [vmem:[#allocation23 + $0x1378] sm:$0xff]
    %v4120 = vld [vmem:[#allocation23 + $0x1380] sm:$0xff]
    %v4121 = vld [vmem:[#allocation23 + $0x1388] sm:$0xff]
    %v4122 = vld [vmem:[#allocation23 + $0x1390] sm:$0xff]
    %v4123 = vld [vmem:[#allocation23 + $0x1398] sm:$0xff]
    %v4124 = vld [vmem:[#allocation23 + $0x13a0] sm:$0xff]
    %v4125 = vld [vmem:[#allocation23 + $0x13a8] sm:$0xff]
    %v4126 = vld [vmem:[#allocation23 + $0x13b0] sm:$0xff]
    %v4127 = vld [vmem:[#allocation23 + $0x13b8] sm:$0xff]
    %v4128 = vld [vmem:[#allocation23 + $0x13c0] sm:$0xff]
    %v4129 = vld [vmem:[#allocation23 + $0x13c8] sm:$0xff]
    %v4130 = vld [vmem:[#allocation23 + $0x13d0] sm:$0xff]
    %v4131 = vld [vmem:[#allocation23 + $0x13d8] sm:$0xff]
    %v4132 = vld [vmem:[#allocation23 + $0x13e0] sm:$0xff]
    %v4133 = vld [vmem:[#allocation23 + $0x13e8] sm:$0xff]
    %v4134 = vld [vmem:[#allocation23 + $0x13f0] sm:$0xff]
    %v4135 = vld [vmem:[#allocation23 + $0x13f8] sm:$0xff]
    %v4136 = vld [vmem:[#allocation23 + $0x1400] sm:$0xff]
    %v4137 = vld [vmem:[#allocation23 + $0x1408] sm:$0xff]
    %v4138 = vld [vmem:[#allocation23 + $0x1410] sm:$0xff]
    %v4139 = vld [vmem:[#allocation23 + $0x1418] sm:$0xff]
    %v4140 = vld [vmem:[#allocation23 + $0x1420] sm:$0xff]
    %v4141 = vld [vmem:[#allocation23 + $0x1428] sm:$0xff]
    %v4142 = vld [vmem:[#allocation23 + $0x1430] sm:$0xff]
    %v4143 = vld [vmem:[#allocation23 + $0x1438] sm:$0xff]
    %v4144 = vld [vmem:[#allocation23 + $0x1440] sm:$0xff]
    %v4145 = vld [vmem:[#allocation23 + $0x1448] sm:$0xff]
    %v4146 = vld [vmem:[#allocation23 + $0x1450] sm:$0xff]
    %v4147 = vld [vmem:[#allocation23 + $0x1458] sm:$0xff]
    %v4148 = vld [vmem:[#allocation23 + $0x1460] sm:$0xff]
    %v4149 = vld [vmem:[#allocation23 + $0x1468] sm:$0xff]
    %v4150 = vld [vmem:[#allocation23 + $0x1470] sm:$0xff]
    %v4151 = vld [vmem:[#allocation23 + $0x1478] sm:$0xff]
    %v4152 = vld [vmem:[#allocation23 + $0x1480] sm:$0xff]
    %v4153 = vld [vmem:[#allocation23 + $0x1488] sm:$0xff]
    %v4154 = vld [vmem:[#allocation23 + $0x1490] sm:$0xff]
    %v4155 = vld [vmem:[#allocation23 + $0x1498] sm:$0xff]
    %v4156 = vld [vmem:[#allocation23 + $0x14a0] sm:$0xff]
    %v4157 = vld [vmem:[#allocation23 + $0x14a8] sm:$0xff]
    %v4158 = vld [vmem:[#allocation23 + $0x14b0] sm:$0xff]
    %v4159 = vld [vmem:[#allocation23 + $0x14b8] sm:$0xff]
    %v4160 = vld [vmem:[#allocation23 + $0x14c0] sm:$0xff]
    %v4161 = vld [vmem:[#allocation23 + $0x14c8] sm:$0xff]
    %v4162 = vld [vmem:[#allocation23 + $0x14d0] sm:$0xff]
    %v4163 = vld [vmem:[#allocation23 + $0x14d8] sm:$0xff]
    %v4164 = vld [vmem:[#allocation23 + $0x14e0] sm:$0xff]
    %v4165 = vld [vmem:[#allocation23 + $0x14e8] sm:$0xff]
    %v4166 = vld [vmem:[#allocation23 + $0x14f0] sm:$0xff]
    %v4167 = vld [vmem:[#allocation23 + $0x14f8] sm:$0xff]
    %v4168 = vld [vmem:[#allocation23 + $0x1500] sm:$0xff]
    %v4169 = vld [vmem:[#allocation23 + $0x1508] sm:$0xff]
    %v4170 = vld [vmem:[#allocation23 + $0x1510] sm:$0xff]
    %v4171 = vld [vmem:[#allocation23 + $0x1518] sm:$0xff]
    %v4172 = vld [vmem:[#allocation23 + $0x1520] sm:$0xff]
    %v4173 = vld [vmem:[#allocation23 + $0x1528] sm:$0xff]
    %v4174 = vld [vmem:[#allocation23 + $0x1530] sm:$0xff]
    %v4175 = vld [vmem:[#allocation23 + $0x1538] sm:$0xff]
    %v4176 = vld [vmem:[#allocation23 + $0x1540] sm:$0xff]
    %v4177 = vld [vmem:[#allocation23 + $0x1548] sm:$0xff]
    %v4178 = vld [vmem:[#allocation23 + $0x1550] sm:$0xff]
    %v4179 = vld [vmem:[#allocation23 + $0x1558] sm:$0xff]
    %v4180 = vld [vmem:[#allocation23 + $0x1560] sm:$0xff]
    %v4181 = vld [vmem:[#allocation23 + $0x1568] sm:$0xff]
    %v4182 = vld [vmem:[#allocation23 + $0x1570] sm:$0xff]
    %v4183 = vld [vmem:[#allocation23 + $0x1578] sm:$0xff]
    %v4184 = vld [vmem:[#allocation23 + $0x1580] sm:$0xff]
    %v4185 = vld [vmem:[#allocation23 + $0x1588] sm:$0xff]
    %v4186 = vld [vmem:[#allocation23 + $0x1590] sm:$0xff]
    %v4187 = vld [vmem:[#allocation23 + $0x1598] sm:$0xff]
    %v4188 = vld [vmem:[#allocation23 + $0x15a0] sm:$0xff]
    %v4189 = vld [vmem:[#allocation23 + $0x15a8] sm:$0xff]
    %v4190 = vld [vmem:[#allocation23 + $0x15b0] sm:$0xff]
    %v4191 = vld [vmem:[#allocation23 + $0x15b8] sm:$0xff]
    %v4192 = vld [vmem:[#allocation23 + $0x15c0] sm:$0xff]
    %v4193 = vld [vmem:[#allocation23 + $0x15c8] sm:$0xff]
    %v4194 = vld [vmem:[#allocation23 + $0x15d0] sm:$0xff]
    %v4195 = vld [vmem:[#allocation23 + $0x15d8] sm:$0xff]
    %v4196 = vld [vmem:[#allocation23 + $0x15e0] sm:$0xff]
    %v4197 = vld [vmem:[#allocation23 + $0x15e8] sm:$0xff]
    %v4198 = vld [vmem:[#allocation23 + $0x15f0] sm:$0xff]
    %v4199 = vld [vmem:[#allocation23 + $0x15f8] sm:$0xff]
    %v4200 = vld [vmem:[#allocation23 + $0x1600] sm:$0xff]
    %v4201 = vld [vmem:[#allocation23 + $0x1608] sm:$0xff]
    %v4202 = vld [vmem:[#allocation23 + $0x1610] sm:$0xff]
    %v4203 = vld [vmem:[#allocation23 + $0x1618] sm:$0xff]
    %v4204 = vld [vmem:[#allocation23 + $0x1620] sm:$0xff]
    %v4205 = vld [vmem:[#allocation23 + $0x1628] sm:$0xff]
    %v4206 = vld [vmem:[#allocation23 + $0x1630] sm:$0xff]
    %v4207 = vld [vmem:[#allocation23 + $0x1638] sm:$0xff]
    %v4208 = vld [vmem:[#allocation23 + $0x1640] sm:$0xff]
    %v4209 = vld [vmem:[#allocation23 + $0x1648] sm:$0xff]
    %v4210 = vld [vmem:[#allocation23 + $0x1650] sm:$0xff]
    %v4211 = vld [vmem:[#allocation23 + $0x1658] sm:$0xff]
    %v4212 = vld [vmem:[#allocation23 + $0x1660] sm:$0xff]
    %v4213 = vld [vmem:[#allocation23 + $0x1668] sm:$0xff]
    %v4214 = vld [vmem:[#allocation23 + $0x1670] sm:$0xff]
    %v4215 = vld [vmem:[#allocation23 + $0x1678] sm:$0xff]
    %v4216 = vld [vmem:[#allocation23 + $0x1680] sm:$0xff]
    %v4217 = vld [vmem:[#allocation23 + $0x1688] sm:$0xff]
    %v4218 = vld [vmem:[#allocation23 + $0x1690] sm:$0xff]
    %v4219 = vld [vmem:[#allocation23 + $0x1698] sm:$0xff]
    %v4220 = vld [vmem:[#allocation23 + $0x16a0] sm:$0xff]
    %v4221 = vld [vmem:[#allocation23 + $0x16a8] sm:$0xff]
    %v4222 = vld [vmem:[#allocation23 + $0x16b0] sm:$0xff]
    %v4223 = vld [vmem:[#allocation23 + $0x16b8] sm:$0xff]
    %v4224 = vld [vmem:[#allocation23 + $0x16c0] sm:$0xff]
    %v4225 = vld [vmem:[#allocation23 + $0x16c8] sm:$0xff]
    %v4226 = vld [vmem:[#allocation23 + $0x16d0] sm:$0xff]
    %v4227 = vld [vmem:[#allocation23 + $0x16d8] sm:$0xff]
    %v4228 = vld [vmem:[#allocation23 + $0x16e0] sm:$0xff]
    %v4229 = vld [vmem:[#allocation23 + $0x16e8] sm:$0xff]
    %v4230 = vld [vmem:[#allocation23 + $0x16f0] sm:$0xff]
    %v4231 = vld [vmem:[#allocation23 + $0x16f8] sm:$0xff]
    %v4232 = vld [vmem:[#allocation23 + $0x1700] sm:$0xff]
    %v4233 = vld [vmem:[#allocation23 + $0x1708] sm:$0xff]
    %v4234 = vld [vmem:[#allocation23 + $0x1710] sm:$0xff]
    %v4235 = vld [vmem:[#allocation23 + $0x1718] sm:$0xff]
    %v4236 = vld [vmem:[#allocation23 + $0x1720] sm:$0xff]
    %v4237 = vld [vmem:[#allocation23 + $0x1728] sm:$0xff]
    %v4238 = vld [vmem:[#allocation23 + $0x1730] sm:$0xff]
    %v4239 = vld [vmem:[#allocation23 + $0x1738] sm:$0xff]
    %v4240 = vld [vmem:[#allocation23 + $0x1740] sm:$0xff]
    %v4241 = vld [vmem:[#allocation23 + $0x1748] sm:$0xff]
    %v4242 = vld [vmem:[#allocation23 + $0x1750] sm:$0xff]
    %v4243 = vld [vmem:[#allocation23 + $0x1758] sm:$0xff]
    %v4244 = vld [vmem:[#allocation23 + $0x1760] sm:$0xff]
    %v4245 = vld [vmem:[#allocation23 + $0x1768] sm:$0xff]
    %v4246 = vld [vmem:[#allocation23 + $0x1770] sm:$0xff]
    %v4247 = vld [vmem:[#allocation23 + $0x1778] sm:$0xff]
    %v4248 = vld [vmem:[#allocation23 + $0x1780] sm:$0xff]
    %v4249 = vld [vmem:[#allocation23 + $0x1788] sm:$0xff]
    %v4250 = vld [vmem:[#allocation23 + $0x1790] sm:$0xff]
    %v4251 = vld [vmem:[#allocation23 + $0x1798] sm:$0xff]
    %v4252 = vld [vmem:[#allocation23 + $0x17a0] sm:$0xff]
    %v4253 = vld [vmem:[#allocation23 + $0x17a8] sm:$0xff]
    %v4254 = vld [vmem:[#allocation23 + $0x17b0] sm:$0xff]
    %v4255 = vld [vmem:[#allocation23 + $0x17b8] sm:$0xff]
    %v4256 = vld [vmem:[#allocation23 + $0x17c0] sm:$0xff]
    %v4257 = vld [vmem:[#allocation23 + $0x17c8] sm:$0xff]
    %v4258 = vld [vmem:[#allocation23 + $0x17d0] sm:$0xff]
    %v4259 = vld [vmem:[#allocation23 + $0x17d8] sm:$0xff]
    %v4260 = vld [vmem:[#allocation23 + $0x17e0] sm:$0xff]
    %v4261 = vld [vmem:[#allocation23 + $0x17e8] sm:$0xff]
    %v4262 = vld [vmem:[#allocation23 + $0x17f0] sm:$0xff]
    %v4263 = vld [vmem:[#allocation23 + $0x17f8] sm:$0xff]
    %v4264 = vld [vmem:[#allocation23 + $0x1800] sm:$0xff]
    %v4265 = vld [vmem:[#allocation23 + $0x1808] sm:$0xff]
    %v4266 = vld [vmem:[#allocation23 + $0x1810] sm:$0xff]
    %v4267 = vld [vmem:[#allocation23 + $0x1818] sm:$0xff]
    %v4268 = vld [vmem:[#allocation23 + $0x1820] sm:$0xff]
    %v4269 = vld [vmem:[#allocation23 + $0x1828] sm:$0xff]
    %v4270 = vld [vmem:[#allocation23 + $0x1830] sm:$0xff]
    %v4271 = vld [vmem:[#allocation23 + $0x1838] sm:$0xff]
    %v4272 = vld [vmem:[#allocation23 + $0x1840] sm:$0xff]
    %v4273 = vld [vmem:[#allocation23 + $0x1848] sm:$0xff]
    %v4274 = vld [vmem:[#allocation23 + $0x1850] sm:$0xff]
    %v4275 = vld [vmem:[#allocation23 + $0x1858] sm:$0xff]
    %v4276 = vld [vmem:[#allocation23 + $0x1860] sm:$0xff]
    %v4277 = vld [vmem:[#allocation23 + $0x1868] sm:$0xff]
    %v4278 = vld [vmem:[#allocation23 + $0x1870] sm:$0xff]
    %v4279 = vld [vmem:[#allocation23 + $0x1878] sm:$0xff]
    %v4280 = vld [vmem:[#allocation23 + $0x1880] sm:$0xff]
    %v4281 = vld [vmem:[#allocation23 + $0x1888] sm:$0xff]
    %v4282 = vld [vmem:[#allocation23 + $0x1890] sm:$0xff]
    %v4283 = vld [vmem:[#allocation23 + $0x1898] sm:$0xff]
    %v4284 = vld [vmem:[#allocation23 + $0x18a0] sm:$0xff]
    %v4285 = vld [vmem:[#allocation23 + $0x18a8] sm:$0xff]
    %v4286 = vld [vmem:[#allocation23 + $0x18b0] sm:$0xff]
    %v4287 = vld [vmem:[#allocation23 + $0x18b8] sm:$0xff]
    %v4288 = vld [vmem:[#allocation23 + $0x18c0] sm:$0xff]
    %v4289 = vld [vmem:[#allocation23 + $0x18c8] sm:$0xff]
    %v4290 = vld [vmem:[#allocation23 + $0x18d0] sm:$0xff]
    %v4291 = vld [vmem:[#allocation23 + $0x18d8] sm:$0xff]
    %v4292 = vld [vmem:[#allocation23 + $0x18e0] sm:$0xff]
    %v4293 = vld [vmem:[#allocation23 + $0x18e8] sm:$0xff]
    %v4294 = vld [vmem:[#allocation23 + $0x18f0] sm:$0xff]
    %v4295 = vld [vmem:[#allocation23 + $0x18f8] sm:$0xff]
    %v4296 = vld [vmem:[#allocation23 + $0x1900] sm:$0xff]
    %v4297 = vld [vmem:[#allocation23 + $0x1908] sm:$0xff]
    %v4298 = vld [vmem:[#allocation23 + $0x1910] sm:$0xff]
    %v4299 = vld [vmem:[#allocation23 + $0x1918] sm:$0xff]
    %v4300 = vld [vmem:[#allocation23 + $0x1920] sm:$0xff]
    %v4301 = vld [vmem:[#allocation23 + $0x1928] sm:$0xff]
    %v4302 = vld [vmem:[#allocation23 + $0x1930] sm:$0xff]
    %v4303 = vld [vmem:[#allocation23 + $0x1938] sm:$0xff]
    %v4304 = vld [vmem:[#allocation23 + $0x1940] sm:$0xff]
    %v4305 = vld [vmem:[#allocation23 + $0x1948] sm:$0xff]
    %v4306 = vld [vmem:[#allocation23 + $0x1950] sm:$0xff]
    %v4307 = vld [vmem:[#allocation23 + $0x1958] sm:$0xff]
    %v4308 = vld [vmem:[#allocation23 + $0x1960] sm:$0xff]
    %v4309 = vld [vmem:[#allocation23 + $0x1968] sm:$0xff]
    %v4310 = vld [vmem:[#allocation23 + $0x1970] sm:$0xff]
    %v4311 = vld [vmem:[#allocation23 + $0x1978] sm:$0xff]
    %v4312 = vld [vmem:[#allocation23 + $0x1980] sm:$0xff]
    %v4313 = vld [vmem:[#allocation23 + $0x1988] sm:$0xff]
    %v4314 = vld [vmem:[#allocation23 + $0x1990] sm:$0xff]
    %v4315 = vld [vmem:[#allocation23 + $0x1998] sm:$0xff]
    %v4316 = vld [vmem:[#allocation23 + $0x19a0] sm:$0xff]
    %v4317 = vld [vmem:[#allocation23 + $0x19a8] sm:$0xff]
    %v4318 = vld [vmem:[#allocation23 + $0x19b0] sm:$0xff]
    %v4319 = vld [vmem:[#allocation23 + $0x19b8] sm:$0xff]
    %v4320 = vld [vmem:[#allocation23 + $0x19c0] sm:$0xff]
    %v4321 = vld [vmem:[#allocation23 + $0x19c8] sm:$0xff]
    %v4322 = vld [vmem:[#allocation23 + $0x19d0] sm:$0xff]
    %v4323 = vld [vmem:[#allocation23 + $0x19d8] sm:$0xff]
    %v4324 = vld [vmem:[#allocation23 + $0x19e0] sm:$0xff]
    %v4325 = vld [vmem:[#allocation23 + $0x19e8] sm:$0xff]
    %v4326 = vld [vmem:[#allocation23 + $0x19f0] sm:$0xff]
    %v4327 = vld [vmem:[#allocation23 + $0x19f8] sm:$0xff]
    %v4328 = vld [vmem:[#allocation23 + $0x1a00] sm:$0xff]
    %v4329 = vld [vmem:[#allocation23 + $0x1a08] sm:$0xff]
    %v4330 = vld [vmem:[#allocation23 + $0x1a10] sm:$0xff]
    %v4331 = vld [vmem:[#allocation23 + $0x1a18] sm:$0xff]
    %v4332 = vld [vmem:[#allocation23 + $0x1a20] sm:$0xff]
    %v4333 = vld [vmem:[#allocation23 + $0x1a28] sm:$0xff]
    %v4334 = vld [vmem:[#allocation23 + $0x1a30] sm:$0xff]
    %v4335 = vld [vmem:[#allocation23 + $0x1a38] sm:$0xff]
    %v4336 = vld [vmem:[#allocation23 + $0x1a40] sm:$0xff]
    %v4337 = vld [vmem:[#allocation23 + $0x1a48] sm:$0xff]
    %v4338 = vld [vmem:[#allocation23 + $0x1a50] sm:$0xff]
    %v4339 = vld [vmem:[#allocation23 + $0x1a58] sm:$0xff]
    %v4340 = vld [vmem:[#allocation23 + $0x1a60] sm:$0xff]
    %v4341 = vld [vmem:[#allocation23 + $0x1a68] sm:$0xff]
    %v4342 = vld [vmem:[#allocation23 + $0x1a70] sm:$0xff]
    %v4343 = vld [vmem:[#allocation23 + $0x1a78] sm:$0xff]
    %v4344 = vld [vmem:[#allocation23 + $0x1a80] sm:$0xff]
    %v4345 = vld [vmem:[#allocation23 + $0x1a88] sm:$0xff]
    %v4346 = vld [vmem:[#allocation23 + $0x1a90] sm:$0xff]
    %v4347 = vld [vmem:[#allocation23 + $0x1a98] sm:$0xff]
    %v4348 = vld [vmem:[#allocation23 + $0x1aa0] sm:$0xff]
    %v4349 = vld [vmem:[#allocation23 + $0x1aa8] sm:$0xff]
    %v4350 = vld [vmem:[#allocation23 + $0x1ab0] sm:$0xff]
    %v4351 = vld [vmem:[#allocation23 + $0x1ab8] sm:$0xff]
    %v4352 = vld [vmem:[#allocation23 + $0x1ac0] sm:$0xff]
    %v4353 = vld [vmem:[#allocation23 + $0x1ac8] sm:$0xff]
    %v4354 = vld [vmem:[#allocation23 + $0x1ad0] sm:$0xff]
    %v4355 = vld [vmem:[#allocation23 + $0x1ad8] sm:$0xff]
    %v4356 = vld [vmem:[#allocation23 + $0x1ae0] sm:$0xff]
    %v4357 = vld [vmem:[#allocation23 + $0x1ae8] sm:$0xff]
    %v4358 = vld [vmem:[#allocation23 + $0x1af0] sm:$0xff]
    %v4359 = vld [vmem:[#allocation23 + $0x1af8] sm:$0xff]
    %v4360 = vld [vmem:[#allocation23 + $0x1b00] sm:$0xff]
    %v4361 = vld [vmem:[#allocation23 + $0x1b08] sm:$0xff]
    %v4362 = vld [vmem:[#allocation23 + $0x1b10] sm:$0xff]
    %v4363 = vld [vmem:[#allocation23 + $0x1b18] sm:$0xff]
    %v4364 = vld [vmem:[#allocation23 + $0x1b20] sm:$0xff]
    %v4365 = vld [vmem:[#allocation23 + $0x1b28] sm:$0xff]
    %v4366 = vld [vmem:[#allocation23 + $0x1b30] sm:$0xff]
    %v4367 = vld [vmem:[#allocation23 + $0x1b38] sm:$0xff]
    %v4368 = vld [vmem:[#allocation23 + $0x1b40] sm:$0xff]
    %v4369 = vld [vmem:[#allocation23 + $0x1b48] sm:$0xff]
    %v4370 = vld [vmem:[#allocation23 + $0x1b50] sm:$0xff]
    %v4371 = vld [vmem:[#allocation23 + $0x1b58] sm:$0xff]
    %v4372 = vld [vmem:[#allocation23 + $0x1b60] sm:$0xff]
    %v4373 = vld [vmem:[#allocation23 + $0x1b68] sm:$0xff]
    %v4374 = vld [vmem:[#allocation23 + $0x1b70] sm:$0xff]
    %v4375 = vld [vmem:[#allocation23 + $0x1b78] sm:$0xff]
    %v4376 = vld [vmem:[#allocation23 + $0x1b80] sm:$0xff]
    %v4377 = vld [vmem:[#allocation23 + $0x1b88] sm:$0xff]
    %v4378 = vld [vmem:[#allocation23 + $0x1b90] sm:$0xff]
    %v4379 = vld [vmem:[#allocation23 + $0x1b98] sm:$0xff]
    %v4380 = vld [vmem:[#allocation23 + $0x1ba0] sm:$0xff]
    %v4381 = vld [vmem:[#allocation23 + $0x1ba8] sm:$0xff]
    %v4382 = vld [vmem:[#allocation23 + $0x1bb0] sm:$0xff]
    %v4383 = vld [vmem:[#allocation23 + $0x1bb8] sm:$0xff]
    %v4384 = vld [vmem:[#allocation23 + $0x1bc0] sm:$0xff]
    %v4385 = vld [vmem:[#allocation23 + $0x1bc8] sm:$0xff]
    %v4386 = vld [vmem:[#allocation23 + $0x1bd0] sm:$0xff]
    %v4387 = vld [vmem:[#allocation23 + $0x1bd8] sm:$0xff]
    %v4388 = vld [vmem:[#allocation23 + $0x1be0] sm:$0xff]
    %v4389 = vld [vmem:[#allocation23 + $0x1be8] sm:$0xff]
    %v4390 = vld [vmem:[#allocation23 + $0x1bf0] sm:$0xff]
    %v4391 = vld [vmem:[#allocation23 + $0x1bf8] sm:$0xff]
    %v4392 = vld [vmem:[#allocation23 + $0x1c00] sm:$0xff]
    %v4393 = vld [vmem:[#allocation23 + $0x1c08] sm:$0xff]
    %v4394 = vld [vmem:[#allocation23 + $0x1c10] sm:$0xff]
    %v4395 = vld [vmem:[#allocation23 + $0x1c18] sm:$0xff]
    %v4396 = vld [vmem:[#allocation23 + $0x1c20] sm:$0xff]
    %v4397 = vld [vmem:[#allocation23 + $0x1c28] sm:$0xff]
    %v4398 = vld [vmem:[#allocation23 + $0x1c30] sm:$0xff]
    %v4399 = vld [vmem:[#allocation23 + $0x1c38] sm:$0xff]
    %v4400 = vld [vmem:[#allocation23 + $0x1c40] sm:$0xff]
    %v4401 = vld [vmem:[#allocation23 + $0x1c48] sm:$0xff]
    %v4402 = vld [vmem:[#allocation23 + $0x1c50] sm:$0xff]
    %v4403 = vld [vmem:[#allocation23 + $0x1c58] sm:$0xff]
    %v4404 = vld [vmem:[#allocation23 + $0x1c60] sm:$0xff]
    %v4405 = vld [vmem:[#allocation23 + $0x1c68] sm:$0xff]
    %v4406 = vld [vmem:[#allocation23 + $0x1c70] sm:$0xff]
    %v4407 = vld [vmem:[#allocation23 + $0x1c78] sm:$0xff]
    %v4408 = vld [vmem:[#allocation23 + $0x1c80] sm:$0xff]
    %v4409 = vld [vmem:[#allocation23 + $0x1c88] sm:$0xff]
    %v4410 = vld [vmem:[#allocation23 + $0x1c90] sm:$0xff]
    %v4411 = vld [vmem:[#allocation23 + $0x1c98] sm:$0xff]
    %v4412 = vld [vmem:[#allocation23 + $0x1ca0] sm:$0xff]
    %v4413 = vld [vmem:[#allocation23 + $0x1ca8] sm:$0xff]
    %v4414 = vld [vmem:[#allocation23 + $0x1cb0] sm:$0xff]
    %v4415 = vld [vmem:[#allocation23 + $0x1cb8] sm:$0xff]
    %v4416 = vld [vmem:[#allocation23 + $0x1cc0] sm:$0xff]
    %v4417 = vld [vmem:[#allocation23 + $0x1cc8] sm:$0xff]
    %v4418 = vld [vmem:[#allocation23 + $0x1cd0] sm:$0xff]
    %v4419 = vld [vmem:[#allocation23 + $0x1cd8] sm:$0xff]
    %v4420 = vld [vmem:[#allocation23 + $0x1ce0] sm:$0xff]
    %v4421 = vld [vmem:[#allocation23 + $0x1ce8] sm:$0xff]
    %v4422 = vld [vmem:[#allocation23 + $0x1cf0] sm:$0xff]
    %v4423 = vld [vmem:[#allocation23 + $0x1cf8] sm:$0xff]
    %v4424 = vld [vmem:[#allocation23 + $0x1d00] sm:$0xff]
    %v4425 = vld [vmem:[#allocation23 + $0x1d08] sm:$0xff]
    %v4426 = vld [vmem:[#allocation23 + $0x1d10] sm:$0xff]
    %v4427 = vld [vmem:[#allocation23 + $0x1d18] sm:$0xff]
    %v4428 = vld [vmem:[#allocation23 + $0x1d20] sm:$0xff]
    %v4429 = vld [vmem:[#allocation23 + $0x1d28] sm:$0xff]
    %v4430 = vld [vmem:[#allocation23 + $0x1d30] sm:$0xff]
    %v4431 = vld [vmem:[#allocation23 + $0x1d38] sm:$0xff]
    %v4432 = vld [vmem:[#allocation23 + $0x1d40] sm:$0xff]
    %v4433 = vld [vmem:[#allocation23 + $0x1d48] sm:$0xff]
    %v4434 = vld [vmem:[#allocation23 + $0x1d50] sm:$0xff]
    %v4435 = vld [vmem:[#allocation23 + $0x1d58] sm:$0xff]
    %v4436 = vld [vmem:[#allocation23 + $0x1d60] sm:$0xff]
    %v4437 = vld [vmem:[#allocation23 + $0x1d68] sm:$0xff]
    %v4438 = vld [vmem:[#allocation23 + $0x1d70] sm:$0xff]
    %v4439 = vld [vmem:[#allocation23 + $0x1d78] sm:$0xff]
    %v4440 = vld [vmem:[#allocation23 + $0x1d80] sm:$0xff]
    %v4441 = vld [vmem:[#allocation23 + $0x1d88] sm:$0xff]
    %v4442 = vld [vmem:[#allocation23 + $0x1d90] sm:$0xff]
    %v4443 = vld [vmem:[#allocation23 + $0x1d98] sm:$0xff]
    %v4444 = vld [vmem:[#allocation23 + $0x1da0] sm:$0xff]
    %v4445 = vld [vmem:[#allocation23 + $0x1da8] sm:$0xff]
    %v4446 = vld [vmem:[#allocation23 + $0x1db0] sm:$0xff]
    %v4447 = vld [vmem:[#allocation23 + $0x1db8] sm:$0xff]
    %v4448 = vld [vmem:[#allocation23 + $0x1dc0] sm:$0xff]
    %v4449 = vld [vmem:[#allocation23 + $0x1dc8] sm:$0xff]
    %v4450 = vld [vmem:[#allocation23 + $0x1dd0] sm:$0xff]
    %v4451 = vld [vmem:[#allocation23 + $0x1dd8] sm:$0xff]
    %v4452 = vld [vmem:[#allocation23 + $0x1de0] sm:$0xff]
    %v4453 = vld [vmem:[#allocation23 + $0x1de8] sm:$0xff]
    %v4454 = vld [vmem:[#allocation23 + $0x1df0] sm:$0xff]
    %v4455 = vld [vmem:[#allocation23 + $0x1df8] sm:$0xff]
    %v4456 = vld [vmem:[#allocation23 + $0x1e00] sm:$0xff]
    %v4457 = vld [vmem:[#allocation23 + $0x1e08] sm:$0xff]
    %v4458 = vld [vmem:[#allocation23 + $0x1e10] sm:$0xff]
    %v4459 = vld [vmem:[#allocation23 + $0x1e18] sm:$0xff]
    %v4460 = vld [vmem:[#allocation23 + $0x1e20] sm:$0xff]
    %v4461 = vld [vmem:[#allocation23 + $0x1e28] sm:$0xff]
    %v4462 = vld [vmem:[#allocation23 + $0x1e30] sm:$0xff]
    %v4463 = vld [vmem:[#allocation23 + $0x1e38] sm:$0xff]
    %v4464 = vld [vmem:[#allocation23 + $0x1e40] sm:$0xff]
    %v4465 = vld [vmem:[#allocation23 + $0x1e48] sm:$0xff]
    %v4466 = vld [vmem:[#allocation23 + $0x1e50] sm:$0xff]
    %v4467 = vld [vmem:[#allocation23 + $0x1e58] sm:$0xff]
    %v4468 = vld [vmem:[#allocation23 + $0x1e60] sm:$0xff]
    %v4469 = vld [vmem:[#allocation23 + $0x1e68] sm:$0xff]
    %v4470 = vld [vmem:[#allocation23 + $0x1e70] sm:$0xff]
    %v4471 = vld [vmem:[#allocation23 + $0x1e78] sm:$0xff]
    %v4472 = vld [vmem:[#allocation23 + $0x1e80] sm:$0xff]
    %v4473 = vld [vmem:[#allocation23 + $0x1e88] sm:$0xff]
    %v4474 = vld [vmem:[#allocation23 + $0x1e90] sm:$0xff]
    %v4475 = vld [vmem:[#allocation23 + $0x1e98] sm:$0xff]
    %v4476 = vld [vmem:[#allocation23 + $0x1ea0] sm:$0xff]
    %v4477 = vld [vmem:[#allocation23 + $0x1ea8] sm:$0xff]
    %v4478 = vld [vmem:[#allocation23 + $0x1eb0] sm:$0xff]
    %v4479 = vld [vmem:[#allocation23 + $0x1eb8] sm:$0xff]
    %v4480 = vld [vmem:[#allocation23 + $0x1ec0] sm:$0xff]
    %v4481 = vld [vmem:[#allocation23 + $0x1ec8] sm:$0xff]
    %v4482 = vld [vmem:[#allocation23 + $0x1ed0] sm:$0xff]
    %v4483 = vld [vmem:[#allocation23 + $0x1ed8] sm:$0xff]
    %v4484 = vld [vmem:[#allocation23 + $0x1ee0] sm:$0xff]
    %v4485 = vld [vmem:[#allocation23 + $0x1ee8] sm:$0xff]
    %v4486 = vld [vmem:[#allocation23 + $0x1ef0] sm:$0xff]
    %v4487 = vld [vmem:[#allocation23 + $0x1ef8] sm:$0xff]
    %v4488 = vld [vmem:[#allocation23 + $0x1f00] sm:$0xff]
    %v4489 = vld [vmem:[#allocation23 + $0x1f08] sm:$0xff]
    %v4490 = vld [vmem:[#allocation23 + $0x1f10] sm:$0xff]
    %v4491 = vld [vmem:[#allocation23 + $0x1f18] sm:$0xff]
    %v4492 = vld [vmem:[#allocation23 + $0x1f20] sm:$0xff]
    %v4493 = vld [vmem:[#allocation23 + $0x1f28] sm:$0xff]
    %v4494 = vld [vmem:[#allocation23 + $0x1f30] sm:$0xff]
    %v4495 = vld [vmem:[#allocation23 + $0x1f38] sm:$0xff]
    %v4496 = vld [vmem:[#allocation23 + $0x1f40] sm:$0xff]
    %v4497 = vld [vmem:[#allocation23 + $0x1f48] sm:$0xff]
    %v4498 = vld [vmem:[#allocation23 + $0x1f50] sm:$0xff]
    %v4499 = vld [vmem:[#allocation23 + $0x1f58] sm:$0xff]
    %v4500 = vld [vmem:[#allocation23 + $0x1f60] sm:$0xff]
    %v4501 = vld [vmem:[#allocation23 + $0x1f68] sm:$0xff]
    %v4502 = vld [vmem:[#allocation23 + $0x1f70] sm:$0xff]
    %v4503 = vld [vmem:[#allocation23 + $0x1f78] sm:$0xff]
    %v4504 = vld [vmem:[#allocation23 + $0x1f80] sm:$0xff]
    %v4505 = vld [vmem:[#allocation23 + $0x1f88] sm:$0xff]
    %v4506 = vld [vmem:[#allocation23 + $0x1f90] sm:$0xff]
    %v4507 = vld [vmem:[#allocation23 + $0x1f98] sm:$0xff]
    %v4508 = vld [vmem:[#allocation23 + $0x1fa0] sm:$0xff]
    %v4509 = vld [vmem:[#allocation23 + $0x1fa8] sm:$0xff]
    %v4510 = vld [vmem:[#allocation23 + $0x1fb0] sm:$0xff]
    %v4511 = vld [vmem:[#allocation23 + $0x1fb8] sm:$0xff]
    %v4512 = vld [vmem:[#allocation23 + $0x1fc0] sm:$0xff]
    %v4513 = vld [vmem:[#allocation23 + $0x1fc8] sm:$0xff]
    %v4514 = vld [vmem:[#allocation23 + $0x1fd0] sm:$0xff]
    %v4515 = vld [vmem:[#allocation23 + $0x1fd8] sm:$0xff]
    %v4516 = vld [vmem:[#allocation23 + $0x1fe0] sm:$0xff]
    %v4517 = vld [vmem:[#allocation23 + $0x1fe8] sm:$0xff]
    %v4518 = vld [vmem:[#allocation23 + $0x1ff0] sm:$0xff]
    %v4519 = vld [vmem:[#allocation23 + $0x1ff8] sm:$0xff]
    %v4520 = vld [vmem:[#allocation25] sm:$0xff]
    %v4521 = vld [vmem:[#allocation25 + $0x8] sm:$0xff]
    %v4524 = vperm.slane %v4520, 0
    %v4525 = vperm.slane %v4520, 1
    %v4526 = vperm.slane %v4520, 2
    %v4527 = vperm.slane %v4520, 3
    %v4528 = vperm.slane %v4520, 4
    %v4529 = vperm.slane %v4520, 5
    %v4530 = vperm.slane %v4520, 6
    %v4531 = vperm.slane %v4520, 7
    %v4532 = vperm.slane %v4521, 0
    %v4533 = vperm.slane %v4521, 1
    %v4534 = vperm.slane %v4521, 2
    %v4535 = vperm.slane %v4521, 3
    %v4536 = vperm.slane %v4521, 4
    %v4537 = vperm.slane %v4521, 5
    %v4538 = vperm.slane %v4521, 6
    %v4539 = vperm.slane %v4521, 7
    %v5580 = vunpack.c.l.b16 %v3496
    %v5581 = vunpack.c.h.b16 %v3496
    %v5582 = vunpack.c.l.b16 %v3497
    %v5583 = vunpack.c.h.b16 %v3497
    %v5584 = vunpack.c.l.b16 %v3498
    %v5585 = vunpack.c.h.b16 %v3498
    %v5586 = vunpack.c.l.b16 %v3499
    %v5587 = vunpack.c.h.b16 %v3499
    %v5588 = vunpack.c.l.b16 %v3500
    %v5589 = vunpack.c.h.b16 %v3500
    %v5590 = vunpack.c.l.b16 %v3501
    %v5591 = vunpack.c.h.b16 %v3501
    %v5592 = vunpack.c.l.b16 %v3502
    %v5593 = vunpack.c.h.b16 %v3502
    %v5594 = vunpack.c.l.b16 %v3503
    %v5595 = vunpack.c.h.b16 %v3503
    %v5596 = vunpack.c.l.b16 %v3504
    %v5597 = vunpack.c.h.b16 %v3504
    %v5598 = vunpack.c.l.b16 %v3505
    %v5599 = vunpack.c.h.b16 %v3505
    %v5600 = vunpack.c.l.b16 %v3506
    %v5601 = vunpack.c.h.b16 %v3506
    %v5602 = vunpack.c.l.b16 %v3507
    %v5603 = vunpack.c.h.b16 %v3507
    %v5604 = vunpack.c.l.b16 %v3508
    %v5605 = vunpack.c.h.b16 %v3508
    %v5606 = vunpack.c.l.b16 %v3509
    %v5607 = vunpack.c.h.b16 %v3509
    %v5608 = vunpack.c.l.b16 %v3510
    %v5609 = vunpack.c.h.b16 %v3510
    %v5610 = vunpack.c.l.b16 %v3511
    %v5611 = vunpack.c.h.b16 %v3511
    %v5612 = vunpack.c.l.b16 %v3512
    %v5613 = vunpack.c.h.b16 %v3512
    %v5614 = vunpack.c.l.b16 %v3513
    %v5615 = vunpack.c.h.b16 %v3513
    %v5616 = vunpack.c.l.b16 %v3514
    %v5617 = vunpack.c.h.b16 %v3514
    %v5618 = vunpack.c.l.b16 %v3515
    %v5619 = vunpack.c.h.b16 %v3515
    %v5620 = vunpack.c.l.b16 %v3516
    %v5621 = vunpack.c.h.b16 %v3516
    %v5622 = vunpack.c.l.b16 %v3517
    %v5623 = vunpack.c.h.b16 %v3517
    %v5624 = vunpack.c.l.b16 %v3518
    %v5625 = vunpack.c.h.b16 %v3518
    %v5626 = vunpack.c.l.b16 %v3519
    %v5627 = vunpack.c.h.b16 %v3519
    %v5628 = vunpack.c.l.b16 %v3520
    %v5629 = vunpack.c.h.b16 %v3520
    %v5630 = vunpack.c.l.b16 %v3521
    %v5631 = vunpack.c.h.b16 %v3521
    %v5632 = vunpack.c.l.b16 %v3522
    %v5633 = vunpack.c.h.b16 %v3522
    %v5634 = vunpack.c.l.b16 %v3523
    %v5635 = vunpack.c.h.b16 %v3523
    %v5636 = vunpack.c.l.b16 %v3524
    %v5637 = vunpack.c.h.b16 %v3524
    %v5638 = vunpack.c.l.b16 %v3525
    %v5639 = vunpack.c.h.b16 %v3525
    %v5640 = vunpack.c.l.b16 %v3526
    %v5641 = vunpack.c.h.b16 %v3526
    %v5642 = vunpack.c.l.b16 %v3527
    %v5643 = vunpack.c.h.b16 %v3527
    %v5644 = vunpack.c.l.b16 %v3528
    %v5645 = vunpack.c.h.b16 %v3528
    %v5646 = vunpack.c.l.b16 %v3529
    %v5647 = vunpack.c.h.b16 %v3529
    %v5648 = vunpack.c.l.b16 %v3530
    %v5649 = vunpack.c.h.b16 %v3530
    %v5650 = vunpack.c.l.b16 %v3531
    %v5651 = vunpack.c.h.b16 %v3531
    %v5652 = vunpack.c.l.b16 %v3532
    %v5653 = vunpack.c.h.b16 %v3532
    %v5654 = vunpack.c.l.b16 %v3533
    %v5655 = vunpack.c.h.b16 %v3533
    %v5656 = vunpack.c.l.b16 %v3534
    %v5657 = vunpack.c.h.b16 %v3534
    %v5658 = vunpack.c.l.b16 %v3535
    %v5659 = vunpack.c.h.b16 %v3535
    %v5660 = vunpack.c.l.b16 %v3536
    %v5661 = vunpack.c.h.b16 %v3536
    %v5662 = vunpack.c.l.b16 %v3537
    %v5663 = vunpack.c.h.b16 %v3537
    %v5664 = vunpack.c.l.b16 %v3538
    %v5665 = vunpack.c.h.b16 %v3538
    %v5666 = vunpack.c.l.b16 %v3539
    %v5667 = vunpack.c.h.b16 %v3539
    %v5668 = vunpack.c.l.b16 %v3540
    %v5669 = vunpack.c.h.b16 %v3540
    %v5670 = vunpack.c.l.b16 %v3541
    %v5671 = vunpack.c.h.b16 %v3541
    %v5672 = vunpack.c.l.b16 %v3542
    %v5673 = vunpack.c.h.b16 %v3542
    %v5674 = vunpack.c.l.b16 %v3543
    %v5675 = vunpack.c.h.b16 %v3543
    %v5676 = vunpack.c.l.b16 %v3544
    %v5677 = vunpack.c.h.b16 %v3544
    %v5678 = vunpack.c.l.b16 %v3545
    %v5679 = vunpack.c.h.b16 %v3545
    %v5680 = vunpack.c.l.b16 %v3546
    %v5681 = vunpack.c.h.b16 %v3546
    %v5682 = vunpack.c.l.b16 %v3547
    %v5683 = vunpack.c.h.b16 %v3547
    %v5684 = vunpack.c.l.b16 %v3548
    %v5685 = vunpack.c.h.b16 %v3548
    %v5686 = vunpack.c.l.b16 %v3549
    %v5687 = vunpack.c.h.b16 %v3549
    %v5688 = vunpack.c.l.b16 %v3550
    %v5689 = vunpack.c.h.b16 %v3550
    %v5690 = vunpack.c.l.b16 %v3551
    %v5691 = vunpack.c.h.b16 %v3551
    %v5692 = vunpack.c.l.b16 %v3552
    %v5693 = vunpack.c.h.b16 %v3552
    %v5694 = vunpack.c.l.b16 %v3553
    %v5695 = vunpack.c.h.b16 %v3553
    %v5696 = vunpack.c.l.b16 %v3554
    %v5697 = vunpack.c.h.b16 %v3554
    %v5698 = vunpack.c.l.b16 %v3555
    %v5699 = vunpack.c.h.b16 %v3555
    %v5700 = vunpack.c.l.b16 %v3556
    %v5701 = vunpack.c.h.b16 %v3556
    %v5702 = vunpack.c.l.b16 %v3557
    %v5703 = vunpack.c.h.b16 %v3557
    %v5704 = vunpack.c.l.b16 %v3558
    %v5705 = vunpack.c.h.b16 %v3558
    %v5706 = vunpack.c.l.b16 %v3559
    %v5707 = vunpack.c.h.b16 %v3559
    %v5708 = vunpack.c.l.b16 %v3560
    %v5709 = vunpack.c.h.b16 %v3560
    %v5710 = vunpack.c.l.b16 %v3561
    %v5711 = vunpack.c.h.b16 %v3561
    %v5712 = vunpack.c.l.b16 %v3562
    %v5713 = vunpack.c.h.b16 %v3562
    %v5714 = vunpack.c.l.b16 %v3563
    %v5715 = vunpack.c.h.b16 %v3563
    %v5716 = vunpack.c.l.b16 %v3564
    %v5717 = vunpack.c.h.b16 %v3564
    %v5718 = vunpack.c.l.b16 %v3565
    %v5719 = vunpack.c.h.b16 %v3565
    %v5720 = vunpack.c.l.b16 %v3566
    %v5721 = vunpack.c.h.b16 %v3566
    %v5722 = vunpack.c.l.b16 %v3567
    %v5723 = vunpack.c.h.b16 %v3567
    %v5724 = vunpack.c.l.b16 %v3568
    %v5725 = vunpack.c.h.b16 %v3568
    %v5726 = vunpack.c.l.b16 %v3569
    %v5727 = vunpack.c.h.b16 %v3569
    %v5728 = vunpack.c.l.b16 %v3570
    %v5729 = vunpack.c.h.b16 %v3570
    %v5730 = vunpack.c.l.b16 %v3571
    %v5731 = vunpack.c.h.b16 %v3571
    %v5732 = vunpack.c.l.b16 %v3572
    %v5733 = vunpack.c.h.b16 %v3572
    %v5734 = vunpack.c.l.b16 %v3573
    %v5735 = vunpack.c.h.b16 %v3573
    %v5736 = vunpack.c.l.b16 %v3574
    %v5737 = vunpack.c.h.b16 %v3574
    %v5738 = vunpack.c.l.b16 %v3575
    %v5739 = vunpack.c.h.b16 %v3575
    %v5740 = vunpack.c.l.b16 %v3576
    %v5741 = vunpack.c.h.b16 %v3576
    %v5742 = vunpack.c.l.b16 %v3577
    %v5743 = vunpack.c.h.b16 %v3577
    %v5744 = vunpack.c.l.b16 %v3578
    %v5745 = vunpack.c.h.b16 %v3578
    %v5746 = vunpack.c.l.b16 %v3579
    %v5747 = vunpack.c.h.b16 %v3579
    %v5748 = vunpack.c.l.b16 %v3580
    %v5749 = vunpack.c.h.b16 %v3580
    %v5750 = vunpack.c.l.b16 %v3581
    %v5751 = vunpack.c.h.b16 %v3581
    %v5752 = vunpack.c.l.b16 %v3582
    %v5753 = vunpack.c.h.b16 %v3582
    %v5754 = vunpack.c.l.b16 %v3583
    %v5755 = vunpack.c.h.b16 %v3583
    %v5756 = vunpack.c.l.b16 %v3584
    %v5757 = vunpack.c.h.b16 %v3584
    %v5758 = vunpack.c.l.b16 %v3585
    %v5759 = vunpack.c.h.b16 %v3585
    %v5760 = vunpack.c.l.b16 %v3586
    %v5761 = vunpack.c.h.b16 %v3586
    %v5762 = vunpack.c.l.b16 %v3587
    %v5763 = vunpack.c.h.b16 %v3587
    %v5764 = vunpack.c.l.b16 %v3588
    %v5765 = vunpack.c.h.b16 %v3588
    %v5766 = vunpack.c.l.b16 %v3589
    %v5767 = vunpack.c.h.b16 %v3589
    %v5768 = vunpack.c.l.b16 %v3590
    %v5769 = vunpack.c.h.b16 %v3590
    %v5770 = vunpack.c.l.b16 %v3591
    %v5771 = vunpack.c.h.b16 %v3591
    %v5772 = vunpack.c.l.b16 %v3592
    %v5773 = vunpack.c.h.b16 %v3592
    %v5774 = vunpack.c.l.b16 %v3593
    %v5775 = vunpack.c.h.b16 %v3593
    %v5776 = vunpack.c.l.b16 %v3594
    %v5777 = vunpack.c.h.b16 %v3594
    %v5778 = vunpack.c.l.b16 %v3595
    %v5779 = vunpack.c.h.b16 %v3595
    %v5780 = vunpack.c.l.b16 %v3596
    %v5781 = vunpack.c.h.b16 %v3596
    %v5782 = vunpack.c.l.b16 %v3597
    %v5783 = vunpack.c.h.b16 %v3597
    %v5784 = vunpack.c.l.b16 %v3598
    %v5785 = vunpack.c.h.b16 %v3598
    %v5786 = vunpack.c.l.b16 %v3599
    %v5787 = vunpack.c.h.b16 %v3599
    %v5788 = vunpack.c.l.b16 %v3600
    %v5789 = vunpack.c.h.b16 %v3600
    %v5790 = vunpack.c.l.b16 %v3601
    %v5791 = vunpack.c.h.b16 %v3601
    %v5792 = vunpack.c.l.b16 %v3602
    %v5793 = vunpack.c.h.b16 %v3602
    %v5794 = vunpack.c.l.b16 %v3603
    %v5795 = vunpack.c.h.b16 %v3603
    %v5796 = vunpack.c.l.b16 %v3604
    %v5797 = vunpack.c.h.b16 %v3604
    %v5798 = vunpack.c.l.b16 %v3605
    %v5799 = vunpack.c.h.b16 %v3605
    %v5800 = vunpack.c.l.b16 %v3606
    %v5801 = vunpack.c.h.b16 %v3606
    %v5802 = vunpack.c.l.b16 %v3607
    %v5803 = vunpack.c.h.b16 %v3607
    %v5804 = vunpack.c.l.b16 %v3608
    %v5805 = vunpack.c.h.b16 %v3608
    %v5806 = vunpack.c.l.b16 %v3609
    %v5807 = vunpack.c.h.b16 %v3609
    %v5808 = vunpack.c.l.b16 %v3610
    %v5809 = vunpack.c.h.b16 %v3610
    %v5810 = vunpack.c.l.b16 %v3611
    %v5811 = vunpack.c.h.b16 %v3611
    %v5812 = vunpack.c.l.b16 %v3612
    %v5813 = vunpack.c.h.b16 %v3612
    %v5814 = vunpack.c.l.b16 %v3613
    %v5815 = vunpack.c.h.b16 %v3613
    %v5816 = vunpack.c.l.b16 %v3614
    %v5817 = vunpack.c.h.b16 %v3614
    %v5818 = vunpack.c.l.b16 %v3615
    %v5819 = vunpack.c.h.b16 %v3615
    %v5820 = vunpack.c.l.b16 %v3616
    %v5821 = vunpack.c.h.b16 %v3616
    %v5822 = vunpack.c.l.b16 %v3617
    %v5823 = vunpack.c.h.b16 %v3617
    %v5824 = vunpack.c.l.b16 %v3618
    %v5825 = vunpack.c.h.b16 %v3618
    %v5826 = vunpack.c.l.b16 %v3619
    %v5827 = vunpack.c.h.b16 %v3619
    %v5828 = vunpack.c.l.b16 %v3620
    %v5829 = vunpack.c.h.b16 %v3620
    %v5830 = vunpack.c.l.b16 %v3621
    %v5831 = vunpack.c.h.b16 %v3621
    %v5832 = vunpack.c.l.b16 %v3622
    %v5833 = vunpack.c.h.b16 %v3622
    %v5834 = vunpack.c.l.b16 %v3623
    %v5835 = vunpack.c.h.b16 %v3623
    %v5836 = vunpack.c.l.b16 %v3624
    %v5837 = vunpack.c.h.b16 %v3624
    %v5838 = vunpack.c.l.b16 %v3625
    %v5839 = vunpack.c.h.b16 %v3625
    %v5840 = vunpack.c.l.b16 %v3626
    %v5841 = vunpack.c.h.b16 %v3626
    %v5842 = vunpack.c.l.b16 %v3627
    %v5843 = vunpack.c.h.b16 %v3627
    %v5844 = vunpack.c.l.b16 %v3628
    %v5845 = vunpack.c.h.b16 %v3628
    %v5846 = vunpack.c.l.b16 %v3629
    %v5847 = vunpack.c.h.b16 %v3629
    %v5848 = vunpack.c.l.b16 %v3630
    %v5849 = vunpack.c.h.b16 %v3630
    %v5850 = vunpack.c.l.b16 %v3631
    %v5851 = vunpack.c.h.b16 %v3631
    %v5852 = vunpack.c.l.b16 %v3632
    %v5853 = vunpack.c.h.b16 %v3632
    %v5854 = vunpack.c.l.b16 %v3633
    %v5855 = vunpack.c.h.b16 %v3633
    %v5856 = vunpack.c.l.b16 %v3634
    %v5857 = vunpack.c.h.b16 %v3634
    %v5858 = vunpack.c.l.b16 %v3635
    %v5859 = vunpack.c.h.b16 %v3635
    %v5860 = vunpack.c.l.b16 %v3636
    %v5861 = vunpack.c.h.b16 %v3636
    %v5862 = vunpack.c.l.b16 %v3637
    %v5863 = vunpack.c.h.b16 %v3637
    %v5864 = vunpack.c.l.b16 %v3638
    %v5865 = vunpack.c.h.b16 %v3638
    %v5866 = vunpack.c.l.b16 %v3639
    %v5867 = vunpack.c.h.b16 %v3639
    %v5868 = vunpack.c.l.b16 %v3640
    %v5869 = vunpack.c.h.b16 %v3640
    %v5870 = vunpack.c.l.b16 %v3641
    %v5871 = vunpack.c.h.b16 %v3641
    %v5872 = vunpack.c.l.b16 %v3642
    %v5873 = vunpack.c.h.b16 %v3642
    %v5874 = vunpack.c.l.b16 %v3643
    %v5875 = vunpack.c.h.b16 %v3643
    %v5876 = vunpack.c.l.b16 %v3644
    %v5877 = vunpack.c.h.b16 %v3644
    %v5878 = vunpack.c.l.b16 %v3645
    %v5879 = vunpack.c.h.b16 %v3645
    %v5880 = vunpack.c.l.b16 %v3646
    %v5881 = vunpack.c.h.b16 %v3646
    %v5882 = vunpack.c.l.b16 %v3647
    %v5883 = vunpack.c.h.b16 %v3647
    %v5884 = vunpack.c.l.b16 %v3648
    %v5885 = vunpack.c.h.b16 %v3648
    %v5886 = vunpack.c.l.b16 %v3649
    %v5887 = vunpack.c.h.b16 %v3649
    %v5888 = vunpack.c.l.b16 %v3650
    %v5889 = vunpack.c.h.b16 %v3650
    %v5890 = vunpack.c.l.b16 %v3651
    %v5891 = vunpack.c.h.b16 %v3651
    %v5892 = vunpack.c.l.b16 %v3652
    %v5893 = vunpack.c.h.b16 %v3652
    %v5894 = vunpack.c.l.b16 %v3653
    %v5895 = vunpack.c.h.b16 %v3653
    %v5896 = vunpack.c.l.b16 %v3654
    %v5897 = vunpack.c.h.b16 %v3654
    %v5898 = vunpack.c.l.b16 %v3655
    %v5899 = vunpack.c.h.b16 %v3655
    %v5900 = vunpack.c.l.b16 %v3656
    %v5901 = vunpack.c.h.b16 %v3656
    %v5902 = vunpack.c.l.b16 %v3657
    %v5903 = vunpack.c.h.b16 %v3657
    %v5904 = vunpack.c.l.b16 %v3658
    %v5905 = vunpack.c.h.b16 %v3658
    %v5906 = vunpack.c.l.b16 %v3659
    %v5907 = vunpack.c.h.b16 %v3659
    %v5908 = vunpack.c.l.b16 %v3660
    %v5909 = vunpack.c.h.b16 %v3660
    %v5910 = vunpack.c.l.b16 %v3661
    %v5911 = vunpack.c.h.b16 %v3661
    %v5912 = vunpack.c.l.b16 %v3662
    %v5913 = vunpack.c.h.b16 %v3662
    %v5914 = vunpack.c.l.b16 %v3663
    %v5915 = vunpack.c.h.b16 %v3663
    %v5916 = vunpack.c.l.b16 %v3664
    %v5917 = vunpack.c.h.b16 %v3664
    %v5918 = vunpack.c.l.b16 %v3665
    %v5919 = vunpack.c.h.b16 %v3665
    %v5920 = vunpack.c.l.b16 %v3666
    %v5921 = vunpack.c.h.b16 %v3666
    %v5922 = vunpack.c.l.b16 %v3667
    %v5923 = vunpack.c.h.b16 %v3667
    %v5924 = vunpack.c.l.b16 %v3668
    %v5925 = vunpack.c.h.b16 %v3668
    %v5926 = vunpack.c.l.b16 %v3669
    %v5927 = vunpack.c.h.b16 %v3669
    %v5928 = vunpack.c.l.b16 %v3670
    %v5929 = vunpack.c.h.b16 %v3670
    %v5930 = vunpack.c.l.b16 %v3671
    %v5931 = vunpack.c.h.b16 %v3671
    %v5932 = vunpack.c.l.b16 %v3672
    %v5933 = vunpack.c.h.b16 %v3672
    %v5934 = vunpack.c.l.b16 %v3673
    %v5935 = vunpack.c.h.b16 %v3673
    %v5936 = vunpack.c.l.b16 %v3674
    %v5937 = vunpack.c.h.b16 %v3674
    %v5938 = vunpack.c.l.b16 %v3675
    %v5939 = vunpack.c.h.b16 %v3675
    %v5940 = vunpack.c.l.b16 %v3676
    %v5941 = vunpack.c.h.b16 %v3676
    %v5942 = vunpack.c.l.b16 %v3677
    %v5943 = vunpack.c.h.b16 %v3677
    %v5944 = vunpack.c.l.b16 %v3678
    %v5945 = vunpack.c.h.b16 %v3678
    %v5946 = vunpack.c.l.b16 %v3679
    %v5947 = vunpack.c.h.b16 %v3679
    %v5948 = vunpack.c.l.b16 %v3680
    %v5949 = vunpack.c.h.b16 %v3680
    %v5950 = vunpack.c.l.b16 %v3681
    %v5951 = vunpack.c.h.b16 %v3681
    %v5952 = vunpack.c.l.b16 %v3682
    %v5953 = vunpack.c.h.b16 %v3682
    %v5954 = vunpack.c.l.b16 %v3683
    %v5955 = vunpack.c.h.b16 %v3683
    %v5956 = vunpack.c.l.b16 %v3684
    %v5957 = vunpack.c.h.b16 %v3684
    %v5958 = vunpack.c.l.b16 %v3685
    %v5959 = vunpack.c.h.b16 %v3685
    %v5960 = vunpack.c.l.b16 %v3686
    %v5961 = vunpack.c.h.b16 %v3686
    %v5962 = vunpack.c.l.b16 %v3687
    %v5963 = vunpack.c.h.b16 %v3687
    %v5964 = vunpack.c.l.b16 %v3688
    %v5965 = vunpack.c.h.b16 %v3688
    %v5966 = vunpack.c.l.b16 %v3689
    %v5967 = vunpack.c.h.b16 %v3689
    %v5968 = vunpack.c.l.b16 %v3690
    %v5969 = vunpack.c.h.b16 %v3690
    %v5970 = vunpack.c.l.b16 %v3691
    %v5971 = vunpack.c.h.b16 %v3691
    %v5972 = vunpack.c.l.b16 %v3692
    %v5973 = vunpack.c.h.b16 %v3692
    %v5974 = vunpack.c.l.b16 %v3693
    %v5975 = vunpack.c.h.b16 %v3693
    %v5976 = vunpack.c.l.b16 %v3694
    %v5977 = vunpack.c.h.b16 %v3694
    %v5978 = vunpack.c.l.b16 %v3695
    %v5979 = vunpack.c.h.b16 %v3695
    %v5980 = vunpack.c.l.b16 %v3696
    %v5981 = vunpack.c.h.b16 %v3696
    %v5982 = vunpack.c.l.b16 %v3697
    %v5983 = vunpack.c.h.b16 %v3697
    %v5984 = vunpack.c.l.b16 %v3698
    %v5985 = vunpack.c.h.b16 %v3698
    %v5986 = vunpack.c.l.b16 %v3699
    %v5987 = vunpack.c.h.b16 %v3699
    %v5988 = vunpack.c.l.b16 %v3700
    %v5989 = vunpack.c.h.b16 %v3700
    %v5990 = vunpack.c.l.b16 %v3701
    %v5991 = vunpack.c.h.b16 %v3701
    %v5992 = vunpack.c.l.b16 %v3702
    %v5993 = vunpack.c.h.b16 %v3702
    %v5994 = vunpack.c.l.b16 %v3703
    %v5995 = vunpack.c.h.b16 %v3703
    %v5996 = vunpack.c.l.b16 %v3704
    %v5997 = vunpack.c.h.b16 %v3704
    %v5998 = vunpack.c.l.b16 %v3705
    %v5999 = vunpack.c.h.b16 %v3705
    %v6000 = vunpack.c.l.b16 %v3706
    %v6001 = vunpack.c.h.b16 %v3706
    %v6002 = vunpack.c.l.b16 %v3707
    %v6003 = vunpack.c.h.b16 %v3707
    %v6004 = vunpack.c.l.b16 %v3708
    %v6005 = vunpack.c.h.b16 %v3708
    %v6006 = vunpack.c.l.b16 %v3709
    %v6007 = vunpack.c.h.b16 %v3709
    %v6008 = vunpack.c.l.b16 %v3710
    %v6009 = vunpack.c.h.b16 %v3710
    %v6010 = vunpack.c.l.b16 %v3711
    %v6011 = vunpack.c.h.b16 %v3711
    %v6012 = vunpack.c.l.b16 %v3712
    %v6013 = vunpack.c.h.b16 %v3712
    %v6014 = vunpack.c.l.b16 %v3713
    %v6015 = vunpack.c.h.b16 %v3713
    %v6016 = vunpack.c.l.b16 %v3714
    %v6017 = vunpack.c.h.b16 %v3714
    %v6018 = vunpack.c.l.b16 %v3715
    %v6019 = vunpack.c.h.b16 %v3715
    %v6020 = vunpack.c.l.b16 %v3716
    %v6021 = vunpack.c.h.b16 %v3716
    %v6022 = vunpack.c.l.b16 %v3717
    %v6023 = vunpack.c.h.b16 %v3717
    %v6024 = vunpack.c.l.b16 %v3718
    %v6025 = vunpack.c.h.b16 %v3718
    %v6026 = vunpack.c.l.b16 %v3719
    %v6027 = vunpack.c.h.b16 %v3719
    %v6028 = vunpack.c.l.b16 %v3720
    %v6029 = vunpack.c.h.b16 %v3720
    %v6030 = vunpack.c.l.b16 %v3721
    %v6031 = vunpack.c.h.b16 %v3721
    %v6032 = vunpack.c.l.b16 %v3722
    %v6033 = vunpack.c.h.b16 %v3722
    %v6034 = vunpack.c.l.b16 %v3723
    %v6035 = vunpack.c.h.b16 %v3723
    %v6036 = vunpack.c.l.b16 %v3724
    %v6037 = vunpack.c.h.b16 %v3724
    %v6038 = vunpack.c.l.b16 %v3725
    %v6039 = vunpack.c.h.b16 %v3725
    %v6040 = vunpack.c.l.b16 %v3726
    %v6041 = vunpack.c.h.b16 %v3726
    %v6042 = vunpack.c.l.b16 %v3727
    %v6043 = vunpack.c.h.b16 %v3727
    %v6044 = vunpack.c.l.b16 %v3728
    %v6045 = vunpack.c.h.b16 %v3728
    %v6046 = vunpack.c.l.b16 %v3729
    %v6047 = vunpack.c.h.b16 %v3729
    %v6048 = vunpack.c.l.b16 %v3730
    %v6049 = vunpack.c.h.b16 %v3730
    %v6050 = vunpack.c.l.b16 %v3731
    %v6051 = vunpack.c.h.b16 %v3731
    %v6052 = vunpack.c.l.b16 %v3732
    %v6053 = vunpack.c.h.b16 %v3732
    %v6054 = vunpack.c.l.b16 %v3733
    %v6055 = vunpack.c.h.b16 %v3733
    %v6056 = vunpack.c.l.b16 %v3734
    %v6057 = vunpack.c.h.b16 %v3734
    %v6058 = vunpack.c.l.b16 %v3735
    %v6059 = vunpack.c.h.b16 %v3735
    %v6060 = vunpack.c.l.b16 %v3736
    %v6061 = vunpack.c.h.b16 %v3736
    %v6062 = vunpack.c.l.b16 %v3737
    %v6063 = vunpack.c.h.b16 %v3737
    %v6064 = vunpack.c.l.b16 %v3738
    %v6065 = vunpack.c.h.b16 %v3738
    %v6066 = vunpack.c.l.b16 %v3739
    %v6067 = vunpack.c.h.b16 %v3739
    %v6068 = vunpack.c.l.b16 %v3740
    %v6069 = vunpack.c.h.b16 %v3740
    %v6070 = vunpack.c.l.b16 %v3741
    %v6071 = vunpack.c.h.b16 %v3741
    %v6072 = vunpack.c.l.b16 %v3742
    %v6073 = vunpack.c.h.b16 %v3742
    %v6074 = vunpack.c.l.b16 %v3743
    %v6075 = vunpack.c.h.b16 %v3743
    %v6076 = vunpack.c.l.b16 %v3744
    %v6077 = vunpack.c.h.b16 %v3744
    %v6078 = vunpack.c.l.b16 %v3745
    %v6079 = vunpack.c.h.b16 %v3745
    %v6080 = vunpack.c.l.b16 %v3746
    %v6081 = vunpack.c.h.b16 %v3746
    %v6082 = vunpack.c.l.b16 %v3747
    %v6083 = vunpack.c.h.b16 %v3747
    %v6084 = vunpack.c.l.b16 %v3748
    %v6085 = vunpack.c.h.b16 %v3748
    %v6086 = vunpack.c.l.b16 %v3749
    %v6087 = vunpack.c.h.b16 %v3749
    %v6088 = vunpack.c.l.b16 %v3750
    %v6089 = vunpack.c.h.b16 %v3750
    %v6090 = vunpack.c.l.b16 %v3751
    %v6091 = vunpack.c.h.b16 %v3751
    %v6092 = vunpack.c.l.b16 %v3752
    %v6093 = vunpack.c.h.b16 %v3752
    %v6094 = vunpack.c.l.b16 %v3753
    %v6095 = vunpack.c.h.b16 %v3753
    %v6096 = vunpack.c.l.b16 %v3754
    %v6097 = vunpack.c.h.b16 %v3754
    %v6098 = vunpack.c.l.b16 %v3755
    %v6099 = vunpack.c.h.b16 %v3755
    %v6100 = vunpack.c.l.b16 %v3756
    %v6101 = vunpack.c.h.b16 %v3756
    %v6102 = vunpack.c.l.b16 %v3757
    %v6103 = vunpack.c.h.b16 %v3757
    %v6104 = vunpack.c.l.b16 %v3758
    %v6105 = vunpack.c.h.b16 %v3758
    %v6106 = vunpack.c.l.b16 %v3759
    %v6107 = vunpack.c.h.b16 %v3759
    %v6108 = vunpack.c.l.b16 %v3760
    %v6109 = vunpack.c.h.b16 %v3760
    %v6110 = vunpack.c.l.b16 %v3761
    %v6111 = vunpack.c.h.b16 %v3761
    %v6112 = vunpack.c.l.b16 %v3762
    %v6113 = vunpack.c.h.b16 %v3762
    %v6114 = vunpack.c.l.b16 %v3763
    %v6115 = vunpack.c.h.b16 %v3763
    %v6116 = vunpack.c.l.b16 %v3764
    %v6117 = vunpack.c.h.b16 %v3764
    %v6118 = vunpack.c.l.b16 %v3765
    %v6119 = vunpack.c.h.b16 %v3765
    %v6120 = vunpack.c.l.b16 %v3766
    %v6121 = vunpack.c.h.b16 %v3766
    %v6122 = vunpack.c.l.b16 %v3767
    %v6123 = vunpack.c.h.b16 %v3767
    %v6124 = vunpack.c.l.b16 %v3768
    %v6125 = vunpack.c.h.b16 %v3768
    %v6126 = vunpack.c.l.b16 %v3769
    %v6127 = vunpack.c.h.b16 %v3769
    %v6128 = vunpack.c.l.b16 %v3770
    %v6129 = vunpack.c.h.b16 %v3770
    %v6130 = vunpack.c.l.b16 %v3771
    %v6131 = vunpack.c.h.b16 %v3771
    %v6132 = vunpack.c.l.b16 %v3772
    %v6133 = vunpack.c.h.b16 %v3772
    %v6134 = vunpack.c.l.b16 %v3773
    %v6135 = vunpack.c.h.b16 %v3773
    %v6136 = vunpack.c.l.b16 %v3774
    %v6137 = vunpack.c.h.b16 %v3774
    %v6138 = vunpack.c.l.b16 %v3775
    %v6139 = vunpack.c.h.b16 %v3775
    %v6140 = vunpack.c.l.b16 %v3776
    %v6141 = vunpack.c.h.b16 %v3776
    %v6142 = vunpack.c.l.b16 %v3777
    %v6143 = vunpack.c.h.b16 %v3777
    %v6144 = vunpack.c.l.b16 %v3778
    %v6145 = vunpack.c.h.b16 %v3778
    %v6146 = vunpack.c.l.b16 %v3779
    %v6147 = vunpack.c.h.b16 %v3779
    %v6148 = vunpack.c.l.b16 %v3780
    %v6149 = vunpack.c.h.b16 %v3780
    %v6150 = vunpack.c.l.b16 %v3781
    %v6151 = vunpack.c.h.b16 %v3781
    %v6152 = vunpack.c.l.b16 %v3782
    %v6153 = vunpack.c.h.b16 %v3782
    %v6154 = vunpack.c.l.b16 %v3783
    %v6155 = vunpack.c.h.b16 %v3783
    %v6156 = vunpack.c.l.b16 %v3784
    %v6157 = vunpack.c.h.b16 %v3784
    %v6158 = vunpack.c.l.b16 %v3785
    %v6159 = vunpack.c.h.b16 %v3785
    %v6160 = vunpack.c.l.b16 %v3786
    %v6161 = vunpack.c.h.b16 %v3786
    %v6162 = vunpack.c.l.b16 %v3787
    %v6163 = vunpack.c.h.b16 %v3787
    %v6164 = vunpack.c.l.b16 %v3788
    %v6165 = vunpack.c.h.b16 %v3788
    %v6166 = vunpack.c.l.b16 %v3789
    %v6167 = vunpack.c.h.b16 %v3789
    %v6168 = vunpack.c.l.b16 %v3790
    %v6169 = vunpack.c.h.b16 %v3790
    %v6170 = vunpack.c.l.b16 %v3791
    %v6171 = vunpack.c.h.b16 %v3791
    %v6172 = vunpack.c.l.b16 %v3792
    %v6173 = vunpack.c.h.b16 %v3792
    %v6174 = vunpack.c.l.b16 %v3793
    %v6175 = vunpack.c.h.b16 %v3793
    %v6176 = vunpack.c.l.b16 %v3794
    %v6177 = vunpack.c.h.b16 %v3794
    %v6178 = vunpack.c.l.b16 %v3795
    %v6179 = vunpack.c.h.b16 %v3795
    %v6180 = vunpack.c.l.b16 %v3796
    %v6181 = vunpack.c.h.b16 %v3796
    %v6182 = vunpack.c.l.b16 %v3797
    %v6183 = vunpack.c.h.b16 %v3797
    %v6184 = vunpack.c.l.b16 %v3798
    %v6185 = vunpack.c.h.b16 %v3798
    %v6186 = vunpack.c.l.b16 %v3799
    %v6187 = vunpack.c.h.b16 %v3799
    %v6188 = vunpack.c.l.b16 %v3800
    %v6189 = vunpack.c.h.b16 %v3800
    %v6190 = vunpack.c.l.b16 %v3801
    %v6191 = vunpack.c.h.b16 %v3801
    %v6192 = vunpack.c.l.b16 %v3802
    %v6193 = vunpack.c.h.b16 %v3802
    %v6194 = vunpack.c.l.b16 %v3803
    %v6195 = vunpack.c.h.b16 %v3803
    %v6196 = vunpack.c.l.b16 %v3804
    %v6197 = vunpack.c.h.b16 %v3804
    %v6198 = vunpack.c.l.b16 %v3805
    %v6199 = vunpack.c.h.b16 %v3805
    %v6200 = vunpack.c.l.b16 %v3806
    %v6201 = vunpack.c.h.b16 %v3806
    %v6202 = vunpack.c.l.b16 %v3807
    %v6203 = vunpack.c.h.b16 %v3807
    %v6204 = vunpack.c.l.b16 %v3808
    %v6205 = vunpack.c.h.b16 %v3808
    %v6206 = vunpack.c.l.b16 %v3809
    %v6207 = vunpack.c.h.b16 %v3809
    %v6208 = vunpack.c.l.b16 %v3810
    %v6209 = vunpack.c.h.b16 %v3810
    %v6210 = vunpack.c.l.b16 %v3811
    %v6211 = vunpack.c.h.b16 %v3811
    %v6212 = vunpack.c.l.b16 %v3812
    %v6213 = vunpack.c.h.b16 %v3812
    %v6214 = vunpack.c.l.b16 %v3813
    %v6215 = vunpack.c.h.b16 %v3813
    %v6216 = vunpack.c.l.b16 %v3814
    %v6217 = vunpack.c.h.b16 %v3814
    %v6218 = vunpack.c.l.b16 %v3815
    %v6219 = vunpack.c.h.b16 %v3815
    %v6220 = vunpack.c.l.b16 %v3816
    %v6221 = vunpack.c.h.b16 %v3816
    %v6222 = vunpack.c.l.b16 %v3817
    %v6223 = vunpack.c.h.b16 %v3817
    %v6224 = vunpack.c.l.b16 %v3818
    %v6225 = vunpack.c.h.b16 %v3818
    %v6226 = vunpack.c.l.b16 %v3819
    %v6227 = vunpack.c.h.b16 %v3819
    %v6228 = vunpack.c.l.b16 %v3820
    %v6229 = vunpack.c.h.b16 %v3820
    %v6230 = vunpack.c.l.b16 %v3821
    %v6231 = vunpack.c.h.b16 %v3821
    %v6232 = vunpack.c.l.b16 %v3822
    %v6233 = vunpack.c.h.b16 %v3822
    %v6234 = vunpack.c.l.b16 %v3823
    %v6235 = vunpack.c.h.b16 %v3823
    %v6236 = vunpack.c.l.b16 %v3824
    %v6237 = vunpack.c.h.b16 %v3824
    %v6238 = vunpack.c.l.b16 %v3825
    %v6239 = vunpack.c.h.b16 %v3825
    %v6240 = vunpack.c.l.b16 %v3826
    %v6241 = vunpack.c.h.b16 %v3826
    %v6242 = vunpack.c.l.b16 %v3827
    %v6243 = vunpack.c.h.b16 %v3827
    %v6244 = vunpack.c.l.b16 %v3828
    %v6245 = vunpack.c.h.b16 %v3828
    %v6246 = vunpack.c.l.b16 %v3829
    %v6247 = vunpack.c.h.b16 %v3829
    %v6248 = vunpack.c.l.b16 %v3830
    %v6249 = vunpack.c.h.b16 %v3830
    %v6250 = vunpack.c.l.b16 %v3831
    %v6251 = vunpack.c.h.b16 %v3831
    %v6252 = vunpack.c.l.b16 %v3832
    %v6253 = vunpack.c.h.b16 %v3832
    %v6254 = vunpack.c.l.b16 %v3833
    %v6255 = vunpack.c.h.b16 %v3833
    %v6256 = vunpack.c.l.b16 %v3834
    %v6257 = vunpack.c.h.b16 %v3834
    %v6258 = vunpack.c.l.b16 %v3835
    %v6259 = vunpack.c.h.b16 %v3835
    %v6260 = vunpack.c.l.b16 %v3836
    %v6261 = vunpack.c.h.b16 %v3836
    %v6262 = vunpack.c.l.b16 %v3837
    %v6263 = vunpack.c.h.b16 %v3837
    %v6264 = vunpack.c.l.b16 %v3838
    %v6265 = vunpack.c.h.b16 %v3838
    %v6266 = vunpack.c.l.b16 %v3839
    %v6267 = vunpack.c.h.b16 %v3839
    %v6268 = vunpack.c.l.b16 %v3840
    %v6269 = vunpack.c.h.b16 %v3840
    %v6270 = vunpack.c.l.b16 %v3841
    %v6271 = vunpack.c.h.b16 %v3841
    %v6272 = vunpack.c.l.b16 %v3842
    %v6273 = vunpack.c.h.b16 %v3842
    %v6274 = vunpack.c.l.b16 %v3843
    %v6275 = vunpack.c.h.b16 %v3843
    %v6276 = vunpack.c.l.b16 %v3844
    %v6277 = vunpack.c.h.b16 %v3844
    %v6278 = vunpack.c.l.b16 %v3845
    %v6279 = vunpack.c.h.b16 %v3845
    %v6280 = vunpack.c.l.b16 %v3846
    %v6281 = vunpack.c.h.b16 %v3846
    %v6282 = vunpack.c.l.b16 %v3847
    %v6283 = vunpack.c.h.b16 %v3847
    %v6284 = vunpack.c.l.b16 %v3848
    %v6285 = vunpack.c.h.b16 %v3848
    %v6286 = vunpack.c.l.b16 %v3849
    %v6287 = vunpack.c.h.b16 %v3849
    %v6288 = vunpack.c.l.b16 %v3850
    %v6289 = vunpack.c.h.b16 %v3850
    %v6290 = vunpack.c.l.b16 %v3851
    %v6291 = vunpack.c.h.b16 %v3851
    %v6292 = vunpack.c.l.b16 %v3852
    %v6293 = vunpack.c.h.b16 %v3852
    %v6294 = vunpack.c.l.b16 %v3853
    %v6295 = vunpack.c.h.b16 %v3853
    %v6296 = vunpack.c.l.b16 %v3854
    %v6297 = vunpack.c.h.b16 %v3854
    %v6298 = vunpack.c.l.b16 %v3855
    %v6299 = vunpack.c.h.b16 %v3855
    %v6300 = vunpack.c.l.b16 %v3856
    %v6301 = vunpack.c.h.b16 %v3856
    %v6302 = vunpack.c.l.b16 %v3857
    %v6303 = vunpack.c.h.b16 %v3857
    %v6304 = vunpack.c.l.b16 %v3858
    %v6305 = vunpack.c.h.b16 %v3858
    %v6306 = vunpack.c.l.b16 %v3859
    %v6307 = vunpack.c.h.b16 %v3859
    %v6308 = vunpack.c.l.b16 %v3860
    %v6309 = vunpack.c.h.b16 %v3860
    %v6310 = vunpack.c.l.b16 %v3861
    %v6311 = vunpack.c.h.b16 %v3861
    %v6312 = vunpack.c.l.b16 %v3862
    %v6313 = vunpack.c.h.b16 %v3862
    %v6314 = vunpack.c.l.b16 %v3863
    %v6315 = vunpack.c.h.b16 %v3863
    %v6316 = vunpack.c.l.b16 %v3864
    %v6317 = vunpack.c.h.b16 %v3864
    %v6318 = vunpack.c.l.b16 %v3865
    %v6319 = vunpack.c.h.b16 %v3865
    %v6320 = vunpack.c.l.b16 %v3866
    %v6321 = vunpack.c.h.b16 %v3866
    %v6322 = vunpack.c.l.b16 %v3867
    %v6323 = vunpack.c.h.b16 %v3867
    %v6324 = vunpack.c.l.b16 %v3868
    %v6325 = vunpack.c.h.b16 %v3868
    %v6326 = vunpack.c.l.b16 %v3869
    %v6327 = vunpack.c.h.b16 %v3869
    %v6328 = vunpack.c.l.b16 %v3870
    %v6329 = vunpack.c.h.b16 %v3870
    %v6330 = vunpack.c.l.b16 %v3871
    %v6331 = vunpack.c.h.b16 %v3871
    %v6332 = vunpack.c.l.b16 %v3872
    %v6333 = vunpack.c.h.b16 %v3872
    %v6334 = vunpack.c.l.b16 %v3873
    %v6335 = vunpack.c.h.b16 %v3873
    %v6336 = vunpack.c.l.b16 %v3874
    %v6337 = vunpack.c.h.b16 %v3874
    %v6338 = vunpack.c.l.b16 %v3875
    %v6339 = vunpack.c.h.b16 %v3875
    %v6340 = vunpack.c.l.b16 %v3876
    %v6341 = vunpack.c.h.b16 %v3876
    %v6342 = vunpack.c.l.b16 %v3877
    %v6343 = vunpack.c.h.b16 %v3877
    %v6344 = vunpack.c.l.b16 %v3878
    %v6345 = vunpack.c.h.b16 %v3878
    %v6346 = vunpack.c.l.b16 %v3879
    %v6347 = vunpack.c.h.b16 %v3879
    %v6348 = vunpack.c.l.b16 %v3880
    %v6349 = vunpack.c.h.b16 %v3880
    %v6350 = vunpack.c.l.b16 %v3881
    %v6351 = vunpack.c.h.b16 %v3881
    %v6352 = vunpack.c.l.b16 %v3882
    %v6353 = vunpack.c.h.b16 %v3882
    %v6354 = vunpack.c.l.b16 %v3883
    %v6355 = vunpack.c.h.b16 %v3883
    %v6356 = vunpack.c.l.b16 %v3884
    %v6357 = vunpack.c.h.b16 %v3884
    %v6358 = vunpack.c.l.b16 %v3885
    %v6359 = vunpack.c.h.b16 %v3885
    %v6360 = vunpack.c.l.b16 %v3886
    %v6361 = vunpack.c.h.b16 %v3886
    %v6362 = vunpack.c.l.b16 %v3887
    %v6363 = vunpack.c.h.b16 %v3887
    %v6364 = vunpack.c.l.b16 %v3888
    %v6365 = vunpack.c.h.b16 %v3888
    %v6366 = vunpack.c.l.b16 %v3889
    %v6367 = vunpack.c.h.b16 %v3889
    %v6368 = vunpack.c.l.b16 %v3890
    %v6369 = vunpack.c.h.b16 %v3890
    %v6370 = vunpack.c.l.b16 %v3891
    %v6371 = vunpack.c.h.b16 %v3891
    %v6372 = vunpack.c.l.b16 %v3892
    %v6373 = vunpack.c.h.b16 %v3892
    %v6374 = vunpack.c.l.b16 %v3893
    %v6375 = vunpack.c.h.b16 %v3893
    %v6376 = vunpack.c.l.b16 %v3894
    %v6377 = vunpack.c.h.b16 %v3894
    %v6378 = vunpack.c.l.b16 %v3895
    %v6379 = vunpack.c.h.b16 %v3895
    %v6380 = vunpack.c.l.b16 %v3896
    %v6381 = vunpack.c.h.b16 %v3896
    %v6382 = vunpack.c.l.b16 %v3897
    %v6383 = vunpack.c.h.b16 %v3897
    %v6384 = vunpack.c.l.b16 %v3898
    %v6385 = vunpack.c.h.b16 %v3898
    %v6386 = vunpack.c.l.b16 %v3899
    %v6387 = vunpack.c.h.b16 %v3899
    %v6388 = vunpack.c.l.b16 %v3900
    %v6389 = vunpack.c.h.b16 %v3900
    %v6390 = vunpack.c.l.b16 %v3901
    %v6391 = vunpack.c.h.b16 %v3901
    %v6392 = vunpack.c.l.b16 %v3902
    %v6393 = vunpack.c.h.b16 %v3902
    %v6394 = vunpack.c.l.b16 %v3903
    %v6395 = vunpack.c.h.b16 %v3903
    %v6396 = vunpack.c.l.b16 %v3904
    %v6397 = vunpack.c.h.b16 %v3904
    %v6398 = vunpack.c.l.b16 %v3905
    %v6399 = vunpack.c.h.b16 %v3905
    %v6400 = vunpack.c.l.b16 %v3906
    %v6401 = vunpack.c.h.b16 %v3906
    %v6402 = vunpack.c.l.b16 %v3907
    %v6403 = vunpack.c.h.b16 %v3907
    %v6404 = vunpack.c.l.b16 %v3908
    %v6405 = vunpack.c.h.b16 %v3908
    %v6406 = vunpack.c.l.b16 %v3909
    %v6407 = vunpack.c.h.b16 %v3909
    %v6408 = vunpack.c.l.b16 %v3910
    %v6409 = vunpack.c.h.b16 %v3910
    %v6410 = vunpack.c.l.b16 %v3911
    %v6411 = vunpack.c.h.b16 %v3911
    %v6412 = vunpack.c.l.b16 %v3912
    %v6413 = vunpack.c.h.b16 %v3912
    %v6414 = vunpack.c.l.b16 %v3913
    %v6415 = vunpack.c.h.b16 %v3913
    %v6416 = vunpack.c.l.b16 %v3914
    %v6417 = vunpack.c.h.b16 %v3914
    %v6418 = vunpack.c.l.b16 %v3915
    %v6419 = vunpack.c.h.b16 %v3915
    %v6420 = vunpack.c.l.b16 %v3916
    %v6421 = vunpack.c.h.b16 %v3916
    %v6422 = vunpack.c.l.b16 %v3917
    %v6423 = vunpack.c.h.b16 %v3917
    %v6424 = vunpack.c.l.b16 %v3918
    %v6425 = vunpack.c.h.b16 %v3918
    %v6426 = vunpack.c.l.b16 %v3919
    %v6427 = vunpack.c.h.b16 %v3919
    %v6428 = vunpack.c.l.b16 %v3920
    %v6429 = vunpack.c.h.b16 %v3920
    %v6430 = vunpack.c.l.b16 %v3921
    %v6431 = vunpack.c.h.b16 %v3921
    %v6432 = vunpack.c.l.b16 %v3922
    %v6433 = vunpack.c.h.b16 %v3922
    %v6434 = vunpack.c.l.b16 %v3923
    %v6435 = vunpack.c.h.b16 %v3923
    %v6436 = vunpack.c.l.b16 %v3924
    %v6437 = vunpack.c.h.b16 %v3924
    %v6438 = vunpack.c.l.b16 %v3925
    %v6439 = vunpack.c.h.b16 %v3925
    %v6440 = vunpack.c.l.b16 %v3926
    %v6441 = vunpack.c.h.b16 %v3926
    %v6442 = vunpack.c.l.b16 %v3927
    %v6443 = vunpack.c.h.b16 %v3927
    %v6444 = vunpack.c.l.b16 %v3928
    %v6445 = vunpack.c.h.b16 %v3928
    %v6446 = vunpack.c.l.b16 %v3929
    %v6447 = vunpack.c.h.b16 %v3929
    %v6448 = vunpack.c.l.b16 %v3930
    %v6449 = vunpack.c.h.b16 %v3930
    %v6450 = vunpack.c.l.b16 %v3931
    %v6451 = vunpack.c.h.b16 %v3931
    %v6452 = vunpack.c.l.b16 %v3932
    %v6453 = vunpack.c.h.b16 %v3932
    %v6454 = vunpack.c.l.b16 %v3933
    %v6455 = vunpack.c.h.b16 %v3933
    %v6456 = vunpack.c.l.b16 %v3934
    %v6457 = vunpack.c.h.b16 %v3934
    %v6458 = vunpack.c.l.b16 %v3935
    %v6459 = vunpack.c.h.b16 %v3935
    %v6460 = vunpack.c.l.b16 %v3936
    %v6461 = vunpack.c.h.b16 %v3936
    %v6462 = vunpack.c.l.b16 %v3937
    %v6463 = vunpack.c.h.b16 %v3937
    %v6464 = vunpack.c.l.b16 %v3938
    %v6465 = vunpack.c.h.b16 %v3938
    %v6466 = vunpack.c.l.b16 %v3939
    %v6467 = vunpack.c.h.b16 %v3939
    %v6468 = vunpack.c.l.b16 %v3940
    %v6469 = vunpack.c.h.b16 %v3940
    %v6470 = vunpack.c.l.b16 %v3941
    %v6471 = vunpack.c.h.b16 %v3941
    %v6472 = vunpack.c.l.b16 %v3942
    %v6473 = vunpack.c.h.b16 %v3942
    %v6474 = vunpack.c.l.b16 %v3943
    %v6475 = vunpack.c.h.b16 %v3943
    %v6476 = vunpack.c.l.b16 %v3944
    %v6477 = vunpack.c.h.b16 %v3944
    %v6478 = vunpack.c.l.b16 %v3945
    %v6479 = vunpack.c.h.b16 %v3945
    %v6480 = vunpack.c.l.b16 %v3946
    %v6481 = vunpack.c.h.b16 %v3946
    %v6482 = vunpack.c.l.b16 %v3947
    %v6483 = vunpack.c.h.b16 %v3947
    %v6484 = vunpack.c.l.b16 %v3948
    %v6485 = vunpack.c.h.b16 %v3948
    %v6486 = vunpack.c.l.b16 %v3949
    %v6487 = vunpack.c.h.b16 %v3949
    %v6488 = vunpack.c.l.b16 %v3950
    %v6489 = vunpack.c.h.b16 %v3950
    %v6490 = vunpack.c.l.b16 %v3951
    %v6491 = vunpack.c.h.b16 %v3951
    %v6492 = vunpack.c.l.b16 %v3952
    %v6493 = vunpack.c.h.b16 %v3952
    %v6494 = vunpack.c.l.b16 %v3953
    %v6495 = vunpack.c.h.b16 %v3953
    %v6496 = vunpack.c.l.b16 %v3954
    %v6497 = vunpack.c.h.b16 %v3954
    %v6498 = vunpack.c.l.b16 %v3955
    %v6499 = vunpack.c.h.b16 %v3955
    %v6500 = vunpack.c.l.b16 %v3956
    %v6501 = vunpack.c.h.b16 %v3956
    %v6502 = vunpack.c.l.b16 %v3957
    %v6503 = vunpack.c.h.b16 %v3957
    %v6504 = vunpack.c.l.b16 %v3958
    %v6505 = vunpack.c.h.b16 %v3958
    %v6506 = vunpack.c.l.b16 %v3959
    %v6507 = vunpack.c.h.b16 %v3959
    %v6508 = vunpack.c.l.b16 %v3960
    %v6509 = vunpack.c.h.b16 %v3960
    %v6510 = vunpack.c.l.b16 %v3961
    %v6511 = vunpack.c.h.b16 %v3961
    %v6512 = vunpack.c.l.b16 %v3962
    %v6513 = vunpack.c.h.b16 %v3962
    %v6514 = vunpack.c.l.b16 %v3963
    %v6515 = vunpack.c.h.b16 %v3963
    %v6516 = vunpack.c.l.b16 %v3964
    %v6517 = vunpack.c.h.b16 %v3964
    %v6518 = vunpack.c.l.b16 %v3965
    %v6519 = vunpack.c.h.b16 %v3965
    %v6520 = vunpack.c.l.b16 %v3966
    %v6521 = vunpack.c.h.b16 %v3966
    %v6522 = vunpack.c.l.b16 %v3967
    %v6523 = vunpack.c.h.b16 %v3967
    %v6524 = vunpack.c.l.b16 %v3968
    %v6525 = vunpack.c.h.b16 %v3968
    %v6526 = vunpack.c.l.b16 %v3969
    %v6527 = vunpack.c.h.b16 %v3969
    %v6528 = vunpack.c.l.b16 %v3970
    %v6529 = vunpack.c.h.b16 %v3970
    %v6530 = vunpack.c.l.b16 %v3971
    %v6531 = vunpack.c.h.b16 %v3971
    %v6532 = vunpack.c.l.b16 %v3972
    %v6533 = vunpack.c.h.b16 %v3972
    %v6534 = vunpack.c.l.b16 %v3973
    %v6535 = vunpack.c.h.b16 %v3973
    %v6536 = vunpack.c.l.b16 %v3974
    %v6537 = vunpack.c.h.b16 %v3974
    %v6538 = vunpack.c.l.b16 %v3975
    %v6539 = vunpack.c.h.b16 %v3975
    %v6540 = vunpack.c.l.b16 %v3976
    %v6541 = vunpack.c.h.b16 %v3976
    %v6542 = vunpack.c.l.b16 %v3977
    %v6543 = vunpack.c.h.b16 %v3977
    %v6544 = vunpack.c.l.b16 %v3978
    %v6545 = vunpack.c.h.b16 %v3978
    %v6546 = vunpack.c.l.b16 %v3979
    %v6547 = vunpack.c.h.b16 %v3979
    %v6548 = vunpack.c.l.b16 %v3980
    %v6549 = vunpack.c.h.b16 %v3980
    %v6550 = vunpack.c.l.b16 %v3981
    %v6551 = vunpack.c.h.b16 %v3981
    %v6552 = vunpack.c.l.b16 %v3982
    %v6553 = vunpack.c.h.b16 %v3982
    %v6554 = vunpack.c.l.b16 %v3983
    %v6555 = vunpack.c.h.b16 %v3983
    %v6556 = vunpack.c.l.b16 %v3984
    %v6557 = vunpack.c.h.b16 %v3984
    %v6558 = vunpack.c.l.b16 %v3985
    %v6559 = vunpack.c.h.b16 %v3985
    %v6560 = vunpack.c.l.b16 %v3986
    %v6561 = vunpack.c.h.b16 %v3986
    %v6562 = vunpack.c.l.b16 %v3987
    %v6563 = vunpack.c.h.b16 %v3987
    %v6564 = vunpack.c.l.b16 %v3988
    %v6565 = vunpack.c.h.b16 %v3988
    %v6566 = vunpack.c.l.b16 %v3989
    %v6567 = vunpack.c.h.b16 %v3989
    %v6568 = vunpack.c.l.b16 %v3990
    %v6569 = vunpack.c.h.b16 %v3990
    %v6570 = vunpack.c.l.b16 %v3991
    %v6571 = vunpack.c.h.b16 %v3991
    %v6572 = vunpack.c.l.b16 %v3992
    %v6573 = vunpack.c.h.b16 %v3992
    %v6574 = vunpack.c.l.b16 %v3993
    %v6575 = vunpack.c.h.b16 %v3993
    %v6576 = vunpack.c.l.b16 %v3994
    %v6577 = vunpack.c.h.b16 %v3994
    %v6578 = vunpack.c.l.b16 %v3995
    %v6579 = vunpack.c.h.b16 %v3995
    %v6580 = vunpack.c.l.b16 %v3996
    %v6581 = vunpack.c.h.b16 %v3996
    %v6582 = vunpack.c.l.b16 %v3997
    %v6583 = vunpack.c.h.b16 %v3997
    %v6584 = vunpack.c.l.b16 %v3998
    %v6585 = vunpack.c.h.b16 %v3998
    %v6586 = vunpack.c.l.b16 %v3999
    %v6587 = vunpack.c.h.b16 %v3999
    %v6588 = vunpack.c.l.b16 %v4000
    %v6589 = vunpack.c.h.b16 %v4000
    %v6590 = vunpack.c.l.b16 %v4001
    %v6591 = vunpack.c.h.b16 %v4001
    %v6592 = vunpack.c.l.b16 %v4002
    %v6593 = vunpack.c.h.b16 %v4002
    %v6594 = vunpack.c.l.b16 %v4003
    %v6595 = vunpack.c.h.b16 %v4003
    %v6596 = vunpack.c.l.b16 %v4004
    %v6597 = vunpack.c.h.b16 %v4004
    %v6598 = vunpack.c.l.b16 %v4005
    %v6599 = vunpack.c.h.b16 %v4005
    %v6600 = vunpack.c.l.b16 %v4006
    %v6601 = vunpack.c.h.b16 %v4006
    %v6602 = vunpack.c.l.b16 %v4007
    %v6603 = vunpack.c.h.b16 %v4007
    %v6604 = vunpack.c.l.b16 %v4008
    %v6605 = vunpack.c.h.b16 %v4008
    %v6606 = vunpack.c.l.b16 %v4009
    %v6607 = vunpack.c.h.b16 %v4009
    %v6608 = vunpack.c.l.b16 %v4010
    %v6609 = vunpack.c.h.b16 %v4010
    %v6610 = vunpack.c.l.b16 %v4011
    %v6611 = vunpack.c.h.b16 %v4011
    %v6612 = vunpack.c.l.b16 %v4012
    %v6613 = vunpack.c.h.b16 %v4012
    %v6614 = vunpack.c.l.b16 %v4013
    %v6615 = vunpack.c.h.b16 %v4013
    %v6616 = vunpack.c.l.b16 %v4014
    %v6617 = vunpack.c.h.b16 %v4014
    %v6618 = vunpack.c.l.b16 %v4015
    %v6619 = vunpack.c.h.b16 %v4015
    %v6620 = vunpack.c.l.b16 %v4016
    %v6621 = vunpack.c.h.b16 %v4016
    %v6622 = vunpack.c.l.b16 %v4017
    %v6623 = vunpack.c.h.b16 %v4017
    %v6624 = vunpack.c.l.b16 %v4018
    %v6625 = vunpack.c.h.b16 %v4018
    %v6626 = vunpack.c.l.b16 %v4019
    %v6627 = vunpack.c.h.b16 %v4019
    %v6628 = vunpack.c.l.b16 %v4020
    %v6629 = vunpack.c.h.b16 %v4020
    %v6630 = vunpack.c.l.b16 %v4021
    %v6631 = vunpack.c.h.b16 %v4021
    %v6632 = vunpack.c.l.b16 %v4022
    %v6633 = vunpack.c.h.b16 %v4022
    %v6634 = vunpack.c.l.b16 %v4023
    %v6635 = vunpack.c.h.b16 %v4023
    %v6636 = vunpack.c.l.b16 %v4024
    %v6637 = vunpack.c.h.b16 %v4024
    %v6638 = vunpack.c.l.b16 %v4025
    %v6639 = vunpack.c.h.b16 %v4025
    %v6640 = vunpack.c.l.b16 %v4026
    %v6641 = vunpack.c.h.b16 %v4026
    %v6642 = vunpack.c.l.b16 %v4027
    %v6643 = vunpack.c.h.b16 %v4027
    %v6644 = vunpack.c.l.b16 %v4028
    %v6645 = vunpack.c.h.b16 %v4028
    %v6646 = vunpack.c.l.b16 %v4029
    %v6647 = vunpack.c.h.b16 %v4029
    %v6648 = vunpack.c.l.b16 %v4030
    %v6649 = vunpack.c.h.b16 %v4030
    %v6650 = vunpack.c.l.b16 %v4031
    %v6651 = vunpack.c.h.b16 %v4031
    %v6652 = vunpack.c.l.b16 %v4032
    %v6653 = vunpack.c.h.b16 %v4032
    %v6654 = vunpack.c.l.b16 %v4033
    %v6655 = vunpack.c.h.b16 %v4033
    %v6656 = vunpack.c.l.b16 %v4034
    %v6657 = vunpack.c.h.b16 %v4034
    %v6658 = vunpack.c.l.b16 %v4035
    %v6659 = vunpack.c.h.b16 %v4035
    %v6660 = vunpack.c.l.b16 %v4036
    %v6661 = vunpack.c.h.b16 %v4036
    %v6662 = vunpack.c.l.b16 %v4037
    %v6663 = vunpack.c.h.b16 %v4037
    %v6664 = vunpack.c.l.b16 %v4038
    %v6665 = vunpack.c.h.b16 %v4038
    %v6666 = vunpack.c.l.b16 %v4039
    %v6667 = vunpack.c.h.b16 %v4039
    %v6668 = vunpack.c.l.b16 %v4040
    %v6669 = vunpack.c.h.b16 %v4040
    %v6670 = vunpack.c.l.b16 %v4041
    %v6671 = vunpack.c.h.b16 %v4041
    %v6672 = vunpack.c.l.b16 %v4042
    %v6673 = vunpack.c.h.b16 %v4042
    %v6674 = vunpack.c.l.b16 %v4043
    %v6675 = vunpack.c.h.b16 %v4043
    %v6676 = vunpack.c.l.b16 %v4044
    %v6677 = vunpack.c.h.b16 %v4044
    %v6678 = vunpack.c.l.b16 %v4045
    %v6679 = vunpack.c.h.b16 %v4045
    %v6680 = vunpack.c.l.b16 %v4046
    %v6681 = vunpack.c.h.b16 %v4046
    %v6682 = vunpack.c.l.b16 %v4047
    %v6683 = vunpack.c.h.b16 %v4047
    %v6684 = vunpack.c.l.b16 %v4048
    %v6685 = vunpack.c.h.b16 %v4048
    %v6686 = vunpack.c.l.b16 %v4049
    %v6687 = vunpack.c.h.b16 %v4049
    %v6688 = vunpack.c.l.b16 %v4050
    %v6689 = vunpack.c.h.b16 %v4050
    %v6690 = vunpack.c.l.b16 %v4051
    %v6691 = vunpack.c.h.b16 %v4051
    %v6692 = vunpack.c.l.b16 %v4052
    %v6693 = vunpack.c.h.b16 %v4052
    %v6694 = vunpack.c.l.b16 %v4053
    %v6695 = vunpack.c.h.b16 %v4053
    %v6696 = vunpack.c.l.b16 %v4054
    %v6697 = vunpack.c.h.b16 %v4054
    %v6698 = vunpack.c.l.b16 %v4055
    %v6699 = vunpack.c.h.b16 %v4055
    %v6700 = vunpack.c.l.b16 %v4056
    %v6701 = vunpack.c.h.b16 %v4056
    %v6702 = vunpack.c.l.b16 %v4057
    %v6703 = vunpack.c.h.b16 %v4057
    %v6704 = vunpack.c.l.b16 %v4058
    %v6705 = vunpack.c.h.b16 %v4058
    %v6706 = vunpack.c.l.b16 %v4059
    %v6707 = vunpack.c.h.b16 %v4059
    %v6708 = vunpack.c.l.b16 %v4060
    %v6709 = vunpack.c.h.b16 %v4060
    %v6710 = vunpack.c.l.b16 %v4061
    %v6711 = vunpack.c.h.b16 %v4061
    %v6712 = vunpack.c.l.b16 %v4062
    %v6713 = vunpack.c.h.b16 %v4062
    %v6714 = vunpack.c.l.b16 %v4063
    %v6715 = vunpack.c.h.b16 %v4063
    %v6716 = vunpack.c.l.b16 %v4064
    %v6717 = vunpack.c.h.b16 %v4064
    %v6718 = vunpack.c.l.b16 %v4065
    %v6719 = vunpack.c.h.b16 %v4065
    %v6720 = vunpack.c.l.b16 %v4066
    %v6721 = vunpack.c.h.b16 %v4066
    %v6722 = vunpack.c.l.b16 %v4067
    %v6723 = vunpack.c.h.b16 %v4067
    %v6724 = vunpack.c.l.b16 %v4068
    %v6725 = vunpack.c.h.b16 %v4068
    %v6726 = vunpack.c.l.b16 %v4069
    %v6727 = vunpack.c.h.b16 %v4069
    %v6728 = vunpack.c.l.b16 %v4070
    %v6729 = vunpack.c.h.b16 %v4070
    %v6730 = vunpack.c.l.b16 %v4071
    %v6731 = vunpack.c.h.b16 %v4071
    %v6732 = vunpack.c.l.b16 %v4072
    %v6733 = vunpack.c.h.b16 %v4072
    %v6734 = vunpack.c.l.b16 %v4073
    %v6735 = vunpack.c.h.b16 %v4073
    %v6736 = vunpack.c.l.b16 %v4074
    %v6737 = vunpack.c.h.b16 %v4074
    %v6738 = vunpack.c.l.b16 %v4075
    %v6739 = vunpack.c.h.b16 %v4075
    %v6740 = vunpack.c.l.b16 %v4076
    %v6741 = vunpack.c.h.b16 %v4076
    %v6742 = vunpack.c.l.b16 %v4077
    %v6743 = vunpack.c.h.b16 %v4077
    %v6744 = vunpack.c.l.b16 %v4078
    %v6745 = vunpack.c.h.b16 %v4078
    %v6746 = vunpack.c.l.b16 %v4079
    %v6747 = vunpack.c.h.b16 %v4079
    %v6748 = vunpack.c.l.b16 %v4080
    %v6749 = vunpack.c.h.b16 %v4080
    %v6750 = vunpack.c.l.b16 %v4081
    %v6751 = vunpack.c.h.b16 %v4081
    %v6752 = vunpack.c.l.b16 %v4082
    %v6753 = vunpack.c.h.b16 %v4082
    %v6754 = vunpack.c.l.b16 %v4083
    %v6755 = vunpack.c.h.b16 %v4083
    %v6756 = vunpack.c.l.b16 %v4084
    %v6757 = vunpack.c.h.b16 %v4084
    %v6758 = vunpack.c.l.b16 %v4085
    %v6759 = vunpack.c.h.b16 %v4085
    %v6760 = vunpack.c.l.b16 %v4086
    %v6761 = vunpack.c.h.b16 %v4086
    %v6762 = vunpack.c.l.b16 %v4087
    %v6763 = vunpack.c.h.b16 %v4087
    %v6764 = vunpack.c.l.b16 %v4088
    %v6765 = vunpack.c.h.b16 %v4088
    %v6766 = vunpack.c.l.b16 %v4089
    %v6767 = vunpack.c.h.b16 %v4089
    %v6768 = vunpack.c.l.b16 %v4090
    %v6769 = vunpack.c.h.b16 %v4090
    %v6770 = vunpack.c.l.b16 %v4091
    %v6771 = vunpack.c.h.b16 %v4091
    %v6772 = vunpack.c.l.b16 %v4092
    %v6773 = vunpack.c.h.b16 %v4092
    %v6774 = vunpack.c.l.b16 %v4093
    %v6775 = vunpack.c.h.b16 %v4093
    %v6776 = vunpack.c.l.b16 %v4094
    %v6777 = vunpack.c.h.b16 %v4094
    %v6778 = vunpack.c.l.b16 %v4095
    %v6779 = vunpack.c.h.b16 %v4095
    %v6780 = vunpack.c.l.b16 %v4096
    %v6781 = vunpack.c.h.b16 %v4096
    %v6782 = vunpack.c.l.b16 %v4097
    %v6783 = vunpack.c.h.b16 %v4097
    %v6784 = vunpack.c.l.b16 %v4098
    %v6785 = vunpack.c.h.b16 %v4098
    %v6786 = vunpack.c.l.b16 %v4099
    %v6787 = vunpack.c.h.b16 %v4099
    %v6788 = vunpack.c.l.b16 %v4100
    %v6789 = vunpack.c.h.b16 %v4100
    %v6790 = vunpack.c.l.b16 %v4101
    %v6791 = vunpack.c.h.b16 %v4101
    %v6792 = vunpack.c.l.b16 %v4102
    %v6793 = vunpack.c.h.b16 %v4102
    %v6794 = vunpack.c.l.b16 %v4103
    %v6795 = vunpack.c.h.b16 %v4103
    %v6796 = vunpack.c.l.b16 %v4104
    %v6797 = vunpack.c.h.b16 %v4104
    %v6798 = vunpack.c.l.b16 %v4105
    %v6799 = vunpack.c.h.b16 %v4105
    %v6800 = vunpack.c.l.b16 %v4106
    %v6801 = vunpack.c.h.b16 %v4106
    %v6802 = vunpack.c.l.b16 %v4107
    %v6803 = vunpack.c.h.b16 %v4107
    %v6804 = vunpack.c.l.b16 %v4108
    %v6805 = vunpack.c.h.b16 %v4108
    %v6806 = vunpack.c.l.b16 %v4109
    %v6807 = vunpack.c.h.b16 %v4109
    %v6808 = vunpack.c.l.b16 %v4110
    %v6809 = vunpack.c.h.b16 %v4110
    %v6810 = vunpack.c.l.b16 %v4111
    %v6811 = vunpack.c.h.b16 %v4111
    %v6812 = vunpack.c.l.b16 %v4112
    %v6813 = vunpack.c.h.b16 %v4112
    %v6814 = vunpack.c.l.b16 %v4113
    %v6815 = vunpack.c.h.b16 %v4113
    %v6816 = vunpack.c.l.b16 %v4114
    %v6817 = vunpack.c.h.b16 %v4114
    %v6818 = vunpack.c.l.b16 %v4115
    %v6819 = vunpack.c.h.b16 %v4115
    %v6820 = vunpack.c.l.b16 %v4116
    %v6821 = vunpack.c.h.b16 %v4116
    %v6822 = vunpack.c.l.b16 %v4117
    %v6823 = vunpack.c.h.b16 %v4117
    %v6824 = vunpack.c.l.b16 %v4118
    %v6825 = vunpack.c.h.b16 %v4118
    %v6826 = vunpack.c.l.b16 %v4119
    %v6827 = vunpack.c.h.b16 %v4119
    %v6828 = vunpack.c.l.b16 %v4120
    %v6829 = vunpack.c.h.b16 %v4120
    %v6830 = vunpack.c.l.b16 %v4121
    %v6831 = vunpack.c.h.b16 %v4121
    %v6832 = vunpack.c.l.b16 %v4122
    %v6833 = vunpack.c.h.b16 %v4122
    %v6834 = vunpack.c.l.b16 %v4123
    %v6835 = vunpack.c.h.b16 %v4123
    %v6836 = vunpack.c.l.b16 %v4124
    %v6837 = vunpack.c.h.b16 %v4124
    %v6838 = vunpack.c.l.b16 %v4125
    %v6839 = vunpack.c.h.b16 %v4125
    %v6840 = vunpack.c.l.b16 %v4126
    %v6841 = vunpack.c.h.b16 %v4126
    %v6842 = vunpack.c.l.b16 %v4127
    %v6843 = vunpack.c.h.b16 %v4127
    %v6844 = vunpack.c.l.b16 %v4128
    %v6845 = vunpack.c.h.b16 %v4128
    %v6846 = vunpack.c.l.b16 %v4129
    %v6847 = vunpack.c.h.b16 %v4129
    %v6848 = vunpack.c.l.b16 %v4130
    %v6849 = vunpack.c.h.b16 %v4130
    %v6850 = vunpack.c.l.b16 %v4131
    %v6851 = vunpack.c.h.b16 %v4131
    %v6852 = vunpack.c.l.b16 %v4132
    %v6853 = vunpack.c.h.b16 %v4132
    %v6854 = vunpack.c.l.b16 %v4133
    %v6855 = vunpack.c.h.b16 %v4133
    %v6856 = vunpack.c.l.b16 %v4134
    %v6857 = vunpack.c.h.b16 %v4134
    %v6858 = vunpack.c.l.b16 %v4135
    %v6859 = vunpack.c.h.b16 %v4135
    %v6860 = vunpack.c.l.b16 %v4136
    %v6861 = vunpack.c.h.b16 %v4136
    %v6862 = vunpack.c.l.b16 %v4137
    %v6863 = vunpack.c.h.b16 %v4137
    %v6864 = vunpack.c.l.b16 %v4138
    %v6865 = vunpack.c.h.b16 %v4138
    %v6866 = vunpack.c.l.b16 %v4139
    %v6867 = vunpack.c.h.b16 %v4139
    %v6868 = vunpack.c.l.b16 %v4140
    %v6869 = vunpack.c.h.b16 %v4140
    %v6870 = vunpack.c.l.b16 %v4141
    %v6871 = vunpack.c.h.b16 %v4141
    %v6872 = vunpack.c.l.b16 %v4142
    %v6873 = vunpack.c.h.b16 %v4142
    %v6874 = vunpack.c.l.b16 %v4143
    %v6875 = vunpack.c.h.b16 %v4143
    %v6876 = vunpack.c.l.b16 %v4144
    %v6877 = vunpack.c.h.b16 %v4144
    %v6878 = vunpack.c.l.b16 %v4145
    %v6879 = vunpack.c.h.b16 %v4145
    %v6880 = vunpack.c.l.b16 %v4146
    %v6881 = vunpack.c.h.b16 %v4146
    %v6882 = vunpack.c.l.b16 %v4147
    %v6883 = vunpack.c.h.b16 %v4147
    %v6884 = vunpack.c.l.b16 %v4148
    %v6885 = vunpack.c.h.b16 %v4148
    %v6886 = vunpack.c.l.b16 %v4149
    %v6887 = vunpack.c.h.b16 %v4149
    %v6888 = vunpack.c.l.b16 %v4150
    %v6889 = vunpack.c.h.b16 %v4150
    %v6890 = vunpack.c.l.b16 %v4151
    %v6891 = vunpack.c.h.b16 %v4151
    %v6892 = vunpack.c.l.b16 %v4152
    %v6893 = vunpack.c.h.b16 %v4152
    %v6894 = vunpack.c.l.b16 %v4153
    %v6895 = vunpack.c.h.b16 %v4153
    %v6896 = vunpack.c.l.b16 %v4154
    %v6897 = vunpack.c.h.b16 %v4154
    %v6898 = vunpack.c.l.b16 %v4155
    %v6899 = vunpack.c.h.b16 %v4155
    %v6900 = vunpack.c.l.b16 %v4156
    %v6901 = vunpack.c.h.b16 %v4156
    %v6902 = vunpack.c.l.b16 %v4157
    %v6903 = vunpack.c.h.b16 %v4157
    %v6904 = vunpack.c.l.b16 %v4158
    %v6905 = vunpack.c.h.b16 %v4158
    %v6906 = vunpack.c.l.b16 %v4159
    %v6907 = vunpack.c.h.b16 %v4159
    %v6908 = vunpack.c.l.b16 %v4160
    %v6909 = vunpack.c.h.b16 %v4160
    %v6910 = vunpack.c.l.b16 %v4161
    %v6911 = vunpack.c.h.b16 %v4161
    %v6912 = vunpack.c.l.b16 %v4162
    %v6913 = vunpack.c.h.b16 %v4162
    %v6914 = vunpack.c.l.b16 %v4163
    %v6915 = vunpack.c.h.b16 %v4163
    %v6916 = vunpack.c.l.b16 %v4164
    %v6917 = vunpack.c.h.b16 %v4164
    %v6918 = vunpack.c.l.b16 %v4165
    %v6919 = vunpack.c.h.b16 %v4165
    %v6920 = vunpack.c.l.b16 %v4166
    %v6921 = vunpack.c.h.b16 %v4166
    %v6922 = vunpack.c.l.b16 %v4167
    %v6923 = vunpack.c.h.b16 %v4167
    %v6924 = vunpack.c.l.b16 %v4168
    %v6925 = vunpack.c.h.b16 %v4168
    %v6926 = vunpack.c.l.b16 %v4169
    %v6927 = vunpack.c.h.b16 %v4169
    %v6928 = vunpack.c.l.b16 %v4170
    %v6929 = vunpack.c.h.b16 %v4170
    %v6930 = vunpack.c.l.b16 %v4171
    %v6931 = vunpack.c.h.b16 %v4171
    %v6932 = vunpack.c.l.b16 %v4172
    %v6933 = vunpack.c.h.b16 %v4172
    %v6934 = vunpack.c.l.b16 %v4173
    %v6935 = vunpack.c.h.b16 %v4173
    %v6936 = vunpack.c.l.b16 %v4174
    %v6937 = vunpack.c.h.b16 %v4174
    %v6938 = vunpack.c.l.b16 %v4175
    %v6939 = vunpack.c.h.b16 %v4175
    %v6940 = vunpack.c.l.b16 %v4176
    %v6941 = vunpack.c.h.b16 %v4176
    %v6942 = vunpack.c.l.b16 %v4177
    %v6943 = vunpack.c.h.b16 %v4177
    %v6944 = vunpack.c.l.b16 %v4178
    %v6945 = vunpack.c.h.b16 %v4178
    %v6946 = vunpack.c.l.b16 %v4179
    %v6947 = vunpack.c.h.b16 %v4179
    %v6948 = vunpack.c.l.b16 %v4180
    %v6949 = vunpack.c.h.b16 %v4180
    %v6950 = vunpack.c.l.b16 %v4181
    %v6951 = vunpack.c.h.b16 %v4181
    %v6952 = vunpack.c.l.b16 %v4182
    %v6953 = vunpack.c.h.b16 %v4182
    %v6954 = vunpack.c.l.b16 %v4183
    %v6955 = vunpack.c.h.b16 %v4183
    %v6956 = vunpack.c.l.b16 %v4184
    %v6957 = vunpack.c.h.b16 %v4184
    %v6958 = vunpack.c.l.b16 %v4185
    %v6959 = vunpack.c.h.b16 %v4185
    %v6960 = vunpack.c.l.b16 %v4186
    %v6961 = vunpack.c.h.b16 %v4186
    %v6962 = vunpack.c.l.b16 %v4187
    %v6963 = vunpack.c.h.b16 %v4187
    %v6964 = vunpack.c.l.b16 %v4188
    %v6965 = vunpack.c.h.b16 %v4188
    %v6966 = vunpack.c.l.b16 %v4189
    %v6967 = vunpack.c.h.b16 %v4189
    %v6968 = vunpack.c.l.b16 %v4190
    %v6969 = vunpack.c.h.b16 %v4190
    %v6970 = vunpack.c.l.b16 %v4191
    %v6971 = vunpack.c.h.b16 %v4191
    %v6972 = vunpack.c.l.b16 %v4192
    %v6973 = vunpack.c.h.b16 %v4192
    %v6974 = vunpack.c.l.b16 %v4193
    %v6975 = vunpack.c.h.b16 %v4193
    %v6976 = vunpack.c.l.b16 %v4194
    %v6977 = vunpack.c.h.b16 %v4194
    %v6978 = vunpack.c.l.b16 %v4195
    %v6979 = vunpack.c.h.b16 %v4195
    %v6980 = vunpack.c.l.b16 %v4196
    %v6981 = vunpack.c.h.b16 %v4196
    %v6982 = vunpack.c.l.b16 %v4197
    %v6983 = vunpack.c.h.b16 %v4197
    %v6984 = vunpack.c.l.b16 %v4198
    %v6985 = vunpack.c.h.b16 %v4198
    %v6986 = vunpack.c.l.b16 %v4199
    %v6987 = vunpack.c.h.b16 %v4199
    %v6988 = vunpack.c.l.b16 %v4200
    %v6989 = vunpack.c.h.b16 %v4200
    %v6990 = vunpack.c.l.b16 %v4201
    %v6991 = vunpack.c.h.b16 %v4201
    %v6992 = vunpack.c.l.b16 %v4202
    %v6993 = vunpack.c.h.b16 %v4202
    %v6994 = vunpack.c.l.b16 %v4203
    %v6995 = vunpack.c.h.b16 %v4203
    %v6996 = vunpack.c.l.b16 %v4204
    %v6997 = vunpack.c.h.b16 %v4204
    %v6998 = vunpack.c.l.b16 %v4205
    %v6999 = vunpack.c.h.b16 %v4205
    %v7000 = vunpack.c.l.b16 %v4206
    %v7001 = vunpack.c.h.b16 %v4206
    %v7002 = vunpack.c.l.b16 %v4207
    %v7003 = vunpack.c.h.b16 %v4207
    %v7004 = vunpack.c.l.b16 %v4208
    %v7005 = vunpack.c.h.b16 %v4208
    %v7006 = vunpack.c.l.b16 %v4209
    %v7007 = vunpack.c.h.b16 %v4209
    %v7008 = vunpack.c.l.b16 %v4210
    %v7009 = vunpack.c.h.b16 %v4210
    %v7010 = vunpack.c.l.b16 %v4211
    %v7011 = vunpack.c.h.b16 %v4211
    %v7012 = vunpack.c.l.b16 %v4212
    %v7013 = vunpack.c.h.b16 %v4212
    %v7014 = vunpack.c.l.b16 %v4213
    %v7015 = vunpack.c.h.b16 %v4213
    %v7016 = vunpack.c.l.b16 %v4214
    %v7017 = vunpack.c.h.b16 %v4214
    %v7018 = vunpack.c.l.b16 %v4215
    %v7019 = vunpack.c.h.b16 %v4215
    %v7020 = vunpack.c.l.b16 %v4216
    %v7021 = vunpack.c.h.b16 %v4216
    %v7022 = vunpack.c.l.b16 %v4217
    %v7023 = vunpack.c.h.b16 %v4217
    %v7024 = vunpack.c.l.b16 %v4218
    %v7025 = vunpack.c.h.b16 %v4218
    %v7026 = vunpack.c.l.b16 %v4219
    %v7027 = vunpack.c.h.b16 %v4219
    %v7028 = vunpack.c.l.b16 %v4220
    %v7029 = vunpack.c.h.b16 %v4220
    %v7030 = vunpack.c.l.b16 %v4221
    %v7031 = vunpack.c.h.b16 %v4221
    %v7032 = vunpack.c.l.b16 %v4222
    %v7033 = vunpack.c.h.b16 %v4222
    %v7034 = vunpack.c.l.b16 %v4223
    %v7035 = vunpack.c.h.b16 %v4223
    %v7036 = vunpack.c.l.b16 %v4224
    %v7037 = vunpack.c.h.b16 %v4224
    %v7038 = vunpack.c.l.b16 %v4225
    %v7039 = vunpack.c.h.b16 %v4225
    %v7040 = vunpack.c.l.b16 %v4226
    %v7041 = vunpack.c.h.b16 %v4226
    %v7042 = vunpack.c.l.b16 %v4227
    %v7043 = vunpack.c.h.b16 %v4227
    %v7044 = vunpack.c.l.b16 %v4228
    %v7045 = vunpack.c.h.b16 %v4228
    %v7046 = vunpack.c.l.b16 %v4229
    %v7047 = vunpack.c.h.b16 %v4229
    %v7048 = vunpack.c.l.b16 %v4230
    %v7049 = vunpack.c.h.b16 %v4230
    %v7050 = vunpack.c.l.b16 %v4231
    %v7051 = vunpack.c.h.b16 %v4231
    %v7052 = vunpack.c.l.b16 %v4232
    %v7053 = vunpack.c.h.b16 %v4232
    %v7054 = vunpack.c.l.b16 %v4233
    %v7055 = vunpack.c.h.b16 %v4233
    %v7056 = vunpack.c.l.b16 %v4234
    %v7057 = vunpack.c.h.b16 %v4234
    %v7058 = vunpack.c.l.b16 %v4235
    %v7059 = vunpack.c.h.b16 %v4235
    %v7060 = vunpack.c.l.b16 %v4236
    %v7061 = vunpack.c.h.b16 %v4236
    %v7062 = vunpack.c.l.b16 %v4237
    %v7063 = vunpack.c.h.b16 %v4237
    %v7064 = vunpack.c.l.b16 %v4238
    %v7065 = vunpack.c.h.b16 %v4238
    %v7066 = vunpack.c.l.b16 %v4239
    %v7067 = vunpack.c.h.b16 %v4239
    %v7068 = vunpack.c.l.b16 %v4240
    %v7069 = vunpack.c.h.b16 %v4240
    %v7070 = vunpack.c.l.b16 %v4241
    %v7071 = vunpack.c.h.b16 %v4241
    %v7072 = vunpack.c.l.b16 %v4242
    %v7073 = vunpack.c.h.b16 %v4242
    %v7074 = vunpack.c.l.b16 %v4243
    %v7075 = vunpack.c.h.b16 %v4243
    %v7076 = vunpack.c.l.b16 %v4244
    %v7077 = vunpack.c.h.b16 %v4244
    %v7078 = vunpack.c.l.b16 %v4245
    %v7079 = vunpack.c.h.b16 %v4245
    %v7080 = vunpack.c.l.b16 %v4246
    %v7081 = vunpack.c.h.b16 %v4246
    %v7082 = vunpack.c.l.b16 %v4247
    %v7083 = vunpack.c.h.b16 %v4247
    %v7084 = vunpack.c.l.b16 %v4248
    %v7085 = vunpack.c.h.b16 %v4248
    %v7086 = vunpack.c.l.b16 %v4249
    %v7087 = vunpack.c.h.b16 %v4249
    %v7088 = vunpack.c.l.b16 %v4250
    %v7089 = vunpack.c.h.b16 %v4250
    %v7090 = vunpack.c.l.b16 %v4251
    %v7091 = vunpack.c.h.b16 %v4251
    %v7092 = vunpack.c.l.b16 %v4252
    %v7093 = vunpack.c.h.b16 %v4252
    %v7094 = vunpack.c.l.b16 %v4253
    %v7095 = vunpack.c.h.b16 %v4253
    %v7096 = vunpack.c.l.b16 %v4254
    %v7097 = vunpack.c.h.b16 %v4254
    %v7098 = vunpack.c.l.b16 %v4255
    %v7099 = vunpack.c.h.b16 %v4255
    %v7100 = vunpack.c.l.b16 %v4256
    %v7101 = vunpack.c.h.b16 %v4256
    %v7102 = vunpack.c.l.b16 %v4257
    %v7103 = vunpack.c.h.b16 %v4257
    %v7104 = vunpack.c.l.b16 %v4258
    %v7105 = vunpack.c.h.b16 %v4258
    %v7106 = vunpack.c.l.b16 %v4259
    %v7107 = vunpack.c.h.b16 %v4259
    %v7108 = vunpack.c.l.b16 %v4260
    %v7109 = vunpack.c.h.b16 %v4260
    %v7110 = vunpack.c.l.b16 %v4261
    %v7111 = vunpack.c.h.b16 %v4261
    %v7112 = vunpack.c.l.b16 %v4262
    %v7113 = vunpack.c.h.b16 %v4262
    %v7114 = vunpack.c.l.b16 %v4263
    %v7115 = vunpack.c.h.b16 %v4263
    %v7116 = vunpack.c.l.b16 %v4264
    %v7117 = vunpack.c.h.b16 %v4264
    %v7118 = vunpack.c.l.b16 %v4265
    %v7119 = vunpack.c.h.b16 %v4265
    %v7120 = vunpack.c.l.b16 %v4266
    %v7121 = vunpack.c.h.b16 %v4266
    %v7122 = vunpack.c.l.b16 %v4267
    %v7123 = vunpack.c.h.b16 %v4267
    %v7124 = vunpack.c.l.b16 %v4268
    %v7125 = vunpack.c.h.b16 %v4268
    %v7126 = vunpack.c.l.b16 %v4269
    %v7127 = vunpack.c.h.b16 %v4269
    %v7128 = vunpack.c.l.b16 %v4270
    %v7129 = vunpack.c.h.b16 %v4270
    %v7130 = vunpack.c.l.b16 %v4271
    %v7131 = vunpack.c.h.b16 %v4271
    %v7132 = vunpack.c.l.b16 %v4272
    %v7133 = vunpack.c.h.b16 %v4272
    %v7134 = vunpack.c.l.b16 %v4273
    %v7135 = vunpack.c.h.b16 %v4273
    %v7136 = vunpack.c.l.b16 %v4274
    %v7137 = vunpack.c.h.b16 %v4274
    %v7138 = vunpack.c.l.b16 %v4275
    %v7139 = vunpack.c.h.b16 %v4275
    %v7140 = vunpack.c.l.b16 %v4276
    %v7141 = vunpack.c.h.b16 %v4276
    %v7142 = vunpack.c.l.b16 %v4277
    %v7143 = vunpack.c.h.b16 %v4277
    %v7144 = vunpack.c.l.b16 %v4278
    %v7145 = vunpack.c.h.b16 %v4278
    %v7146 = vunpack.c.l.b16 %v4279
    %v7147 = vunpack.c.h.b16 %v4279
    %v7148 = vunpack.c.l.b16 %v4280
    %v7149 = vunpack.c.h.b16 %v4280
    %v7150 = vunpack.c.l.b16 %v4281
    %v7151 = vunpack.c.h.b16 %v4281
    %v7152 = vunpack.c.l.b16 %v4282
    %v7153 = vunpack.c.h.b16 %v4282
    %v7154 = vunpack.c.l.b16 %v4283
    %v7155 = vunpack.c.h.b16 %v4283
    %v7156 = vunpack.c.l.b16 %v4284
    %v7157 = vunpack.c.h.b16 %v4284
    %v7158 = vunpack.c.l.b16 %v4285
    %v7159 = vunpack.c.h.b16 %v4285
    %v7160 = vunpack.c.l.b16 %v4286
    %v7161 = vunpack.c.h.b16 %v4286
    %v7162 = vunpack.c.l.b16 %v4287
    %v7163 = vunpack.c.h.b16 %v4287
    %v7164 = vunpack.c.l.b16 %v4288
    %v7165 = vunpack.c.h.b16 %v4288
    %v7166 = vunpack.c.l.b16 %v4289
    %v7167 = vunpack.c.h.b16 %v4289
    %v7168 = vunpack.c.l.b16 %v4290
    %v7169 = vunpack.c.h.b16 %v4290
    %v7170 = vunpack.c.l.b16 %v4291
    %v7171 = vunpack.c.h.b16 %v4291
    %v7172 = vunpack.c.l.b16 %v4292
    %v7173 = vunpack.c.h.b16 %v4292
    %v7174 = vunpack.c.l.b16 %v4293
    %v7175 = vunpack.c.h.b16 %v4293
    %v7176 = vunpack.c.l.b16 %v4294
    %v7177 = vunpack.c.h.b16 %v4294
    %v7178 = vunpack.c.l.b16 %v4295
    %v7179 = vunpack.c.h.b16 %v4295
    %v7180 = vunpack.c.l.b16 %v4296
    %v7181 = vunpack.c.h.b16 %v4296
    %v7182 = vunpack.c.l.b16 %v4297
    %v7183 = vunpack.c.h.b16 %v4297
    %v7184 = vunpack.c.l.b16 %v4298
    %v7185 = vunpack.c.h.b16 %v4298
    %v7186 = vunpack.c.l.b16 %v4299
    %v7187 = vunpack.c.h.b16 %v4299
    %v7188 = vunpack.c.l.b16 %v4300
    %v7189 = vunpack.c.h.b16 %v4300
    %v7190 = vunpack.c.l.b16 %v4301
    %v7191 = vunpack.c.h.b16 %v4301
    %v7192 = vunpack.c.l.b16 %v4302
    %v7193 = vunpack.c.h.b16 %v4302
    %v7194 = vunpack.c.l.b16 %v4303
    %v7195 = vunpack.c.h.b16 %v4303
    %v7196 = vunpack.c.l.b16 %v4304
    %v7197 = vunpack.c.h.b16 %v4304
    %v7198 = vunpack.c.l.b16 %v4305
    %v7199 = vunpack.c.h.b16 %v4305
    %v7200 = vunpack.c.l.b16 %v4306
    %v7201 = vunpack.c.h.b16 %v4306
    %v7202 = vunpack.c.l.b16 %v4307
    %v7203 = vunpack.c.h.b16 %v4307
    %v7204 = vunpack.c.l.b16 %v4308
    %v7205 = vunpack.c.h.b16 %v4308
    %v7206 = vunpack.c.l.b16 %v4309
    %v7207 = vunpack.c.h.b16 %v4309
    %v7208 = vunpack.c.l.b16 %v4310
    %v7209 = vunpack.c.h.b16 %v4310
    %v7210 = vunpack.c.l.b16 %v4311
    %v7211 = vunpack.c.h.b16 %v4311
    %v7212 = vunpack.c.l.b16 %v4312
    %v7213 = vunpack.c.h.b16 %v4312
    %v7214 = vunpack.c.l.b16 %v4313
    %v7215 = vunpack.c.h.b16 %v4313
    %v7216 = vunpack.c.l.b16 %v4314
    %v7217 = vunpack.c.h.b16 %v4314
    %v7218 = vunpack.c.l.b16 %v4315
    %v7219 = vunpack.c.h.b16 %v4315
    %v7220 = vunpack.c.l.b16 %v4316
    %v7221 = vunpack.c.h.b16 %v4316
    %v7222 = vunpack.c.l.b16 %v4317
    %v7223 = vunpack.c.h.b16 %v4317
    %v7224 = vunpack.c.l.b16 %v4318
    %v7225 = vunpack.c.h.b16 %v4318
    %v7226 = vunpack.c.l.b16 %v4319
    %v7227 = vunpack.c.h.b16 %v4319
    %v7228 = vunpack.c.l.b16 %v4320
    %v7229 = vunpack.c.h.b16 %v4320
    %v7230 = vunpack.c.l.b16 %v4321
    %v7231 = vunpack.c.h.b16 %v4321
    %v7232 = vunpack.c.l.b16 %v4322
    %v7233 = vunpack.c.h.b16 %v4322
    %v7234 = vunpack.c.l.b16 %v4323
    %v7235 = vunpack.c.h.b16 %v4323
    %v7236 = vunpack.c.l.b16 %v4324
    %v7237 = vunpack.c.h.b16 %v4324
    %v7238 = vunpack.c.l.b16 %v4325
    %v7239 = vunpack.c.h.b16 %v4325
    %v7240 = vunpack.c.l.b16 %v4326
    %v7241 = vunpack.c.h.b16 %v4326
    %v7242 = vunpack.c.l.b16 %v4327
    %v7243 = vunpack.c.h.b16 %v4327
    %v7244 = vunpack.c.l.b16 %v4328
    %v7245 = vunpack.c.h.b16 %v4328
    %v7246 = vunpack.c.l.b16 %v4329
    %v7247 = vunpack.c.h.b16 %v4329
    %v7248 = vunpack.c.l.b16 %v4330
    %v7249 = vunpack.c.h.b16 %v4330
    %v7250 = vunpack.c.l.b16 %v4331
    %v7251 = vunpack.c.h.b16 %v4331
    %v7252 = vunpack.c.l.b16 %v4332
    %v7253 = vunpack.c.h.b16 %v4332
    %v7254 = vunpack.c.l.b16 %v4333
    %v7255 = vunpack.c.h.b16 %v4333
    %v7256 = vunpack.c.l.b16 %v4334
    %v7257 = vunpack.c.h.b16 %v4334
    %v7258 = vunpack.c.l.b16 %v4335
    %v7259 = vunpack.c.h.b16 %v4335
    %v7260 = vunpack.c.l.b16 %v4336
    %v7261 = vunpack.c.h.b16 %v4336
    %v7262 = vunpack.c.l.b16 %v4337
    %v7263 = vunpack.c.h.b16 %v4337
    %v7264 = vunpack.c.l.b16 %v4338
    %v7265 = vunpack.c.h.b16 %v4338
    %v7266 = vunpack.c.l.b16 %v4339
    %v7267 = vunpack.c.h.b16 %v4339
    %v7268 = vunpack.c.l.b16 %v4340
    %v7269 = vunpack.c.h.b16 %v4340
    %v7270 = vunpack.c.l.b16 %v4341
    %v7271 = vunpack.c.h.b16 %v4341
    %v7272 = vunpack.c.l.b16 %v4342
    %v7273 = vunpack.c.h.b16 %v4342
    %v7274 = vunpack.c.l.b16 %v4343
    %v7275 = vunpack.c.h.b16 %v4343
    %v7276 = vunpack.c.l.b16 %v4344
    %v7277 = vunpack.c.h.b16 %v4344
    %v7278 = vunpack.c.l.b16 %v4345
    %v7279 = vunpack.c.h.b16 %v4345
    %v7280 = vunpack.c.l.b16 %v4346
    %v7281 = vunpack.c.h.b16 %v4346
    %v7282 = vunpack.c.l.b16 %v4347
    %v7283 = vunpack.c.h.b16 %v4347
    %v7284 = vunpack.c.l.b16 %v4348
    %v7285 = vunpack.c.h.b16 %v4348
    %v7286 = vunpack.c.l.b16 %v4349
    %v7287 = vunpack.c.h.b16 %v4349
    %v7288 = vunpack.c.l.b16 %v4350
    %v7289 = vunpack.c.h.b16 %v4350
    %v7290 = vunpack.c.l.b16 %v4351
    %v7291 = vunpack.c.h.b16 %v4351
    %v7292 = vunpack.c.l.b16 %v4352
    %v7293 = vunpack.c.h.b16 %v4352
    %v7294 = vunpack.c.l.b16 %v4353
    %v7295 = vunpack.c.h.b16 %v4353
    %v7296 = vunpack.c.l.b16 %v4354
    %v7297 = vunpack.c.h.b16 %v4354
    %v7298 = vunpack.c.l.b16 %v4355
    %v7299 = vunpack.c.h.b16 %v4355
    %v7300 = vunpack.c.l.b16 %v4356
    %v7301 = vunpack.c.h.b16 %v4356
    %v7302 = vunpack.c.l.b16 %v4357
    %v7303 = vunpack.c.h.b16 %v4357
    %v7304 = vunpack.c.l.b16 %v4358
    %v7305 = vunpack.c.h.b16 %v4358
    %v7306 = vunpack.c.l.b16 %v4359
    %v7307 = vunpack.c.h.b16 %v4359
    %v7308 = vunpack.c.l.b16 %v4360
    %v7309 = vunpack.c.h.b16 %v4360
    %v7310 = vunpack.c.l.b16 %v4361
    %v7311 = vunpack.c.h.b16 %v4361
    %v7312 = vunpack.c.l.b16 %v4362
    %v7313 = vunpack.c.h.b16 %v4362
    %v7314 = vunpack.c.l.b16 %v4363
    %v7315 = vunpack.c.h.b16 %v4363
    %v7316 = vunpack.c.l.b16 %v4364
    %v7317 = vunpack.c.h.b16 %v4364
    %v7318 = vunpack.c.l.b16 %v4365
    %v7319 = vunpack.c.h.b16 %v4365
    %v7320 = vunpack.c.l.b16 %v4366
    %v7321 = vunpack.c.h.b16 %v4366
    %v7322 = vunpack.c.l.b16 %v4367
    %v7323 = vunpack.c.h.b16 %v4367
    %v7324 = vunpack.c.l.b16 %v4368
    %v7325 = vunpack.c.h.b16 %v4368
    %v7326 = vunpack.c.l.b16 %v4369
    %v7327 = vunpack.c.h.b16 %v4369
    %v7328 = vunpack.c.l.b16 %v4370
    %v7329 = vunpack.c.h.b16 %v4370
    %v7330 = vunpack.c.l.b16 %v4371
    %v7331 = vunpack.c.h.b16 %v4371
    %v7332 = vunpack.c.l.b16 %v4372
    %v7333 = vunpack.c.h.b16 %v4372
    %v7334 = vunpack.c.l.b16 %v4373
    %v7335 = vunpack.c.h.b16 %v4373
    %v7336 = vunpack.c.l.b16 %v4374
    %v7337 = vunpack.c.h.b16 %v4374
    %v7338 = vunpack.c.l.b16 %v4375
    %v7339 = vunpack.c.h.b16 %v4375
    %v7340 = vunpack.c.l.b16 %v4376
    %v7341 = vunpack.c.h.b16 %v4376
    %v7342 = vunpack.c.l.b16 %v4377
    %v7343 = vunpack.c.h.b16 %v4377
    %v7344 = vunpack.c.l.b16 %v4378
    %v7345 = vunpack.c.h.b16 %v4378
    %v7346 = vunpack.c.l.b16 %v4379
    %v7347 = vunpack.c.h.b16 %v4379
    %v7348 = vunpack.c.l.b16 %v4380
    %v7349 = vunpack.c.h.b16 %v4380
    %v7350 = vunpack.c.l.b16 %v4381
    %v7351 = vunpack.c.h.b16 %v4381
    %v7352 = vunpack.c.l.b16 %v4382
    %v7353 = vunpack.c.h.b16 %v4382
    %v7354 = vunpack.c.l.b16 %v4383
    %v7355 = vunpack.c.h.b16 %v4383
    %v7356 = vunpack.c.l.b16 %v4384
    %v7357 = vunpack.c.h.b16 %v4384
    %v7358 = vunpack.c.l.b16 %v4385
    %v7359 = vunpack.c.h.b16 %v4385
    %v7360 = vunpack.c.l.b16 %v4386
    %v7361 = vunpack.c.h.b16 %v4386
    %v7362 = vunpack.c.l.b16 %v4387
    %v7363 = vunpack.c.h.b16 %v4387
    %v7364 = vunpack.c.l.b16 %v4388
    %v7365 = vunpack.c.h.b16 %v4388
    %v7366 = vunpack.c.l.b16 %v4389
    %v7367 = vunpack.c.h.b16 %v4389
    %v7368 = vunpack.c.l.b16 %v4390
    %v7369 = vunpack.c.h.b16 %v4390
    %v7370 = vunpack.c.l.b16 %v4391
    %v7371 = vunpack.c.h.b16 %v4391
    %v7372 = vunpack.c.l.b16 %v4392
    %v7373 = vunpack.c.h.b16 %v4392
    %v7374 = vunpack.c.l.b16 %v4393
    %v7375 = vunpack.c.h.b16 %v4393
    %v7376 = vunpack.c.l.b16 %v4394
    %v7377 = vunpack.c.h.b16 %v4394
    %v7378 = vunpack.c.l.b16 %v4395
    %v7379 = vunpack.c.h.b16 %v4395
    %v7380 = vunpack.c.l.b16 %v4396
    %v7381 = vunpack.c.h.b16 %v4396
    %v7382 = vunpack.c.l.b16 %v4397
    %v7383 = vunpack.c.h.b16 %v4397
    %v7384 = vunpack.c.l.b16 %v4398
    %v7385 = vunpack.c.h.b16 %v4398
    %v7386 = vunpack.c.l.b16 %v4399
    %v7387 = vunpack.c.h.b16 %v4399
    %v7388 = vunpack.c.l.b16 %v4400
    %v7389 = vunpack.c.h.b16 %v4400
    %v7390 = vunpack.c.l.b16 %v4401
    %v7391 = vunpack.c.h.b16 %v4401
    %v7392 = vunpack.c.l.b16 %v4402
    %v7393 = vunpack.c.h.b16 %v4402
    %v7394 = vunpack.c.l.b16 %v4403
    %v7395 = vunpack.c.h.b16 %v4403
    %v7396 = vunpack.c.l.b16 %v4404
    %v7397 = vunpack.c.h.b16 %v4404
    %v7398 = vunpack.c.l.b16 %v4405
    %v7399 = vunpack.c.h.b16 %v4405
    %v7400 = vunpack.c.l.b16 %v4406
    %v7401 = vunpack.c.h.b16 %v4406
    %v7402 = vunpack.c.l.b16 %v4407
    %v7403 = vunpack.c.h.b16 %v4407
    %v7404 = vunpack.c.l.b16 %v4408
    %v7405 = vunpack.c.h.b16 %v4408
    %v7406 = vunpack.c.l.b16 %v4409
    %v7407 = vunpack.c.h.b16 %v4409
    %v7408 = vunpack.c.l.b16 %v4410
    %v7409 = vunpack.c.h.b16 %v4410
    %v7410 = vunpack.c.l.b16 %v4411
    %v7411 = vunpack.c.h.b16 %v4411
    %v7412 = vunpack.c.l.b16 %v4412
    %v7413 = vunpack.c.h.b16 %v4412
    %v7414 = vunpack.c.l.b16 %v4413
    %v7415 = vunpack.c.h.b16 %v4413
    %v7416 = vunpack.c.l.b16 %v4414
    %v7417 = vunpack.c.h.b16 %v4414
    %v7418 = vunpack.c.l.b16 %v4415
    %v7419 = vunpack.c.h.b16 %v4415
    %v7420 = vunpack.c.l.b16 %v4416
    %v7421 = vunpack.c.h.b16 %v4416
    %v7422 = vunpack.c.l.b16 %v4417
    %v7423 = vunpack.c.h.b16 %v4417
    %v7424 = vunpack.c.l.b16 %v4418
    %v7425 = vunpack.c.h.b16 %v4418
    %v7426 = vunpack.c.l.b16 %v4419
    %v7427 = vunpack.c.h.b16 %v4419
    %v7428 = vunpack.c.l.b16 %v4420
    %v7429 = vunpack.c.h.b16 %v4420
    %v7430 = vunpack.c.l.b16 %v4421
    %v7431 = vunpack.c.h.b16 %v4421
    %v7432 = vunpack.c.l.b16 %v4422
    %v7433 = vunpack.c.h.b16 %v4422
    %v7434 = vunpack.c.l.b16 %v4423
    %v7435 = vunpack.c.h.b16 %v4423
    %v7436 = vunpack.c.l.b16 %v4424
    %v7437 = vunpack.c.h.b16 %v4424
    %v7438 = vunpack.c.l.b16 %v4425
    %v7439 = vunpack.c.h.b16 %v4425
    %v7440 = vunpack.c.l.b16 %v4426
    %v7441 = vunpack.c.h.b16 %v4426
    %v7442 = vunpack.c.l.b16 %v4427
    %v7443 = vunpack.c.h.b16 %v4427
    %v7444 = vunpack.c.l.b16 %v4428
    %v7445 = vunpack.c.h.b16 %v4428
    %v7446 = vunpack.c.l.b16 %v4429
    %v7447 = vunpack.c.h.b16 %v4429
    %v7448 = vunpack.c.l.b16 %v4430
    %v7449 = vunpack.c.h.b16 %v4430
    %v7450 = vunpack.c.l.b16 %v4431
    %v7451 = vunpack.c.h.b16 %v4431
    %v7452 = vunpack.c.l.b16 %v4432
    %v7453 = vunpack.c.h.b16 %v4432
    %v7454 = vunpack.c.l.b16 %v4433
    %v7455 = vunpack.c.h.b16 %v4433
    %v7456 = vunpack.c.l.b16 %v4434
    %v7457 = vunpack.c.h.b16 %v4434
    %v7458 = vunpack.c.l.b16 %v4435
    %v7459 = vunpack.c.h.b16 %v4435
    %v7460 = vunpack.c.l.b16 %v4436
    %v7461 = vunpack.c.h.b16 %v4436
    %v7462 = vunpack.c.l.b16 %v4437
    %v7463 = vunpack.c.h.b16 %v4437
    %v7464 = vunpack.c.l.b16 %v4438
    %v7465 = vunpack.c.h.b16 %v4438
    %v7466 = vunpack.c.l.b16 %v4439
    %v7467 = vunpack.c.h.b16 %v4439
    %v7468 = vunpack.c.l.b16 %v4440
    %v7469 = vunpack.c.h.b16 %v4440
    %v7470 = vunpack.c.l.b16 %v4441
    %v7471 = vunpack.c.h.b16 %v4441
    %v7472 = vunpack.c.l.b16 %v4442
    %v7473 = vunpack.c.h.b16 %v4442
    %v7474 = vunpack.c.l.b16 %v4443
    %v7475 = vunpack.c.h.b16 %v4443
    %v7476 = vunpack.c.l.b16 %v4444
    %v7477 = vunpack.c.h.b16 %v4444
    %v7478 = vunpack.c.l.b16 %v4445
    %v7479 = vunpack.c.h.b16 %v4445
    %v7480 = vunpack.c.l.b16 %v4446
    %v7481 = vunpack.c.h.b16 %v4446
    %v7482 = vunpack.c.l.b16 %v4447
    %v7483 = vunpack.c.h.b16 %v4447
    %v7484 = vunpack.c.l.b16 %v4448
    %v7485 = vunpack.c.h.b16 %v4448
    %v7486 = vunpack.c.l.b16 %v4449
    %v7487 = vunpack.c.h.b16 %v4449
    %v7488 = vunpack.c.l.b16 %v4450
    %v7489 = vunpack.c.h.b16 %v4450
    %v7490 = vunpack.c.l.b16 %v4451
    %v7491 = vunpack.c.h.b16 %v4451
    %v7492 = vunpack.c.l.b16 %v4452
    %v7493 = vunpack.c.h.b16 %v4452
    %v7494 = vunpack.c.l.b16 %v4453
    %v7495 = vunpack.c.h.b16 %v4453
    %v7496 = vunpack.c.l.b16 %v4454
    %v7497 = vunpack.c.h.b16 %v4454
    %v7498 = vunpack.c.l.b16 %v4455
    %v7499 = vunpack.c.h.b16 %v4455
    %v7500 = vunpack.c.l.b16 %v4456
    %v7501 = vunpack.c.h.b16 %v4456
    %v7502 = vunpack.c.l.b16 %v4457
    %v7503 = vunpack.c.h.b16 %v4457
    %v7504 = vunpack.c.l.b16 %v4458
    %v7505 = vunpack.c.h.b16 %v4458
    %v7506 = vunpack.c.l.b16 %v4459
    %v7507 = vunpack.c.h.b16 %v4459
    %v7508 = vunpack.c.l.b16 %v4460
    %v7509 = vunpack.c.h.b16 %v4460
    %v7510 = vunpack.c.l.b16 %v4461
    %v7511 = vunpack.c.h.b16 %v4461
    %v7512 = vunpack.c.l.b16 %v4462
    %v7513 = vunpack.c.h.b16 %v4462
    %v7514 = vunpack.c.l.b16 %v4463
    %v7515 = vunpack.c.h.b16 %v4463
    %v7516 = vunpack.c.l.b16 %v4464
    %v7517 = vunpack.c.h.b16 %v4464
    %v7518 = vunpack.c.l.b16 %v4465
    %v7519 = vunpack.c.h.b16 %v4465
    %v7520 = vunpack.c.l.b16 %v4466
    %v7521 = vunpack.c.h.b16 %v4466
    %v7522 = vunpack.c.l.b16 %v4467
    %v7523 = vunpack.c.h.b16 %v4467
    %v7524 = vunpack.c.l.b16 %v4468
    %v7525 = vunpack.c.h.b16 %v4468
    %v7526 = vunpack.c.l.b16 %v4469
    %v7527 = vunpack.c.h.b16 %v4469
    %v7528 = vunpack.c.l.b16 %v4470
    %v7529 = vunpack.c.h.b16 %v4470
    %v7530 = vunpack.c.l.b16 %v4471
    %v7531 = vunpack.c.h.b16 %v4471
    %v7532 = vunpack.c.l.b16 %v4472
    %v7533 = vunpack.c.h.b16 %v4472
    %v7534 = vunpack.c.l.b16 %v4473
    %v7535 = vunpack.c.h.b16 %v4473
    %v7536 = vunpack.c.l.b16 %v4474
    %v7537 = vunpack.c.h.b16 %v4474
    %v7538 = vunpack.c.l.b16 %v4475
    %v7539 = vunpack.c.h.b16 %v4475
    %v7540 = vunpack.c.l.b16 %v4476
    %v7541 = vunpack.c.h.b16 %v4476
    %v7542 = vunpack.c.l.b16 %v4477
    %v7543 = vunpack.c.h.b16 %v4477
    %v7544 = vunpack.c.l.b16 %v4478
    %v7545 = vunpack.c.h.b16 %v4478
    %v7546 = vunpack.c.l.b16 %v4479
    %v7547 = vunpack.c.h.b16 %v4479
    %v7548 = vunpack.c.l.b16 %v4480
    %v7549 = vunpack.c.h.b16 %v4480
    %v7550 = vunpack.c.l.b16 %v4481
    %v7551 = vunpack.c.h.b16 %v4481
    %v7552 = vunpack.c.l.b16 %v4482
    %v7553 = vunpack.c.h.b16 %v4482
    %v7554 = vunpack.c.l.b16 %v4483
    %v7555 = vunpack.c.h.b16 %v4483
    %v7556 = vunpack.c.l.b16 %v4484
    %v7557 = vunpack.c.h.b16 %v4484
    %v7558 = vunpack.c.l.b16 %v4485
    %v7559 = vunpack.c.h.b16 %v4485
    %v7560 = vunpack.c.l.b16 %v4486
    %v7561 = vunpack.c.h.b16 %v4486
    %v7562 = vunpack.c.l.b16 %v4487
    %v7563 = vunpack.c.h.b16 %v4487
    %v7564 = vunpack.c.l.b16 %v4488
    %v7565 = vunpack.c.h.b16 %v4488
    %v7566 = vunpack.c.l.b16 %v4489
    %v7567 = vunpack.c.h.b16 %v4489
    %v7568 = vunpack.c.l.b16 %v4490
    %v7569 = vunpack.c.h.b16 %v4490
    %v7570 = vunpack.c.l.b16 %v4491
    %v7571 = vunpack.c.h.b16 %v4491
    %v7572 = vunpack.c.l.b16 %v4492
    %v7573 = vunpack.c.h.b16 %v4492
    %v7574 = vunpack.c.l.b16 %v4493
    %v7575 = vunpack.c.h.b16 %v4493
    %v7576 = vunpack.c.l.b16 %v4494
    %v7577 = vunpack.c.h.b16 %v4494
    %v7578 = vunpack.c.l.b16 %v4495
    %v7579 = vunpack.c.h.b16 %v4495
    %v7580 = vunpack.c.l.b16 %v4496
    %v7581 = vunpack.c.h.b16 %v4496
    %v7582 = vunpack.c.l.b16 %v4497
    %v7583 = vunpack.c.h.b16 %v4497
    %v7584 = vunpack.c.l.b16 %v4498
    %v7585 = vunpack.c.h.b16 %v4498
    %v7586 = vunpack.c.l.b16 %v4499
    %v7587 = vunpack.c.h.b16 %v4499
    %v7588 = vunpack.c.l.b16 %v4500
    %v7589 = vunpack.c.h.b16 %v4500
    %v7590 = vunpack.c.l.b16 %v4501
    %v7591 = vunpack.c.h.b16 %v4501
    %v7592 = vunpack.c.l.b16 %v4502
    %v7593 = vunpack.c.h.b16 %v4502
    %v7594 = vunpack.c.l.b16 %v4503
    %v7595 = vunpack.c.h.b16 %v4503
    %v7596 = vunpack.c.l.b16 %v4504
    %v7597 = vunpack.c.h.b16 %v4504
    %v7598 = vunpack.c.l.b16 %v4505
    %v7599 = vunpack.c.h.b16 %v4505
    %v7600 = vunpack.c.l.b16 %v4506
    %v7601 = vunpack.c.h.b16 %v4506
    %v7602 = vunpack.c.l.b16 %v4507
    %v7603 = vunpack.c.h.b16 %v4507
    %v7604 = vunpack.c.l.b16 %v4508
    %v7605 = vunpack.c.h.b16 %v4508
    %v7606 = vunpack.c.l.b16 %v4509
    %v7607 = vunpack.c.h.b16 %v4509
    %v7608 = vunpack.c.l.b16 %v4510
    %v7609 = vunpack.c.h.b16 %v4510
    %v7610 = vunpack.c.l.b16 %v4511
    %v7611 = vunpack.c.h.b16 %v4511
    %v7612 = vunpack.c.l.b16 %v4512
    %v7613 = vunpack.c.h.b16 %v4512
    %v7614 = vunpack.c.l.b16 %v4513
    %v7615 = vunpack.c.h.b16 %v4513
    %v7616 = vunpack.c.l.b16 %v4514
    %v7617 = vunpack.c.h.b16 %v4514
    %v7618 = vunpack.c.l.b16 %v4515
    %v7619 = vunpack.c.h.b16 %v4515
    %v7620 = vunpack.c.l.b16 %v4516
    %v7621 = vunpack.c.h.b16 %v4516
    %v7622 = vunpack.c.l.b16 %v4517
    %v7623 = vunpack.c.h.b16 %v4517
    %v7624 = vunpack.c.l.b16 %v4518
    %v7625 = vunpack.c.h.b16 %v4518
    %v7626 = vunpack.c.l.b16 %v4519
    %v7627 = vunpack.c.h.b16 %v4519
    %v7628 = vpack.c.b16 %v5596, %v5580
    %v7629 = vpack.c.b16 %v5597, %v5581
    %v7630 = vpack.c.b16 %v5598, %v5582
    %v7631 = vpack.c.b16 %v5599, %v5583
    %v7632 = vpack.c.b16 %v5600, %v5584
    %v7633 = vpack.c.b16 %v5601, %v5585
    %v7634 = vpack.c.b16 %v5602, %v5586
    %v7635 = vpack.c.b16 %v5603, %v5587
    %v7636 = vpack.c.b16 %v5604, %v5588
    %v7637 = vpack.c.b16 %v5605, %v5589
    %v7638 = vpack.c.b16 %v5606, %v5590
    %v7639 = vpack.c.b16 %v5607, %v5591
    %v7640 = vpack.c.b16 %v5608, %v5592
    %v7641 = vpack.c.b16 %v5609, %v5593
    %v7642 = vpack.c.b16 %v5610, %v5594
    %v7643 = vpack.c.b16 %v5611, %v5595
    %v7644 = vpack.c.b16 %v5628, %v5612
    %v7645 = vpack.c.b16 %v5629, %v5613
    %v7646 = vpack.c.b16 %v5630, %v5614
    %v7647 = vpack.c.b16 %v5631, %v5615
    %v7648 = vpack.c.b16 %v5632, %v5616
    %v7649 = vpack.c.b16 %v5633, %v5617
    %v7650 = vpack.c.b16 %v5634, %v5618
    %v7651 = vpack.c.b16 %v5635, %v5619
    %v7652 = vpack.c.b16 %v5636, %v5620
    %v7653 = vpack.c.b16 %v5637, %v5621
    %v7654 = vpack.c.b16 %v5638, %v5622
    %v7655 = vpack.c.b16 %v5639, %v5623
    %v7656 = vpack.c.b16 %v5640, %v5624
    %v7657 = vpack.c.b16 %v5641, %v5625
    %v7658 = vpack.c.b16 %v5642, %v5626
    %v7659 = vpack.c.b16 %v5643, %v5627
    %v7660 = vpack.c.b16 %v5660, %v5644
    %v7661 = vpack.c.b16 %v5661, %v5645
    %v7662 = vpack.c.b16 %v5662, %v5646
    %v7663 = vpack.c.b16 %v5663, %v5647
    %v7664 = vpack.c.b16 %v5664, %v5648
    %v7665 = vpack.c.b16 %v5665, %v5649
    %v7666 = vpack.c.b16 %v5666, %v5650
    %v7667 = vpack.c.b16 %v5667, %v5651
    %v7668 = vpack.c.b16 %v5668, %v5652
    %v7669 = vpack.c.b16 %v5669, %v5653
    %v7670 = vpack.c.b16 %v5670, %v5654
    %v7671 = vpack.c.b16 %v5671, %v5655
    %v7672 = vpack.c.b16 %v5672, %v5656
    %v7673 = vpack.c.b16 %v5673, %v5657
    %v7674 = vpack.c.b16 %v5674, %v5658
    %v7675 = vpack.c.b16 %v5675, %v5659
    %v7676 = vpack.c.b16 %v5692, %v5676
    %v7677 = vpack.c.b16 %v5693, %v5677
    %v7678 = vpack.c.b16 %v5694, %v5678
    %v7679 = vpack.c.b16 %v5695, %v5679
    %v7680 = vpack.c.b16 %v5696, %v5680
    %v7681 = vpack.c.b16 %v5697, %v5681
    %v7682 = vpack.c.b16 %v5698, %v5682
    %v7683 = vpack.c.b16 %v5699, %v5683
    %v7684 = vpack.c.b16 %v5700, %v5684
    %v7685 = vpack.c.b16 %v5701, %v5685
    %v7686 = vpack.c.b16 %v5702, %v5686
    %v7687 = vpack.c.b16 %v5703, %v5687
    %v7688 = vpack.c.b16 %v5704, %v5688
    %v7689 = vpack.c.b16 %v5705, %v5689
    %v7690 = vpack.c.b16 %v5706, %v5690
    %v7691 = vpack.c.b16 %v5707, %v5691
    %v7692 = vpack.c.b16 %v5724, %v5708
    %v7693 = vpack.c.b16 %v5725, %v5709
    %v7694 = vpack.c.b16 %v5726, %v5710
    %v7695 = vpack.c.b16 %v5727, %v5711
    %v7696 = vpack.c.b16 %v5728, %v5712
    %v7697 = vpack.c.b16 %v5729, %v5713
    %v7698 = vpack.c.b16 %v5730, %v5714
    %v7699 = vpack.c.b16 %v5731, %v5715
    %v7700 = vpack.c.b16 %v5732, %v5716
    %v7701 = vpack.c.b16 %v5733, %v5717
    %v7702 = vpack.c.b16 %v5734, %v5718
    %v7703 = vpack.c.b16 %v5735, %v5719
    %v7704 = vpack.c.b16 %v5736, %v5720
    %v7705 = vpack.c.b16 %v5737, %v5721
    %v7706 = vpack.c.b16 %v5738, %v5722
    %v7707 = vpack.c.b16 %v5739, %v5723
    %v7708 = vpack.c.b16 %v5756, %v5740
    %v7709 = vpack.c.b16 %v5757, %v5741
    %v7710 = vpack.c.b16 %v5758, %v5742
    %v7711 = vpack.c.b16 %v5759, %v5743
    %v7712 = vpack.c.b16 %v5760, %v5744
    %v7713 = vpack.c.b16 %v5761, %v5745
    %v7714 = vpack.c.b16 %v5762, %v5746
    %v7715 = vpack.c.b16 %v5763, %v5747
    %v7716 = vpack.c.b16 %v5764, %v5748
    %v7717 = vpack.c.b16 %v5765, %v5749
    %v7718 = vpack.c.b16 %v5766, %v5750
    %v7719 = vpack.c.b16 %v5767, %v5751
    %v7720 = vpack.c.b16 %v5768, %v5752
    %v7721 = vpack.c.b16 %v5769, %v5753
    %v7722 = vpack.c.b16 %v5770, %v5754
    %v7723 = vpack.c.b16 %v5771, %v5755
    %v7724 = vpack.c.b16 %v5788, %v5772
    %v7725 = vpack.c.b16 %v5789, %v5773
    %v7726 = vpack.c.b16 %v5790, %v5774
    %v7727 = vpack.c.b16 %v5791, %v5775
    %v7728 = vpack.c.b16 %v5792, %v5776
    %v7729 = vpack.c.b16 %v5793, %v5777
    %v7730 = vpack.c.b16 %v5794, %v5778
    %v7731 = vpack.c.b16 %v5795, %v5779
    %v7732 = vpack.c.b16 %v5796, %v5780
    %v7733 = vpack.c.b16 %v5797, %v5781
    %v7734 = vpack.c.b16 %v5798, %v5782
    %v7735 = vpack.c.b16 %v5799, %v5783
    %v7736 = vpack.c.b16 %v5800, %v5784
    %v7737 = vpack.c.b16 %v5801, %v5785
    %v7738 = vpack.c.b16 %v5802, %v5786
    %v7739 = vpack.c.b16 %v5803, %v5787
    %v7740 = vpack.c.b16 %v5820, %v5804
    %v7741 = vpack.c.b16 %v5821, %v5805
    %v7742 = vpack.c.b16 %v5822, %v5806
    %v7743 = vpack.c.b16 %v5823, %v5807
    %v7744 = vpack.c.b16 %v5824, %v5808
    %v7745 = vpack.c.b16 %v5825, %v5809
    %v7746 = vpack.c.b16 %v5826, %v5810
    %v7747 = vpack.c.b16 %v5827, %v5811
    %v7748 = vpack.c.b16 %v5828, %v5812
    %v7749 = vpack.c.b16 %v5829, %v5813
    %v7750 = vpack.c.b16 %v5830, %v5814
    %v7751 = vpack.c.b16 %v5831, %v5815
    %v7752 = vpack.c.b16 %v5832, %v5816
    %v7753 = vpack.c.b16 %v5833, %v5817
    %v7754 = vpack.c.b16 %v5834, %v5818
    %v7755 = vpack.c.b16 %v5835, %v5819
    %v7756 = vpack.c.b16 %v5852, %v5836
    %v7757 = vpack.c.b16 %v5853, %v5837
    %v7758 = vpack.c.b16 %v5854, %v5838
    %v7759 = vpack.c.b16 %v5855, %v5839
    %v7760 = vpack.c.b16 %v5856, %v5840
    %v7761 = vpack.c.b16 %v5857, %v5841
    %v7762 = vpack.c.b16 %v5858, %v5842
    %v7763 = vpack.c.b16 %v5859, %v5843
    %v7764 = vpack.c.b16 %v5860, %v5844
    %v7765 = vpack.c.b16 %v5861, %v5845
    %v7766 = vpack.c.b16 %v5862, %v5846
    %v7767 = vpack.c.b16 %v5863, %v5847
    %v7768 = vpack.c.b16 %v5864, %v5848
    %v7769 = vpack.c.b16 %v5865, %v5849
    %v7770 = vpack.c.b16 %v5866, %v5850
    %v7771 = vpack.c.b16 %v5867, %v5851
    %v7772 = vpack.c.b16 %v5884, %v5868
    %v7773 = vpack.c.b16 %v5885, %v5869
    %v7774 = vpack.c.b16 %v5886, %v5870
    %v7775 = vpack.c.b16 %v5887, %v5871
    %v7776 = vpack.c.b16 %v5888, %v5872
    %v7777 = vpack.c.b16 %v5889, %v5873
    %v7778 = vpack.c.b16 %v5890, %v5874
    %v7779 = vpack.c.b16 %v5891, %v5875
    %v7780 = vpack.c.b16 %v5892, %v5876
    %v7781 = vpack.c.b16 %v5893, %v5877
    %v7782 = vpack.c.b16 %v5894, %v5878
    %v7783 = vpack.c.b16 %v5895, %v5879
    %v7784 = vpack.c.b16 %v5896, %v5880
    %v7785 = vpack.c.b16 %v5897, %v5881
    %v7786 = vpack.c.b16 %v5898, %v5882
    %v7787 = vpack.c.b16 %v5899, %v5883
    %v7788 = vpack.c.b16 %v5916, %v5900
    %v7789 = vpack.c.b16 %v5917, %v5901
    %v7790 = vpack.c.b16 %v5918, %v5902
    %v7791 = vpack.c.b16 %v5919, %v5903
    %v7792 = vpack.c.b16 %v5920, %v5904
    %v7793 = vpack.c.b16 %v5921, %v5905
    %v7794 = vpack.c.b16 %v5922, %v5906
    %v7795 = vpack.c.b16 %v5923, %v5907
    %v7796 = vpack.c.b16 %v5924, %v5908
    %v7797 = vpack.c.b16 %v5925, %v5909
    %v7798 = vpack.c.b16 %v5926, %v5910
    %v7799 = vpack.c.b16 %v5927, %v5911
    %v7800 = vpack.c.b16 %v5928, %v5912
    %v7801 = vpack.c.b16 %v5929, %v5913
    %v7802 = vpack.c.b16 %v5930, %v5914
    %v7803 = vpack.c.b16 %v5931, %v5915
    %v7804 = vpack.c.b16 %v5948, %v5932
    %v7805 = vpack.c.b16 %v5949, %v5933
    %v7806 = vpack.c.b16 %v5950, %v5934
    %v7807 = vpack.c.b16 %v5951, %v5935
    %v7808 = vpack.c.b16 %v5952, %v5936
    %v7809 = vpack.c.b16 %v5953, %v5937
    %v7810 = vpack.c.b16 %v5954, %v5938
    %v7811 = vpack.c.b16 %v5955, %v5939
    %v7812 = vpack.c.b16 %v5956, %v5940
    %v7813 = vpack.c.b16 %v5957, %v5941
    %v7814 = vpack.c.b16 %v5958, %v5942
    %v7815 = vpack.c.b16 %v5959, %v5943
    %v7816 = vpack.c.b16 %v5960, %v5944
    %v7817 = vpack.c.b16 %v5961, %v5945
    %v7818 = vpack.c.b16 %v5962, %v5946
    %v7819 = vpack.c.b16 %v5963, %v5947
    %v7820 = vpack.c.b16 %v5980, %v5964
    %v7821 = vpack.c.b16 %v5981, %v5965
    %v7822 = vpack.c.b16 %v5982, %v5966
    %v7823 = vpack.c.b16 %v5983, %v5967
    %v7824 = vpack.c.b16 %v5984, %v5968
    %v7825 = vpack.c.b16 %v5985, %v5969
    %v7826 = vpack.c.b16 %v5986, %v5970
    %v7827 = vpack.c.b16 %v5987, %v5971
    %v7828 = vpack.c.b16 %v5988, %v5972
    %v7829 = vpack.c.b16 %v5989, %v5973
    %v7830 = vpack.c.b16 %v5990, %v5974
    %v7831 = vpack.c.b16 %v5991, %v5975
    %v7832 = vpack.c.b16 %v5992, %v5976
    %v7833 = vpack.c.b16 %v5993, %v5977
    %v7834 = vpack.c.b16 %v5994, %v5978
    %v7835 = vpack.c.b16 %v5995, %v5979
    %v7836 = vpack.c.b16 %v6012, %v5996
    %v7837 = vpack.c.b16 %v6013, %v5997
    %v7838 = vpack.c.b16 %v6014, %v5998
    %v7839 = vpack.c.b16 %v6015, %v5999
    %v7840 = vpack.c.b16 %v6016, %v6000
    %v7841 = vpack.c.b16 %v6017, %v6001
    %v7842 = vpack.c.b16 %v6018, %v6002
    %v7843 = vpack.c.b16 %v6019, %v6003
    %v7844 = vpack.c.b16 %v6020, %v6004
    %v7845 = vpack.c.b16 %v6021, %v6005
    %v7846 = vpack.c.b16 %v6022, %v6006
    %v7847 = vpack.c.b16 %v6023, %v6007
    %v7848 = vpack.c.b16 %v6024, %v6008
    %v7849 = vpack.c.b16 %v6025, %v6009
    %v7850 = vpack.c.b16 %v6026, %v6010
    %v7851 = vpack.c.b16 %v6027, %v6011
    %v7852 = vpack.c.b16 %v6044, %v6028
    %v7853 = vpack.c.b16 %v6045, %v6029
    %v7854 = vpack.c.b16 %v6046, %v6030
    %v7855 = vpack.c.b16 %v6047, %v6031
    %v7856 = vpack.c.b16 %v6048, %v6032
    %v7857 = vpack.c.b16 %v6049, %v6033
    %v7858 = vpack.c.b16 %v6050, %v6034
    %v7859 = vpack.c.b16 %v6051, %v6035
    %v7860 = vpack.c.b16 %v6052, %v6036
    %v7861 = vpack.c.b16 %v6053, %v6037
    %v7862 = vpack.c.b16 %v6054, %v6038
    %v7863 = vpack.c.b16 %v6055, %v6039
    %v7864 = vpack.c.b16 %v6056, %v6040
    %v7865 = vpack.c.b16 %v6057, %v6041
    %v7866 = vpack.c.b16 %v6058, %v6042
    %v7867 = vpack.c.b16 %v6059, %v6043
    %v7868 = vpack.c.b16 %v6076, %v6060
    %v7869 = vpack.c.b16 %v6077, %v6061
    %v7870 = vpack.c.b16 %v6078, %v6062
    %v7871 = vpack.c.b16 %v6079, %v6063
    %v7872 = vpack.c.b16 %v6080, %v6064
    %v7873 = vpack.c.b16 %v6081, %v6065
    %v7874 = vpack.c.b16 %v6082, %v6066
    %v7875 = vpack.c.b16 %v6083, %v6067
    %v7876 = vpack.c.b16 %v6084, %v6068
    %v7877 = vpack.c.b16 %v6085, %v6069
    %v7878 = vpack.c.b16 %v6086, %v6070
    %v7879 = vpack.c.b16 %v6087, %v6071
    %v7880 = vpack.c.b16 %v6088, %v6072
    %v7881 = vpack.c.b16 %v6089, %v6073
    %v7882 = vpack.c.b16 %v6090, %v6074
    %v7883 = vpack.c.b16 %v6091, %v6075
    %v7884 = vpack.c.b16 %v6108, %v6092
    %v7885 = vpack.c.b16 %v6109, %v6093
    %v7886 = vpack.c.b16 %v6110, %v6094
    %v7887 = vpack.c.b16 %v6111, %v6095
    %v7888 = vpack.c.b16 %v6112, %v6096
    %v7889 = vpack.c.b16 %v6113, %v6097
    %v7890 = vpack.c.b16 %v6114, %v6098
    %v7891 = vpack.c.b16 %v6115, %v6099
    %v7892 = vpack.c.b16 %v6116, %v6100
    %v7893 = vpack.c.b16 %v6117, %v6101
    %v7894 = vpack.c.b16 %v6118, %v6102
    %v7895 = vpack.c.b16 %v6119, %v6103
    %v7896 = vpack.c.b16 %v6120, %v6104
    %v7897 = vpack.c.b16 %v6121, %v6105
    %v7898 = vpack.c.b16 %v6122, %v6106
    %v7899 = vpack.c.b16 %v6123, %v6107
    %v7900 = vpack.c.b16 %v6140, %v6124
    %v7901 = vpack.c.b16 %v6141, %v6125
    %v7902 = vpack.c.b16 %v6142, %v6126
    %v7903 = vpack.c.b16 %v6143, %v6127
    %v7904 = vpack.c.b16 %v6144, %v6128
    %v7905 = vpack.c.b16 %v6145, %v6129
    %v7906 = vpack.c.b16 %v6146, %v6130
    %v7907 = vpack.c.b16 %v6147, %v6131
    %v7908 = vpack.c.b16 %v6148, %v6132
    %v7909 = vpack.c.b16 %v6149, %v6133
    %v7910 = vpack.c.b16 %v6150, %v6134
    %v7911 = vpack.c.b16 %v6151, %v6135
    %v7912 = vpack.c.b16 %v6152, %v6136
    %v7913 = vpack.c.b16 %v6153, %v6137
    %v7914 = vpack.c.b16 %v6154, %v6138
    %v7915 = vpack.c.b16 %v6155, %v6139
    %v7916 = vpack.c.b16 %v6172, %v6156
    %v7917 = vpack.c.b16 %v6173, %v6157
    %v7918 = vpack.c.b16 %v6174, %v6158
    %v7919 = vpack.c.b16 %v6175, %v6159
    %v7920 = vpack.c.b16 %v6176, %v6160
    %v7921 = vpack.c.b16 %v6177, %v6161
    %v7922 = vpack.c.b16 %v6178, %v6162
    %v7923 = vpack.c.b16 %v6179, %v6163
    %v7924 = vpack.c.b16 %v6180, %v6164
    %v7925 = vpack.c.b16 %v6181, %v6165
    %v7926 = vpack.c.b16 %v6182, %v6166
    %v7927 = vpack.c.b16 %v6183, %v6167
    %v7928 = vpack.c.b16 %v6184, %v6168
    %v7929 = vpack.c.b16 %v6185, %v6169
    %v7930 = vpack.c.b16 %v6186, %v6170
    %v7931 = vpack.c.b16 %v6187, %v6171
    %v7932 = vpack.c.b16 %v6204, %v6188
    %v7933 = vpack.c.b16 %v6205, %v6189
    %v7934 = vpack.c.b16 %v6206, %v6190
    %v7935 = vpack.c.b16 %v6207, %v6191
    %v7936 = vpack.c.b16 %v6208, %v6192
    %v7937 = vpack.c.b16 %v6209, %v6193
    %v7938 = vpack.c.b16 %v6210, %v6194
    %v7939 = vpack.c.b16 %v6211, %v6195
    %v7940 = vpack.c.b16 %v6212, %v6196
    %v7941 = vpack.c.b16 %v6213, %v6197
    %v7942 = vpack.c.b16 %v6214, %v6198
    %v7943 = vpack.c.b16 %v6215, %v6199
    %v7944 = vpack.c.b16 %v6216, %v6200
    %v7945 = vpack.c.b16 %v6217, %v6201
    %v7946 = vpack.c.b16 %v6218, %v6202
    %v7947 = vpack.c.b16 %v6219, %v6203
    %v7948 = vpack.c.b16 %v6236, %v6220
    %v7949 = vpack.c.b16 %v6237, %v6221
    %v7950 = vpack.c.b16 %v6238, %v6222
    %v7951 = vpack.c.b16 %v6239, %v6223
    %v7952 = vpack.c.b16 %v6240, %v6224
    %v7953 = vpack.c.b16 %v6241, %v6225
    %v7954 = vpack.c.b16 %v6242, %v6226
    %v7955 = vpack.c.b16 %v6243, %v6227
    %v7956 = vpack.c.b16 %v6244, %v6228
    %v7957 = vpack.c.b16 %v6245, %v6229
    %v7958 = vpack.c.b16 %v6246, %v6230
    %v7959 = vpack.c.b16 %v6247, %v6231
    %v7960 = vpack.c.b16 %v6248, %v6232
    %v7961 = vpack.c.b16 %v6249, %v6233
    %v7962 = vpack.c.b16 %v6250, %v6234
    %v7963 = vpack.c.b16 %v6251, %v6235
    %v7964 = vpack.c.b16 %v6268, %v6252
    %v7965 = vpack.c.b16 %v6269, %v6253
    %v7966 = vpack.c.b16 %v6270, %v6254
    %v7967 = vpack.c.b16 %v6271, %v6255
    %v7968 = vpack.c.b16 %v6272, %v6256
    %v7969 = vpack.c.b16 %v6273, %v6257
    %v7970 = vpack.c.b16 %v6274, %v6258
    %v7971 = vpack.c.b16 %v6275, %v6259
    %v7972 = vpack.c.b16 %v6276, %v6260
    %v7973 = vpack.c.b16 %v6277, %v6261
    %v7974 = vpack.c.b16 %v6278, %v6262
    %v7975 = vpack.c.b16 %v6279, %v6263
    %v7976 = vpack.c.b16 %v6280, %v6264
    %v7977 = vpack.c.b16 %v6281, %v6265
    %v7978 = vpack.c.b16 %v6282, %v6266
    %v7979 = vpack.c.b16 %v6283, %v6267
    %v7980 = vpack.c.b16 %v6300, %v6284
    %v7981 = vpack.c.b16 %v6301, %v6285
    %v7982 = vpack.c.b16 %v6302, %v6286
    %v7983 = vpack.c.b16 %v6303, %v6287
    %v7984 = vpack.c.b16 %v6304, %v6288
    %v7985 = vpack.c.b16 %v6305, %v6289
    %v7986 = vpack.c.b16 %v6306, %v6290
    %v7987 = vpack.c.b16 %v6307, %v6291
    %v7988 = vpack.c.b16 %v6308, %v6292
    %v7989 = vpack.c.b16 %v6309, %v6293
    %v7990 = vpack.c.b16 %v6310, %v6294
    %v7991 = vpack.c.b16 %v6311, %v6295
    %v7992 = vpack.c.b16 %v6312, %v6296
    %v7993 = vpack.c.b16 %v6313, %v6297
    %v7994 = vpack.c.b16 %v6314, %v6298
    %v7995 = vpack.c.b16 %v6315, %v6299
    %v7996 = vpack.c.b16 %v6332, %v6316
    %v7997 = vpack.c.b16 %v6333, %v6317
    %v7998 = vpack.c.b16 %v6334, %v6318
    %v7999 = vpack.c.b16 %v6335, %v6319
    %v8000 = vpack.c.b16 %v6336, %v6320
    %v8001 = vpack.c.b16 %v6337, %v6321
    %v8002 = vpack.c.b16 %v6338, %v6322
    %v8003 = vpack.c.b16 %v6339, %v6323
    %v8004 = vpack.c.b16 %v6340, %v6324
    %v8005 = vpack.c.b16 %v6341, %v6325
    %v8006 = vpack.c.b16 %v6342, %v6326
    %v8007 = vpack.c.b16 %v6343, %v6327
    %v8008 = vpack.c.b16 %v6344, %v6328
    %v8009 = vpack.c.b16 %v6345, %v6329
    %v8010 = vpack.c.b16 %v6346, %v6330
    %v8011 = vpack.c.b16 %v6347, %v6331
    %v8012 = vpack.c.b16 %v6364, %v6348
    %v8013 = vpack.c.b16 %v6365, %v6349
    %v8014 = vpack.c.b16 %v6366, %v6350
    %v8015 = vpack.c.b16 %v6367, %v6351
    %v8016 = vpack.c.b16 %v6368, %v6352
    %v8017 = vpack.c.b16 %v6369, %v6353
    %v8018 = vpack.c.b16 %v6370, %v6354
    %v8019 = vpack.c.b16 %v6371, %v6355
    %v8020 = vpack.c.b16 %v6372, %v6356
    %v8021 = vpack.c.b16 %v6373, %v6357
    %v8022 = vpack.c.b16 %v6374, %v6358
    %v8023 = vpack.c.b16 %v6375, %v6359
    %v8024 = vpack.c.b16 %v6376, %v6360
    %v8025 = vpack.c.b16 %v6377, %v6361
    %v8026 = vpack.c.b16 %v6378, %v6362
    %v8027 = vpack.c.b16 %v6379, %v6363
    %v8028 = vpack.c.b16 %v6396, %v6380
    %v8029 = vpack.c.b16 %v6397, %v6381
    %v8030 = vpack.c.b16 %v6398, %v6382
    %v8031 = vpack.c.b16 %v6399, %v6383
    %v8032 = vpack.c.b16 %v6400, %v6384
    %v8033 = vpack.c.b16 %v6401, %v6385
    %v8034 = vpack.c.b16 %v6402, %v6386
    %v8035 = vpack.c.b16 %v6403, %v6387
    %v8036 = vpack.c.b16 %v6404, %v6388
    %v8037 = vpack.c.b16 %v6405, %v6389
    %v8038 = vpack.c.b16 %v6406, %v6390
    %v8039 = vpack.c.b16 %v6407, %v6391
    %v8040 = vpack.c.b16 %v6408, %v6392
    %v8041 = vpack.c.b16 %v6409, %v6393
    %v8042 = vpack.c.b16 %v6410, %v6394
    %v8043 = vpack.c.b16 %v6411, %v6395
    %v8044 = vpack.c.b16 %v6428, %v6412
    %v8045 = vpack.c.b16 %v6429, %v6413
    %v8046 = vpack.c.b16 %v6430, %v6414
    %v8047 = vpack.c.b16 %v6431, %v6415
    %v8048 = vpack.c.b16 %v6432, %v6416
    %v8049 = vpack.c.b16 %v6433, %v6417
    %v8050 = vpack.c.b16 %v6434, %v6418
    %v8051 = vpack.c.b16 %v6435, %v6419
    %v8052 = vpack.c.b16 %v6436, %v6420
    %v8053 = vpack.c.b16 %v6437, %v6421
    %v8054 = vpack.c.b16 %v6438, %v6422
    %v8055 = vpack.c.b16 %v6439, %v6423
    %v8056 = vpack.c.b16 %v6440, %v6424
    %v8057 = vpack.c.b16 %v6441, %v6425
    %v8058 = vpack.c.b16 %v6442, %v6426
    %v8059 = vpack.c.b16 %v6443, %v6427
    %v8060 = vpack.c.b16 %v6460, %v6444
    %v8061 = vpack.c.b16 %v6461, %v6445
    %v8062 = vpack.c.b16 %v6462, %v6446
    %v8063 = vpack.c.b16 %v6463, %v6447
    %v8064 = vpack.c.b16 %v6464, %v6448
    %v8065 = vpack.c.b16 %v6465, %v6449
    %v8066 = vpack.c.b16 %v6466, %v6450
    %v8067 = vpack.c.b16 %v6467, %v6451
    %v8068 = vpack.c.b16 %v6468, %v6452
    %v8069 = vpack.c.b16 %v6469, %v6453
    %v8070 = vpack.c.b16 %v6470, %v6454
    %v8071 = vpack.c.b16 %v6471, %v6455
    %v8072 = vpack.c.b16 %v6472, %v6456
    %v8073 = vpack.c.b16 %v6473, %v6457
    %v8074 = vpack.c.b16 %v6474, %v6458
    %v8075 = vpack.c.b16 %v6475, %v6459
    %v8076 = vpack.c.b16 %v6492, %v6476
    %v8077 = vpack.c.b16 %v6493, %v6477
    %v8078 = vpack.c.b16 %v6494, %v6478
    %v8079 = vpack.c.b16 %v6495, %v6479
    %v8080 = vpack.c.b16 %v6496, %v6480
    %v8081 = vpack.c.b16 %v6497, %v6481
    %v8082 = vpack.c.b16 %v6498, %v6482
    %v8083 = vpack.c.b16 %v6499, %v6483
    %v8084 = vpack.c.b16 %v6500, %v6484
    %v8085 = vpack.c.b16 %v6501, %v6485
    %v8086 = vpack.c.b16 %v6502, %v6486
    %v8087 = vpack.c.b16 %v6503, %v6487
    %v8088 = vpack.c.b16 %v6504, %v6488
    %v8089 = vpack.c.b16 %v6505, %v6489
    %v8090 = vpack.c.b16 %v6506, %v6490
    %v8091 = vpack.c.b16 %v6507, %v6491
    %v8092 = vpack.c.b16 %v6524, %v6508
    %v8093 = vpack.c.b16 %v6525, %v6509
    %v8094 = vpack.c.b16 %v6526, %v6510
    %v8095 = vpack.c.b16 %v6527, %v6511
    %v8096 = vpack.c.b16 %v6528, %v6512
    %v8097 = vpack.c.b16 %v6529, %v6513
    %v8098 = vpack.c.b16 %v6530, %v6514
    %v8099 = vpack.c.b16 %v6531, %v6515
    %v8100 = vpack.c.b16 %v6532, %v6516
    %v8101 = vpack.c.b16 %v6533, %v6517
    %v8102 = vpack.c.b16 %v6534, %v6518
    %v8103 = vpack.c.b16 %v6535, %v6519
    %v8104 = vpack.c.b16 %v6536, %v6520
    %v8105 = vpack.c.b16 %v6537, %v6521
    %v8106 = vpack.c.b16 %v6538, %v6522
    %v8107 = vpack.c.b16 %v6539, %v6523
    %v8108 = vpack.c.b16 %v6556, %v6540
    %v8109 = vpack.c.b16 %v6557, %v6541
    %v8110 = vpack.c.b16 %v6558, %v6542
    %v8111 = vpack.c.b16 %v6559, %v6543
    %v8112 = vpack.c.b16 %v6560, %v6544
    %v8113 = vpack.c.b16 %v6561, %v6545
    %v8114 = vpack.c.b16 %v6562, %v6546
    %v8115 = vpack.c.b16 %v6563, %v6547
    %v8116 = vpack.c.b16 %v6564, %v6548
    %v8117 = vpack.c.b16 %v6565, %v6549
    %v8118 = vpack.c.b16 %v6566, %v6550
    %v8119 = vpack.c.b16 %v6567, %v6551
    %v8120 = vpack.c.b16 %v6568, %v6552
    %v8121 = vpack.c.b16 %v6569, %v6553
    %v8122 = vpack.c.b16 %v6570, %v6554
    %v8123 = vpack.c.b16 %v6571, %v6555
    %v8124 = vpack.c.b16 %v6588, %v6572
    %v8125 = vpack.c.b16 %v6589, %v6573
    %v8126 = vpack.c.b16 %v6590, %v6574
    %v8127 = vpack.c.b16 %v6591, %v6575
    %v8128 = vpack.c.b16 %v6592, %v6576
    %v8129 = vpack.c.b16 %v6593, %v6577
    %v8130 = vpack.c.b16 %v6594, %v6578
    %v8131 = vpack.c.b16 %v6595, %v6579
    %v8132 = vpack.c.b16 %v6596, %v6580
    %v8133 = vpack.c.b16 %v6597, %v6581
    %v8134 = vpack.c.b16 %v6598, %v6582
    %v8135 = vpack.c.b16 %v6599, %v6583
    %v8136 = vpack.c.b16 %v6600, %v6584
    %v8137 = vpack.c.b16 %v6601, %v6585
    %v8138 = vpack.c.b16 %v6602, %v6586
    %v8139 = vpack.c.b16 %v6603, %v6587
    %v8140 = vpack.c.b16 %v6620, %v6604
    %v8141 = vpack.c.b16 %v6621, %v6605
    %v8142 = vpack.c.b16 %v6622, %v6606
    %v8143 = vpack.c.b16 %v6623, %v6607
    %v8144 = vpack.c.b16 %v6624, %v6608
    %v8145 = vpack.c.b16 %v6625, %v6609
    %v8146 = vpack.c.b16 %v6626, %v6610
    %v8147 = vpack.c.b16 %v6627, %v6611
    %v8148 = vpack.c.b16 %v6628, %v6612
    %v8149 = vpack.c.b16 %v6629, %v6613
    %v8150 = vpack.c.b16 %v6630, %v6614
    %v8151 = vpack.c.b16 %v6631, %v6615
    %v8152 = vpack.c.b16 %v6632, %v6616
    %v8153 = vpack.c.b16 %v6633, %v6617
    %v8154 = vpack.c.b16 %v6634, %v6618
    %v8155 = vpack.c.b16 %v6635, %v6619
    %v8156 = vpack.c.b16 %v6652, %v6636
    %v8157 = vpack.c.b16 %v6653, %v6637
    %v8158 = vpack.c.b16 %v6654, %v6638
    %v8159 = vpack.c.b16 %v6655, %v6639
    %v8160 = vpack.c.b16 %v6656, %v6640
    %v8161 = vpack.c.b16 %v6657, %v6641
    %v8162 = vpack.c.b16 %v6658, %v6642
    %v8163 = vpack.c.b16 %v6659, %v6643
    %v8164 = vpack.c.b16 %v6660, %v6644
    %v8165 = vpack.c.b16 %v6661, %v6645
    %v8166 = vpack.c.b16 %v6662, %v6646
    %v8167 = vpack.c.b16 %v6663, %v6647
    %v8168 = vpack.c.b16 %v6664, %v6648
    %v8169 = vpack.c.b16 %v6665, %v6649
    %v8170 = vpack.c.b16 %v6666, %v6650
    %v8171 = vpack.c.b16 %v6667, %v6651
    %v8172 = vpack.c.b16 %v6684, %v6668
    %v8173 = vpack.c.b16 %v6685, %v6669
    %v8174 = vpack.c.b16 %v6686, %v6670
    %v8175 = vpack.c.b16 %v6687, %v6671
    %v8176 = vpack.c.b16 %v6688, %v6672
    %v8177 = vpack.c.b16 %v6689, %v6673
    %v8178 = vpack.c.b16 %v6690, %v6674
    %v8179 = vpack.c.b16 %v6691, %v6675
    %v8180 = vpack.c.b16 %v6692, %v6676
    %v8181 = vpack.c.b16 %v6693, %v6677
    %v8182 = vpack.c.b16 %v6694, %v6678
    %v8183 = vpack.c.b16 %v6695, %v6679
    %v8184 = vpack.c.b16 %v6696, %v6680
    %v8185 = vpack.c.b16 %v6697, %v6681
    %v8186 = vpack.c.b16 %v6698, %v6682
    %v8187 = vpack.c.b16 %v6699, %v6683
    %v8188 = vpack.c.b16 %v6716, %v6700
    %v8189 = vpack.c.b16 %v6717, %v6701
    %v8190 = vpack.c.b16 %v6718, %v6702
    %v8191 = vpack.c.b16 %v6719, %v6703
    %v8192 = vpack.c.b16 %v6720, %v6704
    %v8193 = vpack.c.b16 %v6721, %v6705
    %v8194 = vpack.c.b16 %v6722, %v6706
    %v8195 = vpack.c.b16 %v6723, %v6707
    %v8196 = vpack.c.b16 %v6724, %v6708
    %v8197 = vpack.c.b16 %v6725, %v6709
    %v8198 = vpack.c.b16 %v6726, %v6710
    %v8199 = vpack.c.b16 %v6727, %v6711
    %v8200 = vpack.c.b16 %v6728, %v6712
    %v8201 = vpack.c.b16 %v6729, %v6713
    %v8202 = vpack.c.b16 %v6730, %v6714
    %v8203 = vpack.c.b16 %v6731, %v6715
    %v8204 = vpack.c.b16 %v6748, %v6732
    %v8205 = vpack.c.b16 %v6749, %v6733
    %v8206 = vpack.c.b16 %v6750, %v6734
    %v8207 = vpack.c.b16 %v6751, %v6735
    %v8208 = vpack.c.b16 %v6752, %v6736
    %v8209 = vpack.c.b16 %v6753, %v6737
    %v8210 = vpack.c.b16 %v6754, %v6738
    %v8211 = vpack.c.b16 %v6755, %v6739
    %v8212 = vpack.c.b16 %v6756, %v6740
    %v8213 = vpack.c.b16 %v6757, %v6741
    %v8214 = vpack.c.b16 %v6758, %v6742
    %v8215 = vpack.c.b16 %v6759, %v6743
    %v8216 = vpack.c.b16 %v6760, %v6744
    %v8217 = vpack.c.b16 %v6761, %v6745
    %v8218 = vpack.c.b16 %v6762, %v6746
    %v8219 = vpack.c.b16 %v6763, %v6747
    %v8220 = vpack.c.b16 %v6780, %v6764
    %v8221 = vpack.c.b16 %v6781, %v6765
    %v8222 = vpack.c.b16 %v6782, %v6766
    %v8223 = vpack.c.b16 %v6783, %v6767
    %v8224 = vpack.c.b16 %v6784, %v6768
    %v8225 = vpack.c.b16 %v6785, %v6769
    %v8226 = vpack.c.b16 %v6786, %v6770
    %v8227 = vpack.c.b16 %v6787, %v6771
    %v8228 = vpack.c.b16 %v6788, %v6772
    %v8229 = vpack.c.b16 %v6789, %v6773
    %v8230 = vpack.c.b16 %v6790, %v6774
    %v8231 = vpack.c.b16 %v6791, %v6775
    %v8232 = vpack.c.b16 %v6792, %v6776
    %v8233 = vpack.c.b16 %v6793, %v6777
    %v8234 = vpack.c.b16 %v6794, %v6778
    %v8235 = vpack.c.b16 %v6795, %v6779
    %v8236 = vpack.c.b16 %v6812, %v6796
    %v8237 = vpack.c.b16 %v6813, %v6797
    %v8238 = vpack.c.b16 %v6814, %v6798
    %v8239 = vpack.c.b16 %v6815, %v6799
    %v8240 = vpack.c.b16 %v6816, %v6800
    %v8241 = vpack.c.b16 %v6817, %v6801
    %v8242 = vpack.c.b16 %v6818, %v6802
    %v8243 = vpack.c.b16 %v6819, %v6803
    %v8244 = vpack.c.b16 %v6820, %v6804
    %v8245 = vpack.c.b16 %v6821, %v6805
    %v8246 = vpack.c.b16 %v6822, %v6806
    %v8247 = vpack.c.b16 %v6823, %v6807
    %v8248 = vpack.c.b16 %v6824, %v6808
    %v8249 = vpack.c.b16 %v6825, %v6809
    %v8250 = vpack.c.b16 %v6826, %v6810
    %v8251 = vpack.c.b16 %v6827, %v6811
    %v8252 = vpack.c.b16 %v6844, %v6828
    %v8253 = vpack.c.b16 %v6845, %v6829
    %v8254 = vpack.c.b16 %v6846, %v6830
    %v8255 = vpack.c.b16 %v6847, %v6831
    %v8256 = vpack.c.b16 %v6848, %v6832
    %v8257 = vpack.c.b16 %v6849, %v6833
    %v8258 = vpack.c.b16 %v6850, %v6834
    %v8259 = vpack.c.b16 %v6851, %v6835
    %v8260 = vpack.c.b16 %v6852, %v6836
    %v8261 = vpack.c.b16 %v6853, %v6837
    %v8262 = vpack.c.b16 %v6854, %v6838
    %v8263 = vpack.c.b16 %v6855, %v6839
    %v8264 = vpack.c.b16 %v6856, %v6840
    %v8265 = vpack.c.b16 %v6857, %v6841
    %v8266 = vpack.c.b16 %v6858, %v6842
    %v8267 = vpack.c.b16 %v6859, %v6843
    %v8268 = vpack.c.b16 %v6876, %v6860
    %v8269 = vpack.c.b16 %v6877, %v6861
    %v8270 = vpack.c.b16 %v6878, %v6862
    %v8271 = vpack.c.b16 %v6879, %v6863
    %v8272 = vpack.c.b16 %v6880, %v6864
    %v8273 = vpack.c.b16 %v6881, %v6865
    %v8274 = vpack.c.b16 %v6882, %v6866
    %v8275 = vpack.c.b16 %v6883, %v6867
    %v8276 = vpack.c.b16 %v6884, %v6868
    %v8277 = vpack.c.b16 %v6885, %v6869
    %v8278 = vpack.c.b16 %v6886, %v6870
    %v8279 = vpack.c.b16 %v6887, %v6871
    %v8280 = vpack.c.b16 %v6888, %v6872
    %v8281 = vpack.c.b16 %v6889, %v6873
    %v8282 = vpack.c.b16 %v6890, %v6874
    %v8283 = vpack.c.b16 %v6891, %v6875
    %v8284 = vpack.c.b16 %v6908, %v6892
    %v8285 = vpack.c.b16 %v6909, %v6893
    %v8286 = vpack.c.b16 %v6910, %v6894
    %v8287 = vpack.c.b16 %v6911, %v6895
    %v8288 = vpack.c.b16 %v6912, %v6896
    %v8289 = vpack.c.b16 %v6913, %v6897
    %v8290 = vpack.c.b16 %v6914, %v6898
    %v8291 = vpack.c.b16 %v6915, %v6899
    %v8292 = vpack.c.b16 %v6916, %v6900
    %v8293 = vpack.c.b16 %v6917, %v6901
    %v8294 = vpack.c.b16 %v6918, %v6902
    %v8295 = vpack.c.b16 %v6919, %v6903
    %v8296 = vpack.c.b16 %v6920, %v6904
    %v8297 = vpack.c.b16 %v6921, %v6905
    %v8298 = vpack.c.b16 %v6922, %v6906
    %v8299 = vpack.c.b16 %v6923, %v6907
    %v8300 = vpack.c.b16 %v6940, %v6924
    %v8301 = vpack.c.b16 %v6941, %v6925
    %v8302 = vpack.c.b16 %v6942, %v6926
    %v8303 = vpack.c.b16 %v6943, %v6927
    %v8304 = vpack.c.b16 %v6944, %v6928
    %v8305 = vpack.c.b16 %v6945, %v6929
    %v8306 = vpack.c.b16 %v6946, %v6930
    %v8307 = vpack.c.b16 %v6947, %v6931
    %v8308 = vpack.c.b16 %v6948, %v6932
    %v8309 = vpack.c.b16 %v6949, %v6933
    %v8310 = vpack.c.b16 %v6950, %v6934
    %v8311 = vpack.c.b16 %v6951, %v6935
    %v8312 = vpack.c.b16 %v6952, %v6936
    %v8313 = vpack.c.b16 %v6953, %v6937
    %v8314 = vpack.c.b16 %v6954, %v6938
    %v8315 = vpack.c.b16 %v6955, %v6939
    %v8316 = vpack.c.b16 %v6972, %v6956
    %v8317 = vpack.c.b16 %v6973, %v6957
    %v8318 = vpack.c.b16 %v6974, %v6958
    %v8319 = vpack.c.b16 %v6975, %v6959
    %v8320 = vpack.c.b16 %v6976, %v6960
    %v8321 = vpack.c.b16 %v6977, %v6961
    %v8322 = vpack.c.b16 %v6978, %v6962
    %v8323 = vpack.c.b16 %v6979, %v6963
    %v8324 = vpack.c.b16 %v6980, %v6964
    %v8325 = vpack.c.b16 %v6981, %v6965
    %v8326 = vpack.c.b16 %v6982, %v6966
    %v8327 = vpack.c.b16 %v6983, %v6967
    %v8328 = vpack.c.b16 %v6984, %v6968
    %v8329 = vpack.c.b16 %v6985, %v6969
    %v8330 = vpack.c.b16 %v6986, %v6970
    %v8331 = vpack.c.b16 %v6987, %v6971
    %v8332 = vpack.c.b16 %v7004, %v6988
    %v8333 = vpack.c.b16 %v7005, %v6989
    %v8334 = vpack.c.b16 %v7006, %v6990
    %v8335 = vpack.c.b16 %v7007, %v6991
    %v8336 = vpack.c.b16 %v7008, %v6992
    %v8337 = vpack.c.b16 %v7009, %v6993
    %v8338 = vpack.c.b16 %v7010, %v6994
    %v8339 = vpack.c.b16 %v7011, %v6995
    %v8340 = vpack.c.b16 %v7012, %v6996
    %v8341 = vpack.c.b16 %v7013, %v6997
    %v8342 = vpack.c.b16 %v7014, %v6998
    %v8343 = vpack.c.b16 %v7015, %v6999
    %v8344 = vpack.c.b16 %v7016, %v7000
    %v8345 = vpack.c.b16 %v7017, %v7001
    %v8346 = vpack.c.b16 %v7018, %v7002
    %v8347 = vpack.c.b16 %v7019, %v7003
    %v8348 = vpack.c.b16 %v7036, %v7020
    %v8349 = vpack.c.b16 %v7037, %v7021
    %v8350 = vpack.c.b16 %v7038, %v7022
    %v8351 = vpack.c.b16 %v7039, %v7023
    %v8352 = vpack.c.b16 %v7040, %v7024
    %v8353 = vpack.c.b16 %v7041, %v7025
    %v8354 = vpack.c.b16 %v7042, %v7026
    %v8355 = vpack.c.b16 %v7043, %v7027
    %v8356 = vpack.c.b16 %v7044, %v7028
    %v8357 = vpack.c.b16 %v7045, %v7029
    %v8358 = vpack.c.b16 %v7046, %v7030
    %v8359 = vpack.c.b16 %v7047, %v7031
    %v8360 = vpack.c.b16 %v7048, %v7032
    %v8361 = vpack.c.b16 %v7049, %v7033
    %v8362 = vpack.c.b16 %v7050, %v7034
    %v8363 = vpack.c.b16 %v7051, %v7035
    %v8364 = vpack.c.b16 %v7068, %v7052
    %v8365 = vpack.c.b16 %v7069, %v7053
    %v8366 = vpack.c.b16 %v7070, %v7054
    %v8367 = vpack.c.b16 %v7071, %v7055
    %v8368 = vpack.c.b16 %v7072, %v7056
    %v8369 = vpack.c.b16 %v7073, %v7057
    %v8370 = vpack.c.b16 %v7074, %v7058
    %v8371 = vpack.c.b16 %v7075, %v7059
    %v8372 = vpack.c.b16 %v7076, %v7060
    %v8373 = vpack.c.b16 %v7077, %v7061
    %v8374 = vpack.c.b16 %v7078, %v7062
    %v8375 = vpack.c.b16 %v7079, %v7063
    %v8376 = vpack.c.b16 %v7080, %v7064
    %v8377 = vpack.c.b16 %v7081, %v7065
    %v8378 = vpack.c.b16 %v7082, %v7066
    %v8379 = vpack.c.b16 %v7083, %v7067
    %v8380 = vpack.c.b16 %v7100, %v7084
    %v8381 = vpack.c.b16 %v7101, %v7085
    %v8382 = vpack.c.b16 %v7102, %v7086
    %v8383 = vpack.c.b16 %v7103, %v7087
    %v8384 = vpack.c.b16 %v7104, %v7088
    %v8385 = vpack.c.b16 %v7105, %v7089
    %v8386 = vpack.c.b16 %v7106, %v7090
    %v8387 = vpack.c.b16 %v7107, %v7091
    %v8388 = vpack.c.b16 %v7108, %v7092
    %v8389 = vpack.c.b16 %v7109, %v7093
    %v8390 = vpack.c.b16 %v7110, %v7094
    %v8391 = vpack.c.b16 %v7111, %v7095
    %v8392 = vpack.c.b16 %v7112, %v7096
    %v8393 = vpack.c.b16 %v7113, %v7097
    %v8394 = vpack.c.b16 %v7114, %v7098
    %v8395 = vpack.c.b16 %v7115, %v7099
    %v8396 = vpack.c.b16 %v7132, %v7116
    %v8397 = vpack.c.b16 %v7133, %v7117
    %v8398 = vpack.c.b16 %v7134, %v7118
    %v8399 = vpack.c.b16 %v7135, %v7119
    %v8400 = vpack.c.b16 %v7136, %v7120
    %v8401 = vpack.c.b16 %v7137, %v7121
    %v8402 = vpack.c.b16 %v7138, %v7122
    %v8403 = vpack.c.b16 %v7139, %v7123
    %v8404 = vpack.c.b16 %v7140, %v7124
    %v8405 = vpack.c.b16 %v7141, %v7125
    %v8406 = vpack.c.b16 %v7142, %v7126
    %v8407 = vpack.c.b16 %v7143, %v7127
    %v8408 = vpack.c.b16 %v7144, %v7128
    %v8409 = vpack.c.b16 %v7145, %v7129
    %v8410 = vpack.c.b16 %v7146, %v7130
    %v8411 = vpack.c.b16 %v7147, %v7131
    %v8412 = vpack.c.b16 %v7164, %v7148
    %v8413 = vpack.c.b16 %v7165, %v7149
    %v8414 = vpack.c.b16 %v7166, %v7150
    %v8415 = vpack.c.b16 %v7167, %v7151
    %v8416 = vpack.c.b16 %v7168, %v7152
    %v8417 = vpack.c.b16 %v7169, %v7153
    %v8418 = vpack.c.b16 %v7170, %v7154
    %v8419 = vpack.c.b16 %v7171, %v7155
    %v8420 = vpack.c.b16 %v7172, %v7156
    %v8421 = vpack.c.b16 %v7173, %v7157
    %v8422 = vpack.c.b16 %v7174, %v7158
    %v8423 = vpack.c.b16 %v7175, %v7159
    %v8424 = vpack.c.b16 %v7176, %v7160
    %v8425 = vpack.c.b16 %v7177, %v7161
    %v8426 = vpack.c.b16 %v7178, %v7162
    %v8427 = vpack.c.b16 %v7179, %v7163
    %v8428 = vpack.c.b16 %v7196, %v7180
    %v8429 = vpack.c.b16 %v7197, %v7181
    %v8430 = vpack.c.b16 %v7198, %v7182
    %v8431 = vpack.c.b16 %v7199, %v7183
    %v8432 = vpack.c.b16 %v7200, %v7184
    %v8433 = vpack.c.b16 %v7201, %v7185
    %v8434 = vpack.c.b16 %v7202, %v7186
    %v8435 = vpack.c.b16 %v7203, %v7187
    %v8436 = vpack.c.b16 %v7204, %v7188
    %v8437 = vpack.c.b16 %v7205, %v7189
    %v8438 = vpack.c.b16 %v7206, %v7190
    %v8439 = vpack.c.b16 %v7207, %v7191
    %v8440 = vpack.c.b16 %v7208, %v7192
    %v8441 = vpack.c.b16 %v7209, %v7193
    %v8442 = vpack.c.b16 %v7210, %v7194
    %v8443 = vpack.c.b16 %v7211, %v7195
    %v8444 = vpack.c.b16 %v7228, %v7212
    %v8445 = vpack.c.b16 %v7229, %v7213
    %v8446 = vpack.c.b16 %v7230, %v7214
    %v8447 = vpack.c.b16 %v7231, %v7215
    %v8448 = vpack.c.b16 %v7232, %v7216
    %v8449 = vpack.c.b16 %v7233, %v7217
    %v8450 = vpack.c.b16 %v7234, %v7218
    %v8451 = vpack.c.b16 %v7235, %v7219
    %v8452 = vpack.c.b16 %v7236, %v7220
    %v8453 = vpack.c.b16 %v7237, %v7221
    %v8454 = vpack.c.b16 %v7238, %v7222
    %v8455 = vpack.c.b16 %v7239, %v7223
    %v8456 = vpack.c.b16 %v7240, %v7224
    %v8457 = vpack.c.b16 %v7241, %v7225
    %v8458 = vpack.c.b16 %v7242, %v7226
    %v8459 = vpack.c.b16 %v7243, %v7227
    %v8460 = vpack.c.b16 %v7260, %v7244
    %v8461 = vpack.c.b16 %v7261, %v7245
    %v8462 = vpack.c.b16 %v7262, %v7246
    %v8463 = vpack.c.b16 %v7263, %v7247
    %v8464 = vpack.c.b16 %v7264, %v7248
    %v8465 = vpack.c.b16 %v7265, %v7249
    %v8466 = vpack.c.b16 %v7266, %v7250
    %v8467 = vpack.c.b16 %v7267, %v7251
    %v8468 = vpack.c.b16 %v7268, %v7252
    %v8469 = vpack.c.b16 %v7269, %v7253
    %v8470 = vpack.c.b16 %v7270, %v7254
    %v8471 = vpack.c.b16 %v7271, %v7255
    %v8472 = vpack.c.b16 %v7272, %v7256
    %v8473 = vpack.c.b16 %v7273, %v7257
    %v8474 = vpack.c.b16 %v7274, %v7258
    %v8475 = vpack.c.b16 %v7275, %v7259
    %v8476 = vpack.c.b16 %v7292, %v7276
    %v8477 = vpack.c.b16 %v7293, %v7277
    %v8478 = vpack.c.b16 %v7294, %v7278
    %v8479 = vpack.c.b16 %v7295, %v7279
    %v8480 = vpack.c.b16 %v7296, %v7280
    %v8481 = vpack.c.b16 %v7297, %v7281
    %v8482 = vpack.c.b16 %v7298, %v7282
    %v8483 = vpack.c.b16 %v7299, %v7283
    %v8484 = vpack.c.b16 %v7300, %v7284
    %v8485 = vpack.c.b16 %v7301, %v7285
    %v8486 = vpack.c.b16 %v7302, %v7286
    %v8487 = vpack.c.b16 %v7303, %v7287
    %v8488 = vpack.c.b16 %v7304, %v7288
    %v8489 = vpack.c.b16 %v7305, %v7289
    %v8490 = vpack.c.b16 %v7306, %v7290
    %v8491 = vpack.c.b16 %v7307, %v7291
    %v8492 = vpack.c.b16 %v7324, %v7308
    %v8493 = vpack.c.b16 %v7325, %v7309
    %v8494 = vpack.c.b16 %v7326, %v7310
    %v8495 = vpack.c.b16 %v7327, %v7311
    %v8496 = vpack.c.b16 %v7328, %v7312
    %v8497 = vpack.c.b16 %v7329, %v7313
    %v8498 = vpack.c.b16 %v7330, %v7314
    %v8499 = vpack.c.b16 %v7331, %v7315
    %v8500 = vpack.c.b16 %v7332, %v7316
    %v8501 = vpack.c.b16 %v7333, %v7317
    %v8502 = vpack.c.b16 %v7334, %v7318
    %v8503 = vpack.c.b16 %v7335, %v7319
    %v8504 = vpack.c.b16 %v7336, %v7320
    %v8505 = vpack.c.b16 %v7337, %v7321
    %v8506 = vpack.c.b16 %v7338, %v7322
    %v8507 = vpack.c.b16 %v7339, %v7323
    %v8508 = vpack.c.b16 %v7356, %v7340
    %v8509 = vpack.c.b16 %v7357, %v7341
    %v8510 = vpack.c.b16 %v7358, %v7342
    %v8511 = vpack.c.b16 %v7359, %v7343
    %v8512 = vpack.c.b16 %v7360, %v7344
    %v8513 = vpack.c.b16 %v7361, %v7345
    %v8514 = vpack.c.b16 %v7362, %v7346
    %v8515 = vpack.c.b16 %v7363, %v7347
    %v8516 = vpack.c.b16 %v7364, %v7348
    %v8517 = vpack.c.b16 %v7365, %v7349
    %v8518 = vpack.c.b16 %v7366, %v7350
    %v8519 = vpack.c.b16 %v7367, %v7351
    %v8520 = vpack.c.b16 %v7368, %v7352
    %v8521 = vpack.c.b16 %v7369, %v7353
    %v8522 = vpack.c.b16 %v7370, %v7354
    %v8523 = vpack.c.b16 %v7371, %v7355
    %v8524 = vpack.c.b16 %v7388, %v7372
    %v8525 = vpack.c.b16 %v7389, %v7373
    %v8526 = vpack.c.b16 %v7390, %v7374
    %v8527 = vpack.c.b16 %v7391, %v7375
    %v8528 = vpack.c.b16 %v7392, %v7376
    %v8529 = vpack.c.b16 %v7393, %v7377
    %v8530 = vpack.c.b16 %v7394, %v7378
    %v8531 = vpack.c.b16 %v7395, %v7379
    %v8532 = vpack.c.b16 %v7396, %v7380
    %v8533 = vpack.c.b16 %v7397, %v7381
    %v8534 = vpack.c.b16 %v7398, %v7382
    %v8535 = vpack.c.b16 %v7399, %v7383
    %v8536 = vpack.c.b16 %v7400, %v7384
    %v8537 = vpack.c.b16 %v7401, %v7385
    %v8538 = vpack.c.b16 %v7402, %v7386
    %v8539 = vpack.c.b16 %v7403, %v7387
    %v8540 = vpack.c.b16 %v7420, %v7404
    %v8541 = vpack.c.b16 %v7421, %v7405
    %v8542 = vpack.c.b16 %v7422, %v7406
    %v8543 = vpack.c.b16 %v7423, %v7407
    %v8544 = vpack.c.b16 %v7424, %v7408
    %v8545 = vpack.c.b16 %v7425, %v7409
    %v8546 = vpack.c.b16 %v7426, %v7410
    %v8547 = vpack.c.b16 %v7427, %v7411
    %v8548 = vpack.c.b16 %v7428, %v7412
    %v8549 = vpack.c.b16 %v7429, %v7413
    %v8550 = vpack.c.b16 %v7430, %v7414
    %v8551 = vpack.c.b16 %v7431, %v7415
    %v8552 = vpack.c.b16 %v7432, %v7416
    %v8553 = vpack.c.b16 %v7433, %v7417
    %v8554 = vpack.c.b16 %v7434, %v7418
    %v8555 = vpack.c.b16 %v7435, %v7419
    %v8556 = vpack.c.b16 %v7452, %v7436
    %v8557 = vpack.c.b16 %v7453, %v7437
    %v8558 = vpack.c.b16 %v7454, %v7438
    %v8559 = vpack.c.b16 %v7455, %v7439
    %v8560 = vpack.c.b16 %v7456, %v7440
    %v8561 = vpack.c.b16 %v7457, %v7441
    %v8562 = vpack.c.b16 %v7458, %v7442
    %v8563 = vpack.c.b16 %v7459, %v7443
    %v8564 = vpack.c.b16 %v7460, %v7444
    %v8565 = vpack.c.b16 %v7461, %v7445
    %v8566 = vpack.c.b16 %v7462, %v7446
    %v8567 = vpack.c.b16 %v7463, %v7447
    %v8568 = vpack.c.b16 %v7464, %v7448
    %v8569 = vpack.c.b16 %v7465, %v7449
    %v8570 = vpack.c.b16 %v7466, %v7450
    %v8571 = vpack.c.b16 %v7467, %v7451
    %v8572 = vpack.c.b16 %v7484, %v7468
    %v8573 = vpack.c.b16 %v7485, %v7469
    %v8574 = vpack.c.b16 %v7486, %v7470
    %v8575 = vpack.c.b16 %v7487, %v7471
    %v8576 = vpack.c.b16 %v7488, %v7472
    %v8577 = vpack.c.b16 %v7489, %v7473
    %v8578 = vpack.c.b16 %v7490, %v7474
    %v8579 = vpack.c.b16 %v7491, %v7475
    %v8580 = vpack.c.b16 %v7492, %v7476
    %v8581 = vpack.c.b16 %v7493, %v7477
    %v8582 = vpack.c.b16 %v7494, %v7478
    %v8583 = vpack.c.b16 %v7495, %v7479
    %v8584 = vpack.c.b16 %v7496, %v7480
    %v8585 = vpack.c.b16 %v7497, %v7481
    %v8586 = vpack.c.b16 %v7498, %v7482
    %v8587 = vpack.c.b16 %v7499, %v7483
    %v8588 = vpack.c.b16 %v7516, %v7500
    %v8589 = vpack.c.b16 %v7517, %v7501
    %v8590 = vpack.c.b16 %v7518, %v7502
    %v8591 = vpack.c.b16 %v7519, %v7503
    %v8592 = vpack.c.b16 %v7520, %v7504
    %v8593 = vpack.c.b16 %v7521, %v7505
    %v8594 = vpack.c.b16 %v7522, %v7506
    %v8595 = vpack.c.b16 %v7523, %v7507
    %v8596 = vpack.c.b16 %v7524, %v7508
    %v8597 = vpack.c.b16 %v7525, %v7509
    %v8598 = vpack.c.b16 %v7526, %v7510
    %v8599 = vpack.c.b16 %v7527, %v7511
    %v8600 = vpack.c.b16 %v7528, %v7512
    %v8601 = vpack.c.b16 %v7529, %v7513
    %v8602 = vpack.c.b16 %v7530, %v7514
    %v8603 = vpack.c.b16 %v7531, %v7515
    %v8604 = vpack.c.b16 %v7548, %v7532
    %v8605 = vpack.c.b16 %v7549, %v7533
    %v8606 = vpack.c.b16 %v7550, %v7534
    %v8607 = vpack.c.b16 %v7551, %v7535
    %v8608 = vpack.c.b16 %v7552, %v7536
    %v8609 = vpack.c.b16 %v7553, %v7537
    %v8610 = vpack.c.b16 %v7554, %v7538
    %v8611 = vpack.c.b16 %v7555, %v7539
    %v8612 = vpack.c.b16 %v7556, %v7540
    %v8613 = vpack.c.b16 %v7557, %v7541
    %v8614 = vpack.c.b16 %v7558, %v7542
    %v8615 = vpack.c.b16 %v7559, %v7543
    %v8616 = vpack.c.b16 %v7560, %v7544
    %v8617 = vpack.c.b16 %v7561, %v7545
    %v8618 = vpack.c.b16 %v7562, %v7546
    %v8619 = vpack.c.b16 %v7563, %v7547
    %v8620 = vpack.c.b16 %v7580, %v7564
    %v8621 = vpack.c.b16 %v7581, %v7565
    %v8622 = vpack.c.b16 %v7582, %v7566
    %v8623 = vpack.c.b16 %v7583, %v7567
    %v8624 = vpack.c.b16 %v7584, %v7568
    %v8625 = vpack.c.b16 %v7585, %v7569
    %v8626 = vpack.c.b16 %v7586, %v7570
    %v8627 = vpack.c.b16 %v7587, %v7571
    %v8628 = vpack.c.b16 %v7588, %v7572
    %v8629 = vpack.c.b16 %v7589, %v7573
    %v8630 = vpack.c.b16 %v7590, %v7574
    %v8631 = vpack.c.b16 %v7591, %v7575
    %v8632 = vpack.c.b16 %v7592, %v7576
    %v8633 = vpack.c.b16 %v7593, %v7577
    %v8634 = vpack.c.b16 %v7594, %v7578
    %v8635 = vpack.c.b16 %v7595, %v7579
    %v8636 = vpack.c.b16 %v7612, %v7596
    %v8637 = vpack.c.b16 %v7613, %v7597
    %v8638 = vpack.c.b16 %v7614, %v7598
    %v8639 = vpack.c.b16 %v7615, %v7599
    %v8640 = vpack.c.b16 %v7616, %v7600
    %v8641 = vpack.c.b16 %v7617, %v7601
    %v8642 = vpack.c.b16 %v7618, %v7602
    %v8643 = vpack.c.b16 %v7619, %v7603
    %v8644 = vpack.c.b16 %v7620, %v7604
    %v8645 = vpack.c.b16 %v7621, %v7605
    %v8646 = vpack.c.b16 %v7622, %v7606
    %v8647 = vpack.c.b16 %v7623, %v7607
    %v8648 = vpack.c.b16 %v7624, %v7608
    %v8649 = vpack.c.b16 %v7625, %v7609
    %v8650 = vpack.c.b16 %v7626, %v7610
    %v8651 = vpack.c.b16 %v7627, %v7611
    %9676 = vmatpush.bf16.msra.mxu0 %v7740
    %9677 = vmatpush.bf16.msra.mxu0 %v7724
    %9678 = vmatpush.bf16.msra.mxu0 %v7708
    %9679 = vmatpush.bf16.msra.mxu0 %v7692
    %9680 = vmatpush.bf16.msra.mxu0 %v7676
    %9681 = vmatpush.bf16.msra.mxu0 %v7660
    %9682 = vmatpush.bf16.msra.mxu0 %v7644
    %9683 = vmatpush.bf16.msra.mxu0 %v7628
    %9684 = vmatmul.bf16.gmra.mxu0 %v3488
    %v9685 = vpop.f32.mrf.mxu0
    %v9686 = vadd.f32 %v4524, %v9685
    %v9687 = vpop.f32.mrf.mxu0
    %9688 = vdwg.mxu0
    %9689 = vmatpush.bf16.msra.mxu0 %v7868
    %9690 = vmatpush.bf16.msra.mxu0 %v7852
    %9691 = vmatpush.bf16.msra.mxu0 %v7836
    %9692 = vmatpush.bf16.msra.mxu0 %v7820
    %9693 = vmatpush.bf16.msra.mxu0 %v7804
    %9694 = vmatpush.bf16.msra.mxu0 %v7788
    %9695 = vmatpush.bf16.msra.mxu0 %v7772
    %9696 = vmatpush.bf16.msra.mxu0 %v7756
    %9697 = vmatmul.bf16.gmra.mxu0 %v3489
    %v9698 = vpop.f32.mrf.mxu0
    %v9699 = vadd.f32 %v9686, %v9698
    %v9700 = vpop.f32.mrf.mxu0
    %9701 = vdwg.mxu0
    %9702 = vmatpush.bf16.msra.mxu0 %v7996
    %9703 = vmatpush.bf16.msra.mxu0 %v7980
    %9704 = vmatpush.bf16.msra.mxu0 %v7964
    %9705 = vmatpush.bf16.msra.mxu0 %v7948
    %9706 = vmatpush.bf16.msra.mxu0 %v7932
    %9707 = vmatpush.bf16.msra.mxu0 %v7916
    %9708 = vmatpush.bf16.msra.mxu0 %v7900
    %9709 = vmatpush.bf16.msra.mxu0 %v7884
    %9710 = vmatmul.bf16.gmra.mxu0 %v3490
    %v9711 = vpop.f32.mrf.mxu0
    %v9712 = vadd.f32 %v9699, %v9711
    %v9713 = vpop.f32.mrf.mxu0
    %9714 = vdwg.mxu0
    %9715 = vmatpush.bf16.msra.mxu0 %v8124
    %9716 = vmatpush.bf16.msra.mxu0 %v8108
    %9717 = vmatpush.bf16.msra.mxu0 %v8092
    %9718 = vmatpush.bf16.msra.mxu0 %v8076
    %9719 = vmatpush.bf16.msra.mxu0 %v8060
    %9720 = vmatpush.bf16.msra.mxu0 %v8044
    %9721 = vmatpush.bf16.msra.mxu0 %v8028
    %9722 = vmatpush.bf16.msra.mxu0 %v8012
    %9723 = vmatmul.bf16.gmra.mxu0 %v3491
    %v9724 = vpop.f32.mrf.mxu0
    %v9725 = vadd.f32 %v9712, %v9724
    %v9726 = vpop.f32.mrf.mxu0
    %9727 = vdwg.mxu0
    %9728 = vmatpush.bf16.msra.mxu0 %v8252
    %9729 = vmatpush.bf16.msra.mxu0 %v8236
    %9730 = vmatpush.bf16.msra.mxu0 %v8220
    %9731 = vmatpush.bf16.msra.mxu0 %v8204
    %9732 = vmatpush.bf16.msra.mxu0 %v8188
    %9733 = vmatpush.bf16.msra.mxu0 %v8172
    %9734 = vmatpush.bf16.msra.mxu0 %v8156
    %9735 = vmatpush.bf16.msra.mxu0 %v8140
    %9736 = vmatmul.bf16.gmra.mxu0 %v3492
    %v9737 = vpop.f32.mrf.mxu0
    %v9738 = vadd.f32 %v9725, %v9737
    %v9739 = vpop.f32.mrf.mxu0
    %9740 = vdwg.mxu0
    %9741 = vmatpush.bf16.msra.mxu0 %v8380
    %9742 = vmatpush.bf16.msra.mxu0 %v8364
    %9743 = vmatpush.bf16.msra.mxu0 %v8348
    %9744 = vmatpush.bf16.msra.mxu0 %v8332
    %9745 = vmatpush.bf16.msra.mxu0 %v8316
    %9746 = vmatpush.bf16.msra.mxu0 %v8300
    %9747 = vmatpush.bf16.msra.mxu0 %v8284
    %9748 = vmatpush.bf16.msra.mxu0 %v8268
    %9749 = vmatmul.bf16.gmra.mxu0 %v3493
    %v9750 = vpop.f32.mrf.mxu0
    %v9751 = vadd.f32 %v9738, %v9750
    %v9752 = vpop.f32.mrf.mxu0
    %9753 = vdwg.mxu0
    %9754 = vmatpush.bf16.msra.mxu0 %v8508
    %9755 = vmatpush.bf16.msra.mxu0 %v8492
    %9756 = vmatpush.bf16.msra.mxu0 %v8476
    %9757 = vmatpush.bf16.msra.mxu0 %v8460
    %9758 = vmatpush.bf16.msra.mxu0 %v8444
    %9759 = vmatpush.bf16.msra.mxu0 %v8428
    %9760 = vmatpush.bf16.msra.mxu0 %v8412
    %9761 = vmatpush.bf16.msra.mxu0 %v8396
    %9762 = vmatmul.bf16.gmra.mxu0 %v3494
    %v9763 = vpop.f32.mrf.mxu0
    %v9764 = vadd.f32 %v9751, %v9763
    %v9765 = vpop.f32.mrf.mxu0
    %9766 = vdwg.mxu0
    %9767 = vmatpush.bf16.msra.mxu0 %v8636
    %9768 = vmatpush.bf16.msra.mxu0 %v8620
    %9769 = vmatpush.bf16.msra.mxu0 %v8604
    %9770 = vmatpush.bf16.msra.mxu0 %v8588
    %9771 = vmatpush.bf16.msra.mxu0 %v8572
    %9772 = vmatpush.bf16.msra.mxu0 %v8556
    %9773 = vmatpush.bf16.msra.mxu0 %v8540
    %9774 = vmatpush.bf16.msra.mxu0 %v8524
    %9775 = vmatmul.bf16.gmra.mxu0 %v3495
    %v9776 = vpop.f32.mrf.mxu0
    %v9777 = vadd.f32 %v9764, %v9776
    %v9778 = vpop.f32.mrf.mxu0
    %9779 = vdwg.mxu0
    %9780 = vmatpush.bf16.msra.mxu0 %v7741
    %9781 = vmatpush.bf16.msra.mxu0 %v7725
    %9782 = vmatpush.bf16.msra.mxu0 %v7709
    %9783 = vmatpush.bf16.msra.mxu0 %v7693
    %9784 = vmatpush.bf16.msra.mxu0 %v7677
    %9785 = vmatpush.bf16.msra.mxu0 %v7661
    %9786 = vmatpush.bf16.msra.mxu0 %v7645
    %9787 = vmatpush.bf16.msra.mxu0 %v7629
    %9788 = vmatmul.bf16.gmra.mxu0 %v3488
    %v9789 = vpop.f32.mrf.mxu0
    %v9790 = vadd.f32 %v4525, %v9789
    %v9791 = vpop.f32.mrf.mxu0
    %9792 = vdwg.mxu0
    %9793 = vmatpush.bf16.msra.mxu0 %v7869
    %9794 = vmatpush.bf16.msra.mxu0 %v7853
    %9795 = vmatpush.bf16.msra.mxu0 %v7837
    %9796 = vmatpush.bf16.msra.mxu0 %v7821
    %9797 = vmatpush.bf16.msra.mxu0 %v7805
    %9798 = vmatpush.bf16.msra.mxu0 %v7789
    %9799 = vmatpush.bf16.msra.mxu0 %v7773
    %9800 = vmatpush.bf16.msra.mxu0 %v7757
    %9801 = vmatmul.bf16.gmra.mxu0 %v3489
    %v9802 = vpop.f32.mrf.mxu0
    %v9803 = vadd.f32 %v9790, %v9802
    %v9804 = vpop.f32.mrf.mxu0
    %9805 = vdwg.mxu0
    %9806 = vmatpush.bf16.msra.mxu0 %v7997
    %9807 = vmatpush.bf16.msra.mxu0 %v7981
    %9808 = vmatpush.bf16.msra.mxu0 %v7965
    %9809 = vmatpush.bf16.msra.mxu0 %v7949
    %9810 = vmatpush.bf16.msra.mxu0 %v7933
    %9811 = vmatpush.bf16.msra.mxu0 %v7917
    %9812 = vmatpush.bf16.msra.mxu0 %v7901
    %9813 = vmatpush.bf16.msra.mxu0 %v7885
    %9814 = vmatmul.bf16.gmra.mxu0 %v3490
    %v9815 = vpop.f32.mrf.mxu0
    %v9816 = vadd.f32 %v9803, %v9815
    %v9817 = vpop.f32.mrf.mxu0
    %9818 = vdwg.mxu0
    %9819 = vmatpush.bf16.msra.mxu0 %v8125
    %9820 = vmatpush.bf16.msra.mxu0 %v8109
    %9821 = vmatpush.bf16.msra.mxu0 %v8093
    %9822 = vmatpush.bf16.msra.mxu0 %v8077
    %9823 = vmatpush.bf16.msra.mxu0 %v8061
    %9824 = vmatpush.bf16.msra.mxu0 %v8045
    %9825 = vmatpush.bf16.msra.mxu0 %v8029
    %9826 = vmatpush.bf16.msra.mxu0 %v8013
    %9827 = vmatmul.bf16.gmra.mxu0 %v3491
    %v9828 = vpop.f32.mrf.mxu0
    %v9829 = vadd.f32 %v9816, %v9828
    %v9830 = vpop.f32.mrf.mxu0
    %9831 = vdwg.mxu0
    %9832 = vmatpush.bf16.msra.mxu0 %v8253
    %9833 = vmatpush.bf16.msra.mxu0 %v8237
    %9834 = vmatpush.bf16.msra.mxu0 %v8221
    %9835 = vmatpush.bf16.msra.mxu0 %v8205
    %9836 = vmatpush.bf16.msra.mxu0 %v8189
    %9837 = vmatpush.bf16.msra.mxu0 %v8173
    %9838 = vmatpush.bf16.msra.mxu0 %v8157
    %9839 = vmatpush.bf16.msra.mxu0 %v8141
    %9840 = vmatmul.bf16.gmra.mxu0 %v3492
    %v9841 = vpop.f32.mrf.mxu0
    %v9842 = vadd.f32 %v9829, %v9841
    %v9843 = vpop.f32.mrf.mxu0
    %9844 = vdwg.mxu0
    %9845 = vmatpush.bf16.msra.mxu0 %v8381
    %9846 = vmatpush.bf16.msra.mxu0 %v8365
    %9847 = vmatpush.bf16.msra.mxu0 %v8349
    %9848 = vmatpush.bf16.msra.mxu0 %v8333
    %9849 = vmatpush.bf16.msra.mxu0 %v8317
    %9850 = vmatpush.bf16.msra.mxu0 %v8301
    %9851 = vmatpush.bf16.msra.mxu0 %v8285
    %9852 = vmatpush.bf16.msra.mxu0 %v8269
    %9853 = vmatmul.bf16.gmra.mxu0 %v3493
    %v9854 = vpop.f32.mrf.mxu0
    %v9855 = vadd.f32 %v9842, %v9854
    %v9856 = vpop.f32.mrf.mxu0
    %9857 = vdwg.mxu0
    %9858 = vmatpush.bf16.msra.mxu0 %v8509
    %9859 = vmatpush.bf16.msra.mxu0 %v8493
    %9860 = vmatpush.bf16.msra.mxu0 %v8477
    %9861 = vmatpush.bf16.msra.mxu0 %v8461
    %9862 = vmatpush.bf16.msra.mxu0 %v8445
    %9863 = vmatpush.bf16.msra.mxu0 %v8429
    %9864 = vmatpush.bf16.msra.mxu0 %v8413
    %9865 = vmatpush.bf16.msra.mxu0 %v8397
    %9866 = vmatmul.bf16.gmra.mxu0 %v3494
    %v9867 = vpop.f32.mrf.mxu0
    %v9868 = vadd.f32 %v9855, %v9867
    %v9869 = vpop.f32.mrf.mxu0
    %9870 = vdwg.mxu0
    %9871 = vmatpush.bf16.msra.mxu0 %v8637
    %9872 = vmatpush.bf16.msra.mxu0 %v8621
    %9873 = vmatpush.bf16.msra.mxu0 %v8605
    %9874 = vmatpush.bf16.msra.mxu0 %v8589
    %9875 = vmatpush.bf16.msra.mxu0 %v8573
    %9876 = vmatpush.bf16.msra.mxu0 %v8557
    %9877 = vmatpush.bf16.msra.mxu0 %v8541
    %9878 = vmatpush.bf16.msra.mxu0 %v8525
    %9879 = vmatmul.bf16.gmra.mxu0 %v3495
    %v9880 = vpop.f32.mrf.mxu0
    %v9881 = vadd.f32 %v9868, %v9880
    %v9882 = vpop.f32.mrf.mxu0
    %9883 = vdwg.mxu0
    %9884 = vmatpush.bf16.msra.mxu0 %v7742
    %9885 = vmatpush.bf16.msra.mxu0 %v7726
    %9886 = vmatpush.bf16.msra.mxu0 %v7710
    %9887 = vmatpush.bf16.msra.mxu0 %v7694
    %9888 = vmatpush.bf16.msra.mxu0 %v7678
    %9889 = vmatpush.bf16.msra.mxu0 %v7662
    %9890 = vmatpush.bf16.msra.mxu0 %v7646
    %9891 = vmatpush.bf16.msra.mxu0 %v7630
    %9892 = vmatmul.bf16.gmra.mxu0 %v3488
    %v9893 = vpop.f32.mrf.mxu0
    %v9894 = vadd.f32 %v4526, %v9893
    %v9895 = vpop.f32.mrf.mxu0
    %9896 = vdwg.mxu0
    %9897 = vmatpush.bf16.msra.mxu0 %v7870
    %9898 = vmatpush.bf16.msra.mxu0 %v7854
    %9899 = vmatpush.bf16.msra.mxu0 %v7838
    %9900 = vmatpush.bf16.msra.mxu0 %v7822
    %9901 = vmatpush.bf16.msra.mxu0 %v7806
    %9902 = vmatpush.bf16.msra.mxu0 %v7790
    %9903 = vmatpush.bf16.msra.mxu0 %v7774
    %9904 = vmatpush.bf16.msra.mxu0 %v7758
    %9905 = vmatmul.bf16.gmra.mxu0 %v3489
    %v9906 = vpop.f32.mrf.mxu0
    %v9907 = vadd.f32 %v9894, %v9906
    %v9908 = vpop.f32.mrf.mxu0
    %9909 = vdwg.mxu0
    %9910 = vmatpush.bf16.msra.mxu0 %v7998
    %9911 = vmatpush.bf16.msra.mxu0 %v7982
    %9912 = vmatpush.bf16.msra.mxu0 %v7966
    %9913 = vmatpush.bf16.msra.mxu0 %v7950
    %9914 = vmatpush.bf16.msra.mxu0 %v7934
    %9915 = vmatpush.bf16.msra.mxu0 %v7918
    %9916 = vmatpush.bf16.msra.mxu0 %v7902
    %9917 = vmatpush.bf16.msra.mxu0 %v7886
    %9918 = vmatmul.bf16.gmra.mxu0 %v3490
    %v9919 = vpop.f32.mrf.mxu0
    %v9920 = vadd.f32 %v9907, %v9919
    %v9921 = vpop.f32.mrf.mxu0
    %9922 = vdwg.mxu0
    %9923 = vmatpush.bf16.msra.mxu0 %v8126
    %9924 = vmatpush.bf16.msra.mxu0 %v8110
    %9925 = vmatpush.bf16.msra.mxu0 %v8094
    %9926 = vmatpush.bf16.msra.mxu0 %v8078
    %9927 = vmatpush.bf16.msra.mxu0 %v8062
    %9928 = vmatpush.bf16.msra.mxu0 %v8046
    %9929 = vmatpush.bf16.msra.mxu0 %v8030
    %9930 = vmatpush.bf16.msra.mxu0 %v8014
    %9931 = vmatmul.bf16.gmra.mxu0 %v3491
    %v9932 = vpop.f32.mrf.mxu0
    %v9933 = vadd.f32 %v9920, %v9932
    %v9934 = vpop.f32.mrf.mxu0
    %9935 = vdwg.mxu0
    %9936 = vmatpush.bf16.msra.mxu0 %v8254
    %9937 = vmatpush.bf16.msra.mxu0 %v8238
    %9938 = vmatpush.bf16.msra.mxu0 %v8222
    %9939 = vmatpush.bf16.msra.mxu0 %v8206
    %9940 = vmatpush.bf16.msra.mxu0 %v8190
    %9941 = vmatpush.bf16.msra.mxu0 %v8174
    %9942 = vmatpush.bf16.msra.mxu0 %v8158
    %9943 = vmatpush.bf16.msra.mxu0 %v8142
    %9944 = vmatmul.bf16.gmra.mxu0 %v3492
    %v9945 = vpop.f32.mrf.mxu0
    %v9946 = vadd.f32 %v9933, %v9945
    %v9947 = vpop.f32.mrf.mxu0
    %9948 = vdwg.mxu0
    %9949 = vmatpush.bf16.msra.mxu0 %v8382
    %9950 = vmatpush.bf16.msra.mxu0 %v8366
    %9951 = vmatpush.bf16.msra.mxu0 %v8350
    %9952 = vmatpush.bf16.msra.mxu0 %v8334
    %9953 = vmatpush.bf16.msra.mxu0 %v8318
    %9954 = vmatpush.bf16.msra.mxu0 %v8302
    %9955 = vmatpush.bf16.msra.mxu0 %v8286
    %9956 = vmatpush.bf16.msra.mxu0 %v8270
    %9957 = vmatmul.bf16.gmra.mxu0 %v3493
    %v9958 = vpop.f32.mrf.mxu0
    %v9959 = vadd.f32 %v9946, %v9958
    %v9960 = vpop.f32.mrf.mxu0
    %9961 = vdwg.mxu0
    %9962 = vmatpush.bf16.msra.mxu0 %v8510
    %9963 = vmatpush.bf16.msra.mxu0 %v8494
    %9964 = vmatpush.bf16.msra.mxu0 %v8478
    %9965 = vmatpush.bf16.msra.mxu0 %v8462
    %9966 = vmatpush.bf16.msra.mxu0 %v8446
    %9967 = vmatpush.bf16.msra.mxu0 %v8430
    %9968 = vmatpush.bf16.msra.mxu0 %v8414
    %9969 = vmatpush.bf16.msra.mxu0 %v8398
    %9970 = vmatmul.bf16.gmra.mxu0 %v3494
    %v9971 = vpop.f32.mrf.mxu0
    %v9972 = vadd.f32 %v9959, %v9971
    %v9973 = vpop.f32.mrf.mxu0
    %9974 = vdwg.mxu0
    %9975 = vmatpush.bf16.msra.mxu0 %v8638
    %9976 = vmatpush.bf16.msra.mxu0 %v8622
    %9977 = vmatpush.bf16.msra.mxu0 %v8606
    %9978 = vmatpush.bf16.msra.mxu0 %v8590
    %9979 = vmatpush.bf16.msra.mxu0 %v8574
    %9980 = vmatpush.bf16.msra.mxu0 %v8558
    %9981 = vmatpush.bf16.msra.mxu0 %v8542
    %9982 = vmatpush.bf16.msra.mxu0 %v8526
    %9983 = vmatmul.bf16.gmra.mxu0 %v3495
    %v9984 = vpop.f32.mrf.mxu0
    %v9985 = vadd.f32 %v9972, %v9984
    %v9986 = vpop.f32.mrf.mxu0
    %9987 = vdwg.mxu0
    %9988 = vmatpush.bf16.msra.mxu0 %v7743
    %9989 = vmatpush.bf16.msra.mxu0 %v7727
    %9990 = vmatpush.bf16.msra.mxu0 %v7711
    %9991 = vmatpush.bf16.msra.mxu0 %v7695
    %9992 = vmatpush.bf16.msra.mxu0 %v7679
    %9993 = vmatpush.bf16.msra.mxu0 %v7663
    %9994 = vmatpush.bf16.msra.mxu0 %v7647
    %9995 = vmatpush.bf16.msra.mxu0 %v7631
    %9996 = vmatmul.bf16.gmra.mxu0 %v3488
    %v9997 = vpop.f32.mrf.mxu0
    %v9998 = vadd.f32 %v4527, %v9997
    %v9999 = vpop.f32.mrf.mxu0
    %10000 = vdwg.mxu0
    %10001 = vmatpush.bf16.msra.mxu0 %v7871
    %10002 = vmatpush.bf16.msra.mxu0 %v7855
    %10003 = vmatpush.bf16.msra.mxu0 %v7839
    %10004 = vmatpush.bf16.msra.mxu0 %v7823
    %10005 = vmatpush.bf16.msra.mxu0 %v7807
    %10006 = vmatpush.bf16.msra.mxu0 %v7791
    %10007 = vmatpush.bf16.msra.mxu0 %v7775
    %10008 = vmatpush.bf16.msra.mxu0 %v7759
    %10009 = vmatmul.bf16.gmra.mxu0 %v3489
    %v10010 = vpop.f32.mrf.mxu0
    %v10011 = vadd.f32 %v9998, %v10010
    %v10012 = vpop.f32.mrf.mxu0
    %10013 = vdwg.mxu0
    %10014 = vmatpush.bf16.msra.mxu0 %v7999
    %10015 = vmatpush.bf16.msra.mxu0 %v7983
    %10016 = vmatpush.bf16.msra.mxu0 %v7967
    %10017 = vmatpush.bf16.msra.mxu0 %v7951
    %10018 = vmatpush.bf16.msra.mxu0 %v7935
    %10019 = vmatpush.bf16.msra.mxu0 %v7919
    %10020 = vmatpush.bf16.msra.mxu0 %v7903
    %10021 = vmatpush.bf16.msra.mxu0 %v7887
    %10022 = vmatmul.bf16.gmra.mxu0 %v3490
    %v10023 = vpop.f32.mrf.mxu0
    %v10024 = vadd.f32 %v10011, %v10023
    %v10025 = vpop.f32.mrf.mxu0
    %10026 = vdwg.mxu0
    %10027 = vmatpush.bf16.msra.mxu0 %v8127
    %10028 = vmatpush.bf16.msra.mxu0 %v8111
    %10029 = vmatpush.bf16.msra.mxu0 %v8095
    %10030 = vmatpush.bf16.msra.mxu0 %v8079
    %10031 = vmatpush.bf16.msra.mxu0 %v8063
    %10032 = vmatpush.bf16.msra.mxu0 %v8047
    %10033 = vmatpush.bf16.msra.mxu0 %v8031
    %10034 = vmatpush.bf16.msra.mxu0 %v8015
    %10035 = vmatmul.bf16.gmra.mxu0 %v3491
    %v10036 = vpop.f32.mrf.mxu0
    %v10037 = vadd.f32 %v10024, %v10036
    %v10038 = vpop.f32.mrf.mxu0
    %10039 = vdwg.mxu0
    %10040 = vmatpush.bf16.msra.mxu0 %v8255
    %10041 = vmatpush.bf16.msra.mxu0 %v8239
    %10042 = vmatpush.bf16.msra.mxu0 %v8223
    %10043 = vmatpush.bf16.msra.mxu0 %v8207
    %10044 = vmatpush.bf16.msra.mxu0 %v8191
    %10045 = vmatpush.bf16.msra.mxu0 %v8175
    %10046 = vmatpush.bf16.msra.mxu0 %v8159
    %10047 = vmatpush.bf16.msra.mxu0 %v8143
    %10048 = vmatmul.bf16.gmra.mxu0 %v3492
    %v10049 = vpop.f32.mrf.mxu0
    %v10050 = vadd.f32 %v10037, %v10049
    %v10051 = vpop.f32.mrf.mxu0
    %10052 = vdwg.mxu0
    %10053 = vmatpush.bf16.msra.mxu0 %v8383
    %10054 = vmatpush.bf16.msra.mxu0 %v8367
    %10055 = vmatpush.bf16.msra.mxu0 %v8351
    %10056 = vmatpush.bf16.msra.mxu0 %v8335
    %10057 = vmatpush.bf16.msra.mxu0 %v8319
    %10058 = vmatpush.bf16.msra.mxu0 %v8303
    %10059 = vmatpush.bf16.msra.mxu0 %v8287
    %10060 = vmatpush.bf16.msra.mxu0 %v8271
    %10061 = vmatmul.bf16.gmra.mxu0 %v3493
    %v10062 = vpop.f32.mrf.mxu0
    %v10063 = vadd.f32 %v10050, %v10062
    %v10064 = vpop.f32.mrf.mxu0
    %10065 = vdwg.mxu0
    %10066 = vmatpush.bf16.msra.mxu0 %v8511
    %10067 = vmatpush.bf16.msra.mxu0 %v8495
    %10068 = vmatpush.bf16.msra.mxu0 %v8479
    %10069 = vmatpush.bf16.msra.mxu0 %v8463
    %10070 = vmatpush.bf16.msra.mxu0 %v8447
    %10071 = vmatpush.bf16.msra.mxu0 %v8431
    %10072 = vmatpush.bf16.msra.mxu0 %v8415
    %10073 = vmatpush.bf16.msra.mxu0 %v8399
    %10074 = vmatmul.bf16.gmra.mxu0 %v3494
    %v10075 = vpop.f32.mrf.mxu0
    %v10076 = vadd.f32 %v10063, %v10075
    %v10077 = vpop.f32.mrf.mxu0
    %10078 = vdwg.mxu0
    %10079 = vmatpush.bf16.msra.mxu0 %v8639
    %10080 = vmatpush.bf16.msra.mxu0 %v8623
    %10081 = vmatpush.bf16.msra.mxu0 %v8607
    %10082 = vmatpush.bf16.msra.mxu0 %v8591
    %10083 = vmatpush.bf16.msra.mxu0 %v8575
    %10084 = vmatpush.bf16.msra.mxu0 %v8559
    %10085 = vmatpush.bf16.msra.mxu0 %v8543
    %10086 = vmatpush.bf16.msra.mxu0 %v8527
    %10087 = vmatmul.bf16.gmra.mxu0 %v3495
    %v10088 = vpop.f32.mrf.mxu0
    %v10089 = vadd.f32 %v10076, %v10088
    %v10090 = vpop.f32.mrf.mxu0
    %10091 = vdwg.mxu0
    %10092 = vmatpush.bf16.msra.mxu0 %v7744
    %10093 = vmatpush.bf16.msra.mxu0 %v7728
    %10094 = vmatpush.bf16.msra.mxu0 %v7712
    %10095 = vmatpush.bf16.msra.mxu0 %v7696
    %10096 = vmatpush.bf16.msra.mxu0 %v7680
    %10097 = vmatpush.bf16.msra.mxu0 %v7664
    %10098 = vmatpush.bf16.msra.mxu0 %v7648
    %10099 = vmatpush.bf16.msra.mxu0 %v7632
    %10100 = vmatmul.bf16.gmra.mxu0 %v3488
    %v10101 = vpop.f32.mrf.mxu0
    %v10102 = vadd.f32 %v4528, %v10101
    %v10103 = vpop.f32.mrf.mxu0
    %10104 = vdwg.mxu0
    %10105 = vmatpush.bf16.msra.mxu0 %v7872
    %10106 = vmatpush.bf16.msra.mxu0 %v7856
    %10107 = vmatpush.bf16.msra.mxu0 %v7840
    %10108 = vmatpush.bf16.msra.mxu0 %v7824
    %10109 = vmatpush.bf16.msra.mxu0 %v7808
    %10110 = vmatpush.bf16.msra.mxu0 %v7792
    %10111 = vmatpush.bf16.msra.mxu0 %v7776
    %10112 = vmatpush.bf16.msra.mxu0 %v7760
    %10113 = vmatmul.bf16.gmra.mxu0 %v3489
    %v10114 = vpop.f32.mrf.mxu0
    %v10115 = vadd.f32 %v10102, %v10114
    %v10116 = vpop.f32.mrf.mxu0
    %10117 = vdwg.mxu0
    %10118 = vmatpush.bf16.msra.mxu0 %v8000
    %10119 = vmatpush.bf16.msra.mxu0 %v7984
    %10120 = vmatpush.bf16.msra.mxu0 %v7968
    %10121 = vmatpush.bf16.msra.mxu0 %v7952
    %10122 = vmatpush.bf16.msra.mxu0 %v7936
    %10123 = vmatpush.bf16.msra.mxu0 %v7920
    %10124 = vmatpush.bf16.msra.mxu0 %v7904
    %10125 = vmatpush.bf16.msra.mxu0 %v7888
    %10126 = vmatmul.bf16.gmra.mxu0 %v3490
    %v10127 = vpop.f32.mrf.mxu0
    %v10128 = vadd.f32 %v10115, %v10127
    %v10129 = vpop.f32.mrf.mxu0
    %10130 = vdwg.mxu0
    %10131 = vmatpush.bf16.msra.mxu0 %v8128
    %10132 = vmatpush.bf16.msra.mxu0 %v8112
    %10133 = vmatpush.bf16.msra.mxu0 %v8096
    %10134 = vmatpush.bf16.msra.mxu0 %v8080
    %10135 = vmatpush.bf16.msra.mxu0 %v8064
    %10136 = vmatpush.bf16.msra.mxu0 %v8048
    %10137 = vmatpush.bf16.msra.mxu0 %v8032
    %10138 = vmatpush.bf16.msra.mxu0 %v8016
    %10139 = vmatmul.bf16.gmra.mxu0 %v3491
    %v10140 = vpop.f32.mrf.mxu0
    %v10141 = vadd.f32 %v10128, %v10140
    %v10142 = vpop.f32.mrf.mxu0
    %10143 = vdwg.mxu0
    %10144 = vmatpush.bf16.msra.mxu0 %v8256
    %10145 = vmatpush.bf16.msra.mxu0 %v8240
    %10146 = vmatpush.bf16.msra.mxu0 %v8224
    %10147 = vmatpush.bf16.msra.mxu0 %v8208
    %10148 = vmatpush.bf16.msra.mxu0 %v8192
    %10149 = vmatpush.bf16.msra.mxu0 %v8176
    %10150 = vmatpush.bf16.msra.mxu0 %v8160
    %10151 = vmatpush.bf16.msra.mxu0 %v8144
    %10152 = vmatmul.bf16.gmra.mxu0 %v3492
    %v10153 = vpop.f32.mrf.mxu0
    %v10154 = vadd.f32 %v10141, %v10153
    %v10155 = vpop.f32.mrf.mxu0
    %10156 = vdwg.mxu0
    %10157 = vmatpush.bf16.msra.mxu0 %v8384
    %10158 = vmatpush.bf16.msra.mxu0 %v8368
    %10159 = vmatpush.bf16.msra.mxu0 %v8352
    %10160 = vmatpush.bf16.msra.mxu0 %v8336
    %10161 = vmatpush.bf16.msra.mxu0 %v8320
    %10162 = vmatpush.bf16.msra.mxu0 %v8304
    %10163 = vmatpush.bf16.msra.mxu0 %v8288
    %10164 = vmatpush.bf16.msra.mxu0 %v8272
    %10165 = vmatmul.bf16.gmra.mxu0 %v3493
    %v10166 = vpop.f32.mrf.mxu0
    %v10167 = vadd.f32 %v10154, %v10166
    %v10168 = vpop.f32.mrf.mxu0
    %10169 = vdwg.mxu0
    %10170 = vmatpush.bf16.msra.mxu0 %v8512
    %10171 = vmatpush.bf16.msra.mxu0 %v8496
    %10172 = vmatpush.bf16.msra.mxu0 %v8480
    %10173 = vmatpush.bf16.msra.mxu0 %v8464
    %10174 = vmatpush.bf16.msra.mxu0 %v8448
    %10175 = vmatpush.bf16.msra.mxu0 %v8432
    %10176 = vmatpush.bf16.msra.mxu0 %v8416
    %10177 = vmatpush.bf16.msra.mxu0 %v8400
    %10178 = vmatmul.bf16.gmra.mxu0 %v3494
    %v10179 = vpop.f32.mrf.mxu0
    %v10180 = vadd.f32 %v10167, %v10179
    %v10181 = vpop.f32.mrf.mxu0
    %10182 = vdwg.mxu0
    %10183 = vmatpush.bf16.msra.mxu0 %v8640
    %10184 = vmatpush.bf16.msra.mxu0 %v8624
    %10185 = vmatpush.bf16.msra.mxu0 %v8608
    %10186 = vmatpush.bf16.msra.mxu0 %v8592
    %10187 = vmatpush.bf16.msra.mxu0 %v8576
    %10188 = vmatpush.bf16.msra.mxu0 %v8560
    %10189 = vmatpush.bf16.msra.mxu0 %v8544
    %10190 = vmatpush.bf16.msra.mxu0 %v8528
    %10191 = vmatmul.bf16.gmra.mxu0 %v3495
    %v10192 = vpop.f32.mrf.mxu0
    %v10193 = vadd.f32 %v10180, %v10192
    %v10194 = vpop.f32.mrf.mxu0
    %10195 = vdwg.mxu0
    %10196 = vmatpush.bf16.msra.mxu0 %v7745
    %10197 = vmatpush.bf16.msra.mxu0 %v7729
    %10198 = vmatpush.bf16.msra.mxu0 %v7713
    %10199 = vmatpush.bf16.msra.mxu0 %v7697
    %10200 = vmatpush.bf16.msra.mxu0 %v7681
    %10201 = vmatpush.bf16.msra.mxu0 %v7665
    %10202 = vmatpush.bf16.msra.mxu0 %v7649
    %10203 = vmatpush.bf16.msra.mxu0 %v7633
    %10204 = vmatmul.bf16.gmra.mxu0 %v3488
    %v10205 = vpop.f32.mrf.mxu0
    %v10206 = vadd.f32 %v4529, %v10205
    %v10207 = vpop.f32.mrf.mxu0
    %10208 = vdwg.mxu0
    %10209 = vmatpush.bf16.msra.mxu0 %v7873
    %10210 = vmatpush.bf16.msra.mxu0 %v7857
    %10211 = vmatpush.bf16.msra.mxu0 %v7841
    %10212 = vmatpush.bf16.msra.mxu0 %v7825
    %10213 = vmatpush.bf16.msra.mxu0 %v7809
    %10214 = vmatpush.bf16.msra.mxu0 %v7793
    %10215 = vmatpush.bf16.msra.mxu0 %v7777
    %10216 = vmatpush.bf16.msra.mxu0 %v7761
    %10217 = vmatmul.bf16.gmra.mxu0 %v3489
    %v10218 = vpop.f32.mrf.mxu0
    %v10219 = vadd.f32 %v10206, %v10218
    %v10220 = vpop.f32.mrf.mxu0
    %10221 = vdwg.mxu0
    %10222 = vmatpush.bf16.msra.mxu0 %v8001
    %10223 = vmatpush.bf16.msra.mxu0 %v7985
    %10224 = vmatpush.bf16.msra.mxu0 %v7969
    %10225 = vmatpush.bf16.msra.mxu0 %v7953
    %10226 = vmatpush.bf16.msra.mxu0 %v7937
    %10227 = vmatpush.bf16.msra.mxu0 %v7921
    %10228 = vmatpush.bf16.msra.mxu0 %v7905
    %10229 = vmatpush.bf16.msra.mxu0 %v7889
    %10230 = vmatmul.bf16.gmra.mxu0 %v3490
    %v10231 = vpop.f32.mrf.mxu0
    %v10232 = vadd.f32 %v10219, %v10231
    %v10233 = vpop.f32.mrf.mxu0
    %10234 = vdwg.mxu0
    %10235 = vmatpush.bf16.msra.mxu0 %v8129
    %10236 = vmatpush.bf16.msra.mxu0 %v8113
    %10237 = vmatpush.bf16.msra.mxu0 %v8097
    %10238 = vmatpush.bf16.msra.mxu0 %v8081
    %10239 = vmatpush.bf16.msra.mxu0 %v8065
    %10240 = vmatpush.bf16.msra.mxu0 %v8049
    %10241 = vmatpush.bf16.msra.mxu0 %v8033
    %10242 = vmatpush.bf16.msra.mxu0 %v8017
    %10243 = vmatmul.bf16.gmra.mxu0 %v3491
    %v10244 = vpop.f32.mrf.mxu0
    %v10245 = vadd.f32 %v10232, %v10244
    %v10246 = vpop.f32.mrf.mxu0
    %10247 = vdwg.mxu0
    %10248 = vmatpush.bf16.msra.mxu0 %v8257
    %10249 = vmatpush.bf16.msra.mxu0 %v8241
    %10250 = vmatpush.bf16.msra.mxu0 %v8225
    %10251 = vmatpush.bf16.msra.mxu0 %v8209
    %10252 = vmatpush.bf16.msra.mxu0 %v8193
    %10253 = vmatpush.bf16.msra.mxu0 %v8177
    %10254 = vmatpush.bf16.msra.mxu0 %v8161
    %10255 = vmatpush.bf16.msra.mxu0 %v8145
    %10256 = vmatmul.bf16.gmra.mxu0 %v3492
    %v10257 = vpop.f32.mrf.mxu0
    %v10258 = vadd.f32 %v10245, %v10257
    %v10259 = vpop.f32.mrf.mxu0
    %10260 = vdwg.mxu0
    %10261 = vmatpush.bf16.msra.mxu0 %v8385
    %10262 = vmatpush.bf16.msra.mxu0 %v8369
    %10263 = vmatpush.bf16.msra.mxu0 %v8353
    %10264 = vmatpush.bf16.msra.mxu0 %v8337
    %10265 = vmatpush.bf16.msra.mxu0 %v8321
    %10266 = vmatpush.bf16.msra.mxu0 %v8305
    %10267 = vmatpush.bf16.msra.mxu0 %v8289
    %10268 = vmatpush.bf16.msra.mxu0 %v8273
    %10269 = vmatmul.bf16.gmra.mxu0 %v3493
    %v10270 = vpop.f32.mrf.mxu0
    %v10271 = vadd.f32 %v10258, %v10270
    %v10272 = vpop.f32.mrf.mxu0
    %10273 = vdwg.mxu0
    %10274 = vmatpush.bf16.msra.mxu0 %v8513
    %10275 = vmatpush.bf16.msra.mxu0 %v8497
    %10276 = vmatpush.bf16.msra.mxu0 %v8481
    %10277 = vmatpush.bf16.msra.mxu0 %v8465
    %10278 = vmatpush.bf16.msra.mxu0 %v8449
    %10279 = vmatpush.bf16.msra.mxu0 %v8433
    %10280 = vmatpush.bf16.msra.mxu0 %v8417
    %10281 = vmatpush.bf16.msra.mxu0 %v8401
    %10282 = vmatmul.bf16.gmra.mxu0 %v3494
    %v10283 = vpop.f32.mrf.mxu0
    %v10284 = vadd.f32 %v10271, %v10283
    %v10285 = vpop.f32.mrf.mxu0
    %10286 = vdwg.mxu0
    %10287 = vmatpush.bf16.msra.mxu0 %v8641
    %10288 = vmatpush.bf16.msra.mxu0 %v8625
    %10289 = vmatpush.bf16.msra.mxu0 %v8609
    %10290 = vmatpush.bf16.msra.mxu0 %v8593
    %10291 = vmatpush.bf16.msra.mxu0 %v8577
    %10292 = vmatpush.bf16.msra.mxu0 %v8561
    %10293 = vmatpush.bf16.msra.mxu0 %v8545
    %10294 = vmatpush.bf16.msra.mxu0 %v8529
    %10295 = vmatmul.bf16.gmra.mxu0 %v3495
    %v10296 = vpop.f32.mrf.mxu0
    %v10297 = vadd.f32 %v10284, %v10296
    %v10298 = vpop.f32.mrf.mxu0
    %10299 = vdwg.mxu0
    %10300 = vmatpush.bf16.msra.mxu0 %v7746
    %10301 = vmatpush.bf16.msra.mxu0 %v7730
    %10302 = vmatpush.bf16.msra.mxu0 %v7714
    %10303 = vmatpush.bf16.msra.mxu0 %v7698
    %10304 = vmatpush.bf16.msra.mxu0 %v7682
    %10305 = vmatpush.bf16.msra.mxu0 %v7666
    %10306 = vmatpush.bf16.msra.mxu0 %v7650
    %10307 = vmatpush.bf16.msra.mxu0 %v7634
    %10308 = vmatmul.bf16.gmra.mxu0 %v3488
    %v10309 = vpop.f32.mrf.mxu0
    %v10310 = vadd.f32 %v4530, %v10309
    %v10311 = vpop.f32.mrf.mxu0
    %10312 = vdwg.mxu0
    %10313 = vmatpush.bf16.msra.mxu0 %v7874
    %10314 = vmatpush.bf16.msra.mxu0 %v7858
    %10315 = vmatpush.bf16.msra.mxu0 %v7842
    %10316 = vmatpush.bf16.msra.mxu0 %v7826
    %10317 = vmatpush.bf16.msra.mxu0 %v7810
    %10318 = vmatpush.bf16.msra.mxu0 %v7794
    %10319 = vmatpush.bf16.msra.mxu0 %v7778
    %10320 = vmatpush.bf16.msra.mxu0 %v7762
    %10321 = vmatmul.bf16.gmra.mxu0 %v3489
    %v10322 = vpop.f32.mrf.mxu0
    %v10323 = vadd.f32 %v10310, %v10322
    %v10324 = vpop.f32.mrf.mxu0
    %10325 = vdwg.mxu0
    %10326 = vmatpush.bf16.msra.mxu0 %v8002
    %10327 = vmatpush.bf16.msra.mxu0 %v7986
    %10328 = vmatpush.bf16.msra.mxu0 %v7970
    %10329 = vmatpush.bf16.msra.mxu0 %v7954
    %10330 = vmatpush.bf16.msra.mxu0 %v7938
    %10331 = vmatpush.bf16.msra.mxu0 %v7922
    %10332 = vmatpush.bf16.msra.mxu0 %v7906
    %10333 = vmatpush.bf16.msra.mxu0 %v7890
    %10334 = vmatmul.bf16.gmra.mxu0 %v3490
    %v10335 = vpop.f32.mrf.mxu0
    %v10336 = vadd.f32 %v10323, %v10335
    %v10337 = vpop.f32.mrf.mxu0
    %10338 = vdwg.mxu0
    %10339 = vmatpush.bf16.msra.mxu0 %v8130
    %10340 = vmatpush.bf16.msra.mxu0 %v8114
    %10341 = vmatpush.bf16.msra.mxu0 %v8098
    %10342 = vmatpush.bf16.msra.mxu0 %v8082
    %10343 = vmatpush.bf16.msra.mxu0 %v8066
    %10344 = vmatpush.bf16.msra.mxu0 %v8050
    %10345 = vmatpush.bf16.msra.mxu0 %v8034
    %10346 = vmatpush.bf16.msra.mxu0 %v8018
    %10347 = vmatmul.bf16.gmra.mxu0 %v3491
    %v10348 = vpop.f32.mrf.mxu0
    %v10349 = vadd.f32 %v10336, %v10348
    %v10350 = vpop.f32.mrf.mxu0
    %10351 = vdwg.mxu0
    %10352 = vmatpush.bf16.msra.mxu0 %v8258
    %10353 = vmatpush.bf16.msra.mxu0 %v8242
    %10354 = vmatpush.bf16.msra.mxu0 %v8226
    %10355 = vmatpush.bf16.msra.mxu0 %v8210
    %10356 = vmatpush.bf16.msra.mxu0 %v8194
    %10357 = vmatpush.bf16.msra.mxu0 %v8178
    %10358 = vmatpush.bf16.msra.mxu0 %v8162
    %10359 = vmatpush.bf16.msra.mxu0 %v8146
    %10360 = vmatmul.bf16.gmra.mxu0 %v3492
    %v10361 = vpop.f32.mrf.mxu0
    %v10362 = vadd.f32 %v10349, %v10361
    %v10363 = vpop.f32.mrf.mxu0
    %10364 = vdwg.mxu0
    %10365 = vmatpush.bf16.msra.mxu0 %v8386
    %10366 = vmatpush.bf16.msra.mxu0 %v8370
    %10367 = vmatpush.bf16.msra.mxu0 %v8354
    %10368 = vmatpush.bf16.msra.mxu0 %v8338
    %10369 = vmatpush.bf16.msra.mxu0 %v8322
    %10370 = vmatpush.bf16.msra.mxu0 %v8306
    %10371 = vmatpush.bf16.msra.mxu0 %v8290
    %10372 = vmatpush.bf16.msra.mxu0 %v8274
    %10373 = vmatmul.bf16.gmra.mxu0 %v3493
    %v10374 = vpop.f32.mrf.mxu0
    %v10375 = vadd.f32 %v10362, %v10374
    %v10376 = vpop.f32.mrf.mxu0
    %10377 = vdwg.mxu0
    %10378 = vmatpush.bf16.msra.mxu0 %v8514
    %10379 = vmatpush.bf16.msra.mxu0 %v8498
    %10380 = vmatpush.bf16.msra.mxu0 %v8482
    %10381 = vmatpush.bf16.msra.mxu0 %v8466
    %10382 = vmatpush.bf16.msra.mxu0 %v8450
    %10383 = vmatpush.bf16.msra.mxu0 %v8434
    %10384 = vmatpush.bf16.msra.mxu0 %v8418
    %10385 = vmatpush.bf16.msra.mxu0 %v8402
    %10386 = vmatmul.bf16.gmra.mxu0 %v3494
    %v10387 = vpop.f32.mrf.mxu0
    %v10388 = vadd.f32 %v10375, %v10387
    %v10389 = vpop.f32.mrf.mxu0
    %10390 = vdwg.mxu0
    %10391 = vmatpush.bf16.msra.mxu0 %v8642
    %10392 = vmatpush.bf16.msra.mxu0 %v8626
    %10393 = vmatpush.bf16.msra.mxu0 %v8610
    %10394 = vmatpush.bf16.msra.mxu0 %v8594
    %10395 = vmatpush.bf16.msra.mxu0 %v8578
    %10396 = vmatpush.bf16.msra.mxu0 %v8562
    %10397 = vmatpush.bf16.msra.mxu0 %v8546
    %10398 = vmatpush.bf16.msra.mxu0 %v8530
    %10399 = vmatmul.bf16.gmra.mxu0 %v3495
    %v10400 = vpop.f32.mrf.mxu0
    %v10401 = vadd.f32 %v10388, %v10400
    %v10402 = vpop.f32.mrf.mxu0
    %10403 = vdwg.mxu0
    %10404 = vmatpush.bf16.msra.mxu0 %v7747
    %10405 = vmatpush.bf16.msra.mxu0 %v7731
    %10406 = vmatpush.bf16.msra.mxu0 %v7715
    %10407 = vmatpush.bf16.msra.mxu0 %v7699
    %10408 = vmatpush.bf16.msra.mxu0 %v7683
    %10409 = vmatpush.bf16.msra.mxu0 %v7667
    %10410 = vmatpush.bf16.msra.mxu0 %v7651
    %10411 = vmatpush.bf16.msra.mxu0 %v7635
    %10412 = vmatmul.bf16.gmra.mxu0 %v3488
    %v10413 = vpop.f32.mrf.mxu0
    %v10414 = vadd.f32 %v4531, %v10413
    %v10415 = vpop.f32.mrf.mxu0
    %10416 = vdwg.mxu0
    %10417 = vmatpush.bf16.msra.mxu0 %v7875
    %10418 = vmatpush.bf16.msra.mxu0 %v7859
    %10419 = vmatpush.bf16.msra.mxu0 %v7843
    %10420 = vmatpush.bf16.msra.mxu0 %v7827
    %10421 = vmatpush.bf16.msra.mxu0 %v7811
    %10422 = vmatpush.bf16.msra.mxu0 %v7795
    %10423 = vmatpush.bf16.msra.mxu0 %v7779
    %10424 = vmatpush.bf16.msra.mxu0 %v7763
    %10425 = vmatmul.bf16.gmra.mxu0 %v3489
    %v10426 = vpop.f32.mrf.mxu0
    %v10427 = vadd.f32 %v10414, %v10426
    %v10428 = vpop.f32.mrf.mxu0
    %10429 = vdwg.mxu0
    %10430 = vmatpush.bf16.msra.mxu0 %v8003
    %10431 = vmatpush.bf16.msra.mxu0 %v7987
    %10432 = vmatpush.bf16.msra.mxu0 %v7971
    %10433 = vmatpush.bf16.msra.mxu0 %v7955
    %10434 = vmatpush.bf16.msra.mxu0 %v7939
    %10435 = vmatpush.bf16.msra.mxu0 %v7923
    %10436 = vmatpush.bf16.msra.mxu0 %v7907
    %10437 = vmatpush.bf16.msra.mxu0 %v7891
    %10438 = vmatmul.bf16.gmra.mxu0 %v3490
    %v10439 = vpop.f32.mrf.mxu0
    %v10440 = vadd.f32 %v10427, %v10439
    %v10441 = vpop.f32.mrf.mxu0
    %10442 = vdwg.mxu0
    %10443 = vmatpush.bf16.msra.mxu0 %v8131
    %10444 = vmatpush.bf16.msra.mxu0 %v8115
    %10445 = vmatpush.bf16.msra.mxu0 %v8099
    %10446 = vmatpush.bf16.msra.mxu0 %v8083
    %10447 = vmatpush.bf16.msra.mxu0 %v8067
    %10448 = vmatpush.bf16.msra.mxu0 %v8051
    %10449 = vmatpush.bf16.msra.mxu0 %v8035
    %10450 = vmatpush.bf16.msra.mxu0 %v8019
    %10451 = vmatmul.bf16.gmra.mxu0 %v3491
    %v10452 = vpop.f32.mrf.mxu0
    %v10453 = vadd.f32 %v10440, %v10452
    %v10454 = vpop.f32.mrf.mxu0
    %10455 = vdwg.mxu0
    %10456 = vmatpush.bf16.msra.mxu0 %v8259
    %10457 = vmatpush.bf16.msra.mxu0 %v8243
    %10458 = vmatpush.bf16.msra.mxu0 %v8227
    %10459 = vmatpush.bf16.msra.mxu0 %v8211
    %10460 = vmatpush.bf16.msra.mxu0 %v8195
    %10461 = vmatpush.bf16.msra.mxu0 %v8179
    %10462 = vmatpush.bf16.msra.mxu0 %v8163
    %10463 = vmatpush.bf16.msra.mxu0 %v8147
    %10464 = vmatmul.bf16.gmra.mxu0 %v3492
    %v10465 = vpop.f32.mrf.mxu0
    %v10466 = vadd.f32 %v10453, %v10465
    %v10467 = vpop.f32.mrf.mxu0
    %10468 = vdwg.mxu0
    %10469 = vmatpush.bf16.msra.mxu0 %v8387
    %10470 = vmatpush.bf16.msra.mxu0 %v8371
    %10471 = vmatpush.bf16.msra.mxu0 %v8355
    %10472 = vmatpush.bf16.msra.mxu0 %v8339
    %10473 = vmatpush.bf16.msra.mxu0 %v8323
    %10474 = vmatpush.bf16.msra.mxu0 %v8307
    %10475 = vmatpush.bf16.msra.mxu0 %v8291
    %10476 = vmatpush.bf16.msra.mxu0 %v8275
    %10477 = vmatmul.bf16.gmra.mxu0 %v3493
    %v10478 = vpop.f32.mrf.mxu0
    %v10479 = vadd.f32 %v10466, %v10478
    %v10480 = vpop.f32.mrf.mxu0
    %10481 = vdwg.mxu0
    %10482 = vmatpush.bf16.msra.mxu0 %v8515
    %10483 = vmatpush.bf16.msra.mxu0 %v8499
    %10484 = vmatpush.bf16.msra.mxu0 %v8483
    %10485 = vmatpush.bf16.msra.mxu0 %v8467
    %10486 = vmatpush.bf16.msra.mxu0 %v8451
    %10487 = vmatpush.bf16.msra.mxu0 %v8435
    %10488 = vmatpush.bf16.msra.mxu0 %v8419
    %10489 = vmatpush.bf16.msra.mxu0 %v8403
    %10490 = vmatmul.bf16.gmra.mxu0 %v3494
    %v10491 = vpop.f32.mrf.mxu0
    %v10492 = vadd.f32 %v10479, %v10491
    %v10493 = vpop.f32.mrf.mxu0
    %10494 = vdwg.mxu0
    %10495 = vmatpush.bf16.msra.mxu0 %v8643
    %10496 = vmatpush.bf16.msra.mxu0 %v8627
    %10497 = vmatpush.bf16.msra.mxu0 %v8611
    %10498 = vmatpush.bf16.msra.mxu0 %v8595
    %10499 = vmatpush.bf16.msra.mxu0 %v8579
    %10500 = vmatpush.bf16.msra.mxu0 %v8563
    %10501 = vmatpush.bf16.msra.mxu0 %v8547
    %10502 = vmatpush.bf16.msra.mxu0 %v8531
    %10503 = vmatmul.bf16.gmra.mxu0 %v3495
    %v10504 = vpop.f32.mrf.mxu0
    %v10505 = vadd.f32 %v10492, %v10504
    %v10506 = vpop.f32.mrf.mxu0
    %10507 = vdwg.mxu0
    %10508 = vmatpush.bf16.msra.mxu0 %v7748
    %10509 = vmatpush.bf16.msra.mxu0 %v7732
    %10510 = vmatpush.bf16.msra.mxu0 %v7716
    %10511 = vmatpush.bf16.msra.mxu0 %v7700
    %10512 = vmatpush.bf16.msra.mxu0 %v7684
    %10513 = vmatpush.bf16.msra.mxu0 %v7668
    %10514 = vmatpush.bf16.msra.mxu0 %v7652
    %10515 = vmatpush.bf16.msra.mxu0 %v7636
    %10516 = vmatmul.bf16.gmra.mxu0 %v3488
    %v10517 = vpop.f32.mrf.mxu0
    %v10518 = vadd.f32 %v4532, %v10517
    %v10519 = vpop.f32.mrf.mxu0
    %10520 = vdwg.mxu0
    %10521 = vmatpush.bf16.msra.mxu0 %v7876
    %10522 = vmatpush.bf16.msra.mxu0 %v7860
    %10523 = vmatpush.bf16.msra.mxu0 %v7844
    %10524 = vmatpush.bf16.msra.mxu0 %v7828
    %10525 = vmatpush.bf16.msra.mxu0 %v7812
    %10526 = vmatpush.bf16.msra.mxu0 %v7796
    %10527 = vmatpush.bf16.msra.mxu0 %v7780
    %10528 = vmatpush.bf16.msra.mxu0 %v7764
    %10529 = vmatmul.bf16.gmra.mxu0 %v3489
    %v10530 = vpop.f32.mrf.mxu0
    %v10531 = vadd.f32 %v10518, %v10530
    %v10532 = vpop.f32.mrf.mxu0
    %10533 = vdwg.mxu0
    %10534 = vmatpush.bf16.msra.mxu0 %v8004
    %10535 = vmatpush.bf16.msra.mxu0 %v7988
    %10536 = vmatpush.bf16.msra.mxu0 %v7972
    %10537 = vmatpush.bf16.msra.mxu0 %v7956
    %10538 = vmatpush.bf16.msra.mxu0 %v7940
    %10539 = vmatpush.bf16.msra.mxu0 %v7924
    %10540 = vmatpush.bf16.msra.mxu0 %v7908
    %10541 = vmatpush.bf16.msra.mxu0 %v7892
    %10542 = vmatmul.bf16.gmra.mxu0 %v3490
    %v10543 = vpop.f32.mrf.mxu0
    %v10544 = vadd.f32 %v10531, %v10543
    %v10545 = vpop.f32.mrf.mxu0
    %10546 = vdwg.mxu0
    %10547 = vmatpush.bf16.msra.mxu0 %v8132
    %10548 = vmatpush.bf16.msra.mxu0 %v8116
    %10549 = vmatpush.bf16.msra.mxu0 %v8100
    %10550 = vmatpush.bf16.msra.mxu0 %v8084
    %10551 = vmatpush.bf16.msra.mxu0 %v8068
    %10552 = vmatpush.bf16.msra.mxu0 %v8052
    %10553 = vmatpush.bf16.msra.mxu0 %v8036
    %10554 = vmatpush.bf16.msra.mxu0 %v8020
    %10555 = vmatmul.bf16.gmra.mxu0 %v3491
    %v10556 = vpop.f32.mrf.mxu0
    %v10557 = vadd.f32 %v10544, %v10556
    %v10558 = vpop.f32.mrf.mxu0
    %10559 = vdwg.mxu0
    %10560 = vmatpush.bf16.msra.mxu0 %v8260
    %10561 = vmatpush.bf16.msra.mxu0 %v8244
    %10562 = vmatpush.bf16.msra.mxu0 %v8228
    %10563 = vmatpush.bf16.msra.mxu0 %v8212
    %10564 = vmatpush.bf16.msra.mxu0 %v8196
    %10565 = vmatpush.bf16.msra.mxu0 %v8180
    %10566 = vmatpush.bf16.msra.mxu0 %v8164
    %10567 = vmatpush.bf16.msra.mxu0 %v8148
    %10568 = vmatmul.bf16.gmra.mxu0 %v3492
    %v10569 = vpop.f32.mrf.mxu0
    %v10570 = vadd.f32 %v10557, %v10569
    %v10571 = vpop.f32.mrf.mxu0
    %10572 = vdwg.mxu0
    %10573 = vmatpush.bf16.msra.mxu0 %v8388
    %10574 = vmatpush.bf16.msra.mxu0 %v8372
    %10575 = vmatpush.bf16.msra.mxu0 %v8356
    %10576 = vmatpush.bf16.msra.mxu0 %v8340
    %10577 = vmatpush.bf16.msra.mxu0 %v8324
    %10578 = vmatpush.bf16.msra.mxu0 %v8308
    %10579 = vmatpush.bf16.msra.mxu0 %v8292
    %10580 = vmatpush.bf16.msra.mxu0 %v8276
    %10581 = vmatmul.bf16.gmra.mxu0 %v3493
    %v10582 = vpop.f32.mrf.mxu0
    %v10583 = vadd.f32 %v10570, %v10582
    %v10584 = vpop.f32.mrf.mxu0
    %10585 = vdwg.mxu0
    %10586 = vmatpush.bf16.msra.mxu0 %v8516
    %10587 = vmatpush.bf16.msra.mxu0 %v8500
    %10588 = vmatpush.bf16.msra.mxu0 %v8484
    %10589 = vmatpush.bf16.msra.mxu0 %v8468
    %10590 = vmatpush.bf16.msra.mxu0 %v8452
    %10591 = vmatpush.bf16.msra.mxu0 %v8436
    %10592 = vmatpush.bf16.msra.mxu0 %v8420
    %10593 = vmatpush.bf16.msra.mxu0 %v8404
    %10594 = vmatmul.bf16.gmra.mxu0 %v3494
    %v10595 = vpop.f32.mrf.mxu0
    %v10596 = vadd.f32 %v10583, %v10595
    %v10597 = vpop.f32.mrf.mxu0
    %10598 = vdwg.mxu0
    %10599 = vmatpush.bf16.msra.mxu0 %v8644
    %10600 = vmatpush.bf16.msra.mxu0 %v8628
    %10601 = vmatpush.bf16.msra.mxu0 %v8612
    %10602 = vmatpush.bf16.msra.mxu0 %v8596
    %10603 = vmatpush.bf16.msra.mxu0 %v8580
    %10604 = vmatpush.bf16.msra.mxu0 %v8564
    %10605 = vmatpush.bf16.msra.mxu0 %v8548
    %10606 = vmatpush.bf16.msra.mxu0 %v8532
    %10607 = vmatmul.bf16.gmra.mxu0 %v3495
    %v10608 = vpop.f32.mrf.mxu0
    %v10609 = vadd.f32 %v10596, %v10608
    %v10610 = vpop.f32.mrf.mxu0
    %10611 = vdwg.mxu0
    %10612 = vmatpush.bf16.msra.mxu0 %v7749
    %10613 = vmatpush.bf16.msra.mxu0 %v7733
    %10614 = vmatpush.bf16.msra.mxu0 %v7717
    %10615 = vmatpush.bf16.msra.mxu0 %v7701
    %10616 = vmatpush.bf16.msra.mxu0 %v7685
    %10617 = vmatpush.bf16.msra.mxu0 %v7669
    %10618 = vmatpush.bf16.msra.mxu0 %v7653
    %10619 = vmatpush.bf16.msra.mxu0 %v7637
    %10620 = vmatmul.bf16.gmra.mxu0 %v3488
    %v10621 = vpop.f32.mrf.mxu0
    %v10622 = vadd.f32 %v4533, %v10621
    %v10623 = vpop.f32.mrf.mxu0
    %10624 = vdwg.mxu0
    %10625 = vmatpush.bf16.msra.mxu0 %v7877
    %10626 = vmatpush.bf16.msra.mxu0 %v7861
    %10627 = vmatpush.bf16.msra.mxu0 %v7845
    %10628 = vmatpush.bf16.msra.mxu0 %v7829
    %10629 = vmatpush.bf16.msra.mxu0 %v7813
    %10630 = vmatpush.bf16.msra.mxu0 %v7797
    %10631 = vmatpush.bf16.msra.mxu0 %v7781
    %10632 = vmatpush.bf16.msra.mxu0 %v7765
    %10633 = vmatmul.bf16.gmra.mxu0 %v3489
    %v10634 = vpop.f32.mrf.mxu0
    %v10635 = vadd.f32 %v10622, %v10634
    %v10636 = vpop.f32.mrf.mxu0
    %10637 = vdwg.mxu0
    %10638 = vmatpush.bf16.msra.mxu0 %v8005
    %10639 = vmatpush.bf16.msra.mxu0 %v7989
    %10640 = vmatpush.bf16.msra.mxu0 %v7973
    %10641 = vmatpush.bf16.msra.mxu0 %v7957
    %10642 = vmatpush.bf16.msra.mxu0 %v7941
    %10643 = vmatpush.bf16.msra.mxu0 %v7925
    %10644 = vmatpush.bf16.msra.mxu0 %v7909
    %10645 = vmatpush.bf16.msra.mxu0 %v7893
    %10646 = vmatmul.bf16.gmra.mxu0 %v3490
    %v10647 = vpop.f32.mrf.mxu0
    %v10648 = vadd.f32 %v10635, %v10647
    %v10649 = vpop.f32.mrf.mxu0
    %10650 = vdwg.mxu0
    %10651 = vmatpush.bf16.msra.mxu0 %v8133
    %10652 = vmatpush.bf16.msra.mxu0 %v8117
    %10653 = vmatpush.bf16.msra.mxu0 %v8101
    %10654 = vmatpush.bf16.msra.mxu0 %v8085
    %10655 = vmatpush.bf16.msra.mxu0 %v8069
    %10656 = vmatpush.bf16.msra.mxu0 %v8053
    %10657 = vmatpush.bf16.msra.mxu0 %v8037
    %10658 = vmatpush.bf16.msra.mxu0 %v8021
    %10659 = vmatmul.bf16.gmra.mxu0 %v3491
    %v10660 = vpop.f32.mrf.mxu0
    %v10661 = vadd.f32 %v10648, %v10660
    %v10662 = vpop.f32.mrf.mxu0
    %10663 = vdwg.mxu0
    %10664 = vmatpush.bf16.msra.mxu0 %v8261
    %10665 = vmatpush.bf16.msra.mxu0 %v8245
    %10666 = vmatpush.bf16.msra.mxu0 %v8229
    %10667 = vmatpush.bf16.msra.mxu0 %v8213
    %10668 = vmatpush.bf16.msra.mxu0 %v8197
    %10669 = vmatpush.bf16.msra.mxu0 %v8181
    %10670 = vmatpush.bf16.msra.mxu0 %v8165
    %10671 = vmatpush.bf16.msra.mxu0 %v8149
    %10672 = vmatmul.bf16.gmra.mxu0 %v3492
    %v10673 = vpop.f32.mrf.mxu0
    %v10674 = vadd.f32 %v10661, %v10673
    %v10675 = vpop.f32.mrf.mxu0
    %10676 = vdwg.mxu0
    %10677 = vmatpush.bf16.msra.mxu0 %v8389
    %10678 = vmatpush.bf16.msra.mxu0 %v8373
    %10679 = vmatpush.bf16.msra.mxu0 %v8357
    %10680 = vmatpush.bf16.msra.mxu0 %v8341
    %10681 = vmatpush.bf16.msra.mxu0 %v8325
    %10682 = vmatpush.bf16.msra.mxu0 %v8309
    %10683 = vmatpush.bf16.msra.mxu0 %v8293
    %10684 = vmatpush.bf16.msra.mxu0 %v8277
    %10685 = vmatmul.bf16.gmra.mxu0 %v3493
    %v10686 = vpop.f32.mrf.mxu0
    %v10687 = vadd.f32 %v10674, %v10686
    %v10688 = vpop.f32.mrf.mxu0
    %10689 = vdwg.mxu0
    %10690 = vmatpush.bf16.msra.mxu0 %v8517
    %10691 = vmatpush.bf16.msra.mxu0 %v8501
    %10692 = vmatpush.bf16.msra.mxu0 %v8485
    %10693 = vmatpush.bf16.msra.mxu0 %v8469
    %10694 = vmatpush.bf16.msra.mxu0 %v8453
    %10695 = vmatpush.bf16.msra.mxu0 %v8437
    %10696 = vmatpush.bf16.msra.mxu0 %v8421
    %10697 = vmatpush.bf16.msra.mxu0 %v8405
    %10698 = vmatmul.bf16.gmra.mxu0 %v3494
    %v10699 = vpop.f32.mrf.mxu0
    %v10700 = vadd.f32 %v10687, %v10699
    %v10701 = vpop.f32.mrf.mxu0
    %10702 = vdwg.mxu0
    %10703 = vmatpush.bf16.msra.mxu0 %v8645
    %10704 = vmatpush.bf16.msra.mxu0 %v8629
    %10705 = vmatpush.bf16.msra.mxu0 %v8613
    %10706 = vmatpush.bf16.msra.mxu0 %v8597
    %10707 = vmatpush.bf16.msra.mxu0 %v8581
    %10708 = vmatpush.bf16.msra.mxu0 %v8565
    %10709 = vmatpush.bf16.msra.mxu0 %v8549
    %10710 = vmatpush.bf16.msra.mxu0 %v8533
    %10711 = vmatmul.bf16.gmra.mxu0 %v3495
    %v10712 = vpop.f32.mrf.mxu0
    %v10713 = vadd.f32 %v10700, %v10712
    %v10714 = vpop.f32.mrf.mxu0
    %10715 = vdwg.mxu0
    %10716 = vmatpush.bf16.msra.mxu0 %v7750
    %10717 = vmatpush.bf16.msra.mxu0 %v7734
    %10718 = vmatpush.bf16.msra.mxu0 %v7718
    %10719 = vmatpush.bf16.msra.mxu0 %v7702
    %10720 = vmatpush.bf16.msra.mxu0 %v7686
    %10721 = vmatpush.bf16.msra.mxu0 %v7670
    %10722 = vmatpush.bf16.msra.mxu0 %v7654
    %10723 = vmatpush.bf16.msra.mxu0 %v7638
    %10724 = vmatmul.bf16.gmra.mxu0 %v3488
    %v10725 = vpop.f32.mrf.mxu0
    %v10726 = vadd.f32 %v4534, %v10725
    %v10727 = vpop.f32.mrf.mxu0
    %10728 = vdwg.mxu0
    %10729 = vmatpush.bf16.msra.mxu0 %v7878
    %10730 = vmatpush.bf16.msra.mxu0 %v7862
    %10731 = vmatpush.bf16.msra.mxu0 %v7846
    %10732 = vmatpush.bf16.msra.mxu0 %v7830
    %10733 = vmatpush.bf16.msra.mxu0 %v7814
    %10734 = vmatpush.bf16.msra.mxu0 %v7798
    %10735 = vmatpush.bf16.msra.mxu0 %v7782
    %10736 = vmatpush.bf16.msra.mxu0 %v7766
    %10737 = vmatmul.bf16.gmra.mxu0 %v3489
    %v10738 = vpop.f32.mrf.mxu0
    %v10739 = vadd.f32 %v10726, %v10738
    %v10740 = vpop.f32.mrf.mxu0
    %10741 = vdwg.mxu0
    %10742 = vmatpush.bf16.msra.mxu0 %v8006
    %10743 = vmatpush.bf16.msra.mxu0 %v7990
    %10744 = vmatpush.bf16.msra.mxu0 %v7974
    %10745 = vmatpush.bf16.msra.mxu0 %v7958
    %10746 = vmatpush.bf16.msra.mxu0 %v7942
    %10747 = vmatpush.bf16.msra.mxu0 %v7926
    %10748 = vmatpush.bf16.msra.mxu0 %v7910
    %10749 = vmatpush.bf16.msra.mxu0 %v7894
    %10750 = vmatmul.bf16.gmra.mxu0 %v3490
    %v10751 = vpop.f32.mrf.mxu0
    %v10752 = vadd.f32 %v10739, %v10751
    %v10753 = vpop.f32.mrf.mxu0
    %10754 = vdwg.mxu0
    %10755 = vmatpush.bf16.msra.mxu0 %v8134
    %10756 = vmatpush.bf16.msra.mxu0 %v8118
    %10757 = vmatpush.bf16.msra.mxu0 %v8102
    %10758 = vmatpush.bf16.msra.mxu0 %v8086
    %10759 = vmatpush.bf16.msra.mxu0 %v8070
    %10760 = vmatpush.bf16.msra.mxu0 %v8054
    %10761 = vmatpush.bf16.msra.mxu0 %v8038
    %10762 = vmatpush.bf16.msra.mxu0 %v8022
    %10763 = vmatmul.bf16.gmra.mxu0 %v3491
    %v10764 = vpop.f32.mrf.mxu0
    %v10765 = vadd.f32 %v10752, %v10764
    %v10766 = vpop.f32.mrf.mxu0
    %10767 = vdwg.mxu0
    %10768 = vmatpush.bf16.msra.mxu0 %v8262
    %10769 = vmatpush.bf16.msra.mxu0 %v8246
    %10770 = vmatpush.bf16.msra.mxu0 %v8230
    %10771 = vmatpush.bf16.msra.mxu0 %v8214
    %10772 = vmatpush.bf16.msra.mxu0 %v8198
    %10773 = vmatpush.bf16.msra.mxu0 %v8182
    %10774 = vmatpush.bf16.msra.mxu0 %v8166
    %10775 = vmatpush.bf16.msra.mxu0 %v8150
    %10776 = vmatmul.bf16.gmra.mxu0 %v3492
    %v10777 = vpop.f32.mrf.mxu0
    %v10778 = vadd.f32 %v10765, %v10777
    %v10779 = vpop.f32.mrf.mxu0
    %10780 = vdwg.mxu0
    %10781 = vmatpush.bf16.msra.mxu0 %v8390
    %10782 = vmatpush.bf16.msra.mxu0 %v8374
    %10783 = vmatpush.bf16.msra.mxu0 %v8358
    %10784 = vmatpush.bf16.msra.mxu0 %v8342
    %10785 = vmatpush.bf16.msra.mxu0 %v8326
    %10786 = vmatpush.bf16.msra.mxu0 %v8310
    %10787 = vmatpush.bf16.msra.mxu0 %v8294
    %10788 = vmatpush.bf16.msra.mxu0 %v8278
    %10789 = vmatmul.bf16.gmra.mxu0 %v3493
    %v10790 = vpop.f32.mrf.mxu0
    %v10791 = vadd.f32 %v10778, %v10790
    %v10792 = vpop.f32.mrf.mxu0
    %10793 = vdwg.mxu0
    %10794 = vmatpush.bf16.msra.mxu0 %v8518
    %10795 = vmatpush.bf16.msra.mxu0 %v8502
    %10796 = vmatpush.bf16.msra.mxu0 %v8486
    %10797 = vmatpush.bf16.msra.mxu0 %v8470
    %10798 = vmatpush.bf16.msra.mxu0 %v8454
    %10799 = vmatpush.bf16.msra.mxu0 %v8438
    %10800 = vmatpush.bf16.msra.mxu0 %v8422
    %10801 = vmatpush.bf16.msra.mxu0 %v8406
    %10802 = vmatmul.bf16.gmra.mxu0 %v3494
    %v10803 = vpop.f32.mrf.mxu0
    %v10804 = vadd.f32 %v10791, %v10803
    %v10805 = vpop.f32.mrf.mxu0
    %10806 = vdwg.mxu0
    %10807 = vmatpush.bf16.msra.mxu0 %v8646
    %10808 = vmatpush.bf16.msra.mxu0 %v8630
    %10809 = vmatpush.bf16.msra.mxu0 %v8614
    %10810 = vmatpush.bf16.msra.mxu0 %v8598
    %10811 = vmatpush.bf16.msra.mxu0 %v8582
    %10812 = vmatpush.bf16.msra.mxu0 %v8566
    %10813 = vmatpush.bf16.msra.mxu0 %v8550
    %10814 = vmatpush.bf16.msra.mxu0 %v8534
    %10815 = vmatmul.bf16.gmra.mxu0 %v3495
    %v10816 = vpop.f32.mrf.mxu0
    %v10817 = vadd.f32 %v10804, %v10816
    %v10818 = vpop.f32.mrf.mxu0
    %10819 = vdwg.mxu0
    %10820 = vmatpush.bf16.msra.mxu0 %v7751
    %10821 = vmatpush.bf16.msra.mxu0 %v7735
    %10822 = vmatpush.bf16.msra.mxu0 %v7719
    %10823 = vmatpush.bf16.msra.mxu0 %v7703
    %10824 = vmatpush.bf16.msra.mxu0 %v7687
    %10825 = vmatpush.bf16.msra.mxu0 %v7671
    %10826 = vmatpush.bf16.msra.mxu0 %v7655
    %10827 = vmatpush.bf16.msra.mxu0 %v7639
    %10828 = vmatmul.bf16.gmra.mxu0 %v3488
    %v10829 = vpop.f32.mrf.mxu0
    %v10830 = vadd.f32 %v4535, %v10829
    %v10831 = vpop.f32.mrf.mxu0
    %10832 = vdwg.mxu0
    %10833 = vmatpush.bf16.msra.mxu0 %v7879
    %10834 = vmatpush.bf16.msra.mxu0 %v7863
    %10835 = vmatpush.bf16.msra.mxu0 %v7847
    %10836 = vmatpush.bf16.msra.mxu0 %v7831
    %10837 = vmatpush.bf16.msra.mxu0 %v7815
    %10838 = vmatpush.bf16.msra.mxu0 %v7799
    %10839 = vmatpush.bf16.msra.mxu0 %v7783
    %10840 = vmatpush.bf16.msra.mxu0 %v7767
    %10841 = vmatmul.bf16.gmra.mxu0 %v3489
    %v10842 = vpop.f32.mrf.mxu0
    %v10843 = vadd.f32 %v10830, %v10842
    %v10844 = vpop.f32.mrf.mxu0
    %10845 = vdwg.mxu0
    %10846 = vmatpush.bf16.msra.mxu0 %v8007
    %10847 = vmatpush.bf16.msra.mxu0 %v7991
    %10848 = vmatpush.bf16.msra.mxu0 %v7975
    %10849 = vmatpush.bf16.msra.mxu0 %v7959
    %10850 = vmatpush.bf16.msra.mxu0 %v7943
    %10851 = vmatpush.bf16.msra.mxu0 %v7927
    %10852 = vmatpush.bf16.msra.mxu0 %v7911
    %10853 = vmatpush.bf16.msra.mxu0 %v7895
    %10854 = vmatmul.bf16.gmra.mxu0 %v3490
    %v10855 = vpop.f32.mrf.mxu0
    %v10856 = vadd.f32 %v10843, %v10855
    %v10857 = vpop.f32.mrf.mxu0
    %10858 = vdwg.mxu0
    %10859 = vmatpush.bf16.msra.mxu0 %v8135
    %10860 = vmatpush.bf16.msra.mxu0 %v8119
    %10861 = vmatpush.bf16.msra.mxu0 %v8103
    %10862 = vmatpush.bf16.msra.mxu0 %v8087
    %10863 = vmatpush.bf16.msra.mxu0 %v8071
    %10864 = vmatpush.bf16.msra.mxu0 %v8055
    %10865 = vmatpush.bf16.msra.mxu0 %v8039
    %10866 = vmatpush.bf16.msra.mxu0 %v8023
    %10867 = vmatmul.bf16.gmra.mxu0 %v3491
    %v10868 = vpop.f32.mrf.mxu0
    %v10869 = vadd.f32 %v10856, %v10868
    %v10870 = vpop.f32.mrf.mxu0
    %10871 = vdwg.mxu0
    %10872 = vmatpush.bf16.msra.mxu0 %v8263
    %10873 = vmatpush.bf16.msra.mxu0 %v8247
    %10874 = vmatpush.bf16.msra.mxu0 %v8231
    %10875 = vmatpush.bf16.msra.mxu0 %v8215
    %10876 = vmatpush.bf16.msra.mxu0 %v8199
    %10877 = vmatpush.bf16.msra.mxu0 %v8183
    %10878 = vmatpush.bf16.msra.mxu0 %v8167
    %10879 = vmatpush.bf16.msra.mxu0 %v8151
    %10880 = vmatmul.bf16.gmra.mxu0 %v3492
    %v10881 = vpop.f32.mrf.mxu0
    %v10882 = vadd.f32 %v10869, %v10881
    %v10883 = vpop.f32.mrf.mxu0
    %10884 = vdwg.mxu0
    %10885 = vmatpush.bf16.msra.mxu0 %v8391
    %10886 = vmatpush.bf16.msra.mxu0 %v8375
    %10887 = vmatpush.bf16.msra.mxu0 %v8359
    %10888 = vmatpush.bf16.msra.mxu0 %v8343
    %10889 = vmatpush.bf16.msra.mxu0 %v8327
    %10890 = vmatpush.bf16.msra.mxu0 %v8311
    %10891 = vmatpush.bf16.msra.mxu0 %v8295
    %10892 = vmatpush.bf16.msra.mxu0 %v8279
    %10893 = vmatmul.bf16.gmra.mxu0 %v3493
    %v10894 = vpop.f32.mrf.mxu0
    %v10895 = vadd.f32 %v10882, %v10894
    %v10896 = vpop.f32.mrf.mxu0
    %10897 = vdwg.mxu0
    %10898 = vmatpush.bf16.msra.mxu0 %v8519
    %10899 = vmatpush.bf16.msra.mxu0 %v8503
    %10900 = vmatpush.bf16.msra.mxu0 %v8487
    %10901 = vmatpush.bf16.msra.mxu0 %v8471
    %10902 = vmatpush.bf16.msra.mxu0 %v8455
    %10903 = vmatpush.bf16.msra.mxu0 %v8439
    %10904 = vmatpush.bf16.msra.mxu0 %v8423
    %10905 = vmatpush.bf16.msra.mxu0 %v8407
    %10906 = vmatmul.bf16.gmra.mxu0 %v3494
    %v10907 = vpop.f32.mrf.mxu0
    %v10908 = vadd.f32 %v10895, %v10907
    %v10909 = vpop.f32.mrf.mxu0
    %10910 = vdwg.mxu0
    %10911 = vmatpush.bf16.msra.mxu0 %v8647
    %10912 = vmatpush.bf16.msra.mxu0 %v8631
    %10913 = vmatpush.bf16.msra.mxu0 %v8615
    %10914 = vmatpush.bf16.msra.mxu0 %v8599
    %10915 = vmatpush.bf16.msra.mxu0 %v8583
    %10916 = vmatpush.bf16.msra.mxu0 %v8567
    %10917 = vmatpush.bf16.msra.mxu0 %v8551
    %10918 = vmatpush.bf16.msra.mxu0 %v8535
    %10919 = vmatmul.bf16.gmra.mxu0 %v3495
    %v10920 = vpop.f32.mrf.mxu0
    %v10921 = vadd.f32 %v10908, %v10920
    %v10922 = vpop.f32.mrf.mxu0
    %10923 = vdwg.mxu0
    %10924 = vmatpush.bf16.msra.mxu0 %v7752
    %10925 = vmatpush.bf16.msra.mxu0 %v7736
    %10926 = vmatpush.bf16.msra.mxu0 %v7720
    %10927 = vmatpush.bf16.msra.mxu0 %v7704
    %10928 = vmatpush.bf16.msra.mxu0 %v7688
    %10929 = vmatpush.bf16.msra.mxu0 %v7672
    %10930 = vmatpush.bf16.msra.mxu0 %v7656
    %10931 = vmatpush.bf16.msra.mxu0 %v7640
    %10932 = vmatmul.bf16.gmra.mxu0 %v3488
    %v10933 = vpop.f32.mrf.mxu0
    %v10934 = vadd.f32 %v4536, %v10933
    %v10935 = vpop.f32.mrf.mxu0
    %10936 = vdwg.mxu0
    %10937 = vmatpush.bf16.msra.mxu0 %v7880
    %10938 = vmatpush.bf16.msra.mxu0 %v7864
    %10939 = vmatpush.bf16.msra.mxu0 %v7848
    %10940 = vmatpush.bf16.msra.mxu0 %v7832
    %10941 = vmatpush.bf16.msra.mxu0 %v7816
    %10942 = vmatpush.bf16.msra.mxu0 %v7800
    %10943 = vmatpush.bf16.msra.mxu0 %v7784
    %10944 = vmatpush.bf16.msra.mxu0 %v7768
    %10945 = vmatmul.bf16.gmra.mxu0 %v3489
    %v10946 = vpop.f32.mrf.mxu0
    %v10947 = vadd.f32 %v10934, %v10946
    %v10948 = vpop.f32.mrf.mxu0
    %10949 = vdwg.mxu0
    %10950 = vmatpush.bf16.msra.mxu0 %v8008
    %10951 = vmatpush.bf16.msra.mxu0 %v7992
    %10952 = vmatpush.bf16.msra.mxu0 %v7976
    %10953 = vmatpush.bf16.msra.mxu0 %v7960
    %10954 = vmatpush.bf16.msra.mxu0 %v7944
    %10955 = vmatpush.bf16.msra.mxu0 %v7928
    %10956 = vmatpush.bf16.msra.mxu0 %v7912
    %10957 = vmatpush.bf16.msra.mxu0 %v7896
    %10958 = vmatmul.bf16.gmra.mxu0 %v3490
    %v10959 = vpop.f32.mrf.mxu0
    %v10960 = vadd.f32 %v10947, %v10959
    %v10961 = vpop.f32.mrf.mxu0
    %10962 = vdwg.mxu0
    %10963 = vmatpush.bf16.msra.mxu0 %v8136
    %10964 = vmatpush.bf16.msra.mxu0 %v8120
    %10965 = vmatpush.bf16.msra.mxu0 %v8104
    %10966 = vmatpush.bf16.msra.mxu0 %v8088
    %10967 = vmatpush.bf16.msra.mxu0 %v8072
    %10968 = vmatpush.bf16.msra.mxu0 %v8056
    %10969 = vmatpush.bf16.msra.mxu0 %v8040
    %10970 = vmatpush.bf16.msra.mxu0 %v8024
    %10971 = vmatmul.bf16.gmra.mxu0 %v3491
    %v10972 = vpop.f32.mrf.mxu0
    %v10973 = vadd.f32 %v10960, %v10972
    %v10974 = vpop.f32.mrf.mxu0
    %10975 = vdwg.mxu0
    %10976 = vmatpush.bf16.msra.mxu0 %v8264
    %10977 = vmatpush.bf16.msra.mxu0 %v8248
    %10978 = vmatpush.bf16.msra.mxu0 %v8232
    %10979 = vmatpush.bf16.msra.mxu0 %v8216
    %10980 = vmatpush.bf16.msra.mxu0 %v8200
    %10981 = vmatpush.bf16.msra.mxu0 %v8184
    %10982 = vmatpush.bf16.msra.mxu0 %v8168
    %10983 = vmatpush.bf16.msra.mxu0 %v8152
    %10984 = vmatmul.bf16.gmra.mxu0 %v3492
    %v10985 = vpop.f32.mrf.mxu0
    %v10986 = vadd.f32 %v10973, %v10985
    %v10987 = vpop.f32.mrf.mxu0
    %10988 = vdwg.mxu0
    %10989 = vmatpush.bf16.msra.mxu0 %v8392
    %10990 = vmatpush.bf16.msra.mxu0 %v8376
    %10991 = vmatpush.bf16.msra.mxu0 %v8360
    %10992 = vmatpush.bf16.msra.mxu0 %v8344
    %10993 = vmatpush.bf16.msra.mxu0 %v8328
    %10994 = vmatpush.bf16.msra.mxu0 %v8312
    %10995 = vmatpush.bf16.msra.mxu0 %v8296
    %10996 = vmatpush.bf16.msra.mxu0 %v8280
    %10997 = vmatmul.bf16.gmra.mxu0 %v3493
    %v10998 = vpop.f32.mrf.mxu0
    %v10999 = vadd.f32 %v10986, %v10998
    %v11000 = vpop.f32.mrf.mxu0
    %11001 = vdwg.mxu0
    %11002 = vmatpush.bf16.msra.mxu0 %v8520
    %11003 = vmatpush.bf16.msra.mxu0 %v8504
    %11004 = vmatpush.bf16.msra.mxu0 %v8488
    %11005 = vmatpush.bf16.msra.mxu0 %v8472
    %11006 = vmatpush.bf16.msra.mxu0 %v8456
    %11007 = vmatpush.bf16.msra.mxu0 %v8440
    %11008 = vmatpush.bf16.msra.mxu0 %v8424
    %11009 = vmatpush.bf16.msra.mxu0 %v8408
    %11010 = vmatmul.bf16.gmra.mxu0 %v3494
    %v11011 = vpop.f32.mrf.mxu0
    %v11012 = vadd.f32 %v10999, %v11011
    %v11013 = vpop.f32.mrf.mxu0
    %11014 = vdwg.mxu0
    %11015 = vmatpush.bf16.msra.mxu0 %v8648
    %11016 = vmatpush.bf16.msra.mxu0 %v8632
    %11017 = vmatpush.bf16.msra.mxu0 %v8616
    %11018 = vmatpush.bf16.msra.mxu0 %v8600
    %11019 = vmatpush.bf16.msra.mxu0 %v8584
    %11020 = vmatpush.bf16.msra.mxu0 %v8568
    %11021 = vmatpush.bf16.msra.mxu0 %v8552
    %11022 = vmatpush.bf16.msra.mxu0 %v8536
    %11023 = vmatmul.bf16.gmra.mxu0 %v3495
    %v11024 = vpop.f32.mrf.mxu0
    %v11025 = vadd.f32 %v11012, %v11024
    %v11026 = vpop.f32.mrf.mxu0
    %11027 = vdwg.mxu0
    %11028 = vmatpush.bf16.msra.mxu0 %v7753
    %11029 = vmatpush.bf16.msra.mxu0 %v7737
    %11030 = vmatpush.bf16.msra.mxu0 %v7721
    %11031 = vmatpush.bf16.msra.mxu0 %v7705
    %11032 = vmatpush.bf16.msra.mxu0 %v7689
    %11033 = vmatpush.bf16.msra.mxu0 %v7673
    %11034 = vmatpush.bf16.msra.mxu0 %v7657
    %11035 = vmatpush.bf16.msra.mxu0 %v7641
    %11036 = vmatmul.bf16.gmra.mxu0 %v3488
    %v11037 = vpop.f32.mrf.mxu0
    %v11038 = vadd.f32 %v4537, %v11037
    %v11039 = vpop.f32.mrf.mxu0
    %11040 = vdwg.mxu0
    %11041 = vmatpush.bf16.msra.mxu0 %v7881
    %11042 = vmatpush.bf16.msra.mxu0 %v7865
    %11043 = vmatpush.bf16.msra.mxu0 %v7849
    %11044 = vmatpush.bf16.msra.mxu0 %v7833
    %11045 = vmatpush.bf16.msra.mxu0 %v7817
    %11046 = vmatpush.bf16.msra.mxu0 %v7801
    %11047 = vmatpush.bf16.msra.mxu0 %v7785
    %11048 = vmatpush.bf16.msra.mxu0 %v7769
    %11049 = vmatmul.bf16.gmra.mxu0 %v3489
    %v11050 = vpop.f32.mrf.mxu0
    %v11051 = vadd.f32 %v11038, %v11050
    %v11052 = vpop.f32.mrf.mxu0
    %11053 = vdwg.mxu0
    %11054 = vmatpush.bf16.msra.mxu0 %v8009
    %11055 = vmatpush.bf16.msra.mxu0 %v7993
    %11056 = vmatpush.bf16.msra.mxu0 %v7977
    %11057 = vmatpush.bf16.msra.mxu0 %v7961
    %11058 = vmatpush.bf16.msra.mxu0 %v7945
    %11059 = vmatpush.bf16.msra.mxu0 %v7929
    %11060 = vmatpush.bf16.msra.mxu0 %v7913
    %11061 = vmatpush.bf16.msra.mxu0 %v7897
    %11062 = vmatmul.bf16.gmra.mxu0 %v3490
    %v11063 = vpop.f32.mrf.mxu0
    %v11064 = vadd.f32 %v11051, %v11063
    %v11065 = vpop.f32.mrf.mxu0
    %11066 = vdwg.mxu0
    %11067 = vmatpush.bf16.msra.mxu0 %v8137
    %11068 = vmatpush.bf16.msra.mxu0 %v8121
    %11069 = vmatpush.bf16.msra.mxu0 %v8105
    %11070 = vmatpush.bf16.msra.mxu0 %v8089
    %11071 = vmatpush.bf16.msra.mxu0 %v8073
    %11072 = vmatpush.bf16.msra.mxu0 %v8057
    %11073 = vmatpush.bf16.msra.mxu0 %v8041
    %11074 = vmatpush.bf16.msra.mxu0 %v8025
    %11075 = vmatmul.bf16.gmra.mxu0 %v3491
    %v11076 = vpop.f32.mrf.mxu0
    %v11077 = vadd.f32 %v11064, %v11076
    %v11078 = vpop.f32.mrf.mxu0
    %11079 = vdwg.mxu0
    %11080 = vmatpush.bf16.msra.mxu0 %v8265
    %11081 = vmatpush.bf16.msra.mxu0 %v8249
    %11082 = vmatpush.bf16.msra.mxu0 %v8233
    %11083 = vmatpush.bf16.msra.mxu0 %v8217
    %11084 = vmatpush.bf16.msra.mxu0 %v8201
    %11085 = vmatpush.bf16.msra.mxu0 %v8185
    %11086 = vmatpush.bf16.msra.mxu0 %v8169
    %11087 = vmatpush.bf16.msra.mxu0 %v8153
    %11088 = vmatmul.bf16.gmra.mxu0 %v3492
    %v11089 = vpop.f32.mrf.mxu0
    %v11090 = vadd.f32 %v11077, %v11089
    %v11091 = vpop.f32.mrf.mxu0
    %11092 = vdwg.mxu0
    %11093 = vmatpush.bf16.msra.mxu0 %v8393
    %11094 = vmatpush.bf16.msra.mxu0 %v8377
    %11095 = vmatpush.bf16.msra.mxu0 %v8361
    %11096 = vmatpush.bf16.msra.mxu0 %v8345
    %11097 = vmatpush.bf16.msra.mxu0 %v8329
    %11098 = vmatpush.bf16.msra.mxu0 %v8313
    %11099 = vmatpush.bf16.msra.mxu0 %v8297
    %11100 = vmatpush.bf16.msra.mxu0 %v8281
    %11101 = vmatmul.bf16.gmra.mxu0 %v3493
    %v11102 = vpop.f32.mrf.mxu0
    %v11103 = vadd.f32 %v11090, %v11102
    %v11104 = vpop.f32.mrf.mxu0
    %11105 = vdwg.mxu0
    %11106 = vmatpush.bf16.msra.mxu0 %v8521
    %11107 = vmatpush.bf16.msra.mxu0 %v8505
    %11108 = vmatpush.bf16.msra.mxu0 %v8489
    %11109 = vmatpush.bf16.msra.mxu0 %v8473
    %11110 = vmatpush.bf16.msra.mxu0 %v8457
    %11111 = vmatpush.bf16.msra.mxu0 %v8441
    %11112 = vmatpush.bf16.msra.mxu0 %v8425
    %11113 = vmatpush.bf16.msra.mxu0 %v8409
    %11114 = vmatmul.bf16.gmra.mxu0 %v3494
    %v11115 = vpop.f32.mrf.mxu0
    %v11116 = vadd.f32 %v11103, %v11115
    %v11117 = vpop.f32.mrf.mxu0
    %11118 = vdwg.mxu0
    %11119 = vmatpush.bf16.msra.mxu0 %v8649
    %11120 = vmatpush.bf16.msra.mxu0 %v8633
    %11121 = vmatpush.bf16.msra.mxu0 %v8617
    %11122 = vmatpush.bf16.msra.mxu0 %v8601
    %11123 = vmatpush.bf16.msra.mxu0 %v8585
    %11124 = vmatpush.bf16.msra.mxu0 %v8569
    %11125 = vmatpush.bf16.msra.mxu0 %v8553
    %11126 = vmatpush.bf16.msra.mxu0 %v8537
    %11127 = vmatmul.bf16.gmra.mxu0 %v3495
    %v11128 = vpop.f32.mrf.mxu0
    %v11129 = vadd.f32 %v11116, %v11128
    %v11130 = vpop.f32.mrf.mxu0
    %11131 = vdwg.mxu0
    %11132 = vmatpush.bf16.msra.mxu0 %v7754
    %11133 = vmatpush.bf16.msra.mxu0 %v7738
    %11134 = vmatpush.bf16.msra.mxu0 %v7722
    %11135 = vmatpush.bf16.msra.mxu0 %v7706
    %11136 = vmatpush.bf16.msra.mxu0 %v7690
    %11137 = vmatpush.bf16.msra.mxu0 %v7674
    %11138 = vmatpush.bf16.msra.mxu0 %v7658
    %11139 = vmatpush.bf16.msra.mxu0 %v7642
    %11140 = vmatmul.bf16.gmra.mxu0 %v3488
    %v11141 = vpop.f32.mrf.mxu0
    %v11142 = vadd.f32 %v4538, %v11141
    %v11143 = vpop.f32.mrf.mxu0
    %11144 = vdwg.mxu0
    %11145 = vmatpush.bf16.msra.mxu0 %v7882
    %11146 = vmatpush.bf16.msra.mxu0 %v7866
    %11147 = vmatpush.bf16.msra.mxu0 %v7850
    %11148 = vmatpush.bf16.msra.mxu0 %v7834
    %11149 = vmatpush.bf16.msra.mxu0 %v7818
    %11150 = vmatpush.bf16.msra.mxu0 %v7802
    %11151 = vmatpush.bf16.msra.mxu0 %v7786
    %11152 = vmatpush.bf16.msra.mxu0 %v7770
    %11153 = vmatmul.bf16.gmra.mxu0 %v3489
    %v11154 = vpop.f32.mrf.mxu0
    %v11155 = vadd.f32 %v11142, %v11154
    %v11156 = vpop.f32.mrf.mxu0
    %11157 = vdwg.mxu0
    %11158 = vmatpush.bf16.msra.mxu0 %v8010
    %11159 = vmatpush.bf16.msra.mxu0 %v7994
    %11160 = vmatpush.bf16.msra.mxu0 %v7978
    %11161 = vmatpush.bf16.msra.mxu0 %v7962
    %11162 = vmatpush.bf16.msra.mxu0 %v7946
    %11163 = vmatpush.bf16.msra.mxu0 %v7930
    %11164 = vmatpush.bf16.msra.mxu0 %v7914
    %11165 = vmatpush.bf16.msra.mxu0 %v7898
    %11166 = vmatmul.bf16.gmra.mxu0 %v3490
    %v11167 = vpop.f32.mrf.mxu0
    %v11168 = vadd.f32 %v11155, %v11167
    %v11169 = vpop.f32.mrf.mxu0
    %11170 = vdwg.mxu0
    %11171 = vmatpush.bf16.msra.mxu0 %v8138
    %11172 = vmatpush.bf16.msra.mxu0 %v8122
    %11173 = vmatpush.bf16.msra.mxu0 %v8106
    %11174 = vmatpush.bf16.msra.mxu0 %v8090
    %11175 = vmatpush.bf16.msra.mxu0 %v8074
    %11176 = vmatpush.bf16.msra.mxu0 %v8058
    %11177 = vmatpush.bf16.msra.mxu0 %v8042
    %11178 = vmatpush.bf16.msra.mxu0 %v8026
    %11179 = vmatmul.bf16.gmra.mxu0 %v3491
    %v11180 = vpop.f32.mrf.mxu0
    %v11181 = vadd.f32 %v11168, %v11180
    %v11182 = vpop.f32.mrf.mxu0
    %11183 = vdwg.mxu0
    %11184 = vmatpush.bf16.msra.mxu0 %v8266
    %11185 = vmatpush.bf16.msra.mxu0 %v8250
    %11186 = vmatpush.bf16.msra.mxu0 %v8234
    %11187 = vmatpush.bf16.msra.mxu0 %v8218
    %11188 = vmatpush.bf16.msra.mxu0 %v8202
    %11189 = vmatpush.bf16.msra.mxu0 %v8186
    %11190 = vmatpush.bf16.msra.mxu0 %v8170
    %11191 = vmatpush.bf16.msra.mxu0 %v8154
    %11192 = vmatmul.bf16.gmra.mxu0 %v3492
    %v11193 = vpop.f32.mrf.mxu0
    %v11194 = vadd.f32 %v11181, %v11193
    %v11195 = vpop.f32.mrf.mxu0
    %11196 = vdwg.mxu0
    %11197 = vmatpush.bf16.msra.mxu0 %v8394
    %11198 = vmatpush.bf16.msra.mxu0 %v8378
    %11199 = vmatpush.bf16.msra.mxu0 %v8362
    %11200 = vmatpush.bf16.msra.mxu0 %v8346
    %11201 = vmatpush.bf16.msra.mxu0 %v8330
    %11202 = vmatpush.bf16.msra.mxu0 %v8314
    %11203 = vmatpush.bf16.msra.mxu0 %v8298
    %11204 = vmatpush.bf16.msra.mxu0 %v8282
    %11205 = vmatmul.bf16.gmra.mxu0 %v3493
    %v11206 = vpop.f32.mrf.mxu0
    %v11207 = vadd.f32 %v11194, %v11206
    %v11208 = vpop.f32.mrf.mxu0
    %11209 = vdwg.mxu0
    %11210 = vmatpush.bf16.msra.mxu0 %v8522
    %11211 = vmatpush.bf16.msra.mxu0 %v8506
    %11212 = vmatpush.bf16.msra.mxu0 %v8490
    %11213 = vmatpush.bf16.msra.mxu0 %v8474
    %11214 = vmatpush.bf16.msra.mxu0 %v8458
    %11215 = vmatpush.bf16.msra.mxu0 %v8442
    %11216 = vmatpush.bf16.msra.mxu0 %v8426
    %11217 = vmatpush.bf16.msra.mxu0 %v8410
    %11218 = vmatmul.bf16.gmra.mxu0 %v3494
    %v11219 = vpop.f32.mrf.mxu0
    %v11220 = vadd.f32 %v11207, %v11219
    %v11221 = vpop.f32.mrf.mxu0
    %11222 = vdwg.mxu0
    %11223 = vmatpush.bf16.msra.mxu0 %v8650
    %11224 = vmatpush.bf16.msra.mxu0 %v8634
    %11225 = vmatpush.bf16.msra.mxu0 %v8618
    %11226 = vmatpush.bf16.msra.mxu0 %v8602
    %11227 = vmatpush.bf16.msra.mxu0 %v8586
    %11228 = vmatpush.bf16.msra.mxu0 %v8570
    %11229 = vmatpush.bf16.msra.mxu0 %v8554
    %11230 = vmatpush.bf16.msra.mxu0 %v8538
    %11231 = vmatmul.bf16.gmra.mxu0 %v3495
    %v11232 = vpop.f32.mrf.mxu0
    %v11233 = vadd.f32 %v11220, %v11232
    %v11234 = vpop.f32.mrf.mxu0
    %11235 = vdwg.mxu0
    %11236 = vmatpush.bf16.msra.mxu0 %v7755
    %11237 = vmatpush.bf16.msra.mxu0 %v7739
    %11238 = vmatpush.bf16.msra.mxu0 %v7723
    %11239 = vmatpush.bf16.msra.mxu0 %v7707
    %11240 = vmatpush.bf16.msra.mxu0 %v7691
    %11241 = vmatpush.bf16.msra.mxu0 %v7675
    %11242 = vmatpush.bf16.msra.mxu0 %v7659
    %11243 = vmatpush.bf16.msra.mxu0 %v7643
    %11244 = vmatmul.bf16.gmra.mxu0 %v3488
    %v11245 = vpop.f32.mrf.mxu0
    %v11246 = vadd.f32 %v4539, %v11245
    %v11247 = vpop.f32.mrf.mxu0
    %11248 = vdwg.mxu0
    %11249 = vmatpush.bf16.msra.mxu0 %v7883
    %11250 = vmatpush.bf16.msra.mxu0 %v7867
    %11251 = vmatpush.bf16.msra.mxu0 %v7851
    %11252 = vmatpush.bf16.msra.mxu0 %v7835
    %11253 = vmatpush.bf16.msra.mxu0 %v7819
    %11254 = vmatpush.bf16.msra.mxu0 %v7803
    %11255 = vmatpush.bf16.msra.mxu0 %v7787
    %11256 = vmatpush.bf16.msra.mxu0 %v7771
    %11257 = vmatmul.bf16.gmra.mxu0 %v3489
    %v11258 = vpop.f32.mrf.mxu0
    %v11259 = vadd.f32 %v11246, %v11258
    %v11260 = vpop.f32.mrf.mxu0
    %11261 = vdwg.mxu0
    %11262 = vmatpush.bf16.msra.mxu0 %v8011
    %11263 = vmatpush.bf16.msra.mxu0 %v7995
    %11264 = vmatpush.bf16.msra.mxu0 %v7979
    %11265 = vmatpush.bf16.msra.mxu0 %v7963
    %11266 = vmatpush.bf16.msra.mxu0 %v7947
    %11267 = vmatpush.bf16.msra.mxu0 %v7931
    %11268 = vmatpush.bf16.msra.mxu0 %v7915
    %11269 = vmatpush.bf16.msra.mxu0 %v7899
    %11270 = vmatmul.bf16.gmra.mxu0 %v3490
    %v11271 = vpop.f32.mrf.mxu0
    %v11272 = vadd.f32 %v11259, %v11271
    %v11273 = vpop.f32.mrf.mxu0
    %11274 = vdwg.mxu0
    %11275 = vmatpush.bf16.msra.mxu0 %v8139
    %11276 = vmatpush.bf16.msra.mxu0 %v8123
    %11277 = vmatpush.bf16.msra.mxu0 %v8107
    %11278 = vmatpush.bf16.msra.mxu0 %v8091
    %11279 = vmatpush.bf16.msra.mxu0 %v8075
    %11280 = vmatpush.bf16.msra.mxu0 %v8059
    %11281 = vmatpush.bf16.msra.mxu0 %v8043
    %11282 = vmatpush.bf16.msra.mxu0 %v8027
    %11283 = vmatmul.bf16.gmra.mxu0 %v3491
    %v11284 = vpop.f32.mrf.mxu0
    %v11285 = vadd.f32 %v11272, %v11284
    %v11286 = vpop.f32.mrf.mxu0
    %11287 = vdwg.mxu0
    %11288 = vmatpush.bf16.msra.mxu0 %v8267
    %11289 = vmatpush.bf16.msra.mxu0 %v8251
    %11290 = vmatpush.bf16.msra.mxu0 %v8235
    %11291 = vmatpush.bf16.msra.mxu0 %v8219
    %11292 = vmatpush.bf16.msra.mxu0 %v8203
    %11293 = vmatpush.bf16.msra.mxu0 %v8187
    %11294 = vmatpush.bf16.msra.mxu0 %v8171
    %11295 = vmatpush.bf16.msra.mxu0 %v8155
    %11296 = vmatmul.bf16.gmra.mxu0 %v3492
    %v11297 = vpop.f32.mrf.mxu0
    %v11298 = vadd.f32 %v11285, %v11297
    %v11299 = vpop.f32.mrf.mxu0
    %11300 = vdwg.mxu0
    %11301 = vmatpush.bf16.msra.mxu0 %v8395
    %11302 = vmatpush.bf16.msra.mxu0 %v8379
    %11303 = vmatpush.bf16.msra.mxu0 %v8363
    %11304 = vmatpush.bf16.msra.mxu0 %v8347
    %11305 = vmatpush.bf16.msra.mxu0 %v8331
    %11306 = vmatpush.bf16.msra.mxu0 %v8315
    %11307 = vmatpush.bf16.msra.mxu0 %v8299
    %11308 = vmatpush.bf16.msra.mxu0 %v8283
    %11309 = vmatmul.bf16.gmra.mxu0 %v3493
    %v11310 = vpop.f32.mrf.mxu0
    %v11311 = vadd.f32 %v11298, %v11310
    %v11312 = vpop.f32.mrf.mxu0
    %11313 = vdwg.mxu0
    %11314 = vmatpush.bf16.msra.mxu0 %v8523
    %11315 = vmatpush.bf16.msra.mxu0 %v8507
    %11316 = vmatpush.bf16.msra.mxu0 %v8491
    %11317 = vmatpush.bf16.msra.mxu0 %v8475
    %11318 = vmatpush.bf16.msra.mxu0 %v8459
    %11319 = vmatpush.bf16.msra.mxu0 %v8443
    %11320 = vmatpush.bf16.msra.mxu0 %v8427
    %11321 = vmatpush.bf16.msra.mxu0 %v8411
    %11322 = vmatmul.bf16.gmra.mxu0 %v3494
    %v11323 = vpop.f32.mrf.mxu0
    %v11324 = vadd.f32 %v11311, %v11323
    %v11325 = vpop.f32.mrf.mxu0
    %11326 = vdwg.mxu0
    %11327 = vmatpush.bf16.msra.mxu0 %v8651
    %11328 = vmatpush.bf16.msra.mxu0 %v8635
    %11329 = vmatpush.bf16.msra.mxu0 %v8619
    %11330 = vmatpush.bf16.msra.mxu0 %v8603
    %11331 = vmatpush.bf16.msra.mxu0 %v8587
    %11332 = vmatpush.bf16.msra.mxu0 %v8571
    %11333 = vmatpush.bf16.msra.mxu0 %v8555
    %11334 = vmatpush.bf16.msra.mxu0 %v8539
    %11335 = vmatmul.bf16.gmra.mxu0 %v3495
    %v11336 = vpop.f32.mrf.mxu0
    %v11337 = vadd.f32 %v11324, %v11336
    %v11338 = vpop.f32.mrf.mxu0
    %11339 = vdwg.mxu0
    %v11340 = vmax.f32 %v9777, 0.0
    %v11341 = vmax.f32 %v9881, 0.0
    %v11342 = vmax.f32 %v9985, 0.0
    %v11343 = vmax.f32 %v10089, 0.0
    %v11344 = vmax.f32 %v10193, 0.0
    %v11345 = vmax.f32 %v10297, 0.0
    %v11346 = vmax.f32 %v10401, 0.0
    %v11347 = vmax.f32 %v10505, 0.0
    %v11348 = vmax.f32 %v10609, 0.0
    %v11349 = vmax.f32 %v10713, 0.0
    %v11350 = vmax.f32 %v10817, 0.0
    %v11351 = vmax.f32 %v10921, 0.0
    %v11352 = vmax.f32 %v11025, 0.0
    %v11353 = vmax.f32 %v11129, 0.0
    %v11354 = vmax.f32 %v11233, 0.0
    %v11355 = vmax.f32 %v11337, 0.0
    %v11372 = vrot.slane %v11341, 6
    %v11373 = vrot.slane %v11342, 4
    %v11374 = vrot.slane %v11343, 2
    %v11375 = vrot.slane %v11345, 6
    %v11376 = vrot.slane %v11346, 4
    %v11377 = vrot.slane %v11347, 2
    %v11378 = vrot.slane %v11349, 6
    %v11379 = vrot.slane %v11350, 4
    %v11380 = vrot.slane %v11351, 2
    %v11381 = vrot.slane %v11353, 6
    %v11382 = vrot.slane %v11354, 4
    %v11383 = vrot.slane %v11355, 2
    %vm11384 = vcmask 1041408
    %v11385 = vsel %vm11384, %v11340, %v11372
    %vm11386 = vcmask 1045508
    %v11387 = vsel %vm11386, %v11373, %v11374
    %vm11388 = vcmask 1043456
    %v11389 = vsel %vm11388, %v11385, %v11387
    %v11390 = vsel %vm11384, %v11344, %v11375
    %v11391 = vsel %vm11386, %v11376, %v11377
    %v11392 = vsel %vm11388, %v11390, %v11391
    %v11393 = vsel %vm11384, %v11348, %v11378
    %v11394 = vsel %vm11386, %v11379, %v11380
    %v11395 = vsel %vm11388, %v11393, %v11394
    %v11396 = vsel %vm11384, %v11352, %v11381
    %v11397 = vsel %vm11386, %v11382, %v11383
    %v11398 = vsel %vm11388, %v11396, %v11397
    %11403 = vst [vmem:[#allocation26] sm:$0xff] %v11389
    %11404 = vst [vmem:[#allocation26 + $0x8] sm:$0xff] %v11392
    %11405 = vst [vmem:[#allocation26 + $0x10] sm:$0xff] %v11395
    %11406 = vst [vmem:[#allocation26 + $0x18] sm:$0xff] %v11398
    // Predicated region
    $region122: #{tpu_custom_call.1} parent=1 // pred_check
      _
    $region123: #{tpu_custom_call.1} parent=1 // pred_check_branch
      %11408 = sbr.rel (0) target = $region125
    $region124: #{tpu_custom_call.1} parent=1 // pred_region
      %11410 = vsyncadd [#allocation4], 0
      %s11412 = sshll.u32 [#allocation26], 4
      %s11413 = int_to_ptr.vmem [resolvable:$true] %s11412
      %s11414 = sshll.u32 %s15, 4
      %s11415 = int_to_ptr.hbm [resolvable:$true] %s11414
      %11417 = dma.vmem_to_hbm [thread:$0]  %s11413, 512, %s11415, [#allocation4]
    $region125: #{tpu_custom_call.1} parent=1 // pred_fallthru
      _
    // Predicated region
    $region126: #{tpu_custom_call.1} parent=1 // pred_check
      _
    $region127: #{tpu_custom_call.1} parent=1 // pred_check_branch
      %11419 = sbr.rel (0) target = $region129
    $region128: #{tpu_custom_call.1} parent=1 // pred_region
      %11421 = dma.done [#allocation4], 512
    $region129: #{tpu_custom_call.1} parent=1 // pred_fallthru
      _
    %11422 = vsyncpa [#allocation3], 1
    %11423 = vsyncpa [#allocation6], 1
    %11424 = vsyncpa [#allocation9], 1
    %11425 = vsyncpa [#allocation12], 1
    %11426 = vsyncpa [#allocation15], 1
    %11427 = vsyncpa [#allocation18], 1
    %11428 = vsyncpa [#allocation21], 1
    %11429 = vsyncpa [#allocation24], 1
    %11430 = vsyncpa [#allocation4], 1

</llo_original>
